<compile_context>
chip_gen: v5e
topology: v5e:2x2
jax: 0.10.0
libtpu: 0.0.40
codegen_flags: <defaults>
</compile_context>

<pallas_src>
import functools

import jax
import jax.numpy as jnp
from jax import lax
from jax.experimental import pallas as pl
from jax.experimental.pallas import tpu as pltpu

NORM_LOG_BOUND = 1.0
SANITY_EPS = 1e-8


def _round_up(x, m):
    return ((x + m - 1) // m) * m


# ----------------------------------------------------------------------------
# Parameter construction (plain JAX "glue" — mirrors MyBoxE.embed())
# ----------------------------------------------------------------------------
def init_var(key, shape, min_val, max_val):
    return jax.random.uniform(key, shape, dtype=jnp.float32,
                              minval=min_val, maxval=max_val)


def add_padding(t):
    return jnp.concatenate([t, jnp.zeros((1, t.shape[1]), dtype=t.dtype)], axis=0)


def product_normalise(x, bounded_norm=True):
    step2 = jnp.abs(x) + SANITY_EPS
    log_norm = jnp.log(step2)
    if not bounded_norm:
        norm_volume = jnp.exp(jnp.mean(log_norm, axis=2, keepdims=True))
        return x / norm_volume
    minsize = jnp.minimum(jnp.min(log_norm, axis=2, keepdims=True), -NORM_LOG_BOUND)
    maxsize = jnp.maximum(jnp.max(log_norm, axis=2, keepdims=True), NORM_LOG_BOUND)
    size_norm_ratio = jnp.minimum(-NORM_LOG_BOUND / minsize, NORM_LOG_BOUND / maxsize)
    return jnp.exp(log_norm * size_norm_ratio)


def build_params(key, entities_num, relations_num, max_arity, embedding_dim):
    sqrt_dim = jnp.sqrt(jnp.float32(embedding_dim))
    k1, k2, k3, k4, k5 = jax.random.split(key, 5)

    ent_shape = (entities_num, embedding_dim)
    entity_points = init_var(k1, ent_shape, -0.5 / sqrt_dim, 0.5 / sqrt_dim)
    entities_with_pad = add_padding(entity_points)

    entity_bumps = init_var(k2, ent_shape, -0.5 / sqrt_dim, 0.5 / sqrt_dim)
    # normed_bumps: L2-normalize along the embedding dim
    entity_bumps = entity_bumps / jnp.maximum(
        jnp.linalg.norm(entity_bumps, axis=1, keepdims=True), 1e-12)
    bumps_with_pad = add_padding(entity_bumps)

    rel_tbl_shape = (relations_num, max_arity, embedding_dim)
    scale_mult_shape = (relations_num, max_arity, 1)

    # learnable_shape=True, shared_shape=False, bounded_norm=True
    rel_shapes = init_var(k3, rel_tbl_shape, -0.5 / sqrt_dim, 0.5 / sqrt_dim)
    norm_rel_shapes = product_normalise(rel_shapes, bounded_norm=True)

    # fixed_width=False, hard_total_size=False -> elu(x)+1
    scale_multiples = init_var(k4, scale_mult_shape, -1.0, 1.0)
    scale_multiples = jax.nn.elu(scale_multiples) + 1.0

    rel_bases = init_var(k5, rel_tbl_shape, -0.5 / sqrt_dim, 0.5 / sqrt_dim)
    rel_deltas = scale_multiples * norm_rel_shapes

    # --- device-layout tables for the Pallas kernel ------------------------
    # Transposed so the batch axis of every in-kernel intermediate sits on
    # lanes; entity/relation counts padded to a sublane multiple (padded
    # columns are never selected by the one-hot gather, so they are inert).
    E1 = entities_num + 1
    E1p = _round_up(E1, 8)
    Rp = _round_up(relations_num, 8)
    D = embedding_dim

    pts_tblT = jnp.zeros((D, E1p), jnp.float32).at[:, :E1].set(entities_with_pad.T)
    bmp_tblT = jnp.zeros((D, E1p), jnp.float32).at[:, :E1].set(bumps_with_pad.T)
    basT = jnp.zeros((max_arity, D, Rp), jnp.float32).at[:, :, :relations_num].set(
        jnp.transpose(rel_bases, (1, 2, 0)))
    dltT = jnp.zeros((max_arity, D, Rp), jnp.float32).at[:, :, :relations_num].set(
        jnp.transpose(rel_deltas, (1, 2, 0)))

    return dict(entities_with_pad=entities_with_pad,
                bumps_with_pad=bumps_with_pad,
                rel_bases=rel_bases,
                rel_deltas=rel_deltas,
                rel_multiples=scale_multiples,
                pts_tblT=pts_tblT, bmp_tblT=bmp_tblT, basT=basT, dltT=dltT)


# ----------------------------------------------------------------------------
# Pallas kernel: one-hot MXU gather from VMEM-resident tables + bumps, box,
#                polynomial loss, L1 over embedding dim, sum over arity.
# Layout: batch on lanes, embedding dim on sublanes; arity is a tiny static loop.
# ----------------------------------------------------------------------------
def boxe_loss_kernel(ent_idx_ref, rel_idx_ref,       # (A, TB), (1, TB) int32
                     ptsT_ref, bmpT_ref,             # (D, E1p) f32 (resident)
                     basT_ref, dltT_ref,             # (A, D, Rp) f32 (resident)
                     out_ref):                       # (1, 1, TB) f32
    A, TB = ent_idx_ref.shape
    D, E1p = ptsT_ref.shape
    Rp = basT_ref.shape[2]

    dot = functools.partial(jnp.dot, preferred_element_type=jnp.float32,
                            precision=jax.lax.Precision.HIGHEST)

    eidx = ent_idx_ref[...]                      # (A, TB)
    ridx = rel_idx_ref[...]                      # (1, TB)
    ptsT = ptsT_ref[...]                         # (D, E1p)
    bmpT = bmpT_ref[...]                         # (D, E1p)

    iota_e = lax.broadcasted_iota(jnp.int32, (E1p, TB), 0)
    iota_r = lax.broadcasted_iota(jnp.int32, (Rp, TB), 0)
    oh_r = (ridx == iota_r).astype(jnp.float32)  # (Rp, TB) relation one-hot

    # Entity gathers (one-hot matmul on the otherwise idle MXU); A is tiny & static.
    points, bumps = [], []
    for a in range(A):
        oh_a = (eidx[a:a + 1, :] == iota_e).astype(jnp.float32)   # (E1p, TB)
        points.append(dot(ptsT, oh_a))                            # (D, TB)
        bumps.append(dot(bmpT, oh_a))                             # (D, TB)

    bump_sum = bumps[0]
    for a in range(1, A):
        bump_sum = bump_sum + bumps[a]

    total = jnp.zeros((1, TB), jnp.float32)
    for a in range(A):
        pts = points[a] + bump_sum - bumps[a]                     # bump translation
        bas = dot(basT_ref[a], oh_r)                              # (D, TB)
        dlt = dot(dltT_ref[a], oh_r)                              # (D, TB)

        # compute_box
        second = bas + 0.5 * dlt
        first = bas - 0.5 * dlt
        low = jnp.minimum(first, second)
        high = jnp.maximum(first, second)

        # polynomial_loss
        widths = high - low
        wp1 = widths + 1.0
        inv_wp1 = 1.0 / wp1
        centres = 0.5 * (low + high)
        dist = jnp.abs(pts - centres)
        inside = jnp.logical_and(low <= pts, pts <= high)
        cond = jnp.where(inside, dist * inv_wp1,
                         wp1 * dist - 0.5 * widths * (wp1 - inv_wp1))

        # TODO(synk): dropout (p > 0) not implemented in-kernel; config uses p = 0.0.
        # L1 over embedding dim (sublane reduce), accumulate over arity.
        total = total + jnp.sum(jnp.abs(cond), axis=0, keepdims=True)

    out_ref[...] = total[None, :, :]             # lane-dense (1, 1, TB) store


def boxe_loss_pallas(ent_idx, rel_idx, ptsT, bmpT, basT, dltT, *, tile_b=256):
    """ent_idx: [B, A] int32, rel_idx: [B] int32; tables already device-laid-out."""
    B, A = ent_idx.shape
    D, E1p = ptsT.shape
    Rp = basT.shape[2]

    num_tiles = pl.cdiv(B, tile_b)
    if num_tiles > 1 and num_tiles % 2 == 1:
        num_tiles += 1          # even tile count: keep both v7x TensorCores busy
    Bp = num_tiles * tile_b
    if Bp != B:
        # Padded rows use entity/relation index 0; their results are sliced off.
        ent_idx = jnp.pad(ent_idx, ((0, Bp - B), (0, 0)))
        rel_idx = jnp.pad(rel_idx, ((0, Bp - B),))

    ent_idx_t = ent_idx.T.astype(jnp.int32)          # (A, Bp)  — batch on lanes
    rel_idx_2d = rel_idx.astype(jnp.int32)[None, :]  # (1, Bp)

    grid_spec = pltpu.PrefetchScalarGridSpec(
        num_scalar_prefetch=0,
        grid=(num_tiles,),
        in_specs=[
            pl.BlockSpec((A, tile_b), lambda i: (0, i)),        # entity indices
            pl.BlockSpec((1, tile_b), lambda i: (0, i)),        # relation indices
            pl.BlockSpec((D, E1p), lambda i: (0, 0)),           # point table (resident)
            pl.BlockSpec((D, E1p), lambda i: (0, 0)),           # bump table (resident)
            pl.BlockSpec((A, D, Rp), lambda i: (0, 0, 0)),      # rel bases (resident)
            pl.BlockSpec((A, D, Rp), lambda i: (0, 0, 0)),      # rel deltas (resident)
        ],
        out_specs=pl.BlockSpec((1, 1, tile_b), lambda i: (i, 0, 0)),
    )

    out = pl.pallas_call(
        boxe_loss_kernel,
        out_shape=jax.ShapeDtypeStruct((num_tiles, 1, tile_b), jnp.float32),
        grid_spec=grid_spec,
        compiler_params=pltpu.CompilerParams(
            dimension_semantics=("parallel",)),
    )(ent_idx_t, rel_idx_2d, ptsT, bmpT, basT, dltT)

    return out.reshape(Bp)[:B]


# ----------------------------------------------------------------------------
# Forward (index prep in plain JAX glue; gather + loss fully in the kernel)
# ----------------------------------------------------------------------------
@functools.partial(jax.jit, static_argnames=("max_arity", "tile_b"))
def my_boxe_forward(params, sample, max_arity, tile_b=256):
    ent_idx = sample[:, :max_arity].astype(jnp.int32)    # [B, A]
    rel_idx = sample[:, -1].astype(jnp.int32)            # [B]
    # TODO(synk): for entity tables too large for VMEM, fall back to a
    # scalar-prefetch + manual-DMA gather path instead of resident tables.
    return boxe_loss_pallas(ent_idx, rel_idx,
                            params["pts_tblT"], params["bmp_tblT"],
                            params["basT"], params["dltT"], tile_b=tile_b)


# Pure-JAX reference of the same forward, for a correctness check.
def my_boxe_forward_ref(params, sample, max_arity):
    ent_idx = sample[:, :max_arity]
    rel_idx = sample[:, -1]
    points = params["entities_with_pad"][ent_idx]
    bumps = params["bumps_with_pad"][ent_idx]
    bases = params["rel_bases"][rel_idx]
    deltas = params["rel_deltas"][rel_idx]

    points = points + jnp.sum(bumps, axis=1, keepdims=True) - bumps
    second = bases + 0.5 * deltas
    first = bases - 0.5 * deltas
    low = jnp.minimum(first, second)
    high = jnp.maximum(first, second)
    widths = high - low
    widths_p1 = widths + 1.0
    centres = 0.5 * (low + high)
    dist = jnp.abs(points - centres)
    cond = jnp.where(jnp.logical_and(low <= points, points <= high),
                     dist / widths_p1,
                     widths_p1 * dist - 0.5 * widths * (widths_p1 - 1.0 / widths_p1))
    return jnp.sum(jnp.sum(jnp.abs(cond), axis=2), axis=1)


if __name__ == "__main__":
    entities_num, relations_num, max_arity, embedding_dim = 10, 5, 3, 32
    batch = 12   # B < tile_b -> exercises the padded trailing tile

    key = jax.random.PRNGKey(0)
    kparam, ksamp_e, ksamp_r = jax.random.split(key, 3)

    params = build_params(kparam, entities_num, relations_num, max_arity,
                          embedding_dim)

    ent_cols = jax.random.randint(ksamp_e, (batch, max_arity), 0,
                                  entities_num + 1, dtype=jnp.int32)
    rel_col = jax.random.randint(ksamp_r, (batch, 1), 0, relations_num,
                                 dtype=jnp.int32)
    sample = jnp.concatenate([ent_cols, rel_col], axis=1)   # [B, max_arity+1]

    loss = my_boxe_forward(params, sample, max_arity)
    loss = jax.block_until_ready(loss)

    loss_ref = my_boxe_forward_ref(params, sample, max_arity)
    assert loss.shape == (batch,)
    assert jnp.allclose(loss, loss_ref, atol=1e-5, rtol=1e-5), (loss, loss_ref)

    print("KERNEL_OK")
</pallas_src>

<mosaic_0001>
module attributes {stable_mosaic.version = 11 : i64} {
  func.func @boxe_loss_kernel(%arg0: i32, %arg1: memref<3x256xi32, #tpu.memory_space<vmem>>, %arg2: memref<1x256xi32, #tpu.memory_space<vmem>>, %arg3: memref<32x16xf32, #tpu.memory_space<vmem>>, %arg4: memref<32x16xf32, #tpu.memory_space<vmem>>, %arg5: memref<3x32x8xf32, #tpu.memory_space<vmem>>, %arg6: memref<3x32x8xf32, #tpu.memory_space<vmem>>, %arg7: memref<1x1x256xf32, #tpu.memory_space<vmem>>) attributes {dimension_semantics = [#tpu.dimension_semantics<parallel>], iteration_bounds = array<i64: 1>, scalar_prefetch = 0 : i64, scratch_operands = 0 : i64, tpu.core_type = #tpu.core_type<tc>, window_params = [{transform_indices = @transform_0, window_bounds = array<i64: 3, 256>}, {transform_indices = @transform_1, window_bounds = array<i64: 1, 256>}, {pipeline_mode = #tpu.pipeline_mode<synchronous>, transform_indices = @transform_2, window_bounds = array<i64: 32, 16>}, {pipeline_mode = #tpu.pipeline_mode<synchronous>, transform_indices = @transform_3, window_bounds = array<i64: 32, 16>}, {pipeline_mode = #tpu.pipeline_mode<synchronous>, transform_indices = @transform_4, window_bounds = array<i64: 3, 32, 8>}, {pipeline_mode = #tpu.pipeline_mode<synchronous>, transform_indices = @transform_5, window_bounds = array<i64: 3, 32, 8>}, {transform_indices = @transform_6, window_bounds = array<i64: 1, 1, 256>}]} {
    %c0 = arith.constant 0 : index
    %c0_0 = arith.constant 0 : index
    %0 = vector.load %arg1[%c0, %c0_0] : memref<3x256xi32, #tpu.memory_space<vmem>>, vector<3x256xi32>
    %c0_1 = arith.constant 0 : index
    %c0_2 = arith.constant 0 : index
    %1 = vector.load %arg2[%c0_1, %c0_2] : memref<1x256xi32, #tpu.memory_space<vmem>>, vector<1x256xi32>
    %c0_3 = arith.constant 0 : index
    %c0_4 = arith.constant 0 : index
    %2 = vector.load %arg3[%c0_3, %c0_4] : memref<32x16xf32, #tpu.memory_space<vmem>>, vector<32x16xf32>
    %c0_5 = arith.constant 0 : index
    %c0_6 = arith.constant 0 : index
    %3 = vector.load %arg4[%c0_5, %c0_6] : memref<32x16xf32, #tpu.memory_space<vmem>>, vector<32x16xf32>
    %4 = tpu.iota {dimensions = array<i32: 0>} : vector<16x256xi32>
    %5 = tpu.iota {dimensions = array<i32: 0>} : vector<8x256xi32>
    %6 = vector.broadcast %1 : vector<1x256xi32> to vector<8x256xi32>
    %7 = arith.cmpi eq, %6, %5 : vector<8x256xi32>
    %8 = arith.extui %7 : vector<8x256xi1> to vector<8x256xi32>
    %9 = arith.sitofp %8 : vector<8x256xi32> to vector<8x256xf32>
    %10 = vector.extract_strided_slice %0 {offsets = [0, 0], sizes = [1, 256], strides = [1, 1]} : vector<3x256xi32> to vector<1x256xi32>
    %11 = vector.broadcast %10 : vector<1x256xi32> to vector<16x256xi32>
    %12 = arith.cmpi eq, %11, %4 : vector<16x256xi32>
    %13 = arith.extui %12 : vector<16x256xi1> to vector<16x256xi32>
    %14 = arith.sitofp %13 : vector<16x256xi32> to vector<16x256xf32>
    %cst = arith.constant dense<0.000000e+00> : vector<32x256xf32>
    %15 = tpu.matmul %2, %14, %cst {dimension_numbers = #tpu.dot_dimension_numbers<[1], [0], [0], [1], [0, 0, 1, 1], [], []>, precision = #tpu.contract_precision<fp32>} : vector<32x16xf32>, vector<16x256xf32>, vector<32x256xf32> -> vector<32x256xf32>
    %cst_7 = arith.constant dense<0.000000e+00> : vector<32x256xf32>
    %16 = tpu.matmul %3, %14, %cst_7 {dimension_numbers = #tpu.dot_dimension_numbers<[1], [0], [0], [1], [0, 0, 1, 1], [], []>, precision = #tpu.contract_precision<fp32>} : vector<32x16xf32>, vector<16x256xf32>, vector<32x256xf32> -> vector<32x256xf32>
    %17 = vector.extract_strided_slice %0 {offsets = [1, 0], sizes = [1, 256], strides = [1, 1]} : vector<3x256xi32> to vector<1x256xi32>
    %18 = vector.broadcast %17 : vector<1x256xi32> to vector<16x256xi32>
    %19 = arith.cmpi eq, %18, %4 : vector<16x256xi32>
    %20 = arith.extui %19 : vector<16x256xi1> to vector<16x256xi32>
    %21 = arith.sitofp %20 : vector<16x256xi32> to vector<16x256xf32>
    %cst_8 = arith.constant dense<0.000000e+00> : vector<32x256xf32>
    %22 = tpu.matmul %2, %21, %cst_8 {dimension_numbers = #tpu.dot_dimension_numbers<[1], [0], [0], [1], [0, 0, 1, 1], [], []>, precision = #tpu.contract_precision<fp32>} : vector<32x16xf32>, vector<16x256xf32>, vector<32x256xf32> -> vector<32x256xf32>
    %cst_9 = arith.constant dense<0.000000e+00> : vector<32x256xf32>
    %23 = tpu.matmul %3, %21, %cst_9 {dimension_numbers = #tpu.dot_dimension_numbers<[1], [0], [0], [1], [0, 0, 1, 1], [], []>, precision = #tpu.contract_precision<fp32>} : vector<32x16xf32>, vector<16x256xf32>, vector<32x256xf32> -> vector<32x256xf32>
    %24 = vector.extract_strided_slice %0 {offsets = [2, 0], sizes = [1, 256], strides = [1, 1]} : vector<3x256xi32> to vector<1x256xi32>
    %25 = vector.broadcast %24 : vector<1x256xi32> to vector<16x256xi32>
    %26 = arith.cmpi eq, %25, %4 : vector<16x256xi32>
    %27 = arith.extui %26 : vector<16x256xi1> to vector<16x256xi32>
    %28 = arith.sitofp %27 : vector<16x256xi32> to vector<16x256xf32>
    %cst_10 = arith.constant dense<0.000000e+00> : vector<32x256xf32>
    %29 = tpu.matmul %2, %28, %cst_10 {dimension_numbers = #tpu.dot_dimension_numbers<[1], [0], [0], [1], [0, 0, 1, 1], [], []>, precision = #tpu.contract_precision<fp32>} : vector<32x16xf32>, vector<16x256xf32>, vector<32x256xf32> -> vector<32x256xf32>
    %cst_11 = arith.constant dense<0.000000e+00> : vector<32x256xf32>
    %30 = tpu.matmul %3, %28, %cst_11 {dimension_numbers = #tpu.dot_dimension_numbers<[1], [0], [0], [1], [0, 0, 1, 1], [], []>, precision = #tpu.contract_precision<fp32>} : vector<32x16xf32>, vector<16x256xf32>, vector<32x256xf32> -> vector<32x256xf32>
    %31 = arith.addf %16, %23 : vector<32x256xf32>
    %32 = arith.addf %31, %30 : vector<32x256xf32>
    %cst_12 = arith.constant 0.000000e+00 : f32
    %33 = vector.broadcast %cst_12 : f32 to vector<1x256xf32>
    %34 = arith.addf %15, %32 : vector<32x256xf32>
    %35 = arith.subf %34, %16 : vector<32x256xf32>
    %c0_13 = arith.constant 0 : index
    %c0_14 = arith.constant 0 : index
    %c0_15 = arith.constant 0 : index
    %36 = vector.load %arg5[%c0_13, %c0_14, %c0_15] : memref<3x32x8xf32, #tpu.memory_space<vmem>>, vector<1x32x8xf32>
    %37 = vector.shape_cast %36 : vector<1x32x8xf32> to vector<32x8xf32>
    %cst_16 = arith.constant dense<0.000000e+00> : vector<32x256xf32>
    %38 = tpu.matmul %37, %9, %cst_16 {dimension_numbers = #tpu.dot_dimension_numbers<[1], [0], [0], [1], [0, 0, 1, 1], [], []>, precision = #tpu.contract_precision<fp32>} : vector<32x8xf32>, vector<8x256xf32>, vector<32x256xf32> -> vector<32x256xf32>
    %c0_17 = arith.constant 0 : index
    %c0_18 = arith.constant 0 : index
    %c0_19 = arith.constant 0 : index
    %39 = vector.load %arg6[%c0_17, %c0_18, %c0_19] : memref<3x32x8xf32, #tpu.memory_space<vmem>>, vector<1x32x8xf32>
    %40 = vector.shape_cast %39 : vector<1x32x8xf32> to vector<32x8xf32>
    %cst_20 = arith.constant dense<0.000000e+00> : vector<32x256xf32>
    %41 = tpu.matmul %40, %9, %cst_20 {dimension_numbers = #tpu.dot_dimension_numbers<[1], [0], [0], [1], [0, 0, 1, 1], [], []>, precision = #tpu.contract_precision<fp32>} : vector<32x8xf32>, vector<8x256xf32>, vector<32x256xf32> -> vector<32x256xf32>
    %cst_21 = arith.constant 5.000000e-01 : f32
    %42 = vector.broadcast %cst_21 : f32 to vector<32x256xf32>
    %43 = arith.mulf %42, %41 : vector<32x256xf32>
    %44 = arith.addf %38, %43 : vector<32x256xf32>
    %cst_22 = arith.constant 5.000000e-01 : f32
    %45 = vector.broadcast %cst_22 : f32 to vector<32x256xf32>
    %46 = arith.mulf %45, %41 : vector<32x256xf32>
    %47 = arith.subf %38, %46 : vector<32x256xf32>
    %48 = arith.minimumf %47, %44 : vector<32x256xf32>
    %49 = arith.maximumf %47, %44 : vector<32x256xf32>
    %50 = arith.subf %49, %48 : vector<32x256xf32>
    %cst_23 = arith.constant 1.000000e+00 : f32
    %51 = vector.broadcast %cst_23 : f32 to vector<32x256xf32>
    %52 = arith.addf %50, %51 : vector<32x256xf32>
    %cst_24 = arith.constant 1.000000e+00 : f32
    %53 = vector.broadcast %cst_24 : f32 to vector<32x256xf32>
    %54 = arith.divf %53, %52 : vector<32x256xf32>
    %55 = arith.addf %48, %49 : vector<32x256xf32>
    %cst_25 = arith.constant 5.000000e-01 : f32
    %56 = vector.broadcast %cst_25 : f32 to vector<32x256xf32>
    %57 = arith.mulf %56, %55 : vector<32x256xf32>
    %58 = arith.subf %35, %57 : vector<32x256xf32>
    %59 = math.absf %58 : vector<32x256xf32>
    %60 = arith.cmpf ole, %48, %35 : vector<32x256xf32>
    %61 = arith.cmpf ole, %35, %49 : vector<32x256xf32>
    %62 = arith.andi %60, %61 : vector<32x256xi1>
    %63 = arith.mulf %59, %54 : vector<32x256xf32>
    %64 = arith.mulf %52, %59 : vector<32x256xf32>
    %cst_26 = arith.constant 5.000000e-01 : f32
    %65 = vector.broadcast %cst_26 : f32 to vector<32x256xf32>
    %66 = arith.mulf %65, %50 : vector<32x256xf32>
    %67 = arith.subf %52, %54 : vector<32x256xf32>
    %68 = arith.mulf %66, %67 : vector<32x256xf32>
    %69 = arith.subf %64, %68 : vector<32x256xf32>
    %70 = arith.select %62, %63, %69 : vector<32x256xi1>, vector<32x256xf32>
    %71 = math.absf %70 : vector<32x256xf32>
    %cst_27 = arith.constant dense<0.000000e+00> : vector<256xf32>
    %72 = vector.multi_reduction <add>, %71, %cst_27 [0] : vector<32x256xf32> to vector<256xf32>
    %73 = vector.shape_cast %72 : vector<256xf32> to vector<1x256xf32>
    %74 = arith.addf %33, %73 : vector<1x256xf32>
    %75 = arith.addf %22, %32 : vector<32x256xf32>
    %76 = arith.subf %75, %23 : vector<32x256xf32>
    %c1 = arith.constant 1 : index
    %c0_28 = arith.constant 0 : index
    %c0_29 = arith.constant 0 : index
    %77 = vector.load %arg5[%c1, %c0_28, %c0_29] : memref<3x32x8xf32, #tpu.memory_space<vmem>>, vector<1x32x8xf32>
    %78 = vector.shape_cast %77 : vector<1x32x8xf32> to vector<32x8xf32>
    %cst_30 = arith.constant dense<0.000000e+00> : vector<32x256xf32>
    %79 = tpu.matmul %78, %9, %cst_30 {dimension_numbers = #tpu.dot_dimension_numbers<[1], [0], [0], [1], [0, 0, 1, 1], [], []>, precision = #tpu.contract_precision<fp32>} : vector<32x8xf32>, vector<8x256xf32>, vector<32x256xf32> -> vector<32x256xf32>
    %c1_31 = arith.constant 1 : index
    %c0_32 = arith.constant 0 : index
    %c0_33 = arith.constant 0 : index
    %80 = vector.load %arg6[%c1_31, %c0_32, %c0_33] : memref<3x32x8xf32, #tpu.memory_space<vmem>>, vector<1x32x8xf32>
    %81 = vector.shape_cast %80 : vector<1x32x8xf32> to vector<32x8xf32>
    %cst_34 = arith.constant dense<0.000000e+00> : vector<32x256xf32>
    %82 = tpu.matmul %81, %9, %cst_34 {dimension_numbers = #tpu.dot_dimension_numbers<[1], [0], [0], [1], [0, 0, 1, 1], [], []>, precision = #tpu.contract_precision<fp32>} : vector<32x8xf32>, vector<8x256xf32>, vector<32x256xf32> -> vector<32x256xf32>
    %cst_35 = arith.constant 5.000000e-01 : f32
    %83 = vector.broadcast %cst_35 : f32 to vector<32x256xf32>
    %84 = arith.mulf %83, %82 : vector<32x256xf32>
    %85 = arith.addf %79, %84 : vector<32x256xf32>
    %cst_36 = arith.constant 5.000000e-01 : f32
    %86 = vector.broadcast %cst_36 : f32 to vector<32x256xf32>
    %87 = arith.mulf %86, %82 : vector<32x256xf32>
    %88 = arith.subf %79, %87 : vector<32x256xf32>
    %89 = arith.minimumf %88, %85 : vector<32x256xf32>
    %90 = arith.maximumf %88, %85 : vector<32x256xf32>
    %91 = arith.subf %90, %89 : vector<32x256xf32>
    %cst_37 = arith.constant 1.000000e+00 : f32
    %92 = vector.broadcast %cst_37 : f32 to vector<32x256xf32>
    %93 = arith.addf %91, %92 : vector<32x256xf32>
    %cst_38 = arith.constant 1.000000e+00 : f32
    %94 = vector.broadcast %cst_38 : f32 to vector<32x256xf32>
    %95 = arith.divf %94, %93 : vector<32x256xf32>
    %96 = arith.addf %89, %90 : vector<32x256xf32>
    %cst_39 = arith.constant 5.000000e-01 : f32
    %97 = vector.broadcast %cst_39 : f32 to vector<32x256xf32>
    %98 = arith.mulf %97, %96 : vector<32x256xf32>
    %99 = arith.subf %76, %98 : vector<32x256xf32>
    %100 = math.absf %99 : vector<32x256xf32>
    %101 = arith.cmpf ole, %89, %76 : vector<32x256xf32>
    %102 = arith.cmpf ole, %76, %90 : vector<32x256xf32>
    %103 = arith.andi %101, %102 : vector<32x256xi1>
    %104 = arith.mulf %100, %95 : vector<32x256xf32>
    %105 = arith.mulf %93, %100 : vector<32x256xf32>
    %cst_40 = arith.constant 5.000000e-01 : f32
    %106 = vector.broadcast %cst_40 : f32 to vector<32x256xf32>
    %107 = arith.mulf %106, %91 : vector<32x256xf32>
    %108 = arith.subf %93, %95 : vector<32x256xf32>
    %109 = arith.mulf %107, %108 : vector<32x256xf32>
    %110 = arith.subf %105, %109 : vector<32x256xf32>
    %111 = arith.select %103, %104, %110 : vector<32x256xi1>, vector<32x256xf32>
    %112 = math.absf %111 : vector<32x256xf32>
    %cst_41 = arith.constant dense<0.000000e+00> : vector<256xf32>
    %113 = vector.multi_reduction <add>, %112, %cst_41 [0] : vector<32x256xf32> to vector<256xf32>
    %114 = vector.shape_cast %113 : vector<256xf32> to vector<1x256xf32>
    %115 = arith.addf %74, %114 : vector<1x256xf32>
    %116 = arith.addf %29, %32 : vector<32x256xf32>
    %117 = arith.subf %116, %30 : vector<32x256xf32>
    %c2 = arith.constant 2 : index
    %c0_42 = arith.constant 0 : index
    %c0_43 = arith.constant 0 : index
    %118 = vector.load %arg5[%c2, %c0_42, %c0_43] : memref<3x32x8xf32, #tpu.memory_space<vmem>>, vector<1x32x8xf32>
    %119 = vector.shape_cast %118 : vector<1x32x8xf32> to vector<32x8xf32>
    %cst_44 = arith.constant dense<0.000000e+00> : vector<32x256xf32>
    %120 = tpu.matmul %119, %9, %cst_44 {dimension_numbers = #tpu.dot_dimension_numbers<[1], [0], [0], [1], [0, 0, 1, 1], [], []>, precision = #tpu.contract_precision<fp32>} : vector<32x8xf32>, vector<8x256xf32>, vector<32x256xf32> -> vector<32x256xf32>
    %c2_45 = arith.constant 2 : index
    %c0_46 = arith.constant 0 : index
    %c0_47 = arith.constant 0 : index
    %121 = vector.load %arg6[%c2_45, %c0_46, %c0_47] : memref<3x32x8xf32, #tpu.memory_space<vmem>>, vector<1x32x8xf32>
    %122 = vector.shape_cast %121 : vector<1x32x8xf32> to vector<32x8xf32>
    %cst_48 = arith.constant dense<0.000000e+00> : vector<32x256xf32>
    %123 = tpu.matmul %122, %9, %cst_48 {dimension_numbers = #tpu.dot_dimension_numbers<[1], [0], [0], [1], [0, 0, 1, 1], [], []>, precision = #tpu.contract_precision<fp32>} : vector<32x8xf32>, vector<8x256xf32>, vector<32x256xf32> -> vector<32x256xf32>
    %cst_49 = arith.constant 5.000000e-01 : f32
    %124 = vector.broadcast %cst_49 : f32 to vector<32x256xf32>
    %125 = arith.mulf %124, %123 : vector<32x256xf32>
    %126 = arith.addf %120, %125 : vector<32x256xf32>
    %cst_50 = arith.constant 5.000000e-01 : f32
    %127 = vector.broadcast %cst_50 : f32 to vector<32x256xf32>
    %128 = arith.mulf %127, %123 : vector<32x256xf32>
    %129 = arith.subf %120, %128 : vector<32x256xf32>
    %130 = arith.minimumf %129, %126 : vector<32x256xf32>
    %131 = arith.maximumf %129, %126 : vector<32x256xf32>
    %132 = arith.subf %131, %130 : vector<32x256xf32>
    %cst_51 = arith.constant 1.000000e+00 : f32
    %133 = vector.broadcast %cst_51 : f32 to vector<32x256xf32>
    %134 = arith.addf %132, %133 : vector<32x256xf32>
    %cst_52 = arith.constant 1.000000e+00 : f32
    %135 = vector.broadcast %cst_52 : f32 to vector<32x256xf32>
    %136 = arith.divf %135, %134 : vector<32x256xf32>
    %137 = arith.addf %130, %131 : vector<32x256xf32>
    %cst_53 = arith.constant 5.000000e-01 : f32
    %138 = vector.broadcast %cst_53 : f32 to vector<32x256xf32>
    %139 = arith.mulf %138, %137 : vector<32x256xf32>
    %140 = arith.subf %117, %139 : vector<32x256xf32>
    %141 = math.absf %140 : vector<32x256xf32>
    %142 = arith.cmpf ole, %130, %117 : vector<32x256xf32>
    %143 = arith.cmpf ole, %117, %131 : vector<32x256xf32>
    %144 = arith.andi %142, %143 : vector<32x256xi1>
    %145 = arith.mulf %141, %136 : vector<32x256xf32>
    %146 = arith.mulf %134, %141 : vector<32x256xf32>
    %cst_54 = arith.constant 5.000000e-01 : f32
    %147 = vector.broadcast %cst_54 : f32 to vector<32x256xf32>
    %148 = arith.mulf %147, %132 : vector<32x256xf32>
    %149 = arith.subf %134, %136 : vector<32x256xf32>
    %150 = arith.mulf %148, %149 : vector<32x256xf32>
    %151 = arith.subf %146, %150 : vector<32x256xf32>
    %152 = arith.select %144, %145, %151 : vector<32x256xi1>, vector<32x256xf32>
    %153 = math.absf %152 : vector<32x256xf32>
    %cst_55 = arith.constant dense<0.000000e+00> : vector<256xf32>
    %154 = vector.multi_reduction <add>, %153, %cst_55 [0] : vector<32x256xf32> to vector<256xf32>
    %155 = vector.shape_cast %154 : vector<256xf32> to vector<1x256xf32>
    %156 = arith.addf %115, %155 : vector<1x256xf32>
    %157 = vector.shape_cast %156 : vector<1x256xf32> to vector<1x1x256xf32>
    %c0_56 = arith.constant 0 : index
    %c0_57 = arith.constant 0 : index
    %c0_58 = arith.constant 0 : index
    %158 = vector.load %arg7[%c0_56, %c0_57, %c0_58] : memref<1x1x256xf32, #tpu.memory_space<vmem>>, vector<1x1x256xf32>
    tpu.vector_store %arg7[%c0_56, %c0_57, %c0_58], %157 {strides = array<i32>} : memref<1x1x256xf32, #tpu.memory_space<vmem>>, vector<1x1x256xf32>,
    return
  }
  func.func @transform_0(%arg0: i32) -> (i32, i32) {
    %c0_i32 = arith.constant 0 : i32
    %c0_i32_0 = arith.constant 0 : i32
    return %c0_i32, %arg0 : i32, i32
  }
  func.func @transform_1(%arg0: i32) -> (i32, i32) {
    %c0_i32 = arith.constant 0 : i32
    %c0_i32_0 = arith.constant 0 : i32
    return %c0_i32, %arg0 : i32, i32
  }
  func.func @transform_2(%arg0: i32) -> (i32, i32) {
    %c0_i32 = arith.constant 0 : i32
    %c0_i32_0 = arith.constant 0 : i32
    %c0_i32_1 = arith.constant 0 : i32
    return %c0_i32, %c0_i32_0 : i32, i32
  }
  func.func @transform_3(%arg0: i32) -> (i32, i32) {
    %c0_i32 = arith.constant 0 : i32
    %c0_i32_0 = arith.constant 0 : i32
    %c0_i32_1 = arith.constant 0 : i32
    return %c0_i32, %c0_i32_0 : i32, i32
  }
  func.func @transform_4(%arg0: i32) -> (i32, i32, i32) {
    %c0_i32 = arith.constant 0 : i32
    %c0_i32_0 = arith.constant 0 : i32
    %c0_i32_1 = arith.constant 0 : i32
    %c0_i32_2 = arith.constant 0 : i32
    return %c0_i32, %c0_i32_0, %c0_i32_1 : i32, i32, i32
  }
  func.func @transform_5(%arg0: i32) -> (i32, i32, i32) {
    %c0_i32 = arith.constant 0 : i32
    %c0_i32_0 = arith.constant 0 : i32
    %c0_i32_1 = arith.constant 0 : i32
    %c0_i32_2 = arith.constant 0 : i32
    return %c0_i32, %c0_i32_0, %c0_i32_1 : i32, i32, i32
  }
  func.func @transform_6(%arg0: i32) -> (i32, i32, i32) {
    %c0_i32 = arith.constant 0 : i32
    %c0_i32_0 = arith.constant 0 : i32
    %c0_i32_1 = arith.constant 0 : i32
    return %arg0, %c0_i32, %c0_i32_0 : i32, i32, i32
  }
}

</mosaic_0001>

<llo_original>
// kernel: my_boxe_forward.1
$region0: #{my_boxe_forward.1}
  #allocation0 [shape = 'u32[]', space=smem, size = 0x4, offset = 0x4, fixed_abs, tag = 'smem constant byte address 0x4 - core index']
  #allocation1 [shape = 'u32[72,128]{1,0:T(1,128)}', space=vmem, size = 0x9000, scoped, tag = 'internal scratch']
  %s0 = inlined_call_operand.vmem [shape: s32[3,256], index: 0, kind: input, shape index: {}]
  %s1 = inlined_call_operand.vmem [shape: s32[1,256], index: 1, kind: input, shape index: {}]
  %s2 = inlined_call_operand.vmem [shape: f32[32,16], index: 2, kind: input, shape index: {}]
  %s3 = inlined_call_operand.vmem [shape: f32[32,16], index: 3, kind: input, shape index: {}]
  %s4 = inlined_call_operand.vmem [shape: f32[3,32,8], index: 4, kind: input, shape index: {}]
  %s5 = inlined_call_operand.vmem [shape: f32[3,32,8], index: 5, kind: input, shape index: {}]
  %s6 = inlined_call_operand.vmem [shape: f32[1,1,256], index: 6, kind: output, shape index: {}]
  %s7 = sld [smem:[#allocation0]]
  $region34: #{my_boxe_forward.1} parent=0
    _
  %s9 = ssub.s32 1, %s7
  %s10 = scalar_select 0, %s9, %s7
  // Predicated region
  $region2: #{my_boxe_forward.1} parent=0 // pred_check
    _
  $region3: #{my_boxe_forward.1} parent=0 // pred_check_branch
    %12 = sbr.rel (0) target = $region5
  $region4: #{my_boxe_forward.1} parent=0 // pred_region
    _
  $region5: #{my_boxe_forward.1} parent=0 // pred_fallthru
    _
  // Predicated region
  $region6: #{my_boxe_forward.1} parent=0 // pred_check
    _
  $region7: #{my_boxe_forward.1} parent=0 // pred_check_branch
    %14 = sbr.rel (0) target = $region9
  $region8: #{my_boxe_forward.1} parent=0 // pred_region
    _
  $region9: #{my_boxe_forward.1} parent=0 // pred_fallthru
    _
  // Predicated region
  $region10: #{my_boxe_forward.1} parent=0 // pred_check
    _
  $region11: #{my_boxe_forward.1} parent=0 // pred_check_branch
    %16 = sbr.rel (0) target = $region13
  $region12: #{my_boxe_forward.1} parent=0 // pred_region
    _
  $region13: #{my_boxe_forward.1} parent=0 // pred_fallthru
    _
  // Predicated region
  $region14: #{my_boxe_forward.1} parent=0 // pred_check
    _
  $region15: #{my_boxe_forward.1} parent=0 // pred_check_branch
    %18 = sbr.rel (0) target = $region17
  $region16: #{my_boxe_forward.1} parent=0 // pred_region
    _
  $region17: #{my_boxe_forward.1} parent=0 // pred_fallthru
    _
  // Predicated region
  $region18: #{my_boxe_forward.1} parent=0 // pred_check
    _
  $region19: #{my_boxe_forward.1} parent=0 // pred_check_branch
    %20 = sbr.rel (0) target = $region21
  $region20: #{my_boxe_forward.1} parent=0 // pred_region
    _
  $region21: #{my_boxe_forward.1} parent=0 // pred_fallthru
    _
  // Predicated region
  $region22: #{my_boxe_forward.1} parent=0 // pred_check
    _
  $region23: #{my_boxe_forward.1} parent=0 // pred_check_branch
    %22 = sbr.rel (0) target = $region25
  $region24: #{my_boxe_forward.1} parent=0 // pred_region
    _
  $region25: #{my_boxe_forward.1} parent=0 // pred_fallthru
    _
  %v23 = vld [vmem:[%s0] sm:$0x77]
  %v24 = vld [vmem:[%s1] sm:$0x3]
  %v25 = vld [vmem:[%s2] sm:$0xff]
  %v26 = vld [vmem:[%s2 + $0x8] sm:$0xff]
  %v27 = vld [vmem:[%s2 + $0x10] sm:$0xff]
  %v28 = vld [vmem:[%s2 + $0x18] sm:$0xff]
  %v29 = vld [vmem:[%s3] sm:$0xff]
  %v30 = vld [vmem:[%s3 + $0x8] sm:$0xff]
  %v31 = vld [vmem:[%s3 + $0x10] sm:$0xff]
  %v32 = vld [vmem:[%s3 + $0x18] sm:$0xff]
  %v33 = vlaneseq
  %v34 = vshrl.u32 %v33, 7
  %v35 = vadd.s32 %v34, 8
  %v36 = vperm.slane %v24, 0
  %v37 = vperm.slane %v24, 1
  %vm38 = vcmp.eq.s32.totalorder %v36, %v34
  %vm39 = vcmp.eq.s32.totalorder %v37, %v34
  %v40 = vsel %vm38, 1, 0
  %v41 = vsel %vm39, 1, 0
  %v42 = vcvt.s32.f32 %v40
  %v43 = vcvt.s32.f32 %v41
  %v44 = vperm.slane %v23, 0
  %v45 = vperm.slane %v23, 4
  %v46 = vperm.slane %v44, 0
  %v47 = vperm.slane %v45, 0
  %vm48 = vcmp.eq.s32.totalorder %v46, %v34
  %vm49 = vcmp.eq.s32.totalorder %v47, %v34
  %vm50 = vcmp.eq.s32.totalorder %v46, %v35
  %vm51 = vcmp.eq.s32.totalorder %v47, %v35
  %v52 = vsel %vm48, 1, 0
  %v53 = vsel %vm49, 1, 0
  %v54 = vsel %vm50, 1, 0
  %v55 = vsel %vm51, 1, 0
  %v56 = vcvt.s32.f32 %v52
  %v57 = vcvt.s32.f32 %v53
  %v58 = vcvt.s32.f32 %v54
  %v59 = vcvt.s32.f32 %v55
  %vm60 = vcmask 130048
  %v62 = vsel %vm60, %v29, 0
  %v65 = vsel %vm60, %v30, 0
  %v68 = vsel %vm60, %v31, 0
  %v71 = vsel %vm60, %v32, 0
  %73 = vmatpush.msra.mxu0 0.0
  %74 = vmatpush.msra.mxu0 0.0
  %75 = vmatpush.msra.mxu0 0.0
  %76 = vmatpush.msra.mxu0 0.0
  %77 = vmatpush.msra.mxu0 0.0
  %78 = vmatpush.msra.mxu0 0.0
  %79 = vmatpush.msra.mxu0 0.0
  %80 = vmatpush.msra.mxu0 0.0
  %81 = vmatpush.msra.mxu0 0.0
  %82 = vmatpush.msra.mxu0 0.0
  %83 = vmatpush.msra.mxu0 0.0
  %84 = vmatpush.msra.mxu0 0.0
  %85 = vmatpush.msra.mxu0 0.0
  %86 = vmatpush.msra.mxu0 0.0
  %v87 = vand.u32 %v58, 4294901760
  %88 = vmatpush.msra.mxu0 %v87
  %v89 = vand.u32 %v56, 4294901760
  %90 = vmatpush.msra.mxu0 %v89
  %v91 = vand.u32 %v62, 4294901760
  %v92 = vsub.f32 %v62, %v91
  %v93 = vand.u32 %v92, 4294901760
  %v94 = vsub.f32 %v92, %v93
  %v95 = vand.u32 %v94, 4294901760
  %96 = vmatmul.f32.gmra.mxu0 %v95
  %v97 = vpop.f32.mrf.mxu0
  %v98 = vadd.f32 0.0, %v97
  %v99 = vand.u32 %v65, 4294901760
  %v100 = vsub.f32 %v65, %v99
  %v101 = vand.u32 %v100, 4294901760
  %v102 = vsub.f32 %v100, %v101
  %v103 = vand.u32 %v102, 4294901760
  %104 = vmatmul.f32.gmra.mxu0 %v103
  %v105 = vpop.f32.mrf.mxu0
  %v106 = vadd.f32 0.0, %v105
  %v107 = vand.u32 %v68, 4294901760
  %v108 = vsub.f32 %v68, %v107
  %v109 = vand.u32 %v108, 4294901760
  %v110 = vsub.f32 %v108, %v109
  %v111 = vand.u32 %v110, 4294901760
  %112 = vmatmul.f32.gmra.mxu0 %v111
  %v113 = vpop.f32.mrf.mxu0
  %v114 = vadd.f32 0.0, %v113
  %v115 = vand.u32 %v71, 4294901760
  %v116 = vsub.f32 %v71, %v115
  %v117 = vand.u32 %v116, 4294901760
  %v118 = vsub.f32 %v116, %v117
  %v119 = vand.u32 %v118, 4294901760
  %120 = vmatmul.f32.gmra.mxu0 %v119
  %v121 = vpop.f32.mrf.mxu0
  %v122 = vadd.f32 0.0, %v121
  %123 = vdwg.mxu0
  %124 = vmatpush.msra.mxu0 0.0
  %125 = vmatpush.msra.mxu0 0.0
  %126 = vmatpush.msra.mxu0 0.0
  %127 = vmatpush.msra.mxu0 0.0
  %128 = vmatpush.msra.mxu0 0.0
  %129 = vmatpush.msra.mxu0 0.0
  %130 = vmatpush.msra.mxu0 0.0
  %131 = vmatpush.msra.mxu0 0.0
  %132 = vmatpush.msra.mxu0 0.0
  %133 = vmatpush.msra.mxu0 0.0
  %134 = vmatpush.msra.mxu0 0.0
  %135 = vmatpush.msra.mxu0 0.0
  %136 = vmatpush.msra.mxu0 0.0
  %137 = vmatpush.msra.mxu0 0.0
  %v138 = vand.u32 %v58, 4294901760
  %v139 = vsub.f32 %v58, %v138
  %v140 = vand.u32 %v139, 4294901760
  %v141 = vsub.f32 %v139, %v140
  %v142 = vand.u32 %v141, 4294901760
  %143 = vmatpush.msra.mxu0 %v142
  %v144 = vand.u32 %v56, 4294901760
  %v145 = vsub.f32 %v56, %v144
  %v146 = vand.u32 %v145, 4294901760
  %v147 = vsub.f32 %v145, %v146
  %v148 = vand.u32 %v147, 4294901760
  %149 = vmatpush.msra.mxu0 %v148
  %v150 = vand.u32 %v62, 4294901760
  %151 = vmatmul.f32.gmra.mxu0 %v150
  %v152 = vpop.f32.mrf.mxu0
  %v153 = vadd.f32 %v98, %v152
  %v154 = vand.u32 %v65, 4294901760
  %155 = vmatmul.f32.gmra.mxu0 %v154
  %v156 = vpop.f32.mrf.mxu0
  %v157 = vadd.f32 %v106, %v156
  %v158 = vand.u32 %v68, 4294901760
  %159 = vmatmul.f32.gmra.mxu0 %v158
  %v160 = vpop.f32.mrf.mxu0
  %v161 = vadd.f32 %v114, %v160
  %v162 = vand.u32 %v71, 4294901760
  %163 = vmatmul.f32.gmra.mxu0 %v162
  %v164 = vpop.f32.mrf.mxu0
  %v165 = vadd.f32 %v122, %v164
  %166 = vdwg.mxu0
  %167 = vmatpush.msra.mxu0 0.0
  %168 = vmatpush.msra.mxu0 0.0
  %169 = vmatpush.msra.mxu0 0.0
  %170 = vmatpush.msra.mxu0 0.0
  %171 = vmatpush.msra.mxu0 0.0
  %172 = vmatpush.msra.mxu0 0.0
  %173 = vmatpush.msra.mxu0 0.0
  %174 = vmatpush.msra.mxu0 0.0
  %175 = vmatpush.msra.mxu0 0.0
  %176 = vmatpush.msra.mxu0 0.0
  %177 = vmatpush.msra.mxu0 0.0
  %178 = vmatpush.msra.mxu0 0.0
  %179 = vmatpush.msra.mxu0 0.0
  %180 = vmatpush.msra.mxu0 0.0
  %v181 = vand.u32 %v58, 4294901760
  %v182 = vsub.f32 %v58, %v181
  %183 = vmatpush.msra.mxu0 %v182
  %v184 = vand.u32 %v56, 4294901760
  %v185 = vsub.f32 %v56, %v184
  %186 = vmatpush.msra.mxu0 %v185
  %v187 = vand.u32 %v62, 4294901760
  %v188 = vsub.f32 %v62, %v187
  %189 = vmatmul.f32.gmra.mxu0 %v188
  %v190 = vpop.f32.mrf.mxu0
  %v191 = vadd.f32 %v153, %v190
  %v192 = vand.u32 %v65, 4294901760
  %v193 = vsub.f32 %v65, %v192
  %194 = vmatmul.f32.gmra.mxu0 %v193
  %v195 = vpop.f32.mrf.mxu0
  %v196 = vadd.f32 %v157, %v195
  %v197 = vand.u32 %v68, 4294901760
  %v198 = vsub.f32 %v68, %v197
  %199 = vmatmul.f32.gmra.mxu0 %v198
  %v200 = vpop.f32.mrf.mxu0
  %v201 = vadd.f32 %v161, %v200
  %v202 = vand.u32 %v71, 4294901760
  %v203 = vsub.f32 %v71, %v202
  %204 = vmatmul.f32.gmra.mxu0 %v203
  %v205 = vpop.f32.mrf.mxu0
  %v206 = vadd.f32 %v165, %v205
  %207 = vdwg.mxu0
  %208 = vmatpush.msra.mxu0 0.0
  %209 = vmatpush.msra.mxu0 0.0
  %210 = vmatpush.msra.mxu0 0.0
  %211 = vmatpush.msra.mxu0 0.0
  %212 = vmatpush.msra.mxu0 0.0
  %213 = vmatpush.msra.mxu0 0.0
  %214 = vmatpush.msra.mxu0 0.0
  %215 = vmatpush.msra.mxu0 0.0
  %216 = vmatpush.msra.mxu0 0.0
  %217 = vmatpush.msra.mxu0 0.0
  %218 = vmatpush.msra.mxu0 0.0
  %219 = vmatpush.msra.mxu0 0.0
  %220 = vmatpush.msra.mxu0 0.0
  %221 = vmatpush.msra.mxu0 0.0
  %v222 = vand.u32 %v58, 4294901760
  %223 = vmatpush.msra.mxu0 %v222
  %v224 = vand.u32 %v56, 4294901760
  %225 = vmatpush.msra.mxu0 %v224
  %v226 = vand.u32 %v62, 4294901760
  %v227 = vsub.f32 %v62, %v226
  %v228 = vand.u32 %v227, 4294901760
  %229 = vmatmul.f32.gmra.mxu0 %v228
  %v230 = vpop.f32.mrf.mxu0
  %v231 = vadd.f32 %v191, %v230
  %v232 = vand.u32 %v65, 4294901760
  %v233 = vsub.f32 %v65, %v232
  %v234 = vand.u32 %v233, 4294901760
  %235 = vmatmul.f32.gmra.mxu0 %v234
  %v236 = vpop.f32.mrf.mxu0
  %v237 = vadd.f32 %v196, %v236
  %v238 = vand.u32 %v68, 4294901760
  %v239 = vsub.f32 %v68, %v238
  %v240 = vand.u32 %v239, 4294901760
  %241 = vmatmul.f32.gmra.mxu0 %v240
  %v242 = vpop.f32.mrf.mxu0
  %v243 = vadd.f32 %v201, %v242
  %v244 = vand.u32 %v71, 4294901760
  %v245 = vsub.f32 %v71, %v244
  %v246 = vand.u32 %v245, 4294901760
  %247 = vmatmul.f32.gmra.mxu0 %v246
  %v248 = vpop.f32.mrf.mxu0
  %v249 = vadd.f32 %v206, %v248
  %250 = vdwg.mxu0
  %251 = vmatpush.msra.mxu0 0.0
  %252 = vmatpush.msra.mxu0 0.0
  %253 = vmatpush.msra.mxu0 0.0
  %254 = vmatpush.msra.mxu0 0.0
  %255 = vmatpush.msra.mxu0 0.0
  %256 = vmatpush.msra.mxu0 0.0
  %257 = vmatpush.msra.mxu0 0.0
  %258 = vmatpush.msra.mxu0 0.0
  %259 = vmatpush.msra.mxu0 0.0
  %260 = vmatpush.msra.mxu0 0.0
  %261 = vmatpush.msra.mxu0 0.0
  %262 = vmatpush.msra.mxu0 0.0
  %263 = vmatpush.msra.mxu0 0.0
  %264 = vmatpush.msra.mxu0 0.0
  %v265 = vand.u32 %v58, 4294901760
  %v266 = vsub.f32 %v58, %v265
  %v267 = vand.u32 %v266, 4294901760
  %268 = vmatpush.msra.mxu0 %v267
  %v269 = vand.u32 %v56, 4294901760
  %v270 = vsub.f32 %v56, %v269
  %v271 = vand.u32 %v270, 4294901760
  %272 = vmatpush.msra.mxu0 %v271
  %v273 = vand.u32 %v62, 4294901760
  %274 = vmatmul.f32.gmra.mxu0 %v273
  %v275 = vpop.f32.mrf.mxu0
  %v276 = vadd.f32 %v231, %v275
  %v277 = vand.u32 %v65, 4294901760
  %278 = vmatmul.f32.gmra.mxu0 %v277
  %v279 = vpop.f32.mrf.mxu0
  %v280 = vadd.f32 %v237, %v279
  %v281 = vand.u32 %v68, 4294901760
  %282 = vmatmul.f32.gmra.mxu0 %v281
  %v283 = vpop.f32.mrf.mxu0
  %v284 = vadd.f32 %v243, %v283
  %v285 = vand.u32 %v71, 4294901760
  %286 = vmatmul.f32.gmra.mxu0 %v285
  %v287 = vpop.f32.mrf.mxu0
  %v288 = vadd.f32 %v249, %v287
  %289 = vdwg.mxu0
  %290 = vmatpush.msra.mxu0 0.0
  %291 = vmatpush.msra.mxu0 0.0
  %292 = vmatpush.msra.mxu0 0.0
  %293 = vmatpush.msra.mxu0 0.0
  %294 = vmatpush.msra.mxu0 0.0
  %295 = vmatpush.msra.mxu0 0.0
  %296 = vmatpush.msra.mxu0 0.0
  %297 = vmatpush.msra.mxu0 0.0
  %298 = vmatpush.msra.mxu0 0.0
  %299 = vmatpush.msra.mxu0 0.0
  %300 = vmatpush.msra.mxu0 0.0
  %301 = vmatpush.msra.mxu0 0.0
  %302 = vmatpush.msra.mxu0 0.0
  %303 = vmatpush.msra.mxu0 0.0
  %v304 = vand.u32 %v58, 4294901760
  %305 = vmatpush.msra.mxu0 %v304
  %v306 = vand.u32 %v56, 4294901760
  %307 = vmatpush.msra.mxu0 %v306
  %v308 = vand.u32 %v62, 4294901760
  %309 = vmatmul.f32.gmra.mxu0 %v308
  %v310 = vpop.f32.mrf.mxu0
  %v311 = vadd.f32 %v276, %v310
  %v312 = vand.u32 %v65, 4294901760
  %313 = vmatmul.f32.gmra.mxu0 %v312
  %v314 = vpop.f32.mrf.mxu0
  %v315 = vadd.f32 %v280, %v314
  %v316 = vand.u32 %v68, 4294901760
  %317 = vmatmul.f32.gmra.mxu0 %v316
  %v318 = vpop.f32.mrf.mxu0
  %v319 = vadd.f32 %v284, %v318
  %v320 = vand.u32 %v71, 4294901760
  %321 = vmatmul.f32.gmra.mxu0 %v320
  %v322 = vpop.f32.mrf.mxu0
  %v323 = vadd.f32 %v288, %v322
  %324 = vdwg.mxu0
  %325 = vmatpush.msra.mxu0 0.0
  %326 = vmatpush.msra.mxu0 0.0
  %327 = vmatpush.msra.mxu0 0.0
  %328 = vmatpush.msra.mxu0 0.0
  %329 = vmatpush.msra.mxu0 0.0
  %330 = vmatpush.msra.mxu0 0.0
  %331 = vmatpush.msra.mxu0 0.0
  %332 = vmatpush.msra.mxu0 0.0
  %333 = vmatpush.msra.mxu0 0.0
  %334 = vmatpush.msra.mxu0 0.0
  %335 = vmatpush.msra.mxu0 0.0
  %336 = vmatpush.msra.mxu0 0.0
  %337 = vmatpush.msra.mxu0 0.0
  %338 = vmatpush.msra.mxu0 0.0
  %v339 = vand.u32 %v59, 4294901760
  %340 = vmatpush.msra.mxu0 %v339
  %v341 = vand.u32 %v57, 4294901760
  %342 = vmatpush.msra.mxu0 %v341
  %v343 = vand.u32 %v62, 4294901760
  %v344 = vsub.f32 %v62, %v343
  %v345 = vand.u32 %v344, 4294901760
  %v346 = vsub.f32 %v344, %v345
  %v347 = vand.u32 %v346, 4294901760
  %348 = vmatmul.f32.gmra.mxu0 %v347
  %v349 = vpop.f32.mrf.mxu0
  %v350 = vadd.f32 0.0, %v349
  %v351 = vand.u32 %v65, 4294901760
  %v352 = vsub.f32 %v65, %v351
  %v353 = vand.u32 %v352, 4294901760
  %v354 = vsub.f32 %v352, %v353
  %v355 = vand.u32 %v354, 4294901760
  %356 = vmatmul.f32.gmra.mxu0 %v355
  %v357 = vpop.f32.mrf.mxu0
  %v358 = vadd.f32 0.0, %v357
  %v359 = vand.u32 %v68, 4294901760
  %v360 = vsub.f32 %v68, %v359
  %v361 = vand.u32 %v360, 4294901760
  %v362 = vsub.f32 %v360, %v361
  %v363 = vand.u32 %v362, 4294901760
  %364 = vmatmul.f32.gmra.mxu0 %v363
  %v365 = vpop.f32.mrf.mxu0
  %v366 = vadd.f32 0.0, %v365
  %v367 = vand.u32 %v71, 4294901760
  %v368 = vsub.f32 %v71, %v367
  %v369 = vand.u32 %v368, 4294901760
  %v370 = vsub.f32 %v368, %v369
  %v371 = vand.u32 %v370, 4294901760
  %372 = vmatmul.f32.gmra.mxu0 %v371
  %v373 = vpop.f32.mrf.mxu0
  %v374 = vadd.f32 0.0, %v373
  %375 = vdwg.mxu0
  %376 = vmatpush.msra.mxu0 0.0
  %377 = vmatpush.msra.mxu0 0.0
  %378 = vmatpush.msra.mxu0 0.0
  %379 = vmatpush.msra.mxu0 0.0
  %380 = vmatpush.msra.mxu0 0.0
  %381 = vmatpush.msra.mxu0 0.0
  %382 = vmatpush.msra.mxu0 0.0
  %383 = vmatpush.msra.mxu0 0.0
  %384 = vmatpush.msra.mxu0 0.0
  %385 = vmatpush.msra.mxu0 0.0
  %386 = vmatpush.msra.mxu0 0.0
  %387 = vmatpush.msra.mxu0 0.0
  %388 = vmatpush.msra.mxu0 0.0
  %389 = vmatpush.msra.mxu0 0.0
  %v390 = vand.u32 %v59, 4294901760
  %v391 = vsub.f32 %v59, %v390
  %v392 = vand.u32 %v391, 4294901760
  %v393 = vsub.f32 %v391, %v392
  %v394 = vand.u32 %v393, 4294901760
  %395 = vmatpush.msra.mxu0 %v394
  %v396 = vand.u32 %v57, 4294901760
  %v397 = vsub.f32 %v57, %v396
  %v398 = vand.u32 %v397, 4294901760
  %v399 = vsub.f32 %v397, %v398
  %v400 = vand.u32 %v399, 4294901760
  %401 = vmatpush.msra.mxu0 %v400
  %v402 = vand.u32 %v62, 4294901760
  %403 = vmatmul.f32.gmra.mxu0 %v402
  %v404 = vpop.f32.mrf.mxu0
  %v405 = vadd.f32 %v350, %v404
  %v406 = vand.u32 %v65, 4294901760
  %407 = vmatmul.f32.gmra.mxu0 %v406
  %v408 = vpop.f32.mrf.mxu0
  %v409 = vadd.f32 %v358, %v408
  %v410 = vand.u32 %v68, 4294901760
  %411 = vmatmul.f32.gmra.mxu0 %v410
  %v412 = vpop.f32.mrf.mxu0
  %v413 = vadd.f32 %v366, %v412
  %v414 = vand.u32 %v71, 4294901760
  %415 = vmatmul.f32.gmra.mxu0 %v414
  %v416 = vpop.f32.mrf.mxu0
  %v417 = vadd.f32 %v374, %v416
  %418 = vdwg.mxu0
  %419 = vmatpush.msra.mxu0 0.0
  %420 = vmatpush.msra.mxu0 0.0
  %421 = vmatpush.msra.mxu0 0.0
  %422 = vmatpush.msra.mxu0 0.0
  %423 = vmatpush.msra.mxu0 0.0
  %424 = vmatpush.msra.mxu0 0.0
  %425 = vmatpush.msra.mxu0 0.0
  %426 = vmatpush.msra.mxu0 0.0
  %427 = vmatpush.msra.mxu0 0.0
  %428 = vmatpush.msra.mxu0 0.0
  %429 = vmatpush.msra.mxu0 0.0
  %430 = vmatpush.msra.mxu0 0.0
  %431 = vmatpush.msra.mxu0 0.0
  %432 = vmatpush.msra.mxu0 0.0
  %v433 = vand.u32 %v59, 4294901760
  %v434 = vsub.f32 %v59, %v433
  %435 = vmatpush.msra.mxu0 %v434
  %v436 = vand.u32 %v57, 4294901760
  %v437 = vsub.f32 %v57, %v436
  %438 = vmatpush.msra.mxu0 %v437
  %v439 = vand.u32 %v62, 4294901760
  %v440 = vsub.f32 %v62, %v439
  %441 = vmatmul.f32.gmra.mxu0 %v440
  %v442 = vpop.f32.mrf.mxu0
  %v443 = vadd.f32 %v405, %v442
  %v444 = vand.u32 %v65, 4294901760
  %v445 = vsub.f32 %v65, %v444
  %446 = vmatmul.f32.gmra.mxu0 %v445
  %v447 = vpop.f32.mrf.mxu0
  %v448 = vadd.f32 %v409, %v447
  %v449 = vand.u32 %v68, 4294901760
  %v450 = vsub.f32 %v68, %v449
  %451 = vmatmul.f32.gmra.mxu0 %v450
  %v452 = vpop.f32.mrf.mxu0
  %v453 = vadd.f32 %v413, %v452
  %v454 = vand.u32 %v71, 4294901760
  %v455 = vsub.f32 %v71, %v454
  %456 = vmatmul.f32.gmra.mxu0 %v455
  %v457 = vpop.f32.mrf.mxu0
  %v458 = vadd.f32 %v417, %v457
  %459 = vdwg.mxu0
  %460 = vmatpush.msra.mxu0 0.0
  %461 = vmatpush.msra.mxu0 0.0
  %462 = vmatpush.msra.mxu0 0.0
  %463 = vmatpush.msra.mxu0 0.0
  %464 = vmatpush.msra.mxu0 0.0
  %465 = vmatpush.msra.mxu0 0.0
  %466 = vmatpush.msra.mxu0 0.0
  %467 = vmatpush.msra.mxu0 0.0
  %468 = vmatpush.msra.mxu0 0.0
  %469 = vmatpush.msra.mxu0 0.0
  %470 = vmatpush.msra.mxu0 0.0
  %471 = vmatpush.msra.mxu0 0.0
  %472 = vmatpush.msra.mxu0 0.0
  %473 = vmatpush.msra.mxu0 0.0
  %v474 = vand.u32 %v59, 4294901760
  %475 = vmatpush.msra.mxu0 %v474
  %v476 = vand.u32 %v57, 4294901760
  %477 = vmatpush.msra.mxu0 %v476
  %v478 = vand.u32 %v62, 4294901760
  %v479 = vsub.f32 %v62, %v478
  %v480 = vand.u32 %v479, 4294901760
  %481 = vmatmul.f32.gmra.mxu0 %v480
  %v482 = vpop.f32.mrf.mxu0
  %v483 = vadd.f32 %v443, %v482
  %v484 = vand.u32 %v65, 4294901760
  %v485 = vsub.f32 %v65, %v484
  %v486 = vand.u32 %v485, 4294901760
  %487 = vmatmul.f32.gmra.mxu0 %v486
  %v488 = vpop.f32.mrf.mxu0
  %v489 = vadd.f32 %v448, %v488
  %v490 = vand.u32 %v68, 4294901760
  %v491 = vsub.f32 %v68, %v490
  %v492 = vand.u32 %v491, 4294901760
  %493 = vmatmul.f32.gmra.mxu0 %v492
  %v494 = vpop.f32.mrf.mxu0
  %v495 = vadd.f32 %v453, %v494
  %v496 = vand.u32 %v71, 4294901760
  %v497 = vsub.f32 %v71, %v496
  %v498 = vand.u32 %v497, 4294901760
  %499 = vmatmul.f32.gmra.mxu0 %v498
  %v500 = vpop.f32.mrf.mxu0
  %v501 = vadd.f32 %v458, %v500
  %502 = vdwg.mxu0
  %503 = vmatpush.msra.mxu0 0.0
  %504 = vmatpush.msra.mxu0 0.0
  %505 = vmatpush.msra.mxu0 0.0
  %506 = vmatpush.msra.mxu0 0.0
  %507 = vmatpush.msra.mxu0 0.0
  %508 = vmatpush.msra.mxu0 0.0
  %509 = vmatpush.msra.mxu0 0.0
  %510 = vmatpush.msra.mxu0 0.0
  %511 = vmatpush.msra.mxu0 0.0
  %512 = vmatpush.msra.mxu0 0.0
  %513 = vmatpush.msra.mxu0 0.0
  %514 = vmatpush.msra.mxu0 0.0
  %515 = vmatpush.msra.mxu0 0.0
  %516 = vmatpush.msra.mxu0 0.0
  %v517 = vand.u32 %v59, 4294901760
  %v518 = vsub.f32 %v59, %v517
  %v519 = vand.u32 %v518, 4294901760
  %520 = vmatpush.msra.mxu0 %v519
  %v521 = vand.u32 %v57, 4294901760
  %v522 = vsub.f32 %v57, %v521
  %v523 = vand.u32 %v522, 4294901760
  %524 = vmatpush.msra.mxu0 %v523
  %v525 = vand.u32 %v62, 4294901760
  %526 = vmatmul.f32.gmra.mxu0 %v525
  %v527 = vpop.f32.mrf.mxu0
  %v528 = vadd.f32 %v483, %v527
  %v529 = vand.u32 %v65, 4294901760
  %530 = vmatmul.f32.gmra.mxu0 %v529
  %v531 = vpop.f32.mrf.mxu0
  %v532 = vadd.f32 %v489, %v531
  %v533 = vand.u32 %v68, 4294901760
  %534 = vmatmul.f32.gmra.mxu0 %v533
  %v535 = vpop.f32.mrf.mxu0
  %v536 = vadd.f32 %v495, %v535
  %v537 = vand.u32 %v71, 4294901760
  %538 = vmatmul.f32.gmra.mxu0 %v537
  %v539 = vpop.f32.mrf.mxu0
  %v540 = vadd.f32 %v501, %v539
  %541 = vdwg.mxu0
  %542 = vmatpush.msra.mxu0 0.0
  %543 = vmatpush.msra.mxu0 0.0
  %544 = vmatpush.msra.mxu0 0.0
  %545 = vmatpush.msra.mxu0 0.0
  %546 = vmatpush.msra.mxu0 0.0
  %547 = vmatpush.msra.mxu0 0.0
  %548 = vmatpush.msra.mxu0 0.0
  %549 = vmatpush.msra.mxu0 0.0
  %550 = vmatpush.msra.mxu0 0.0
  %551 = vmatpush.msra.mxu0 0.0
  %552 = vmatpush.msra.mxu0 0.0
  %553 = vmatpush.msra.mxu0 0.0
  %554 = vmatpush.msra.mxu0 0.0
  %555 = vmatpush.msra.mxu0 0.0
  %v556 = vand.u32 %v59, 4294901760
  %557 = vmatpush.msra.mxu0 %v556
  %v558 = vand.u32 %v57, 4294901760
  %559 = vmatpush.msra.mxu0 %v558
  %v560 = vand.u32 %v62, 4294901760
  %561 = vmatmul.f32.gmra.mxu0 %v560
  %v562 = vpop.f32.mrf.mxu0
  %v563 = vadd.f32 %v528, %v562
  %v564 = vand.u32 %v65, 4294901760
  %565 = vmatmul.f32.gmra.mxu0 %v564
  %v566 = vpop.f32.mrf.mxu0
  %v567 = vadd.f32 %v532, %v566
  %v568 = vand.u32 %v68, 4294901760
  %569 = vmatmul.f32.gmra.mxu0 %v568
  %v570 = vpop.f32.mrf.mxu0
  %v571 = vadd.f32 %v536, %v570
  %v572 = vand.u32 %v71, 4294901760
  %573 = vmatmul.f32.gmra.mxu0 %v572
  %v574 = vpop.f32.mrf.mxu0
  %v575 = vadd.f32 %v540, %v574
  %576 = vdwg.mxu0
  %v577 = vperm.slane %v23, 1
  %v578 = vperm.slane %v23, 5
  %v579 = vperm.slane %v577, 1
  %v580 = vperm.slane %v578, 1
  %vm581 = vcmp.eq.s32.totalorder %v579, %v34
  %vm582 = vcmp.eq.s32.totalorder %v580, %v34
  %vm583 = vcmp.eq.s32.totalorder %v579, %v35
  %vm584 = vcmp.eq.s32.totalorder %v580, %v35
  %v585 = vsel %vm581, 1, 0
  %v586 = vsel %vm582, 1, 0
  %v587 = vsel %vm583, 1, 0
  %v588 = vsel %vm584, 1, 0
  %v589 = vcvt.s32.f32 %v585
  %v590 = vcvt.s32.f32 %v586
  %v591 = vcvt.s32.f32 %v587
  %v592 = vcvt.s32.f32 %v588
  %593 = vmatpush.msra.mxu0 0.0
  %594 = vmatpush.msra.mxu0 0.0
  %595 = vmatpush.msra.mxu0 0.0
  %596 = vmatpush.msra.mxu0 0.0
  %597 = vmatpush.msra.mxu0 0.0
  %598 = vmatpush.msra.mxu0 0.0
  %599 = vmatpush.msra.mxu0 0.0
  %600 = vmatpush.msra.mxu0 0.0
  %601 = vmatpush.msra.mxu0 0.0
  %602 = vmatpush.msra.mxu0 0.0
  %603 = vmatpush.msra.mxu0 0.0
  %604 = vmatpush.msra.mxu0 0.0
  %605 = vmatpush.msra.mxu0 0.0
  %606 = vmatpush.msra.mxu0 0.0
  %v607 = vand.u32 %v591, 4294901760
  %608 = vmatpush.msra.mxu0 %v607
  %v609 = vand.u32 %v589, 4294901760
  %610 = vmatpush.msra.mxu0 %v609
  %v611 = vand.u32 %v62, 4294901760
  %v612 = vsub.f32 %v62, %v611
  %v613 = vand.u32 %v612, 4294901760
  %v614 = vsub.f32 %v612, %v613
  %v615 = vand.u32 %v614, 4294901760
  %616 = vmatmul.f32.gmra.mxu0 %v615
  %v617 = vpop.f32.mrf.mxu0
  %v618 = vadd.f32 0.0, %v617
  %v619 = vand.u32 %v65, 4294901760
  %v620 = vsub.f32 %v65, %v619
  %v621 = vand.u32 %v620, 4294901760
  %v622 = vsub.f32 %v620, %v621
  %v623 = vand.u32 %v622, 4294901760
  %624 = vmatmul.f32.gmra.mxu0 %v623
  %v625 = vpop.f32.mrf.mxu0
  %v626 = vadd.f32 0.0, %v625
  %v627 = vand.u32 %v68, 4294901760
  %v628 = vsub.f32 %v68, %v627
  %v629 = vand.u32 %v628, 4294901760
  %v630 = vsub.f32 %v628, %v629
  %v631 = vand.u32 %v630, 4294901760
  %632 = vmatmul.f32.gmra.mxu0 %v631
  %v633 = vpop.f32.mrf.mxu0
  %v634 = vadd.f32 0.0, %v633
  %v635 = vand.u32 %v71, 4294901760
  %v636 = vsub.f32 %v71, %v635
  %v637 = vand.u32 %v636, 4294901760
  %v638 = vsub.f32 %v636, %v637
  %v639 = vand.u32 %v638, 4294901760
  %640 = vmatmul.f32.gmra.mxu0 %v639
  %v641 = vpop.f32.mrf.mxu0
  %v642 = vadd.f32 0.0, %v641
  %643 = vdwg.mxu0
  %644 = vmatpush.msra.mxu0 0.0
  %645 = vmatpush.msra.mxu0 0.0
  %646 = vmatpush.msra.mxu0 0.0
  %647 = vmatpush.msra.mxu0 0.0
  %648 = vmatpush.msra.mxu0 0.0
  %649 = vmatpush.msra.mxu0 0.0
  %650 = vmatpush.msra.mxu0 0.0
  %651 = vmatpush.msra.mxu0 0.0
  %652 = vmatpush.msra.mxu0 0.0
  %653 = vmatpush.msra.mxu0 0.0
  %654 = vmatpush.msra.mxu0 0.0
  %655 = vmatpush.msra.mxu0 0.0
  %656 = vmatpush.msra.mxu0 0.0
  %657 = vmatpush.msra.mxu0 0.0
  %v658 = vand.u32 %v591, 4294901760
  %v659 = vsub.f32 %v591, %v658
  %v660 = vand.u32 %v659, 4294901760
  %v661 = vsub.f32 %v659, %v660
  %v662 = vand.u32 %v661, 4294901760
  %663 = vmatpush.msra.mxu0 %v662
  %v664 = vand.u32 %v589, 4294901760
  %v665 = vsub.f32 %v589, %v664
  %v666 = vand.u32 %v665, 4294901760
  %v667 = vsub.f32 %v665, %v666
  %v668 = vand.u32 %v667, 4294901760
  %669 = vmatpush.msra.mxu0 %v668
  %v670 = vand.u32 %v62, 4294901760
  %671 = vmatmul.f32.gmra.mxu0 %v670
  %v672 = vpop.f32.mrf.mxu0
  %v673 = vadd.f32 %v618, %v672
  %v674 = vand.u32 %v65, 4294901760
  %675 = vmatmul.f32.gmra.mxu0 %v674
  %v676 = vpop.f32.mrf.mxu0
  %v677 = vadd.f32 %v626, %v676
  %v678 = vand.u32 %v68, 4294901760
  %679 = vmatmul.f32.gmra.mxu0 %v678
  %v680 = vpop.f32.mrf.mxu0
  %v681 = vadd.f32 %v634, %v680
  %v682 = vand.u32 %v71, 4294901760
  %683 = vmatmul.f32.gmra.mxu0 %v682
  %v684 = vpop.f32.mrf.mxu0
  %v685 = vadd.f32 %v642, %v684
  %686 = vdwg.mxu0
  %687 = vmatpush.msra.mxu0 0.0
  %688 = vmatpush.msra.mxu0 0.0
  %689 = vmatpush.msra.mxu0 0.0
  %690 = vmatpush.msra.mxu0 0.0
  %691 = vmatpush.msra.mxu0 0.0
  %692 = vmatpush.msra.mxu0 0.0
  %693 = vmatpush.msra.mxu0 0.0
  %694 = vmatpush.msra.mxu0 0.0
  %695 = vmatpush.msra.mxu0 0.0
  %696 = vmatpush.msra.mxu0 0.0
  %697 = vmatpush.msra.mxu0 0.0
  %698 = vmatpush.msra.mxu0 0.0
  %699 = vmatpush.msra.mxu0 0.0
  %700 = vmatpush.msra.mxu0 0.0
  %v701 = vand.u32 %v591, 4294901760
  %v702 = vsub.f32 %v591, %v701
  %703 = vmatpush.msra.mxu0 %v702
  %v704 = vand.u32 %v589, 4294901760
  %v705 = vsub.f32 %v589, %v704
  %706 = vmatpush.msra.mxu0 %v705
  %v707 = vand.u32 %v62, 4294901760
  %v708 = vsub.f32 %v62, %v707
  %709 = vmatmul.f32.gmra.mxu0 %v708
  %v710 = vpop.f32.mrf.mxu0
  %v711 = vadd.f32 %v673, %v710
  %v712 = vand.u32 %v65, 4294901760
  %v713 = vsub.f32 %v65, %v712
  %714 = vmatmul.f32.gmra.mxu0 %v713
  %v715 = vpop.f32.mrf.mxu0
  %v716 = vadd.f32 %v677, %v715
  %v717 = vand.u32 %v68, 4294901760
  %v718 = vsub.f32 %v68, %v717
  %719 = vmatmul.f32.gmra.mxu0 %v718
  %v720 = vpop.f32.mrf.mxu0
  %v721 = vadd.f32 %v681, %v720
  %v722 = vand.u32 %v71, 4294901760
  %v723 = vsub.f32 %v71, %v722
  %724 = vmatmul.f32.gmra.mxu0 %v723
  %v725 = vpop.f32.mrf.mxu0
  %v726 = vadd.f32 %v685, %v725
  %727 = vdwg.mxu0
  %728 = vmatpush.msra.mxu0 0.0
  %729 = vmatpush.msra.mxu0 0.0
  %730 = vmatpush.msra.mxu0 0.0
  %731 = vmatpush.msra.mxu0 0.0
  %732 = vmatpush.msra.mxu0 0.0
  %733 = vmatpush.msra.mxu0 0.0
  %734 = vmatpush.msra.mxu0 0.0
  %735 = vmatpush.msra.mxu0 0.0
  %736 = vmatpush.msra.mxu0 0.0
  %737 = vmatpush.msra.mxu0 0.0
  %738 = vmatpush.msra.mxu0 0.0
  %739 = vmatpush.msra.mxu0 0.0
  %740 = vmatpush.msra.mxu0 0.0
  %741 = vmatpush.msra.mxu0 0.0
  %v742 = vand.u32 %v591, 4294901760
  %743 = vmatpush.msra.mxu0 %v742
  %v744 = vand.u32 %v589, 4294901760
  %745 = vmatpush.msra.mxu0 %v744
  %v746 = vand.u32 %v62, 4294901760
  %v747 = vsub.f32 %v62, %v746
  %v748 = vand.u32 %v747, 4294901760
  %749 = vmatmul.f32.gmra.mxu0 %v748
  %v750 = vpop.f32.mrf.mxu0
  %v751 = vadd.f32 %v711, %v750
  %v752 = vand.u32 %v65, 4294901760
  %v753 = vsub.f32 %v65, %v752
  %v754 = vand.u32 %v753, 4294901760
  %755 = vmatmul.f32.gmra.mxu0 %v754
  %v756 = vpop.f32.mrf.mxu0
  %v757 = vadd.f32 %v716, %v756
  %v758 = vand.u32 %v68, 4294901760
  %v759 = vsub.f32 %v68, %v758
  %v760 = vand.u32 %v759, 4294901760
  %761 = vmatmul.f32.gmra.mxu0 %v760
  %v762 = vpop.f32.mrf.mxu0
  %v763 = vadd.f32 %v721, %v762
  %v764 = vand.u32 %v71, 4294901760
  %v765 = vsub.f32 %v71, %v764
  %v766 = vand.u32 %v765, 4294901760
  %767 = vmatmul.f32.gmra.mxu0 %v766
  %v768 = vpop.f32.mrf.mxu0
  %v769 = vadd.f32 %v726, %v768
  %770 = vdwg.mxu0
  %771 = vmatpush.msra.mxu0 0.0
  %772 = vmatpush.msra.mxu0 0.0
  %773 = vmatpush.msra.mxu0 0.0
  %774 = vmatpush.msra.mxu0 0.0
  %775 = vmatpush.msra.mxu0 0.0
  %776 = vmatpush.msra.mxu0 0.0
  %777 = vmatpush.msra.mxu0 0.0
  %778 = vmatpush.msra.mxu0 0.0
  %779 = vmatpush.msra.mxu0 0.0
  %780 = vmatpush.msra.mxu0 0.0
  %781 = vmatpush.msra.mxu0 0.0
  %782 = vmatpush.msra.mxu0 0.0
  %783 = vmatpush.msra.mxu0 0.0
  %784 = vmatpush.msra.mxu0 0.0
  %v785 = vand.u32 %v591, 4294901760
  %v786 = vsub.f32 %v591, %v785
  %v787 = vand.u32 %v786, 4294901760
  %788 = vmatpush.msra.mxu0 %v787
  %v789 = vand.u32 %v589, 4294901760
  %v790 = vsub.f32 %v589, %v789
  %v791 = vand.u32 %v790, 4294901760
  %792 = vmatpush.msra.mxu0 %v791
  %v793 = vand.u32 %v62, 4294901760
  %794 = vmatmul.f32.gmra.mxu0 %v793
  %v795 = vpop.f32.mrf.mxu0
  %v796 = vadd.f32 %v751, %v795
  %v797 = vand.u32 %v65, 4294901760
  %798 = vmatmul.f32.gmra.mxu0 %v797
  %v799 = vpop.f32.mrf.mxu0
  %v800 = vadd.f32 %v757, %v799
  %v801 = vand.u32 %v68, 4294901760
  %802 = vmatmul.f32.gmra.mxu0 %v801
  %v803 = vpop.f32.mrf.mxu0
  %v804 = vadd.f32 %v763, %v803
  %v805 = vand.u32 %v71, 4294901760
  %806 = vmatmul.f32.gmra.mxu0 %v805
  %v807 = vpop.f32.mrf.mxu0
  %v808 = vadd.f32 %v769, %v807
  %809 = vdwg.mxu0
  %810 = vmatpush.msra.mxu0 0.0
  %811 = vmatpush.msra.mxu0 0.0
  %812 = vmatpush.msra.mxu0 0.0
  %813 = vmatpush.msra.mxu0 0.0
  %814 = vmatpush.msra.mxu0 0.0
  %815 = vmatpush.msra.mxu0 0.0
  %816 = vmatpush.msra.mxu0 0.0
  %817 = vmatpush.msra.mxu0 0.0
  %818 = vmatpush.msra.mxu0 0.0
  %819 = vmatpush.msra.mxu0 0.0
  %820 = vmatpush.msra.mxu0 0.0
  %821 = vmatpush.msra.mxu0 0.0
  %822 = vmatpush.msra.mxu0 0.0
  %823 = vmatpush.msra.mxu0 0.0
  %v824 = vand.u32 %v591, 4294901760
  %825 = vmatpush.msra.mxu0 %v824
  %v826 = vand.u32 %v589, 4294901760
  %827 = vmatpush.msra.mxu0 %v826
  %v828 = vand.u32 %v62, 4294901760
  %829 = vmatmul.f32.gmra.mxu0 %v828
  %v830 = vpop.f32.mrf.mxu0
  %v831 = vadd.f32 %v796, %v830
  %v832 = vand.u32 %v65, 4294901760
  %833 = vmatmul.f32.gmra.mxu0 %v832
  %v834 = vpop.f32.mrf.mxu0
  %v835 = vadd.f32 %v800, %v834
  %v836 = vand.u32 %v68, 4294901760
  %837 = vmatmul.f32.gmra.mxu0 %v836
  %v838 = vpop.f32.mrf.mxu0
  %v839 = vadd.f32 %v804, %v838
  %v840 = vand.u32 %v71, 4294901760
  %841 = vmatmul.f32.gmra.mxu0 %v840
  %v842 = vpop.f32.mrf.mxu0
  %v843 = vadd.f32 %v808, %v842
  %844 = vdwg.mxu0
  %845 = vmatpush.msra.mxu0 0.0
  %846 = vmatpush.msra.mxu0 0.0
  %847 = vmatpush.msra.mxu0 0.0
  %848 = vmatpush.msra.mxu0 0.0
  %849 = vmatpush.msra.mxu0 0.0
  %850 = vmatpush.msra.mxu0 0.0
  %851 = vmatpush.msra.mxu0 0.0
  %852 = vmatpush.msra.mxu0 0.0
  %853 = vmatpush.msra.mxu0 0.0
  %854 = vmatpush.msra.mxu0 0.0
  %855 = vmatpush.msra.mxu0 0.0
  %856 = vmatpush.msra.mxu0 0.0
  %857 = vmatpush.msra.mxu0 0.0
  %858 = vmatpush.msra.mxu0 0.0
  %v859 = vand.u32 %v592, 4294901760
  %860 = vmatpush.msra.mxu0 %v859
  %v861 = vand.u32 %v590, 4294901760
  %862 = vmatpush.msra.mxu0 %v861
  %v863 = vand.u32 %v62, 4294901760
  %v864 = vsub.f32 %v62, %v863
  %v865 = vand.u32 %v864, 4294901760
  %v866 = vsub.f32 %v864, %v865
  %v867 = vand.u32 %v866, 4294901760
  %868 = vmatmul.f32.gmra.mxu0 %v867
  %v869 = vpop.f32.mrf.mxu0
  %v870 = vadd.f32 0.0, %v869
  %v871 = vand.u32 %v65, 4294901760
  %v872 = vsub.f32 %v65, %v871
  %v873 = vand.u32 %v872, 4294901760
  %v874 = vsub.f32 %v872, %v873
  %v875 = vand.u32 %v874, 4294901760
  %876 = vmatmul.f32.gmra.mxu0 %v875
  %v877 = vpop.f32.mrf.mxu0
  %v878 = vadd.f32 0.0, %v877
  %v879 = vand.u32 %v68, 4294901760
  %v880 = vsub.f32 %v68, %v879
  %v881 = vand.u32 %v880, 4294901760
  %v882 = vsub.f32 %v880, %v881
  %v883 = vand.u32 %v882, 4294901760
  %884 = vmatmul.f32.gmra.mxu0 %v883
  %v885 = vpop.f32.mrf.mxu0
  %v886 = vadd.f32 0.0, %v885
  %v887 = vand.u32 %v71, 4294901760
  %v888 = vsub.f32 %v71, %v887
  %v889 = vand.u32 %v888, 4294901760
  %v890 = vsub.f32 %v888, %v889
  %v891 = vand.u32 %v890, 4294901760
  %892 = vmatmul.f32.gmra.mxu0 %v891
  %v893 = vpop.f32.mrf.mxu0
  %v894 = vadd.f32 0.0, %v893
  %895 = vdwg.mxu0
  %896 = vmatpush.msra.mxu0 0.0
  %897 = vmatpush.msra.mxu0 0.0
  %898 = vmatpush.msra.mxu0 0.0
  %899 = vmatpush.msra.mxu0 0.0
  %900 = vmatpush.msra.mxu0 0.0
  %901 = vmatpush.msra.mxu0 0.0
  %902 = vmatpush.msra.mxu0 0.0
  %903 = vmatpush.msra.mxu0 0.0
  %904 = vmatpush.msra.mxu0 0.0
  %905 = vmatpush.msra.mxu0 0.0
  %906 = vmatpush.msra.mxu0 0.0
  %907 = vmatpush.msra.mxu0 0.0
  %908 = vmatpush.msra.mxu0 0.0
  %909 = vmatpush.msra.mxu0 0.0
  %v910 = vand.u32 %v592, 4294901760
  %v911 = vsub.f32 %v592, %v910
  %v912 = vand.u32 %v911, 4294901760
  %v913 = vsub.f32 %v911, %v912
  %v914 = vand.u32 %v913, 4294901760
  %915 = vmatpush.msra.mxu0 %v914
  %v916 = vand.u32 %v590, 4294901760
  %v917 = vsub.f32 %v590, %v916
  %v918 = vand.u32 %v917, 4294901760
  %v919 = vsub.f32 %v917, %v918
  %v920 = vand.u32 %v919, 4294901760
  %921 = vmatpush.msra.mxu0 %v920
  %v922 = vand.u32 %v62, 4294901760
  %923 = vmatmul.f32.gmra.mxu0 %v922
  %v924 = vpop.f32.mrf.mxu0
  %v925 = vadd.f32 %v870, %v924
  %v926 = vand.u32 %v65, 4294901760
  %927 = vmatmul.f32.gmra.mxu0 %v926
  %v928 = vpop.f32.mrf.mxu0
  %v929 = vadd.f32 %v878, %v928
  %v930 = vand.u32 %v68, 4294901760
  %931 = vmatmul.f32.gmra.mxu0 %v930
  %v932 = vpop.f32.mrf.mxu0
  %v933 = vadd.f32 %v886, %v932
  %v934 = vand.u32 %v71, 4294901760
  %935 = vmatmul.f32.gmra.mxu0 %v934
  %v936 = vpop.f32.mrf.mxu0
  %v937 = vadd.f32 %v894, %v936
  %938 = vdwg.mxu0
  %939 = vmatpush.msra.mxu0 0.0
  %940 = vmatpush.msra.mxu0 0.0
  %941 = vmatpush.msra.mxu0 0.0
  %942 = vmatpush.msra.mxu0 0.0
  %943 = vmatpush.msra.mxu0 0.0
  %944 = vmatpush.msra.mxu0 0.0
  %945 = vmatpush.msra.mxu0 0.0
  %946 = vmatpush.msra.mxu0 0.0
  %947 = vmatpush.msra.mxu0 0.0
  %948 = vmatpush.msra.mxu0 0.0
  %949 = vmatpush.msra.mxu0 0.0
  %950 = vmatpush.msra.mxu0 0.0
  %951 = vmatpush.msra.mxu0 0.0
  %952 = vmatpush.msra.mxu0 0.0
  %v953 = vand.u32 %v592, 4294901760
  %v954 = vsub.f32 %v592, %v953
  %955 = vmatpush.msra.mxu0 %v954
  %v956 = vand.u32 %v590, 4294901760
  %v957 = vsub.f32 %v590, %v956
  %958 = vmatpush.msra.mxu0 %v957
  %v959 = vand.u32 %v62, 4294901760
  %v960 = vsub.f32 %v62, %v959
  %961 = vmatmul.f32.gmra.mxu0 %v960
  %v962 = vpop.f32.mrf.mxu0
  %v963 = vadd.f32 %v925, %v962
  %v964 = vand.u32 %v65, 4294901760
  %v965 = vsub.f32 %v65, %v964
  %966 = vmatmul.f32.gmra.mxu0 %v965
  %v967 = vpop.f32.mrf.mxu0
  %v968 = vadd.f32 %v929, %v967
  %v969 = vand.u32 %v68, 4294901760
  %v970 = vsub.f32 %v68, %v969
  %971 = vmatmul.f32.gmra.mxu0 %v970
  %v972 = vpop.f32.mrf.mxu0
  %v973 = vadd.f32 %v933, %v972
  %v974 = vand.u32 %v71, 4294901760
  %v975 = vsub.f32 %v71, %v974
  %976 = vmatmul.f32.gmra.mxu0 %v975
  %v977 = vpop.f32.mrf.mxu0
  %v978 = vadd.f32 %v937, %v977
  %979 = vdwg.mxu0
  %980 = vmatpush.msra.mxu0 0.0
  %981 = vmatpush.msra.mxu0 0.0
  %982 = vmatpush.msra.mxu0 0.0
  %983 = vmatpush.msra.mxu0 0.0
  %984 = vmatpush.msra.mxu0 0.0
  %985 = vmatpush.msra.mxu0 0.0
  %986 = vmatpush.msra.mxu0 0.0
  %987 = vmatpush.msra.mxu0 0.0
  %988 = vmatpush.msra.mxu0 0.0
  %989 = vmatpush.msra.mxu0 0.0
  %990 = vmatpush.msra.mxu0 0.0
  %991 = vmatpush.msra.mxu0 0.0
  %992 = vmatpush.msra.mxu0 0.0
  %993 = vmatpush.msra.mxu0 0.0
  %v994 = vand.u32 %v592, 4294901760
  %995 = vmatpush.msra.mxu0 %v994
  %v996 = vand.u32 %v590, 4294901760
  %997 = vmatpush.msra.mxu0 %v996
  %v998 = vand.u32 %v62, 4294901760
  %v999 = vsub.f32 %v62, %v998
  %v1000 = vand.u32 %v999, 4294901760
  %1001 = vmatmul.f32.gmra.mxu0 %v1000
  %v1002 = vpop.f32.mrf.mxu0
  %v1003 = vadd.f32 %v963, %v1002
  %v1004 = vand.u32 %v65, 4294901760
  %v1005 = vsub.f32 %v65, %v1004
  %v1006 = vand.u32 %v1005, 4294901760
  %1007 = vmatmul.f32.gmra.mxu0 %v1006
  %v1008 = vpop.f32.mrf.mxu0
  %v1009 = vadd.f32 %v968, %v1008
  %v1010 = vand.u32 %v68, 4294901760
  %v1011 = vsub.f32 %v68, %v1010
  %v1012 = vand.u32 %v1011, 4294901760
  %1013 = vmatmul.f32.gmra.mxu0 %v1012
  %v1014 = vpop.f32.mrf.mxu0
  %v1015 = vadd.f32 %v973, %v1014
  %v1016 = vand.u32 %v71, 4294901760
  %v1017 = vsub.f32 %v71, %v1016
  %v1018 = vand.u32 %v1017, 4294901760
  %1019 = vmatmul.f32.gmra.mxu0 %v1018
  %v1020 = vpop.f32.mrf.mxu0
  %v1021 = vadd.f32 %v978, %v1020
  %1022 = vdwg.mxu0
  %1023 = vmatpush.msra.mxu0 0.0
  %1024 = vmatpush.msra.mxu0 0.0
  %1025 = vmatpush.msra.mxu0 0.0
  %1026 = vmatpush.msra.mxu0 0.0
  %1027 = vmatpush.msra.mxu0 0.0
  %1028 = vmatpush.msra.mxu0 0.0
  %1029 = vmatpush.msra.mxu0 0.0
  %1030 = vmatpush.msra.mxu0 0.0
  %1031 = vmatpush.msra.mxu0 0.0
  %1032 = vmatpush.msra.mxu0 0.0
  %1033 = vmatpush.msra.mxu0 0.0
  %1034 = vmatpush.msra.mxu0 0.0
  %1035 = vmatpush.msra.mxu0 0.0
  %1036 = vmatpush.msra.mxu0 0.0
  %v1037 = vand.u32 %v592, 4294901760
  %v1038 = vsub.f32 %v592, %v1037
  %v1039 = vand.u32 %v1038, 4294901760
  %1040 = vmatpush.msra.mxu0 %v1039
  %v1041 = vand.u32 %v590, 4294901760
  %v1042 = vsub.f32 %v590, %v1041
  %v1043 = vand.u32 %v1042, 4294901760
  %1044 = vmatpush.msra.mxu0 %v1043
  %v1045 = vand.u32 %v62, 4294901760
  %1046 = vmatmul.f32.gmra.mxu0 %v1045
  %v1047 = vpop.f32.mrf.mxu0
  %v1048 = vadd.f32 %v1003, %v1047
  %v1049 = vand.u32 %v65, 4294901760
  %1050 = vmatmul.f32.gmra.mxu0 %v1049
  %v1051 = vpop.f32.mrf.mxu0
  %v1052 = vadd.f32 %v1009, %v1051
  %v1053 = vand.u32 %v68, 4294901760
  %1054 = vmatmul.f32.gmra.mxu0 %v1053
  %v1055 = vpop.f32.mrf.mxu0
  %v1056 = vadd.f32 %v1015, %v1055
  %v1057 = vand.u32 %v71, 4294901760
  %1058 = vmatmul.f32.gmra.mxu0 %v1057
  %v1059 = vpop.f32.mrf.mxu0
  %v1060 = vadd.f32 %v1021, %v1059
  %1061 = vdwg.mxu0
  %1062 = vmatpush.msra.mxu0 0.0
  %1063 = vmatpush.msra.mxu0 0.0
  %1064 = vmatpush.msra.mxu0 0.0
  %1065 = vmatpush.msra.mxu0 0.0
  %1066 = vmatpush.msra.mxu0 0.0
  %1067 = vmatpush.msra.mxu0 0.0
  %1068 = vmatpush.msra.mxu0 0.0
  %1069 = vmatpush.msra.mxu0 0.0
  %1070 = vmatpush.msra.mxu0 0.0
  %1071 = vmatpush.msra.mxu0 0.0
  %1072 = vmatpush.msra.mxu0 0.0
  %1073 = vmatpush.msra.mxu0 0.0
  %1074 = vmatpush.msra.mxu0 0.0
  %1075 = vmatpush.msra.mxu0 0.0
  %v1076 = vand.u32 %v592, 4294901760
  %1077 = vmatpush.msra.mxu0 %v1076
  %v1078 = vand.u32 %v590, 4294901760
  %1079 = vmatpush.msra.mxu0 %v1078
  %v1080 = vand.u32 %v62, 4294901760
  %1081 = vmatmul.f32.gmra.mxu0 %v1080
  %v1082 = vpop.f32.mrf.mxu0
  %v1083 = vadd.f32 %v1048, %v1082
  %v1084 = vand.u32 %v65, 4294901760
  %1085 = vmatmul.f32.gmra.mxu0 %v1084
  %v1086 = vpop.f32.mrf.mxu0
  %v1087 = vadd.f32 %v1052, %v1086
  %v1088 = vand.u32 %v68, 4294901760
  %1089 = vmatmul.f32.gmra.mxu0 %v1088
  %v1090 = vpop.f32.mrf.mxu0
  %v1091 = vadd.f32 %v1056, %v1090
  %v1092 = vand.u32 %v71, 4294901760
  %1093 = vmatmul.f32.gmra.mxu0 %v1092
  %v1094 = vpop.f32.mrf.mxu0
  %v1095 = vadd.f32 %v1060, %v1094
  %1096 = vdwg.mxu0
  %v1097 = vperm.slane %v23, 2
  %v1098 = vperm.slane %v23, 6
  %v1099 = vperm.slane %v1097, 2
  %v1100 = vperm.slane %v1098, 2
  %vm1101 = vcmp.eq.s32.totalorder %v1099, %v34
  %vm1102 = vcmp.eq.s32.totalorder %v1100, %v34
  %vm1103 = vcmp.eq.s32.totalorder %v1099, %v35
  %vm1104 = vcmp.eq.s32.totalorder %v1100, %v35
  %v1105 = vsel %vm1101, 1, 0
  %v1106 = vsel %vm1102, 1, 0
  %v1107 = vsel %vm1103, 1, 0
  %v1108 = vsel %vm1104, 1, 0
  %v1109 = vcvt.s32.f32 %v1105
  %v1110 = vcvt.s32.f32 %v1106
  %v1111 = vcvt.s32.f32 %v1107
  %v1112 = vcvt.s32.f32 %v1108
  %1113 = vmatpush.msra.mxu0 0.0
  %1114 = vmatpush.msra.mxu0 0.0
  %1115 = vmatpush.msra.mxu0 0.0
  %1116 = vmatpush.msra.mxu0 0.0
  %1117 = vmatpush.msra.mxu0 0.0
  %1118 = vmatpush.msra.mxu0 0.0
  %1119 = vmatpush.msra.mxu0 0.0
  %1120 = vmatpush.msra.mxu0 0.0
  %1121 = vmatpush.msra.mxu0 0.0
  %1122 = vmatpush.msra.mxu0 0.0
  %1123 = vmatpush.msra.mxu0 0.0
  %1124 = vmatpush.msra.mxu0 0.0
  %1125 = vmatpush.msra.mxu0 0.0
  %1126 = vmatpush.msra.mxu0 0.0
  %v1127 = vand.u32 %v1111, 4294901760
  %1128 = vmatpush.msra.mxu0 %v1127
  %v1129 = vand.u32 %v1109, 4294901760
  %1130 = vmatpush.msra.mxu0 %v1129
  %v1131 = vand.u32 %v62, 4294901760
  %v1132 = vsub.f32 %v62, %v1131
  %v1133 = vand.u32 %v1132, 4294901760
  %v1134 = vsub.f32 %v1132, %v1133
  %v1135 = vand.u32 %v1134, 4294901760
  %1136 = vmatmul.f32.gmra.mxu0 %v1135
  %v1137 = vpop.f32.mrf.mxu0
  %v1138 = vadd.f32 0.0, %v1137
  %v1139 = vand.u32 %v65, 4294901760
  %v1140 = vsub.f32 %v65, %v1139
  %v1141 = vand.u32 %v1140, 4294901760
  %v1142 = vsub.f32 %v1140, %v1141
  %v1143 = vand.u32 %v1142, 4294901760
  %1144 = vmatmul.f32.gmra.mxu0 %v1143
  %v1145 = vpop.f32.mrf.mxu0
  %v1146 = vadd.f32 0.0, %v1145
  %v1147 = vand.u32 %v68, 4294901760
  %v1148 = vsub.f32 %v68, %v1147
  %v1149 = vand.u32 %v1148, 4294901760
  %v1150 = vsub.f32 %v1148, %v1149
  %v1151 = vand.u32 %v1150, 4294901760
  %1152 = vmatmul.f32.gmra.mxu0 %v1151
  %v1153 = vpop.f32.mrf.mxu0
  %v1154 = vadd.f32 0.0, %v1153
  %v1155 = vand.u32 %v71, 4294901760
  %v1156 = vsub.f32 %v71, %v1155
  %v1157 = vand.u32 %v1156, 4294901760
  %v1158 = vsub.f32 %v1156, %v1157
  %v1159 = vand.u32 %v1158, 4294901760
  %1160 = vmatmul.f32.gmra.mxu0 %v1159
  %v1161 = vpop.f32.mrf.mxu0
  %v1162 = vadd.f32 0.0, %v1161
  %1163 = vdwg.mxu0
  %1164 = vmatpush.msra.mxu0 0.0
  %1165 = vmatpush.msra.mxu0 0.0
  %1166 = vmatpush.msra.mxu0 0.0
  %1167 = vmatpush.msra.mxu0 0.0
  %1168 = vmatpush.msra.mxu0 0.0
  %1169 = vmatpush.msra.mxu0 0.0
  %1170 = vmatpush.msra.mxu0 0.0
  %1171 = vmatpush.msra.mxu0 0.0
  %1172 = vmatpush.msra.mxu0 0.0
  %1173 = vmatpush.msra.mxu0 0.0
  %1174 = vmatpush.msra.mxu0 0.0
  %1175 = vmatpush.msra.mxu0 0.0
  %1176 = vmatpush.msra.mxu0 0.0
  %1177 = vmatpush.msra.mxu0 0.0
  %v1178 = vand.u32 %v1111, 4294901760
  %v1179 = vsub.f32 %v1111, %v1178
  %v1180 = vand.u32 %v1179, 4294901760
  %v1181 = vsub.f32 %v1179, %v1180
  %v1182 = vand.u32 %v1181, 4294901760
  %1183 = vmatpush.msra.mxu0 %v1182
  %v1184 = vand.u32 %v1109, 4294901760
  %v1185 = vsub.f32 %v1109, %v1184
  %v1186 = vand.u32 %v1185, 4294901760
  %v1187 = vsub.f32 %v1185, %v1186
  %v1188 = vand.u32 %v1187, 4294901760
  %1189 = vmatpush.msra.mxu0 %v1188
  %v1190 = vand.u32 %v62, 4294901760
  %1191 = vmatmul.f32.gmra.mxu0 %v1190
  %v1192 = vpop.f32.mrf.mxu0
  %v1193 = vadd.f32 %v1138, %v1192
  %v1194 = vand.u32 %v65, 4294901760
  %1195 = vmatmul.f32.gmra.mxu0 %v1194
  %v1196 = vpop.f32.mrf.mxu0
  %v1197 = vadd.f32 %v1146, %v1196
  %v1198 = vand.u32 %v68, 4294901760
  %1199 = vmatmul.f32.gmra.mxu0 %v1198
  %v1200 = vpop.f32.mrf.mxu0
  %v1201 = vadd.f32 %v1154, %v1200
  %v1202 = vand.u32 %v71, 4294901760
  %1203 = vmatmul.f32.gmra.mxu0 %v1202
  %v1204 = vpop.f32.mrf.mxu0
  %v1205 = vadd.f32 %v1162, %v1204
  %1206 = vdwg.mxu0
  %1207 = vmatpush.msra.mxu0 0.0
  %1208 = vmatpush.msra.mxu0 0.0
  %1209 = vmatpush.msra.mxu0 0.0
  %1210 = vmatpush.msra.mxu0 0.0
  %1211 = vmatpush.msra.mxu0 0.0
  %1212 = vmatpush.msra.mxu0 0.0
  %1213 = vmatpush.msra.mxu0 0.0
  %1214 = vmatpush.msra.mxu0 0.0
  %1215 = vmatpush.msra.mxu0 0.0
  %1216 = vmatpush.msra.mxu0 0.0
  %1217 = vmatpush.msra.mxu0 0.0
  %1218 = vmatpush.msra.mxu0 0.0
  %1219 = vmatpush.msra.mxu0 0.0
  %1220 = vmatpush.msra.mxu0 0.0
  %v1221 = vand.u32 %v1111, 4294901760
  %v1222 = vsub.f32 %v1111, %v1221
  %1223 = vmatpush.msra.mxu0 %v1222
  %v1224 = vand.u32 %v1109, 4294901760
  %v1225 = vsub.f32 %v1109, %v1224
  %1226 = vmatpush.msra.mxu0 %v1225
  %v1227 = vand.u32 %v62, 4294901760
  %v1228 = vsub.f32 %v62, %v1227
  %1229 = vmatmul.f32.gmra.mxu0 %v1228
  %v1230 = vpop.f32.mrf.mxu0
  %v1231 = vadd.f32 %v1193, %v1230
  %v1232 = vand.u32 %v65, 4294901760
  %v1233 = vsub.f32 %v65, %v1232
  %1234 = vmatmul.f32.gmra.mxu0 %v1233
  %v1235 = vpop.f32.mrf.mxu0
  %v1236 = vadd.f32 %v1197, %v1235
  %v1237 = vand.u32 %v68, 4294901760
  %v1238 = vsub.f32 %v68, %v1237
  %1239 = vmatmul.f32.gmra.mxu0 %v1238
  %v1240 = vpop.f32.mrf.mxu0
  %v1241 = vadd.f32 %v1201, %v1240
  %v1242 = vand.u32 %v71, 4294901760
  %v1243 = vsub.f32 %v71, %v1242
  %1244 = vmatmul.f32.gmra.mxu0 %v1243
  %v1245 = vpop.f32.mrf.mxu0
  %v1246 = vadd.f32 %v1205, %v1245
  %1247 = vdwg.mxu0
  %1248 = vmatpush.msra.mxu0 0.0
  %1249 = vmatpush.msra.mxu0 0.0
  %1250 = vmatpush.msra.mxu0 0.0
  %1251 = vmatpush.msra.mxu0 0.0
  %1252 = vmatpush.msra.mxu0 0.0
  %1253 = vmatpush.msra.mxu0 0.0
  %1254 = vmatpush.msra.mxu0 0.0
  %1255 = vmatpush.msra.mxu0 0.0
  %1256 = vmatpush.msra.mxu0 0.0
  %1257 = vmatpush.msra.mxu0 0.0
  %1258 = vmatpush.msra.mxu0 0.0
  %1259 = vmatpush.msra.mxu0 0.0
  %1260 = vmatpush.msra.mxu0 0.0
  %1261 = vmatpush.msra.mxu0 0.0
  %v1262 = vand.u32 %v1111, 4294901760
  %1263 = vmatpush.msra.mxu0 %v1262
  %v1264 = vand.u32 %v1109, 4294901760
  %1265 = vmatpush.msra.mxu0 %v1264
  %v1266 = vand.u32 %v62, 4294901760
  %v1267 = vsub.f32 %v62, %v1266
  %v1268 = vand.u32 %v1267, 4294901760
  %1269 = vmatmul.f32.gmra.mxu0 %v1268
  %v1270 = vpop.f32.mrf.mxu0
  %v1271 = vadd.f32 %v1231, %v1270
  %v1272 = vand.u32 %v65, 4294901760
  %v1273 = vsub.f32 %v65, %v1272
  %v1274 = vand.u32 %v1273, 4294901760
  %1275 = vmatmul.f32.gmra.mxu0 %v1274
  %v1276 = vpop.f32.mrf.mxu0
  %v1277 = vadd.f32 %v1236, %v1276
  %v1278 = vand.u32 %v68, 4294901760
  %v1279 = vsub.f32 %v68, %v1278
  %v1280 = vand.u32 %v1279, 4294901760
  %1281 = vmatmul.f32.gmra.mxu0 %v1280
  %v1282 = vpop.f32.mrf.mxu0
  %v1283 = vadd.f32 %v1241, %v1282
  %v1284 = vand.u32 %v71, 4294901760
  %v1285 = vsub.f32 %v71, %v1284
  %v1286 = vand.u32 %v1285, 4294901760
  %1287 = vmatmul.f32.gmra.mxu0 %v1286
  %v1288 = vpop.f32.mrf.mxu0
  %v1289 = vadd.f32 %v1246, %v1288
  %1290 = vdwg.mxu0
  %1291 = vmatpush.msra.mxu0 0.0
  %1292 = vmatpush.msra.mxu0 0.0
  %1293 = vmatpush.msra.mxu0 0.0
  %1294 = vmatpush.msra.mxu0 0.0
  %1295 = vmatpush.msra.mxu0 0.0
  %1296 = vmatpush.msra.mxu0 0.0
  %1297 = vmatpush.msra.mxu0 0.0
  %1298 = vmatpush.msra.mxu0 0.0
  %1299 = vmatpush.msra.mxu0 0.0
  %1300 = vmatpush.msra.mxu0 0.0
  %1301 = vmatpush.msra.mxu0 0.0
  %1302 = vmatpush.msra.mxu0 0.0
  %1303 = vmatpush.msra.mxu0 0.0
  %1304 = vmatpush.msra.mxu0 0.0
  %v1305 = vand.u32 %v1111, 4294901760
  %v1306 = vsub.f32 %v1111, %v1305
  %v1307 = vand.u32 %v1306, 4294901760
  %1308 = vmatpush.msra.mxu0 %v1307
  %v1309 = vand.u32 %v1109, 4294901760
  %v1310 = vsub.f32 %v1109, %v1309
  %v1311 = vand.u32 %v1310, 4294901760
  %1312 = vmatpush.msra.mxu0 %v1311
  %v1313 = vand.u32 %v62, 4294901760
  %1314 = vmatmul.f32.gmra.mxu0 %v1313
  %v1315 = vpop.f32.mrf.mxu0
  %v1316 = vadd.f32 %v1271, %v1315
  %v1317 = vand.u32 %v65, 4294901760
  %1318 = vmatmul.f32.gmra.mxu0 %v1317
  %v1319 = vpop.f32.mrf.mxu0
  %v1320 = vadd.f32 %v1277, %v1319
  %v1321 = vand.u32 %v68, 4294901760
  %1322 = vmatmul.f32.gmra.mxu0 %v1321
  %v1323 = vpop.f32.mrf.mxu0
  %v1324 = vadd.f32 %v1283, %v1323
  %v1325 = vand.u32 %v71, 4294901760
  %1326 = vmatmul.f32.gmra.mxu0 %v1325
  %v1327 = vpop.f32.mrf.mxu0
  %v1328 = vadd.f32 %v1289, %v1327
  %1329 = vdwg.mxu0
  %1330 = vmatpush.msra.mxu0 0.0
  %1331 = vmatpush.msra.mxu0 0.0
  %1332 = vmatpush.msra.mxu0 0.0
  %1333 = vmatpush.msra.mxu0 0.0
  %1334 = vmatpush.msra.mxu0 0.0
  %1335 = vmatpush.msra.mxu0 0.0
  %1336 = vmatpush.msra.mxu0 0.0
  %1337 = vmatpush.msra.mxu0 0.0
  %1338 = vmatpush.msra.mxu0 0.0
  %1339 = vmatpush.msra.mxu0 0.0
  %1340 = vmatpush.msra.mxu0 0.0
  %1341 = vmatpush.msra.mxu0 0.0
  %1342 = vmatpush.msra.mxu0 0.0
  %1343 = vmatpush.msra.mxu0 0.0
  %v1344 = vand.u32 %v1111, 4294901760
  %1345 = vmatpush.msra.mxu0 %v1344
  %v1346 = vand.u32 %v1109, 4294901760
  %1347 = vmatpush.msra.mxu0 %v1346
  %v1348 = vand.u32 %v62, 4294901760
  %1349 = vmatmul.f32.gmra.mxu0 %v1348
  %v1350 = vpop.f32.mrf.mxu0
  %v1351 = vadd.f32 %v1316, %v1350
  %v1352 = vand.u32 %v65, 4294901760
  %1353 = vmatmul.f32.gmra.mxu0 %v1352
  %v1354 = vpop.f32.mrf.mxu0
  %v1355 = vadd.f32 %v1320, %v1354
  %v1356 = vand.u32 %v68, 4294901760
  %1357 = vmatmul.f32.gmra.mxu0 %v1356
  %v1358 = vpop.f32.mrf.mxu0
  %v1359 = vadd.f32 %v1324, %v1358
  %v1360 = vand.u32 %v71, 4294901760
  %1361 = vmatmul.f32.gmra.mxu0 %v1360
  %v1362 = vpop.f32.mrf.mxu0
  %v1363 = vadd.f32 %v1328, %v1362
  %1364 = vdwg.mxu0
  %1365 = vmatpush.msra.mxu0 0.0
  %1366 = vmatpush.msra.mxu0 0.0
  %1367 = vmatpush.msra.mxu0 0.0
  %1368 = vmatpush.msra.mxu0 0.0
  %1369 = vmatpush.msra.mxu0 0.0
  %1370 = vmatpush.msra.mxu0 0.0
  %1371 = vmatpush.msra.mxu0 0.0
  %1372 = vmatpush.msra.mxu0 0.0
  %1373 = vmatpush.msra.mxu0 0.0
  %1374 = vmatpush.msra.mxu0 0.0
  %1375 = vmatpush.msra.mxu0 0.0
  %1376 = vmatpush.msra.mxu0 0.0
  %1377 = vmatpush.msra.mxu0 0.0
  %1378 = vmatpush.msra.mxu0 0.0
  %v1379 = vand.u32 %v1112, 4294901760
  %1380 = vmatpush.msra.mxu0 %v1379
  %v1381 = vand.u32 %v1110, 4294901760
  %1382 = vmatpush.msra.mxu0 %v1381
  %v1383 = vand.u32 %v62, 4294901760
  %v1384 = vsub.f32 %v62, %v1383
  %v1385 = vand.u32 %v1384, 4294901760
  %v1386 = vsub.f32 %v1384, %v1385
  %v1387 = vand.u32 %v1386, 4294901760
  %1388 = vmatmul.f32.gmra.mxu0 %v1387
  %v1389 = vpop.f32.mrf.mxu0
  %v1390 = vadd.f32 0.0, %v1389
  %v1391 = vand.u32 %v65, 4294901760
  %v1392 = vsub.f32 %v65, %v1391
  %v1393 = vand.u32 %v1392, 4294901760
  %v1394 = vsub.f32 %v1392, %v1393
  %v1395 = vand.u32 %v1394, 4294901760
  %1396 = vmatmul.f32.gmra.mxu0 %v1395
  %v1397 = vpop.f32.mrf.mxu0
  %v1398 = vadd.f32 0.0, %v1397
  %v1399 = vand.u32 %v68, 4294901760
  %v1400 = vsub.f32 %v68, %v1399
  %v1401 = vand.u32 %v1400, 4294901760
  %v1402 = vsub.f32 %v1400, %v1401
  %v1403 = vand.u32 %v1402, 4294901760
  %1404 = vmatmul.f32.gmra.mxu0 %v1403
  %v1405 = vpop.f32.mrf.mxu0
  %v1406 = vadd.f32 0.0, %v1405
  %v1407 = vand.u32 %v71, 4294901760
  %v1408 = vsub.f32 %v71, %v1407
  %v1409 = vand.u32 %v1408, 4294901760
  %v1410 = vsub.f32 %v1408, %v1409
  %v1411 = vand.u32 %v1410, 4294901760
  %1412 = vmatmul.f32.gmra.mxu0 %v1411
  %v1413 = vpop.f32.mrf.mxu0
  %v1414 = vadd.f32 0.0, %v1413
  %1415 = vdwg.mxu0
  %1416 = vmatpush.msra.mxu0 0.0
  %1417 = vmatpush.msra.mxu0 0.0
  %1418 = vmatpush.msra.mxu0 0.0
  %1419 = vmatpush.msra.mxu0 0.0
  %1420 = vmatpush.msra.mxu0 0.0
  %1421 = vmatpush.msra.mxu0 0.0
  %1422 = vmatpush.msra.mxu0 0.0
  %1423 = vmatpush.msra.mxu0 0.0
  %1424 = vmatpush.msra.mxu0 0.0
  %1425 = vmatpush.msra.mxu0 0.0
  %1426 = vmatpush.msra.mxu0 0.0
  %1427 = vmatpush.msra.mxu0 0.0
  %1428 = vmatpush.msra.mxu0 0.0
  %1429 = vmatpush.msra.mxu0 0.0
  %v1430 = vand.u32 %v1112, 4294901760
  %v1431 = vsub.f32 %v1112, %v1430
  %v1432 = vand.u32 %v1431, 4294901760
  %v1433 = vsub.f32 %v1431, %v1432
  %v1434 = vand.u32 %v1433, 4294901760
  %1435 = vmatpush.msra.mxu0 %v1434
  %v1436 = vand.u32 %v1110, 4294901760
  %v1437 = vsub.f32 %v1110, %v1436
  %v1438 = vand.u32 %v1437, 4294901760
  %v1439 = vsub.f32 %v1437, %v1438
  %v1440 = vand.u32 %v1439, 4294901760
  %1441 = vmatpush.msra.mxu0 %v1440
  %v1442 = vand.u32 %v62, 4294901760
  %1443 = vmatmul.f32.gmra.mxu0 %v1442
  %v1444 = vpop.f32.mrf.mxu0
  %v1445 = vadd.f32 %v1390, %v1444
  %v1446 = vand.u32 %v65, 4294901760
  %1447 = vmatmul.f32.gmra.mxu0 %v1446
  %v1448 = vpop.f32.mrf.mxu0
  %v1449 = vadd.f32 %v1398, %v1448
  %v1450 = vand.u32 %v68, 4294901760
  %1451 = vmatmul.f32.gmra.mxu0 %v1450
  %v1452 = vpop.f32.mrf.mxu0
  %v1453 = vadd.f32 %v1406, %v1452
  %v1454 = vand.u32 %v71, 4294901760
  %1455 = vmatmul.f32.gmra.mxu0 %v1454
  %v1456 = vpop.f32.mrf.mxu0
  %v1457 = vadd.f32 %v1414, %v1456
  %1458 = vdwg.mxu0
  %1459 = vmatpush.msra.mxu0 0.0
  %1460 = vmatpush.msra.mxu0 0.0
  %1461 = vmatpush.msra.mxu0 0.0
  %1462 = vmatpush.msra.mxu0 0.0
  %1463 = vmatpush.msra.mxu0 0.0
  %1464 = vmatpush.msra.mxu0 0.0
  %1465 = vmatpush.msra.mxu0 0.0
  %1466 = vmatpush.msra.mxu0 0.0
  %1467 = vmatpush.msra.mxu0 0.0
  %1468 = vmatpush.msra.mxu0 0.0
  %1469 = vmatpush.msra.mxu0 0.0
  %1470 = vmatpush.msra.mxu0 0.0
  %1471 = vmatpush.msra.mxu0 0.0
  %1472 = vmatpush.msra.mxu0 0.0
  %v1473 = vand.u32 %v1112, 4294901760
  %v1474 = vsub.f32 %v1112, %v1473
  %1475 = vmatpush.msra.mxu0 %v1474
  %v1476 = vand.u32 %v1110, 4294901760
  %v1477 = vsub.f32 %v1110, %v1476
  %1478 = vmatpush.msra.mxu0 %v1477
  %v1479 = vand.u32 %v62, 4294901760
  %v1480 = vsub.f32 %v62, %v1479
  %1481 = vmatmul.f32.gmra.mxu0 %v1480
  %v1482 = vpop.f32.mrf.mxu0
  %v1483 = vadd.f32 %v1445, %v1482
  %v1484 = vand.u32 %v65, 4294901760
  %v1485 = vsub.f32 %v65, %v1484
  %1486 = vmatmul.f32.gmra.mxu0 %v1485
  %v1487 = vpop.f32.mrf.mxu0
  %v1488 = vadd.f32 %v1449, %v1487
  %v1489 = vand.u32 %v68, 4294901760
  %v1490 = vsub.f32 %v68, %v1489
  %1491 = vmatmul.f32.gmra.mxu0 %v1490
  %v1492 = vpop.f32.mrf.mxu0
  %v1493 = vadd.f32 %v1453, %v1492
  %v1494 = vand.u32 %v71, 4294901760
  %v1495 = vsub.f32 %v71, %v1494
  %1496 = vmatmul.f32.gmra.mxu0 %v1495
  %v1497 = vpop.f32.mrf.mxu0
  %v1498 = vadd.f32 %v1457, %v1497
  %1499 = vdwg.mxu0
  %1500 = vmatpush.msra.mxu0 0.0
  %1501 = vmatpush.msra.mxu0 0.0
  %1502 = vmatpush.msra.mxu0 0.0
  %1503 = vmatpush.msra.mxu0 0.0
  %1504 = vmatpush.msra.mxu0 0.0
  %1505 = vmatpush.msra.mxu0 0.0
  %1506 = vmatpush.msra.mxu0 0.0
  %1507 = vmatpush.msra.mxu0 0.0
  %1508 = vmatpush.msra.mxu0 0.0
  %1509 = vmatpush.msra.mxu0 0.0
  %1510 = vmatpush.msra.mxu0 0.0
  %1511 = vmatpush.msra.mxu0 0.0
  %1512 = vmatpush.msra.mxu0 0.0
  %1513 = vmatpush.msra.mxu0 0.0
  %v1514 = vand.u32 %v1112, 4294901760
  %1515 = vmatpush.msra.mxu0 %v1514
  %v1516 = vand.u32 %v1110, 4294901760
  %1517 = vmatpush.msra.mxu0 %v1516
  %v1518 = vand.u32 %v62, 4294901760
  %v1519 = vsub.f32 %v62, %v1518
  %v1520 = vand.u32 %v1519, 4294901760
  %1521 = vmatmul.f32.gmra.mxu0 %v1520
  %v1522 = vpop.f32.mrf.mxu0
  %v1523 = vadd.f32 %v1483, %v1522
  %v1524 = vand.u32 %v65, 4294901760
  %v1525 = vsub.f32 %v65, %v1524
  %v1526 = vand.u32 %v1525, 4294901760
  %1527 = vmatmul.f32.gmra.mxu0 %v1526
  %v1528 = vpop.f32.mrf.mxu0
  %v1529 = vadd.f32 %v1488, %v1528
  %v1530 = vand.u32 %v68, 4294901760
  %v1531 = vsub.f32 %v68, %v1530
  %v1532 = vand.u32 %v1531, 4294901760
  %1533 = vmatmul.f32.gmra.mxu0 %v1532
  %v1534 = vpop.f32.mrf.mxu0
  %v1535 = vadd.f32 %v1493, %v1534
  %v1536 = vand.u32 %v71, 4294901760
  %v1537 = vsub.f32 %v71, %v1536
  %v1538 = vand.u32 %v1537, 4294901760
  %1539 = vmatmul.f32.gmra.mxu0 %v1538
  %v1540 = vpop.f32.mrf.mxu0
  %v1541 = vadd.f32 %v1498, %v1540
  %1542 = vdwg.mxu0
  %1543 = vmatpush.msra.mxu0 0.0
  %1544 = vmatpush.msra.mxu0 0.0
  %1545 = vmatpush.msra.mxu0 0.0
  %1546 = vmatpush.msra.mxu0 0.0
  %1547 = vmatpush.msra.mxu0 0.0
  %1548 = vmatpush.msra.mxu0 0.0
  %1549 = vmatpush.msra.mxu0 0.0
  %1550 = vmatpush.msra.mxu0 0.0
  %1551 = vmatpush.msra.mxu0 0.0
  %1552 = vmatpush.msra.mxu0 0.0
  %1553 = vmatpush.msra.mxu0 0.0
  %1554 = vmatpush.msra.mxu0 0.0
  %1555 = vmatpush.msra.mxu0 0.0
  %1556 = vmatpush.msra.mxu0 0.0
  %v1557 = vand.u32 %v1112, 4294901760
  %v1558 = vsub.f32 %v1112, %v1557
  %v1559 = vand.u32 %v1558, 4294901760
  %1560 = vmatpush.msra.mxu0 %v1559
  %v1561 = vand.u32 %v1110, 4294901760
  %v1562 = vsub.f32 %v1110, %v1561
  %v1563 = vand.u32 %v1562, 4294901760
  %1564 = vmatpush.msra.mxu0 %v1563
  %v1565 = vand.u32 %v62, 4294901760
  %1566 = vmatmul.f32.gmra.mxu0 %v1565
  %v1567 = vpop.f32.mrf.mxu0
  %v1568 = vadd.f32 %v1523, %v1567
  %v1569 = vand.u32 %v65, 4294901760
  %1570 = vmatmul.f32.gmra.mxu0 %v1569
  %v1571 = vpop.f32.mrf.mxu0
  %v1572 = vadd.f32 %v1529, %v1571
  %v1573 = vand.u32 %v68, 4294901760
  %1574 = vmatmul.f32.gmra.mxu0 %v1573
  %v1575 = vpop.f32.mrf.mxu0
  %v1576 = vadd.f32 %v1535, %v1575
  %v1577 = vand.u32 %v71, 4294901760
  %1578 = vmatmul.f32.gmra.mxu0 %v1577
  %v1579 = vpop.f32.mrf.mxu0
  %v1580 = vadd.f32 %v1541, %v1579
  %1581 = vdwg.mxu0
  %1582 = vmatpush.msra.mxu0 0.0
  %1583 = vmatpush.msra.mxu0 0.0
  %1584 = vmatpush.msra.mxu0 0.0
  %1585 = vmatpush.msra.mxu0 0.0
  %1586 = vmatpush.msra.mxu0 0.0
  %1587 = vmatpush.msra.mxu0 0.0
  %1588 = vmatpush.msra.mxu0 0.0
  %1589 = vmatpush.msra.mxu0 0.0
  %1590 = vmatpush.msra.mxu0 0.0
  %1591 = vmatpush.msra.mxu0 0.0
  %1592 = vmatpush.msra.mxu0 0.0
  %1593 = vmatpush.msra.mxu0 0.0
  %1594 = vmatpush.msra.mxu0 0.0
  %1595 = vmatpush.msra.mxu0 0.0
  %v1596 = vand.u32 %v1112, 4294901760
  %1597 = vmatpush.msra.mxu0 %v1596
  %v1598 = vand.u32 %v1110, 4294901760
  %1599 = vmatpush.msra.mxu0 %v1598
  %v1600 = vand.u32 %v62, 4294901760
  %1601 = vmatmul.f32.gmra.mxu0 %v1600
  %v1602 = vpop.f32.mrf.mxu0
  %v1603 = vadd.f32 %v1568, %v1602
  %v1604 = vand.u32 %v65, 4294901760
  %1605 = vmatmul.f32.gmra.mxu0 %v1604
  %v1606 = vpop.f32.mrf.mxu0
  %v1607 = vadd.f32 %v1572, %v1606
  %v1608 = vand.u32 %v68, 4294901760
  %1609 = vmatmul.f32.gmra.mxu0 %v1608
  %v1610 = vpop.f32.mrf.mxu0
  %v1611 = vadd.f32 %v1576, %v1610
  %v1612 = vand.u32 %v71, 4294901760
  %1613 = vmatmul.f32.gmra.mxu0 %v1612
  %v1614 = vpop.f32.mrf.mxu0
  %v1615 = vadd.f32 %v1580, %v1614
  %1616 = vdwg.mxu0
  %v1617 = vadd.f32 %v311, %v831
  %v1618 = vadd.f32 %v563, %v1083
  %v1619 = vadd.f32 %v315, %v835
  %v1620 = vadd.f32 %v567, %v1087
  %v1621 = vadd.f32 %v319, %v839
  %v1622 = vadd.f32 %v571, %v1091
  %v1623 = vadd.f32 %v323, %v843
  %v1624 = vadd.f32 %v575, %v1095
  %v1625 = vadd.f32 %v1617, %v1351
  %v1626 = vadd.f32 %v1618, %v1603
  %v1627 = vadd.f32 %v1619, %v1355
  %v1628 = vadd.f32 %v1620, %v1607
  %v1629 = vadd.f32 %v1621, %v1359
  %v1630 = vadd.f32 %v1622, %v1611
  %v1631 = vadd.f32 %v1623, %v1363
  %v1632 = vadd.f32 %v1624, %v1615
  %v1634 = vsel %vm60, %v25, 0
  %v1637 = vsel %vm60, %v26, 0
  %v1640 = vsel %vm60, %v27, 0
  %v1643 = vsel %vm60, %v28, 0
  %1645 = vmatpush.msra.mxu0 0.0
  %1646 = vmatpush.msra.mxu0 0.0
  %1647 = vmatpush.msra.mxu0 0.0
  %1648 = vmatpush.msra.mxu0 0.0
  %1649 = vmatpush.msra.mxu0 0.0
  %1650 = vmatpush.msra.mxu0 0.0
  %1651 = vmatpush.msra.mxu0 0.0
  %1652 = vmatpush.msra.mxu0 0.0
  %1653 = vmatpush.msra.mxu0 0.0
  %1654 = vmatpush.msra.mxu0 0.0
  %1655 = vmatpush.msra.mxu0 0.0
  %1656 = vmatpush.msra.mxu0 0.0
  %1657 = vmatpush.msra.mxu0 0.0
  %1658 = vmatpush.msra.mxu0 0.0
  %v1659 = vand.u32 %v58, 4294901760
  %1660 = vmatpush.msra.mxu0 %v1659
  %v1661 = vand.u32 %v56, 4294901760
  %1662 = vmatpush.msra.mxu0 %v1661
  %v1663 = vand.u32 %v1634, 4294901760
  %v1664 = vsub.f32 %v1634, %v1663
  %v1665 = vand.u32 %v1664, 4294901760
  %v1666 = vsub.f32 %v1664, %v1665
  %v1667 = vand.u32 %v1666, 4294901760
  %1668 = vmatmul.f32.gmra.mxu0 %v1667
  %v1669 = vpop.f32.mrf.mxu0
  %v1670 = vadd.f32 %v1625, %v1669
  %v1671 = vand.u32 %v1637, 4294901760
  %v1672 = vsub.f32 %v1637, %v1671
  %v1673 = vand.u32 %v1672, 4294901760
  %v1674 = vsub.f32 %v1672, %v1673
  %v1675 = vand.u32 %v1674, 4294901760
  %1676 = vmatmul.f32.gmra.mxu0 %v1675
  %v1677 = vpop.f32.mrf.mxu0
  %v1678 = vadd.f32 %v1627, %v1677
  %v1679 = vand.u32 %v1640, 4294901760
  %v1680 = vsub.f32 %v1640, %v1679
  %v1681 = vand.u32 %v1680, 4294901760
  %v1682 = vsub.f32 %v1680, %v1681
  %v1683 = vand.u32 %v1682, 4294901760
  %1684 = vmatmul.f32.gmra.mxu0 %v1683
  %v1685 = vpop.f32.mrf.mxu0
  %v1686 = vadd.f32 %v1629, %v1685
  %v1687 = vand.u32 %v1643, 4294901760
  %v1688 = vsub.f32 %v1643, %v1687
  %v1689 = vand.u32 %v1688, 4294901760
  %v1690 = vsub.f32 %v1688, %v1689
  %v1691 = vand.u32 %v1690, 4294901760
  %1692 = vmatmul.f32.gmra.mxu0 %v1691
  %v1693 = vpop.f32.mrf.mxu0
  %v1694 = vadd.f32 %v1631, %v1693
  %1695 = vdwg.mxu0
  %1696 = vmatpush.msra.mxu0 0.0
  %1697 = vmatpush.msra.mxu0 0.0
  %1698 = vmatpush.msra.mxu0 0.0
  %1699 = vmatpush.msra.mxu0 0.0
  %1700 = vmatpush.msra.mxu0 0.0
  %1701 = vmatpush.msra.mxu0 0.0
  %1702 = vmatpush.msra.mxu0 0.0
  %1703 = vmatpush.msra.mxu0 0.0
  %1704 = vmatpush.msra.mxu0 0.0
  %1705 = vmatpush.msra.mxu0 0.0
  %1706 = vmatpush.msra.mxu0 0.0
  %1707 = vmatpush.msra.mxu0 0.0
  %1708 = vmatpush.msra.mxu0 0.0
  %1709 = vmatpush.msra.mxu0 0.0
  %v1710 = vand.u32 %v58, 4294901760
  %v1711 = vsub.f32 %v58, %v1710
  %v1712 = vand.u32 %v1711, 4294901760
  %v1713 = vsub.f32 %v1711, %v1712
  %v1714 = vand.u32 %v1713, 4294901760
  %1715 = vmatpush.msra.mxu0 %v1714
  %v1716 = vand.u32 %v56, 4294901760
  %v1717 = vsub.f32 %v56, %v1716
  %v1718 = vand.u32 %v1717, 4294901760
  %v1719 = vsub.f32 %v1717, %v1718
  %v1720 = vand.u32 %v1719, 4294901760
  %1721 = vmatpush.msra.mxu0 %v1720
  %v1722 = vand.u32 %v1634, 4294901760
  %1723 = vmatmul.f32.gmra.mxu0 %v1722
  %v1724 = vpop.f32.mrf.mxu0
  %v1725 = vadd.f32 %v1670, %v1724
  %v1726 = vand.u32 %v1637, 4294901760
  %1727 = vmatmul.f32.gmra.mxu0 %v1726
  %v1728 = vpop.f32.mrf.mxu0
  %v1729 = vadd.f32 %v1678, %v1728
  %v1730 = vand.u32 %v1640, 4294901760
  %1731 = vmatmul.f32.gmra.mxu0 %v1730
  %v1732 = vpop.f32.mrf.mxu0
  %v1733 = vadd.f32 %v1686, %v1732
  %v1734 = vand.u32 %v1643, 4294901760
  %1735 = vmatmul.f32.gmra.mxu0 %v1734
  %v1736 = vpop.f32.mrf.mxu0
  %v1737 = vadd.f32 %v1694, %v1736
  %1738 = vdwg.mxu0
  %1739 = vmatpush.msra.mxu0 0.0
  %1740 = vmatpush.msra.mxu0 0.0
  %1741 = vmatpush.msra.mxu0 0.0
  %1742 = vmatpush.msra.mxu0 0.0
  %1743 = vmatpush.msra.mxu0 0.0
  %1744 = vmatpush.msra.mxu0 0.0
  %1745 = vmatpush.msra.mxu0 0.0
  %1746 = vmatpush.msra.mxu0 0.0
  %1747 = vmatpush.msra.mxu0 0.0
  %1748 = vmatpush.msra.mxu0 0.0
  %1749 = vmatpush.msra.mxu0 0.0
  %1750 = vmatpush.msra.mxu0 0.0
  %1751 = vmatpush.msra.mxu0 0.0
  %1752 = vmatpush.msra.mxu0 0.0
  %v1753 = vand.u32 %v58, 4294901760
  %v1754 = vsub.f32 %v58, %v1753
  %1755 = vmatpush.msra.mxu0 %v1754
  %v1756 = vand.u32 %v56, 4294901760
  %v1757 = vsub.f32 %v56, %v1756
  %1758 = vmatpush.msra.mxu0 %v1757
  %v1759 = vand.u32 %v1634, 4294901760
  %v1760 = vsub.f32 %v1634, %v1759
  %1761 = vmatmul.f32.gmra.mxu0 %v1760
  %v1762 = vpop.f32.mrf.mxu0
  %v1763 = vadd.f32 %v1725, %v1762
  %v1764 = vand.u32 %v1637, 4294901760
  %v1765 = vsub.f32 %v1637, %v1764
  %1766 = vmatmul.f32.gmra.mxu0 %v1765
  %v1767 = vpop.f32.mrf.mxu0
  %v1768 = vadd.f32 %v1729, %v1767
  %v1769 = vand.u32 %v1640, 4294901760
  %v1770 = vsub.f32 %v1640, %v1769
  %1771 = vmatmul.f32.gmra.mxu0 %v1770
  %v1772 = vpop.f32.mrf.mxu0
  %v1773 = vadd.f32 %v1733, %v1772
  %v1774 = vand.u32 %v1643, 4294901760
  %v1775 = vsub.f32 %v1643, %v1774
  %1776 = vmatmul.f32.gmra.mxu0 %v1775
  %v1777 = vpop.f32.mrf.mxu0
  %v1778 = vadd.f32 %v1737, %v1777
  %1779 = vdwg.mxu0
  %1780 = vmatpush.msra.mxu0 0.0
  %1781 = vmatpush.msra.mxu0 0.0
  %1782 = vmatpush.msra.mxu0 0.0
  %1783 = vmatpush.msra.mxu0 0.0
  %1784 = vmatpush.msra.mxu0 0.0
  %1785 = vmatpush.msra.mxu0 0.0
  %1786 = vmatpush.msra.mxu0 0.0
  %1787 = vmatpush.msra.mxu0 0.0
  %1788 = vmatpush.msra.mxu0 0.0
  %1789 = vmatpush.msra.mxu0 0.0
  %1790 = vmatpush.msra.mxu0 0.0
  %1791 = vmatpush.msra.mxu0 0.0
  %1792 = vmatpush.msra.mxu0 0.0
  %1793 = vmatpush.msra.mxu0 0.0
  %v1794 = vand.u32 %v58, 4294901760
  %1795 = vmatpush.msra.mxu0 %v1794
  %v1796 = vand.u32 %v56, 4294901760
  %1797 = vmatpush.msra.mxu0 %v1796
  %v1798 = vand.u32 %v1634, 4294901760
  %v1799 = vsub.f32 %v1634, %v1798
  %v1800 = vand.u32 %v1799, 4294901760
  %1801 = vmatmul.f32.gmra.mxu0 %v1800
  %v1802 = vpop.f32.mrf.mxu0
  %v1803 = vadd.f32 %v1763, %v1802
  %v1804 = vand.u32 %v1637, 4294901760
  %v1805 = vsub.f32 %v1637, %v1804
  %v1806 = vand.u32 %v1805, 4294901760
  %1807 = vmatmul.f32.gmra.mxu0 %v1806
  %v1808 = vpop.f32.mrf.mxu0
  %v1809 = vadd.f32 %v1768, %v1808
  %v1810 = vand.u32 %v1640, 4294901760
  %v1811 = vsub.f32 %v1640, %v1810
  %v1812 = vand.u32 %v1811, 4294901760
  %1813 = vmatmul.f32.gmra.mxu0 %v1812
  %v1814 = vpop.f32.mrf.mxu0
  %v1815 = vadd.f32 %v1773, %v1814
  %v1816 = vand.u32 %v1643, 4294901760
  %v1817 = vsub.f32 %v1643, %v1816
  %v1818 = vand.u32 %v1817, 4294901760
  %1819 = vmatmul.f32.gmra.mxu0 %v1818
  %v1820 = vpop.f32.mrf.mxu0
  %v1821 = vadd.f32 %v1778, %v1820
  %1822 = vdwg.mxu0
  %1823 = vmatpush.msra.mxu0 0.0
  %1824 = vmatpush.msra.mxu0 0.0
  %1825 = vmatpush.msra.mxu0 0.0
  %1826 = vmatpush.msra.mxu0 0.0
  %1827 = vmatpush.msra.mxu0 0.0
  %1828 = vmatpush.msra.mxu0 0.0
  %1829 = vmatpush.msra.mxu0 0.0
  %1830 = vmatpush.msra.mxu0 0.0
  %1831 = vmatpush.msra.mxu0 0.0
  %1832 = vmatpush.msra.mxu0 0.0
  %1833 = vmatpush.msra.mxu0 0.0
  %1834 = vmatpush.msra.mxu0 0.0
  %1835 = vmatpush.msra.mxu0 0.0
  %1836 = vmatpush.msra.mxu0 0.0
  %v1837 = vand.u32 %v58, 4294901760
  %v1838 = vsub.f32 %v58, %v1837
  %v1839 = vand.u32 %v1838, 4294901760
  %1840 = vmatpush.msra.mxu0 %v1839
  %v1841 = vand.u32 %v56, 4294901760
  %v1842 = vsub.f32 %v56, %v1841
  %v1843 = vand.u32 %v1842, 4294901760
  %1844 = vmatpush.msra.mxu0 %v1843
  %v1845 = vand.u32 %v1634, 4294901760
  %1846 = vmatmul.f32.gmra.mxu0 %v1845
  %v1847 = vpop.f32.mrf.mxu0
  %v1848 = vadd.f32 %v1803, %v1847
  %v1849 = vand.u32 %v1637, 4294901760
  %1850 = vmatmul.f32.gmra.mxu0 %v1849
  %v1851 = vpop.f32.mrf.mxu0
  %v1852 = vadd.f32 %v1809, %v1851
  %v1853 = vand.u32 %v1640, 4294901760
  %1854 = vmatmul.f32.gmra.mxu0 %v1853
  %v1855 = vpop.f32.mrf.mxu0
  %v1856 = vadd.f32 %v1815, %v1855
  %v1857 = vand.u32 %v1643, 4294901760
  %1858 = vmatmul.f32.gmra.mxu0 %v1857
  %v1859 = vpop.f32.mrf.mxu0
  %v1860 = vadd.f32 %v1821, %v1859
  %1861 = vdwg.mxu0
  %1862 = vmatpush.msra.mxu0 0.0
  %1863 = vmatpush.msra.mxu0 0.0
  %1864 = vmatpush.msra.mxu0 0.0
  %1865 = vmatpush.msra.mxu0 0.0
  %1866 = vmatpush.msra.mxu0 0.0
  %1867 = vmatpush.msra.mxu0 0.0
  %1868 = vmatpush.msra.mxu0 0.0
  %1869 = vmatpush.msra.mxu0 0.0
  %1870 = vmatpush.msra.mxu0 0.0
  %1871 = vmatpush.msra.mxu0 0.0
  %1872 = vmatpush.msra.mxu0 0.0
  %1873 = vmatpush.msra.mxu0 0.0
  %1874 = vmatpush.msra.mxu0 0.0
  %1875 = vmatpush.msra.mxu0 0.0
  %v1876 = vand.u32 %v58, 4294901760
  %1877 = vmatpush.msra.mxu0 %v1876
  %v1878 = vand.u32 %v56, 4294901760
  %1879 = vmatpush.msra.mxu0 %v1878
  %v1880 = vand.u32 %v1634, 4294901760
  %1881 = vmatmul.f32.gmra.mxu0 %v1880
  %v1882 = vpop.f32.mrf.mxu0
  %v1883 = vadd.f32 %v1848, %v1882
  %v1884 = vand.u32 %v1637, 4294901760
  %1885 = vmatmul.f32.gmra.mxu0 %v1884
  %v1886 = vpop.f32.mrf.mxu0
  %v1887 = vadd.f32 %v1852, %v1886
  %v1888 = vand.u32 %v1640, 4294901760
  %1889 = vmatmul.f32.gmra.mxu0 %v1888
  %v1890 = vpop.f32.mrf.mxu0
  %v1891 = vadd.f32 %v1856, %v1890
  %v1892 = vand.u32 %v1643, 4294901760
  %1893 = vmatmul.f32.gmra.mxu0 %v1892
  %v1894 = vpop.f32.mrf.mxu0
  %v1895 = vadd.f32 %v1860, %v1894
  %1896 = vdwg.mxu0
  %1897 = vmatpush.msra.mxu0 0.0
  %1898 = vmatpush.msra.mxu0 0.0
  %1899 = vmatpush.msra.mxu0 0.0
  %1900 = vmatpush.msra.mxu0 0.0
  %1901 = vmatpush.msra.mxu0 0.0
  %1902 = vmatpush.msra.mxu0 0.0
  %1903 = vmatpush.msra.mxu0 0.0
  %1904 = vmatpush.msra.mxu0 0.0
  %1905 = vmatpush.msra.mxu0 0.0
  %1906 = vmatpush.msra.mxu0 0.0
  %1907 = vmatpush.msra.mxu0 0.0
  %1908 = vmatpush.msra.mxu0 0.0
  %1909 = vmatpush.msra.mxu0 0.0
  %1910 = vmatpush.msra.mxu0 0.0
  %v1911 = vand.u32 %v59, 4294901760
  %1912 = vmatpush.msra.mxu0 %v1911
  %v1913 = vand.u32 %v57, 4294901760
  %1914 = vmatpush.msra.mxu0 %v1913
  %v1915 = vand.u32 %v1634, 4294901760
  %v1916 = vsub.f32 %v1634, %v1915
  %v1917 = vand.u32 %v1916, 4294901760
  %v1918 = vsub.f32 %v1916, %v1917
  %v1919 = vand.u32 %v1918, 4294901760
  %1920 = vmatmul.f32.gmra.mxu0 %v1919
  %v1921 = vpop.f32.mrf.mxu0
  %v1922 = vadd.f32 %v1626, %v1921
  %v1923 = vand.u32 %v1637, 4294901760
  %v1924 = vsub.f32 %v1637, %v1923
  %v1925 = vand.u32 %v1924, 4294901760
  %v1926 = vsub.f32 %v1924, %v1925
  %v1927 = vand.u32 %v1926, 4294901760
  %1928 = vmatmul.f32.gmra.mxu0 %v1927
  %v1929 = vpop.f32.mrf.mxu0
  %v1930 = vadd.f32 %v1628, %v1929
  %v1931 = vand.u32 %v1640, 4294901760
  %v1932 = vsub.f32 %v1640, %v1931
  %v1933 = vand.u32 %v1932, 4294901760
  %v1934 = vsub.f32 %v1932, %v1933
  %v1935 = vand.u32 %v1934, 4294901760
  %1936 = vmatmul.f32.gmra.mxu0 %v1935
  %v1937 = vpop.f32.mrf.mxu0
  %v1938 = vadd.f32 %v1630, %v1937
  %v1939 = vand.u32 %v1643, 4294901760
  %v1940 = vsub.f32 %v1643, %v1939
  %v1941 = vand.u32 %v1940, 4294901760
  %v1942 = vsub.f32 %v1940, %v1941
  %v1943 = vand.u32 %v1942, 4294901760
  %1944 = vmatmul.f32.gmra.mxu0 %v1943
  %v1945 = vpop.f32.mrf.mxu0
  %v1946 = vadd.f32 %v1632, %v1945
  %1947 = vdwg.mxu0
  %1948 = vmatpush.msra.mxu0 0.0
  %1949 = vmatpush.msra.mxu0 0.0
  %1950 = vmatpush.msra.mxu0 0.0
  %1951 = vmatpush.msra.mxu0 0.0
  %1952 = vmatpush.msra.mxu0 0.0
  %1953 = vmatpush.msra.mxu0 0.0
  %1954 = vmatpush.msra.mxu0 0.0
  %1955 = vmatpush.msra.mxu0 0.0
  %1956 = vmatpush.msra.mxu0 0.0
  %1957 = vmatpush.msra.mxu0 0.0
  %1958 = vmatpush.msra.mxu0 0.0
  %1959 = vmatpush.msra.mxu0 0.0
  %1960 = vmatpush.msra.mxu0 0.0
  %1961 = vmatpush.msra.mxu0 0.0
  %v1962 = vand.u32 %v59, 4294901760
  %v1963 = vsub.f32 %v59, %v1962
  %v1964 = vand.u32 %v1963, 4294901760
  %v1965 = vsub.f32 %v1963, %v1964
  %v1966 = vand.u32 %v1965, 4294901760
  %1967 = vmatpush.msra.mxu0 %v1966
  %v1968 = vand.u32 %v57, 4294901760
  %v1969 = vsub.f32 %v57, %v1968
  %v1970 = vand.u32 %v1969, 4294901760
  %v1971 = vsub.f32 %v1969, %v1970
  %v1972 = vand.u32 %v1971, 4294901760
  %1973 = vmatpush.msra.mxu0 %v1972
  %v1974 = vand.u32 %v1634, 4294901760
  %1975 = vmatmul.f32.gmra.mxu0 %v1974
  %v1976 = vpop.f32.mrf.mxu0
  %v1977 = vadd.f32 %v1922, %v1976
  %v1978 = vand.u32 %v1637, 4294901760
  %1979 = vmatmul.f32.gmra.mxu0 %v1978
  %v1980 = vpop.f32.mrf.mxu0
  %v1981 = vadd.f32 %v1930, %v1980
  %v1982 = vand.u32 %v1640, 4294901760
  %1983 = vmatmul.f32.gmra.mxu0 %v1982
  %v1984 = vpop.f32.mrf.mxu0
  %v1985 = vadd.f32 %v1938, %v1984
  %v1986 = vand.u32 %v1643, 4294901760
  %1987 = vmatmul.f32.gmra.mxu0 %v1986
  %v1988 = vpop.f32.mrf.mxu0
  %v1989 = vadd.f32 %v1946, %v1988
  %1990 = vdwg.mxu0
  %1991 = vmatpush.msra.mxu0 0.0
  %1992 = vmatpush.msra.mxu0 0.0
  %1993 = vmatpush.msra.mxu0 0.0
  %1994 = vmatpush.msra.mxu0 0.0
  %1995 = vmatpush.msra.mxu0 0.0
  %1996 = vmatpush.msra.mxu0 0.0
  %1997 = vmatpush.msra.mxu0 0.0
  %1998 = vmatpush.msra.mxu0 0.0
  %1999 = vmatpush.msra.mxu0 0.0
  %2000 = vmatpush.msra.mxu0 0.0
  %2001 = vmatpush.msra.mxu0 0.0
  %2002 = vmatpush.msra.mxu0 0.0
  %2003 = vmatpush.msra.mxu0 0.0
  %2004 = vmatpush.msra.mxu0 0.0
  %v2005 = vand.u32 %v59, 4294901760
  %v2006 = vsub.f32 %v59, %v2005
  %2007 = vmatpush.msra.mxu0 %v2006
  %v2008 = vand.u32 %v57, 4294901760
  %v2009 = vsub.f32 %v57, %v2008
  %2010 = vmatpush.msra.mxu0 %v2009
  %v2011 = vand.u32 %v1634, 4294901760
  %v2012 = vsub.f32 %v1634, %v2011
  %2013 = vmatmul.f32.gmra.mxu0 %v2012
  %v2014 = vpop.f32.mrf.mxu0
  %v2015 = vadd.f32 %v1977, %v2014
  %v2016 = vand.u32 %v1637, 4294901760
  %v2017 = vsub.f32 %v1637, %v2016
  %2018 = vmatmul.f32.gmra.mxu0 %v2017
  %v2019 = vpop.f32.mrf.mxu0
  %v2020 = vadd.f32 %v1981, %v2019
  %v2021 = vand.u32 %v1640, 4294901760
  %v2022 = vsub.f32 %v1640, %v2021
  %2023 = vmatmul.f32.gmra.mxu0 %v2022
  %v2024 = vpop.f32.mrf.mxu0
  %v2025 = vadd.f32 %v1985, %v2024
  %v2026 = vand.u32 %v1643, 4294901760
  %v2027 = vsub.f32 %v1643, %v2026
  %2028 = vmatmul.f32.gmra.mxu0 %v2027
  %v2029 = vpop.f32.mrf.mxu0
  %v2030 = vadd.f32 %v1989, %v2029
  %2031 = vdwg.mxu0
  %2032 = vmatpush.msra.mxu0 0.0
  %2033 = vmatpush.msra.mxu0 0.0
  %2034 = vmatpush.msra.mxu0 0.0
  %2035 = vmatpush.msra.mxu0 0.0
  %2036 = vmatpush.msra.mxu0 0.0
  %2037 = vmatpush.msra.mxu0 0.0
  %2038 = vmatpush.msra.mxu0 0.0
  %2039 = vmatpush.msra.mxu0 0.0
  %2040 = vmatpush.msra.mxu0 0.0
  %2041 = vmatpush.msra.mxu0 0.0
  %2042 = vmatpush.msra.mxu0 0.0
  %2043 = vmatpush.msra.mxu0 0.0
  %2044 = vmatpush.msra.mxu0 0.0
  %2045 = vmatpush.msra.mxu0 0.0
  %v2046 = vand.u32 %v59, 4294901760
  %2047 = vmatpush.msra.mxu0 %v2046
  %v2048 = vand.u32 %v57, 4294901760
  %2049 = vmatpush.msra.mxu0 %v2048
  %v2050 = vand.u32 %v1634, 4294901760
  %v2051 = vsub.f32 %v1634, %v2050
  %v2052 = vand.u32 %v2051, 4294901760
  %2053 = vmatmul.f32.gmra.mxu0 %v2052
  %v2054 = vpop.f32.mrf.mxu0
  %v2055 = vadd.f32 %v2015, %v2054
  %v2056 = vand.u32 %v1637, 4294901760
  %v2057 = vsub.f32 %v1637, %v2056
  %v2058 = vand.u32 %v2057, 4294901760
  %2059 = vmatmul.f32.gmra.mxu0 %v2058
  %v2060 = vpop.f32.mrf.mxu0
  %v2061 = vadd.f32 %v2020, %v2060
  %v2062 = vand.u32 %v1640, 4294901760
  %v2063 = vsub.f32 %v1640, %v2062
  %v2064 = vand.u32 %v2063, 4294901760
  %2065 = vmatmul.f32.gmra.mxu0 %v2064
  %v2066 = vpop.f32.mrf.mxu0
  %v2067 = vadd.f32 %v2025, %v2066
  %v2068 = vand.u32 %v1643, 4294901760
  %v2069 = vsub.f32 %v1643, %v2068
  %v2070 = vand.u32 %v2069, 4294901760
  %2071 = vmatmul.f32.gmra.mxu0 %v2070
  %v2072 = vpop.f32.mrf.mxu0
  %v2073 = vadd.f32 %v2030, %v2072
  %2074 = vdwg.mxu0
  %2075 = vmatpush.msra.mxu0 0.0
  %2076 = vmatpush.msra.mxu0 0.0
  %2077 = vmatpush.msra.mxu0 0.0
  %2078 = vmatpush.msra.mxu0 0.0
  %2079 = vmatpush.msra.mxu0 0.0
  %2080 = vmatpush.msra.mxu0 0.0
  %2081 = vmatpush.msra.mxu0 0.0
  %2082 = vmatpush.msra.mxu0 0.0
  %2083 = vmatpush.msra.mxu0 0.0
  %2084 = vmatpush.msra.mxu0 0.0
  %2085 = vmatpush.msra.mxu0 0.0
  %2086 = vmatpush.msra.mxu0 0.0
  %2087 = vmatpush.msra.mxu0 0.0
  %2088 = vmatpush.msra.mxu0 0.0
  %v2089 = vand.u32 %v59, 4294901760
  %v2090 = vsub.f32 %v59, %v2089
  %v2091 = vand.u32 %v2090, 4294901760
  %2092 = vmatpush.msra.mxu0 %v2091
  %v2093 = vand.u32 %v57, 4294901760
  %v2094 = vsub.f32 %v57, %v2093
  %v2095 = vand.u32 %v2094, 4294901760
  %2096 = vmatpush.msra.mxu0 %v2095
  %v2097 = vand.u32 %v1634, 4294901760
  %2098 = vmatmul.f32.gmra.mxu0 %v2097
  %v2099 = vpop.f32.mrf.mxu0
  %v2100 = vadd.f32 %v2055, %v2099
  %v2101 = vand.u32 %v1637, 4294901760
  %2102 = vmatmul.f32.gmra.mxu0 %v2101
  %v2103 = vpop.f32.mrf.mxu0
  %v2104 = vadd.f32 %v2061, %v2103
  %v2105 = vand.u32 %v1640, 4294901760
  %2106 = vmatmul.f32.gmra.mxu0 %v2105
  %v2107 = vpop.f32.mrf.mxu0
  %v2108 = vadd.f32 %v2067, %v2107
  %v2109 = vand.u32 %v1643, 4294901760
  %2110 = vmatmul.f32.gmra.mxu0 %v2109
  %v2111 = vpop.f32.mrf.mxu0
  %v2112 = vadd.f32 %v2073, %v2111
  %2113 = vdwg.mxu0
  %2114 = vmatpush.msra.mxu0 0.0
  %2115 = vmatpush.msra.mxu0 0.0
  %2116 = vmatpush.msra.mxu0 0.0
  %2117 = vmatpush.msra.mxu0 0.0
  %2118 = vmatpush.msra.mxu0 0.0
  %2119 = vmatpush.msra.mxu0 0.0
  %2120 = vmatpush.msra.mxu0 0.0
  %2121 = vmatpush.msra.mxu0 0.0
  %2122 = vmatpush.msra.mxu0 0.0
  %2123 = vmatpush.msra.mxu0 0.0
  %2124 = vmatpush.msra.mxu0 0.0
  %2125 = vmatpush.msra.mxu0 0.0
  %2126 = vmatpush.msra.mxu0 0.0
  %2127 = vmatpush.msra.mxu0 0.0
  %v2128 = vand.u32 %v59, 4294901760
  %2129 = vmatpush.msra.mxu0 %v2128
  %v2130 = vand.u32 %v57, 4294901760
  %2131 = vmatpush.msra.mxu0 %v2130
  %v2132 = vand.u32 %v1634, 4294901760
  %2133 = vmatmul.f32.gmra.mxu0 %v2132
  %v2134 = vpop.f32.mrf.mxu0
  %v2135 = vadd.f32 %v2100, %v2134
  %v2136 = vand.u32 %v1637, 4294901760
  %2137 = vmatmul.f32.gmra.mxu0 %v2136
  %v2138 = vpop.f32.mrf.mxu0
  %v2139 = vadd.f32 %v2104, %v2138
  %v2140 = vand.u32 %v1640, 4294901760
  %2141 = vmatmul.f32.gmra.mxu0 %v2140
  %v2142 = vpop.f32.mrf.mxu0
  %v2143 = vadd.f32 %v2108, %v2142
  %v2144 = vand.u32 %v1643, 4294901760
  %2145 = vmatmul.f32.gmra.mxu0 %v2144
  %v2146 = vpop.f32.mrf.mxu0
  %v2147 = vadd.f32 %v2112, %v2146
  %2148 = vdwg.mxu0
  %v2149 = vsub.f32 %v1883, %v311
  %v2150 = vsub.f32 %v2135, %v563
  %v2151 = vsub.f32 %v1887, %v315
  %v2152 = vsub.f32 %v2139, %v567
  %v2153 = vsub.f32 %v1891, %v319
  %v2154 = vsub.f32 %v2143, %v571
  %v2155 = vsub.f32 %v1895, %v323
  %v2156 = vsub.f32 %v2147, %v575
  %v2157 = vld [vmem:[%s4] sm:$0xff]
  %v2158 = vld [vmem:[%s4 + $0x8] sm:$0xff]
  %v2159 = vld [vmem:[%s4 + $0x10] sm:$0xff]
  %v2160 = vld [vmem:[%s4 + $0x18] sm:$0xff]
  %vm2161 = vcmask 64512
  %v2163 = vsel %vm2161, %v2157, 0
  %v2166 = vsel %vm2161, %v2158, 0
  %v2169 = vsel %vm2161, %v2159, 0
  %v2172 = vsel %vm2161, %v2160, 0
  %2174 = vmatpush.msra.mxu0 0.0
  %2175 = vmatpush.msra.mxu0 0.0
  %2176 = vmatpush.msra.mxu0 0.0
  %2177 = vmatpush.msra.mxu0 0.0
  %2178 = vmatpush.msra.mxu0 0.0
  %2179 = vmatpush.msra.mxu0 0.0
  %2180 = vmatpush.msra.mxu0 0.0
  %2181 = vmatpush.msra.mxu0 0.0
  %2182 = vmatpush.msra.mxu0 0.0
  %2183 = vmatpush.msra.mxu0 0.0
  %2184 = vmatpush.msra.mxu0 0.0
  %2185 = vmatpush.msra.mxu0 0.0
  %2186 = vmatpush.msra.mxu0 0.0
  %2187 = vmatpush.msra.mxu0 0.0
  %2188 = vmatpush.msra.mxu0 0.0
  %v2189 = vand.u32 %v42, 4294901760
  %2190 = vmatpush.msra.mxu0 %v2189
  %v2191 = vand.u32 %v2163, 4294901760
  %v2192 = vsub.f32 %v2163, %v2191
  %v2193 = vand.u32 %v2192, 4294901760
  %v2194 = vsub.f32 %v2192, %v2193
  %v2195 = vand.u32 %v2194, 4294901760
  %2196 = vmatmul.f32.gmra.mxu0 %v2195
  %v2197 = vpop.f32.mrf.mxu0
  %v2198 = vadd.f32 0.0, %v2197
  %v2199 = vand.u32 %v2166, 4294901760
  %v2200 = vsub.f32 %v2166, %v2199
  %v2201 = vand.u32 %v2200, 4294901760
  %v2202 = vsub.f32 %v2200, %v2201
  %v2203 = vand.u32 %v2202, 4294901760
  %2204 = vmatmul.f32.gmra.mxu0 %v2203
  %v2205 = vpop.f32.mrf.mxu0
  %v2206 = vadd.f32 0.0, %v2205
  %v2207 = vand.u32 %v2169, 4294901760
  %v2208 = vsub.f32 %v2169, %v2207
  %v2209 = vand.u32 %v2208, 4294901760
  %v2210 = vsub.f32 %v2208, %v2209
  %v2211 = vand.u32 %v2210, 4294901760
  %2212 = vmatmul.f32.gmra.mxu0 %v2211
  %v2213 = vpop.f32.mrf.mxu0
  %v2214 = vadd.f32 0.0, %v2213
  %v2215 = vand.u32 %v2172, 4294901760
  %v2216 = vsub.f32 %v2172, %v2215
  %v2217 = vand.u32 %v2216, 4294901760
  %v2218 = vsub.f32 %v2216, %v2217
  %v2219 = vand.u32 %v2218, 4294901760
  %2220 = vmatmul.f32.gmra.mxu0 %v2219
  %v2221 = vpop.f32.mrf.mxu0
  %v2222 = vadd.f32 0.0, %v2221
  %2223 = vdwg.mxu0
  %2224 = vmatpush.msra.mxu0 0.0
  %2225 = vmatpush.msra.mxu0 0.0
  %2226 = vmatpush.msra.mxu0 0.0
  %2227 = vmatpush.msra.mxu0 0.0
  %2228 = vmatpush.msra.mxu0 0.0
  %2229 = vmatpush.msra.mxu0 0.0
  %2230 = vmatpush.msra.mxu0 0.0
  %2231 = vmatpush.msra.mxu0 0.0
  %2232 = vmatpush.msra.mxu0 0.0
  %2233 = vmatpush.msra.mxu0 0.0
  %2234 = vmatpush.msra.mxu0 0.0
  %2235 = vmatpush.msra.mxu0 0.0
  %2236 = vmatpush.msra.mxu0 0.0
  %2237 = vmatpush.msra.mxu0 0.0
  %2238 = vmatpush.msra.mxu0 0.0
  %v2239 = vand.u32 %v42, 4294901760
  %v2240 = vsub.f32 %v42, %v2239
  %v2241 = vand.u32 %v2240, 4294901760
  %v2242 = vsub.f32 %v2240, %v2241
  %v2243 = vand.u32 %v2242, 4294901760
  %2244 = vmatpush.msra.mxu0 %v2243
  %v2245 = vand.u32 %v2163, 4294901760
  %2246 = vmatmul.f32.gmra.mxu0 %v2245
  %v2247 = vpop.f32.mrf.mxu0
  %v2248 = vadd.f32 %v2198, %v2247
  %v2249 = vand.u32 %v2166, 4294901760
  %2250 = vmatmul.f32.gmra.mxu0 %v2249
  %v2251 = vpop.f32.mrf.mxu0
  %v2252 = vadd.f32 %v2206, %v2251
  %v2253 = vand.u32 %v2169, 4294901760
  %2254 = vmatmul.f32.gmra.mxu0 %v2253
  %v2255 = vpop.f32.mrf.mxu0
  %v2256 = vadd.f32 %v2214, %v2255
  %v2257 = vand.u32 %v2172, 4294901760
  %2258 = vmatmul.f32.gmra.mxu0 %v2257
  %v2259 = vpop.f32.mrf.mxu0
  %v2260 = vadd.f32 %v2222, %v2259
  %2261 = vdwg.mxu0
  %2262 = vmatpush.msra.mxu0 0.0
  %2263 = vmatpush.msra.mxu0 0.0
  %2264 = vmatpush.msra.mxu0 0.0
  %2265 = vmatpush.msra.mxu0 0.0
  %2266 = vmatpush.msra.mxu0 0.0
  %2267 = vmatpush.msra.mxu0 0.0
  %2268 = vmatpush.msra.mxu0 0.0
  %2269 = vmatpush.msra.mxu0 0.0
  %2270 = vmatpush.msra.mxu0 0.0
  %2271 = vmatpush.msra.mxu0 0.0
  %2272 = vmatpush.msra.mxu0 0.0
  %2273 = vmatpush.msra.mxu0 0.0
  %2274 = vmatpush.msra.mxu0 0.0
  %2275 = vmatpush.msra.mxu0 0.0
  %2276 = vmatpush.msra.mxu0 0.0
  %v2277 = vand.u32 %v42, 4294901760
  %v2278 = vsub.f32 %v42, %v2277
  %2279 = vmatpush.msra.mxu0 %v2278
  %v2280 = vand.u32 %v2163, 4294901760
  %v2281 = vsub.f32 %v2163, %v2280
  %2282 = vmatmul.f32.gmra.mxu0 %v2281
  %v2283 = vpop.f32.mrf.mxu0
  %v2284 = vadd.f32 %v2248, %v2283
  %v2285 = vand.u32 %v2166, 4294901760
  %v2286 = vsub.f32 %v2166, %v2285
  %2287 = vmatmul.f32.gmra.mxu0 %v2286
  %v2288 = vpop.f32.mrf.mxu0
  %v2289 = vadd.f32 %v2252, %v2288
  %v2290 = vand.u32 %v2169, 4294901760
  %v2291 = vsub.f32 %v2169, %v2290
  %2292 = vmatmul.f32.gmra.mxu0 %v2291
  %v2293 = vpop.f32.mrf.mxu0
  %v2294 = vadd.f32 %v2256, %v2293
  %v2295 = vand.u32 %v2172, 4294901760
  %v2296 = vsub.f32 %v2172, %v2295
  %2297 = vmatmul.f32.gmra.mxu0 %v2296
  %v2298 = vpop.f32.mrf.mxu0
  %v2299 = vadd.f32 %v2260, %v2298
  %2300 = vdwg.mxu0
  %2301 = vmatpush.msra.mxu0 0.0
  %2302 = vmatpush.msra.mxu0 0.0
  %2303 = vmatpush.msra.mxu0 0.0
  %2304 = vmatpush.msra.mxu0 0.0
  %2305 = vmatpush.msra.mxu0 0.0
  %2306 = vmatpush.msra.mxu0 0.0
  %2307 = vmatpush.msra.mxu0 0.0
  %2308 = vmatpush.msra.mxu0 0.0
  %2309 = vmatpush.msra.mxu0 0.0
  %2310 = vmatpush.msra.mxu0 0.0
  %2311 = vmatpush.msra.mxu0 0.0
  %2312 = vmatpush.msra.mxu0 0.0
  %2313 = vmatpush.msra.mxu0 0.0
  %2314 = vmatpush.msra.mxu0 0.0
  %2315 = vmatpush.msra.mxu0 0.0
  %v2316 = vand.u32 %v42, 4294901760
  %2317 = vmatpush.msra.mxu0 %v2316
  %v2318 = vand.u32 %v2163, 4294901760
  %v2319 = vsub.f32 %v2163, %v2318
  %v2320 = vand.u32 %v2319, 4294901760
  %2321 = vmatmul.f32.gmra.mxu0 %v2320
  %v2322 = vpop.f32.mrf.mxu0
  %v2323 = vadd.f32 %v2284, %v2322
  %v2324 = vand.u32 %v2166, 4294901760
  %v2325 = vsub.f32 %v2166, %v2324
  %v2326 = vand.u32 %v2325, 4294901760
  %2327 = vmatmul.f32.gmra.mxu0 %v2326
  %v2328 = vpop.f32.mrf.mxu0
  %v2329 = vadd.f32 %v2289, %v2328
  %v2330 = vand.u32 %v2169, 4294901760
  %v2331 = vsub.f32 %v2169, %v2330
  %v2332 = vand.u32 %v2331, 4294901760
  %2333 = vmatmul.f32.gmra.mxu0 %v2332
  %v2334 = vpop.f32.mrf.mxu0
  %v2335 = vadd.f32 %v2294, %v2334
  %v2336 = vand.u32 %v2172, 4294901760
  %v2337 = vsub.f32 %v2172, %v2336
  %v2338 = vand.u32 %v2337, 4294901760
  %2339 = vmatmul.f32.gmra.mxu0 %v2338
  %v2340 = vpop.f32.mrf.mxu0
  %v2341 = vadd.f32 %v2299, %v2340
  %2342 = vdwg.mxu0
  %2343 = vmatpush.msra.mxu0 0.0
  %2344 = vmatpush.msra.mxu0 0.0
  %2345 = vmatpush.msra.mxu0 0.0
  %2346 = vmatpush.msra.mxu0 0.0
  %2347 = vmatpush.msra.mxu0 0.0
  %2348 = vmatpush.msra.mxu0 0.0
  %2349 = vmatpush.msra.mxu0 0.0
  %2350 = vmatpush.msra.mxu0 0.0
  %2351 = vmatpush.msra.mxu0 0.0
  %2352 = vmatpush.msra.mxu0 0.0
  %2353 = vmatpush.msra.mxu0 0.0
  %2354 = vmatpush.msra.mxu0 0.0
  %2355 = vmatpush.msra.mxu0 0.0
  %2356 = vmatpush.msra.mxu0 0.0
  %2357 = vmatpush.msra.mxu0 0.0
  %v2358 = vand.u32 %v42, 4294901760
  %v2359 = vsub.f32 %v42, %v2358
  %v2360 = vand.u32 %v2359, 4294901760
  %2361 = vmatpush.msra.mxu0 %v2360
  %v2362 = vand.u32 %v2163, 4294901760
  %2363 = vmatmul.f32.gmra.mxu0 %v2362
  %v2364 = vpop.f32.mrf.mxu0
  %v2365 = vadd.f32 %v2323, %v2364
  %v2366 = vand.u32 %v2166, 4294901760
  %2367 = vmatmul.f32.gmra.mxu0 %v2366
  %v2368 = vpop.f32.mrf.mxu0
  %v2369 = vadd.f32 %v2329, %v2368
  %v2370 = vand.u32 %v2169, 4294901760
  %2371 = vmatmul.f32.gmra.mxu0 %v2370
  %v2372 = vpop.f32.mrf.mxu0
  %v2373 = vadd.f32 %v2335, %v2372
  %v2374 = vand.u32 %v2172, 4294901760
  %2375 = vmatmul.f32.gmra.mxu0 %v2374
  %v2376 = vpop.f32.mrf.mxu0
  %v2377 = vadd.f32 %v2341, %v2376
  %2378 = vdwg.mxu0
  %2379 = vmatpush.msra.mxu0 0.0
  %2380 = vmatpush.msra.mxu0 0.0
  %2381 = vmatpush.msra.mxu0 0.0
  %2382 = vmatpush.msra.mxu0 0.0
  %2383 = vmatpush.msra.mxu0 0.0
  %2384 = vmatpush.msra.mxu0 0.0
  %2385 = vmatpush.msra.mxu0 0.0
  %2386 = vmatpush.msra.mxu0 0.0
  %2387 = vmatpush.msra.mxu0 0.0
  %2388 = vmatpush.msra.mxu0 0.0
  %2389 = vmatpush.msra.mxu0 0.0
  %2390 = vmatpush.msra.mxu0 0.0
  %2391 = vmatpush.msra.mxu0 0.0
  %2392 = vmatpush.msra.mxu0 0.0
  %2393 = vmatpush.msra.mxu0 0.0
  %v2394 = vand.u32 %v42, 4294901760
  %2395 = vmatpush.msra.mxu0 %v2394
  %v2396 = vand.u32 %v2163, 4294901760
  %2397 = vmatmul.f32.gmra.mxu0 %v2396
  %v2398 = vpop.f32.mrf.mxu0
  %v2399 = vadd.f32 %v2365, %v2398
  %v2400 = vand.u32 %v2166, 4294901760
  %2401 = vmatmul.f32.gmra.mxu0 %v2400
  %v2402 = vpop.f32.mrf.mxu0
  %v2403 = vadd.f32 %v2369, %v2402
  %v2404 = vand.u32 %v2169, 4294901760
  %2405 = vmatmul.f32.gmra.mxu0 %v2404
  %v2406 = vpop.f32.mrf.mxu0
  %v2407 = vadd.f32 %v2373, %v2406
  %v2408 = vand.u32 %v2172, 4294901760
  %2409 = vmatmul.f32.gmra.mxu0 %v2408
  %v2410 = vpop.f32.mrf.mxu0
  %v2411 = vadd.f32 %v2377, %v2410
  %2412 = vdwg.mxu0
  %2413 = vmatpush.msra.mxu0 0.0
  %2414 = vmatpush.msra.mxu0 0.0
  %2415 = vmatpush.msra.mxu0 0.0
  %2416 = vmatpush.msra.mxu0 0.0
  %2417 = vmatpush.msra.mxu0 0.0
  %2418 = vmatpush.msra.mxu0 0.0
  %2419 = vmatpush.msra.mxu0 0.0
  %2420 = vmatpush.msra.mxu0 0.0
  %2421 = vmatpush.msra.mxu0 0.0
  %2422 = vmatpush.msra.mxu0 0.0
  %2423 = vmatpush.msra.mxu0 0.0
  %2424 = vmatpush.msra.mxu0 0.0
  %2425 = vmatpush.msra.mxu0 0.0
  %2426 = vmatpush.msra.mxu0 0.0
  %2427 = vmatpush.msra.mxu0 0.0
  %v2428 = vand.u32 %v43, 4294901760
  %2429 = vmatpush.msra.mxu0 %v2428
  %v2430 = vand.u32 %v2163, 4294901760
  %v2431 = vsub.f32 %v2163, %v2430
  %v2432 = vand.u32 %v2431, 4294901760
  %v2433 = vsub.f32 %v2431, %v2432
  %v2434 = vand.u32 %v2433, 4294901760
  %2435 = vmatmul.f32.gmra.mxu0 %v2434
  %v2436 = vpop.f32.mrf.mxu0
  %v2437 = vadd.f32 0.0, %v2436
  %v2438 = vand.u32 %v2166, 4294901760
  %v2439 = vsub.f32 %v2166, %v2438
  %v2440 = vand.u32 %v2439, 4294901760
  %v2441 = vsub.f32 %v2439, %v2440
  %v2442 = vand.u32 %v2441, 4294901760
  %2443 = vmatmul.f32.gmra.mxu0 %v2442
  %v2444 = vpop.f32.mrf.mxu0
  %v2445 = vadd.f32 0.0, %v2444
  %v2446 = vand.u32 %v2169, 4294901760
  %v2447 = vsub.f32 %v2169, %v2446
  %v2448 = vand.u32 %v2447, 4294901760
  %v2449 = vsub.f32 %v2447, %v2448
  %v2450 = vand.u32 %v2449, 4294901760
  %2451 = vmatmul.f32.gmra.mxu0 %v2450
  %v2452 = vpop.f32.mrf.mxu0
  %v2453 = vadd.f32 0.0, %v2452
  %v2454 = vand.u32 %v2172, 4294901760
  %v2455 = vsub.f32 %v2172, %v2454
  %v2456 = vand.u32 %v2455, 4294901760
  %v2457 = vsub.f32 %v2455, %v2456
  %v2458 = vand.u32 %v2457, 4294901760
  %2459 = vmatmul.f32.gmra.mxu0 %v2458
  %v2460 = vpop.f32.mrf.mxu0
  %v2461 = vadd.f32 0.0, %v2460
  %2462 = vdwg.mxu0
  %2463 = vmatpush.msra.mxu0 0.0
  %2464 = vmatpush.msra.mxu0 0.0
  %2465 = vmatpush.msra.mxu0 0.0
  %2466 = vmatpush.msra.mxu0 0.0
  %2467 = vmatpush.msra.mxu0 0.0
  %2468 = vmatpush.msra.mxu0 0.0
  %2469 = vmatpush.msra.mxu0 0.0
  %2470 = vmatpush.msra.mxu0 0.0
  %2471 = vmatpush.msra.mxu0 0.0
  %2472 = vmatpush.msra.mxu0 0.0
  %2473 = vmatpush.msra.mxu0 0.0
  %2474 = vmatpush.msra.mxu0 0.0
  %2475 = vmatpush.msra.mxu0 0.0
  %2476 = vmatpush.msra.mxu0 0.0
  %2477 = vmatpush.msra.mxu0 0.0
  %v2478 = vand.u32 %v43, 4294901760
  %v2479 = vsub.f32 %v43, %v2478
  %v2480 = vand.u32 %v2479, 4294901760
  %v2481 = vsub.f32 %v2479, %v2480
  %v2482 = vand.u32 %v2481, 4294901760
  %2483 = vmatpush.msra.mxu0 %v2482
  %v2484 = vand.u32 %v2163, 4294901760
  %2485 = vmatmul.f32.gmra.mxu0 %v2484
  %v2486 = vpop.f32.mrf.mxu0
  %v2487 = vadd.f32 %v2437, %v2486
  %v2488 = vand.u32 %v2166, 4294901760
  %2489 = vmatmul.f32.gmra.mxu0 %v2488
  %v2490 = vpop.f32.mrf.mxu0
  %v2491 = vadd.f32 %v2445, %v2490
  %v2492 = vand.u32 %v2169, 4294901760
  %2493 = vmatmul.f32.gmra.mxu0 %v2492
  %v2494 = vpop.f32.mrf.mxu0
  %v2495 = vadd.f32 %v2453, %v2494
  %v2496 = vand.u32 %v2172, 4294901760
  %2497 = vmatmul.f32.gmra.mxu0 %v2496
  %v2498 = vpop.f32.mrf.mxu0
  %v2499 = vadd.f32 %v2461, %v2498
  %2500 = vdwg.mxu0
  %2501 = vmatpush.msra.mxu0 0.0
  %2502 = vmatpush.msra.mxu0 0.0
  %2503 = vmatpush.msra.mxu0 0.0
  %2504 = vmatpush.msra.mxu0 0.0
  %2505 = vmatpush.msra.mxu0 0.0
  %2506 = vmatpush.msra.mxu0 0.0
  %2507 = vmatpush.msra.mxu0 0.0
  %2508 = vmatpush.msra.mxu0 0.0
  %2509 = vmatpush.msra.mxu0 0.0
  %2510 = vmatpush.msra.mxu0 0.0
  %2511 = vmatpush.msra.mxu0 0.0
  %2512 = vmatpush.msra.mxu0 0.0
  %2513 = vmatpush.msra.mxu0 0.0
  %2514 = vmatpush.msra.mxu0 0.0
  %2515 = vmatpush.msra.mxu0 0.0
  %v2516 = vand.u32 %v43, 4294901760
  %v2517 = vsub.f32 %v43, %v2516
  %2518 = vmatpush.msra.mxu0 %v2517
  %v2519 = vand.u32 %v2163, 4294901760
  %v2520 = vsub.f32 %v2163, %v2519
  %2521 = vmatmul.f32.gmra.mxu0 %v2520
  %v2522 = vpop.f32.mrf.mxu0
  %v2523 = vadd.f32 %v2487, %v2522
  %v2524 = vand.u32 %v2166, 4294901760
  %v2525 = vsub.f32 %v2166, %v2524
  %2526 = vmatmul.f32.gmra.mxu0 %v2525
  %v2527 = vpop.f32.mrf.mxu0
  %v2528 = vadd.f32 %v2491, %v2527
  %v2529 = vand.u32 %v2169, 4294901760
  %v2530 = vsub.f32 %v2169, %v2529
  %2531 = vmatmul.f32.gmra.mxu0 %v2530
  %v2532 = vpop.f32.mrf.mxu0
  %v2533 = vadd.f32 %v2495, %v2532
  %v2534 = vand.u32 %v2172, 4294901760
  %v2535 = vsub.f32 %v2172, %v2534
  %2536 = vmatmul.f32.gmra.mxu0 %v2535
  %v2537 = vpop.f32.mrf.mxu0
  %v2538 = vadd.f32 %v2499, %v2537
  %2539 = vdwg.mxu0
  %2540 = vmatpush.msra.mxu0 0.0
  %2541 = vmatpush.msra.mxu0 0.0
  %2542 = vmatpush.msra.mxu0 0.0
  %2543 = vmatpush.msra.mxu0 0.0
  %2544 = vmatpush.msra.mxu0 0.0
  %2545 = vmatpush.msra.mxu0 0.0
  %2546 = vmatpush.msra.mxu0 0.0
  %2547 = vmatpush.msra.mxu0 0.0
  %2548 = vmatpush.msra.mxu0 0.0
  %2549 = vmatpush.msra.mxu0 0.0
  %2550 = vmatpush.msra.mxu0 0.0
  %2551 = vmatpush.msra.mxu0 0.0
  %2552 = vmatpush.msra.mxu0 0.0
  %2553 = vmatpush.msra.mxu0 0.0
  %2554 = vmatpush.msra.mxu0 0.0
  %v2555 = vand.u32 %v43, 4294901760
  %2556 = vmatpush.msra.mxu0 %v2555
  %v2557 = vand.u32 %v2163, 4294901760
  %v2558 = vsub.f32 %v2163, %v2557
  %v2559 = vand.u32 %v2558, 4294901760
  %2560 = vmatmul.f32.gmra.mxu0 %v2559
  %v2561 = vpop.f32.mrf.mxu0
  %v2562 = vadd.f32 %v2523, %v2561
  %v2563 = vand.u32 %v2166, 4294901760
  %v2564 = vsub.f32 %v2166, %v2563
  %v2565 = vand.u32 %v2564, 4294901760
  %2566 = vmatmul.f32.gmra.mxu0 %v2565
  %v2567 = vpop.f32.mrf.mxu0
  %v2568 = vadd.f32 %v2528, %v2567
  %v2569 = vand.u32 %v2169, 4294901760
  %v2570 = vsub.f32 %v2169, %v2569
  %v2571 = vand.u32 %v2570, 4294901760
  %2572 = vmatmul.f32.gmra.mxu0 %v2571
  %v2573 = vpop.f32.mrf.mxu0
  %v2574 = vadd.f32 %v2533, %v2573
  %v2575 = vand.u32 %v2172, 4294901760
  %v2576 = vsub.f32 %v2172, %v2575
  %v2577 = vand.u32 %v2576, 4294901760
  %2578 = vmatmul.f32.gmra.mxu0 %v2577
  %v2579 = vpop.f32.mrf.mxu0
  %v2580 = vadd.f32 %v2538, %v2579
  %2581 = vdwg.mxu0
  %2582 = vmatpush.msra.mxu0 0.0
  %2583 = vmatpush.msra.mxu0 0.0
  %2584 = vmatpush.msra.mxu0 0.0
  %2585 = vmatpush.msra.mxu0 0.0
  %2586 = vmatpush.msra.mxu0 0.0
  %2587 = vmatpush.msra.mxu0 0.0
  %2588 = vmatpush.msra.mxu0 0.0
  %2589 = vmatpush.msra.mxu0 0.0
  %2590 = vmatpush.msra.mxu0 0.0
  %2591 = vmatpush.msra.mxu0 0.0
  %2592 = vmatpush.msra.mxu0 0.0
  %2593 = vmatpush.msra.mxu0 0.0
  %2594 = vmatpush.msra.mxu0 0.0
  %2595 = vmatpush.msra.mxu0 0.0
  %2596 = vmatpush.msra.mxu0 0.0
  %v2597 = vand.u32 %v43, 4294901760
  %v2598 = vsub.f32 %v43, %v2597
  %v2599 = vand.u32 %v2598, 4294901760
  %2600 = vmatpush.msra.mxu0 %v2599
  %v2601 = vand.u32 %v2163, 4294901760
  %2602 = vmatmul.f32.gmra.mxu0 %v2601
  %v2603 = vpop.f32.mrf.mxu0
  %v2604 = vadd.f32 %v2562, %v2603
  %v2605 = vand.u32 %v2166, 4294901760
  %2606 = vmatmul.f32.gmra.mxu0 %v2605
  %v2607 = vpop.f32.mrf.mxu0
  %v2608 = vadd.f32 %v2568, %v2607
  %v2609 = vand.u32 %v2169, 4294901760
  %2610 = vmatmul.f32.gmra.mxu0 %v2609
  %v2611 = vpop.f32.mrf.mxu0
  %v2612 = vadd.f32 %v2574, %v2611
  %v2613 = vand.u32 %v2172, 4294901760
  %2614 = vmatmul.f32.gmra.mxu0 %v2613
  %v2615 = vpop.f32.mrf.mxu0
  %v2616 = vadd.f32 %v2580, %v2615
  %2617 = vdwg.mxu0
  %2618 = vmatpush.msra.mxu0 0.0
  %2619 = vmatpush.msra.mxu0 0.0
  %2620 = vmatpush.msra.mxu0 0.0
  %2621 = vmatpush.msra.mxu0 0.0
  %2622 = vmatpush.msra.mxu0 0.0
  %2623 = vmatpush.msra.mxu0 0.0
  %2624 = vmatpush.msra.mxu0 0.0
  %2625 = vmatpush.msra.mxu0 0.0
  %2626 = vmatpush.msra.mxu0 0.0
  %2627 = vmatpush.msra.mxu0 0.0
  %2628 = vmatpush.msra.mxu0 0.0
  %2629 = vmatpush.msra.mxu0 0.0
  %2630 = vmatpush.msra.mxu0 0.0
  %2631 = vmatpush.msra.mxu0 0.0
  %2632 = vmatpush.msra.mxu0 0.0
  %v2633 = vand.u32 %v43, 4294901760
  %2634 = vmatpush.msra.mxu0 %v2633
  %v2635 = vand.u32 %v2163, 4294901760
  %2636 = vmatmul.f32.gmra.mxu0 %v2635
  %v2637 = vpop.f32.mrf.mxu0
  %v2638 = vadd.f32 %v2604, %v2637
  %v2639 = vand.u32 %v2166, 4294901760
  %2640 = vmatmul.f32.gmra.mxu0 %v2639
  %v2641 = vpop.f32.mrf.mxu0
  %v2642 = vadd.f32 %v2608, %v2641
  %v2643 = vand.u32 %v2169, 4294901760
  %2644 = vmatmul.f32.gmra.mxu0 %v2643
  %v2645 = vpop.f32.mrf.mxu0
  %v2646 = vadd.f32 %v2612, %v2645
  %v2647 = vand.u32 %v2172, 4294901760
  %2648 = vmatmul.f32.gmra.mxu0 %v2647
  %v2649 = vpop.f32.mrf.mxu0
  %v2650 = vadd.f32 %v2616, %v2649
  %2651 = vdwg.mxu0
  %v2652 = vld [vmem:[%s5] sm:$0xff]
  %v2653 = vld [vmem:[%s5 + $0x8] sm:$0xff]
  %v2654 = vld [vmem:[%s5 + $0x10] sm:$0xff]
  %v2655 = vld [vmem:[%s5 + $0x18] sm:$0xff]
  %v2657 = vsel %vm2161, %v2652, 0
  %v2660 = vsel %vm2161, %v2653, 0
  %v2663 = vsel %vm2161, %v2654, 0
  %v2666 = vsel %vm2161, %v2655, 0
  %2668 = vmatpush.msra.mxu0 0.0
  %2669 = vmatpush.msra.mxu0 0.0
  %2670 = vmatpush.msra.mxu0 0.0
  %2671 = vmatpush.msra.mxu0 0.0
  %2672 = vmatpush.msra.mxu0 0.0
  %2673 = vmatpush.msra.mxu0 0.0
  %2674 = vmatpush.msra.mxu0 0.0
  %2675 = vmatpush.msra.mxu0 0.0
  %2676 = vmatpush.msra.mxu0 0.0
  %2677 = vmatpush.msra.mxu0 0.0
  %2678 = vmatpush.msra.mxu0 0.0
  %2679 = vmatpush.msra.mxu0 0.0
  %2680 = vmatpush.msra.mxu0 0.0
  %2681 = vmatpush.msra.mxu0 0.0
  %2682 = vmatpush.msra.mxu0 0.0
  %v2683 = vand.u32 %v42, 4294901760
  %2684 = vmatpush.msra.mxu0 %v2683
  %v2685 = vand.u32 %v2657, 4294901760
  %v2686 = vsub.f32 %v2657, %v2685
  %v2687 = vand.u32 %v2686, 4294901760
  %v2688 = vsub.f32 %v2686, %v2687
  %v2689 = vand.u32 %v2688, 4294901760
  %2690 = vmatmul.f32.gmra.mxu0 %v2689
  %v2691 = vpop.f32.mrf.mxu0
  %v2692 = vadd.f32 0.0, %v2691
  %v2693 = vand.u32 %v2660, 4294901760
  %v2694 = vsub.f32 %v2660, %v2693
  %v2695 = vand.u32 %v2694, 4294901760
  %v2696 = vsub.f32 %v2694, %v2695
  %v2697 = vand.u32 %v2696, 4294901760
  %2698 = vmatmul.f32.gmra.mxu0 %v2697
  %v2699 = vpop.f32.mrf.mxu0
  %v2700 = vadd.f32 0.0, %v2699
  %v2701 = vand.u32 %v2663, 4294901760
  %v2702 = vsub.f32 %v2663, %v2701
  %v2703 = vand.u32 %v2702, 4294901760
  %v2704 = vsub.f32 %v2702, %v2703
  %v2705 = vand.u32 %v2704, 4294901760
  %2706 = vmatmul.f32.gmra.mxu0 %v2705
  %v2707 = vpop.f32.mrf.mxu0
  %v2708 = vadd.f32 0.0, %v2707
  %v2709 = vand.u32 %v2666, 4294901760
  %v2710 = vsub.f32 %v2666, %v2709
  %v2711 = vand.u32 %v2710, 4294901760
  %v2712 = vsub.f32 %v2710, %v2711
  %v2713 = vand.u32 %v2712, 4294901760
  %2714 = vmatmul.f32.gmra.mxu0 %v2713
  %v2715 = vpop.f32.mrf.mxu0
  %v2716 = vadd.f32 0.0, %v2715
  %2717 = vdwg.mxu0
  %2718 = vmatpush.msra.mxu0 0.0
  %2719 = vmatpush.msra.mxu0 0.0
  %2720 = vmatpush.msra.mxu0 0.0
  %2721 = vmatpush.msra.mxu0 0.0
  %2722 = vmatpush.msra.mxu0 0.0
  %2723 = vmatpush.msra.mxu0 0.0
  %2724 = vmatpush.msra.mxu0 0.0
  %2725 = vmatpush.msra.mxu0 0.0
  %2726 = vmatpush.msra.mxu0 0.0
  %2727 = vmatpush.msra.mxu0 0.0
  %2728 = vmatpush.msra.mxu0 0.0
  %2729 = vmatpush.msra.mxu0 0.0
  %2730 = vmatpush.msra.mxu0 0.0
  %2731 = vmatpush.msra.mxu0 0.0
  %2732 = vmatpush.msra.mxu0 0.0
  %v2733 = vand.u32 %v42, 4294901760
  %v2734 = vsub.f32 %v42, %v2733
  %v2735 = vand.u32 %v2734, 4294901760
  %v2736 = vsub.f32 %v2734, %v2735
  %v2737 = vand.u32 %v2736, 4294901760
  %2738 = vmatpush.msra.mxu0 %v2737
  %v2739 = vand.u32 %v2657, 4294901760
  %2740 = vmatmul.f32.gmra.mxu0 %v2739
  %v2741 = vpop.f32.mrf.mxu0
  %v2742 = vadd.f32 %v2692, %v2741
  %v2743 = vand.u32 %v2660, 4294901760
  %2744 = vmatmul.f32.gmra.mxu0 %v2743
  %v2745 = vpop.f32.mrf.mxu0
  %v2746 = vadd.f32 %v2700, %v2745
  %v2747 = vand.u32 %v2663, 4294901760
  %2748 = vmatmul.f32.gmra.mxu0 %v2747
  %v2749 = vpop.f32.mrf.mxu0
  %v2750 = vadd.f32 %v2708, %v2749
  %v2751 = vand.u32 %v2666, 4294901760
  %2752 = vmatmul.f32.gmra.mxu0 %v2751
  %v2753 = vpop.f32.mrf.mxu0
  %v2754 = vadd.f32 %v2716, %v2753
  %2755 = vdwg.mxu0
  %2756 = vmatpush.msra.mxu0 0.0
  %2757 = vmatpush.msra.mxu0 0.0
  %2758 = vmatpush.msra.mxu0 0.0
  %2759 = vmatpush.msra.mxu0 0.0
  %2760 = vmatpush.msra.mxu0 0.0
  %2761 = vmatpush.msra.mxu0 0.0
  %2762 = vmatpush.msra.mxu0 0.0
  %2763 = vmatpush.msra.mxu0 0.0
  %2764 = vmatpush.msra.mxu0 0.0
  %2765 = vmatpush.msra.mxu0 0.0
  %2766 = vmatpush.msra.mxu0 0.0
  %2767 = vmatpush.msra.mxu0 0.0
  %2768 = vmatpush.msra.mxu0 0.0
  %2769 = vmatpush.msra.mxu0 0.0
  %2770 = vmatpush.msra.mxu0 0.0
  %v2771 = vand.u32 %v42, 4294901760
  %v2772 = vsub.f32 %v42, %v2771
  %2773 = vmatpush.msra.mxu0 %v2772
  %v2774 = vand.u32 %v2657, 4294901760
  %v2775 = vsub.f32 %v2657, %v2774
  %2776 = vmatmul.f32.gmra.mxu0 %v2775
  %v2777 = vpop.f32.mrf.mxu0
  %v2778 = vadd.f32 %v2742, %v2777
  %v2779 = vand.u32 %v2660, 4294901760
  %v2780 = vsub.f32 %v2660, %v2779
  %2781 = vmatmul.f32.gmra.mxu0 %v2780
  %v2782 = vpop.f32.mrf.mxu0
  %v2783 = vadd.f32 %v2746, %v2782
  %v2784 = vand.u32 %v2663, 4294901760
  %v2785 = vsub.f32 %v2663, %v2784
  %2786 = vmatmul.f32.gmra.mxu0 %v2785
  %v2787 = vpop.f32.mrf.mxu0
  %v2788 = vadd.f32 %v2750, %v2787
  %v2789 = vand.u32 %v2666, 4294901760
  %v2790 = vsub.f32 %v2666, %v2789
  %2791 = vmatmul.f32.gmra.mxu0 %v2790
  %v2792 = vpop.f32.mrf.mxu0
  %v2793 = vadd.f32 %v2754, %v2792
  %2794 = vdwg.mxu0
  %2795 = vmatpush.msra.mxu0 0.0
  %2796 = vmatpush.msra.mxu0 0.0
  %2797 = vmatpush.msra.mxu0 0.0
  %2798 = vmatpush.msra.mxu0 0.0
  %2799 = vmatpush.msra.mxu0 0.0
  %2800 = vmatpush.msra.mxu0 0.0
  %2801 = vmatpush.msra.mxu0 0.0
  %2802 = vmatpush.msra.mxu0 0.0
  %2803 = vmatpush.msra.mxu0 0.0
  %2804 = vmatpush.msra.mxu0 0.0
  %2805 = vmatpush.msra.mxu0 0.0
  %2806 = vmatpush.msra.mxu0 0.0
  %2807 = vmatpush.msra.mxu0 0.0
  %2808 = vmatpush.msra.mxu0 0.0
  %2809 = vmatpush.msra.mxu0 0.0
  %v2810 = vand.u32 %v42, 4294901760
  %2811 = vmatpush.msra.mxu0 %v2810
  %v2812 = vand.u32 %v2657, 4294901760
  %v2813 = vsub.f32 %v2657, %v2812
  %v2814 = vand.u32 %v2813, 4294901760
  %2815 = vmatmul.f32.gmra.mxu0 %v2814
  %v2816 = vpop.f32.mrf.mxu0
  %v2817 = vadd.f32 %v2778, %v2816
  %v2818 = vand.u32 %v2660, 4294901760
  %v2819 = vsub.f32 %v2660, %v2818
  %v2820 = vand.u32 %v2819, 4294901760
  %2821 = vmatmul.f32.gmra.mxu0 %v2820
  %v2822 = vpop.f32.mrf.mxu0
  %v2823 = vadd.f32 %v2783, %v2822
  %v2824 = vand.u32 %v2663, 4294901760
  %v2825 = vsub.f32 %v2663, %v2824
  %v2826 = vand.u32 %v2825, 4294901760
  %2827 = vmatmul.f32.gmra.mxu0 %v2826
  %v2828 = vpop.f32.mrf.mxu0
  %v2829 = vadd.f32 %v2788, %v2828
  %v2830 = vand.u32 %v2666, 4294901760
  %v2831 = vsub.f32 %v2666, %v2830
  %v2832 = vand.u32 %v2831, 4294901760
  %2833 = vmatmul.f32.gmra.mxu0 %v2832
  %v2834 = vpop.f32.mrf.mxu0
  %v2835 = vadd.f32 %v2793, %v2834
  %2836 = vdwg.mxu0
  %2837 = vmatpush.msra.mxu0 0.0
  %2838 = vmatpush.msra.mxu0 0.0
  %2839 = vmatpush.msra.mxu0 0.0
  %2840 = vmatpush.msra.mxu0 0.0
  %2841 = vmatpush.msra.mxu0 0.0
  %2842 = vmatpush.msra.mxu0 0.0
  %2843 = vmatpush.msra.mxu0 0.0
  %2844 = vmatpush.msra.mxu0 0.0
  %2845 = vmatpush.msra.mxu0 0.0
  %2846 = vmatpush.msra.mxu0 0.0
  %2847 = vmatpush.msra.mxu0 0.0
  %2848 = vmatpush.msra.mxu0 0.0
  %2849 = vmatpush.msra.mxu0 0.0
  %2850 = vmatpush.msra.mxu0 0.0
  %2851 = vmatpush.msra.mxu0 0.0
  %v2852 = vand.u32 %v42, 4294901760
  %v2853 = vsub.f32 %v42, %v2852
  %v2854 = vand.u32 %v2853, 4294901760
  %2855 = vmatpush.msra.mxu0 %v2854
  %v2856 = vand.u32 %v2657, 4294901760
  %2857 = vmatmul.f32.gmra.mxu0 %v2856
  %v2858 = vpop.f32.mrf.mxu0
  %v2859 = vadd.f32 %v2817, %v2858
  %v2860 = vand.u32 %v2660, 4294901760
  %2861 = vmatmul.f32.gmra.mxu0 %v2860
  %v2862 = vpop.f32.mrf.mxu0
  %v2863 = vadd.f32 %v2823, %v2862
  %v2864 = vand.u32 %v2663, 4294901760
  %2865 = vmatmul.f32.gmra.mxu0 %v2864
  %v2866 = vpop.f32.mrf.mxu0
  %v2867 = vadd.f32 %v2829, %v2866
  %v2868 = vand.u32 %v2666, 4294901760
  %2869 = vmatmul.f32.gmra.mxu0 %v2868
  %v2870 = vpop.f32.mrf.mxu0
  %v2871 = vadd.f32 %v2835, %v2870
  %2872 = vdwg.mxu0
  %2873 = vmatpush.msra.mxu0 0.0
  %2874 = vmatpush.msra.mxu0 0.0
  %2875 = vmatpush.msra.mxu0 0.0
  %2876 = vmatpush.msra.mxu0 0.0
  %2877 = vmatpush.msra.mxu0 0.0
  %2878 = vmatpush.msra.mxu0 0.0
  %2879 = vmatpush.msra.mxu0 0.0
  %2880 = vmatpush.msra.mxu0 0.0
  %2881 = vmatpush.msra.mxu0 0.0
  %2882 = vmatpush.msra.mxu0 0.0
  %2883 = vmatpush.msra.mxu0 0.0
  %2884 = vmatpush.msra.mxu0 0.0
  %2885 = vmatpush.msra.mxu0 0.0
  %2886 = vmatpush.msra.mxu0 0.0
  %2887 = vmatpush.msra.mxu0 0.0
  %v2888 = vand.u32 %v42, 4294901760
  %2889 = vmatpush.msra.mxu0 %v2888
  %v2890 = vand.u32 %v2657, 4294901760
  %2891 = vmatmul.f32.gmra.mxu0 %v2890
  %v2892 = vpop.f32.mrf.mxu0
  %v2893 = vadd.f32 %v2859, %v2892
  %v2894 = vand.u32 %v2660, 4294901760
  %2895 = vmatmul.f32.gmra.mxu0 %v2894
  %v2896 = vpop.f32.mrf.mxu0
  %v2897 = vadd.f32 %v2863, %v2896
  %v2898 = vand.u32 %v2663, 4294901760
  %2899 = vmatmul.f32.gmra.mxu0 %v2898
  %v2900 = vpop.f32.mrf.mxu0
  %v2901 = vadd.f32 %v2867, %v2900
  %v2902 = vand.u32 %v2666, 4294901760
  %2903 = vmatmul.f32.gmra.mxu0 %v2902
  %v2904 = vpop.f32.mrf.mxu0
  %v2905 = vadd.f32 %v2871, %v2904
  %2906 = vdwg.mxu0
  %2907 = vmatpush.msra.mxu0 0.0
  %2908 = vmatpush.msra.mxu0 0.0
  %2909 = vmatpush.msra.mxu0 0.0
  %2910 = vmatpush.msra.mxu0 0.0
  %2911 = vmatpush.msra.mxu0 0.0
  %2912 = vmatpush.msra.mxu0 0.0
  %2913 = vmatpush.msra.mxu0 0.0
  %2914 = vmatpush.msra.mxu0 0.0
  %2915 = vmatpush.msra.mxu0 0.0
  %2916 = vmatpush.msra.mxu0 0.0
  %2917 = vmatpush.msra.mxu0 0.0
  %2918 = vmatpush.msra.mxu0 0.0
  %2919 = vmatpush.msra.mxu0 0.0
  %2920 = vmatpush.msra.mxu0 0.0
  %2921 = vmatpush.msra.mxu0 0.0
  %v2922 = vand.u32 %v43, 4294901760
  %2923 = vmatpush.msra.mxu0 %v2922
  %v2924 = vand.u32 %v2657, 4294901760
  %v2925 = vsub.f32 %v2657, %v2924
  %v2926 = vand.u32 %v2925, 4294901760
  %v2927 = vsub.f32 %v2925, %v2926
  %v2928 = vand.u32 %v2927, 4294901760
  %2929 = vmatmul.f32.gmra.mxu0 %v2928
  %v2930 = vpop.f32.mrf.mxu0
  %v2931 = vadd.f32 0.0, %v2930
  %v2932 = vand.u32 %v2660, 4294901760
  %v2933 = vsub.f32 %v2660, %v2932
  %v2934 = vand.u32 %v2933, 4294901760
  %v2935 = vsub.f32 %v2933, %v2934
  %v2936 = vand.u32 %v2935, 4294901760
  %2937 = vmatmul.f32.gmra.mxu0 %v2936
  %v2938 = vpop.f32.mrf.mxu0
  %v2939 = vadd.f32 0.0, %v2938
  %v2940 = vand.u32 %v2663, 4294901760
  %v2941 = vsub.f32 %v2663, %v2940
  %v2942 = vand.u32 %v2941, 4294901760
  %v2943 = vsub.f32 %v2941, %v2942
  %v2944 = vand.u32 %v2943, 4294901760
  %2945 = vmatmul.f32.gmra.mxu0 %v2944
  %v2946 = vpop.f32.mrf.mxu0
  %v2947 = vadd.f32 0.0, %v2946
  %v2948 = vand.u32 %v2666, 4294901760
  %v2949 = vsub.f32 %v2666, %v2948
  %v2950 = vand.u32 %v2949, 4294901760
  %v2951 = vsub.f32 %v2949, %v2950
  %v2952 = vand.u32 %v2951, 4294901760
  %2953 = vmatmul.f32.gmra.mxu0 %v2952
  %v2954 = vpop.f32.mrf.mxu0
  %v2955 = vadd.f32 0.0, %v2954
  %2956 = vdwg.mxu0
  %2957 = vmatpush.msra.mxu0 0.0
  %2958 = vmatpush.msra.mxu0 0.0
  %2959 = vmatpush.msra.mxu0 0.0
  %2960 = vmatpush.msra.mxu0 0.0
  %2961 = vmatpush.msra.mxu0 0.0
  %2962 = vmatpush.msra.mxu0 0.0
  %2963 = vmatpush.msra.mxu0 0.0
  %2964 = vmatpush.msra.mxu0 0.0
  %2965 = vmatpush.msra.mxu0 0.0
  %2966 = vmatpush.msra.mxu0 0.0
  %2967 = vmatpush.msra.mxu0 0.0
  %2968 = vmatpush.msra.mxu0 0.0
  %2969 = vmatpush.msra.mxu0 0.0
  %2970 = vmatpush.msra.mxu0 0.0
  %2971 = vmatpush.msra.mxu0 0.0
  %v2972 = vand.u32 %v43, 4294901760
  %v2973 = vsub.f32 %v43, %v2972
  %v2974 = vand.u32 %v2973, 4294901760
  %v2975 = vsub.f32 %v2973, %v2974
  %v2976 = vand.u32 %v2975, 4294901760
  %2977 = vmatpush.msra.mxu0 %v2976
  %v2978 = vand.u32 %v2657, 4294901760
  %2979 = vmatmul.f32.gmra.mxu0 %v2978
  %v2980 = vpop.f32.mrf.mxu0
  %v2981 = vadd.f32 %v2931, %v2980
  %v2982 = vand.u32 %v2660, 4294901760
  %2983 = vmatmul.f32.gmra.mxu0 %v2982
  %v2984 = vpop.f32.mrf.mxu0
  %v2985 = vadd.f32 %v2939, %v2984
  %v2986 = vand.u32 %v2663, 4294901760
  %2987 = vmatmul.f32.gmra.mxu0 %v2986
  %v2988 = vpop.f32.mrf.mxu0
  %v2989 = vadd.f32 %v2947, %v2988
  %v2990 = vand.u32 %v2666, 4294901760
  %2991 = vmatmul.f32.gmra.mxu0 %v2990
  %v2992 = vpop.f32.mrf.mxu0
  %v2993 = vadd.f32 %v2955, %v2992
  %2994 = vdwg.mxu0
  %2995 = vmatpush.msra.mxu0 0.0
  %2996 = vmatpush.msra.mxu0 0.0
  %2997 = vmatpush.msra.mxu0 0.0
  %2998 = vmatpush.msra.mxu0 0.0
  %2999 = vmatpush.msra.mxu0 0.0
  %3000 = vmatpush.msra.mxu0 0.0
  %3001 = vmatpush.msra.mxu0 0.0
  %3002 = vmatpush.msra.mxu0 0.0
  %3003 = vmatpush.msra.mxu0 0.0
  %3004 = vmatpush.msra.mxu0 0.0
  %3005 = vmatpush.msra.mxu0 0.0
  %3006 = vmatpush.msra.mxu0 0.0
  %3007 = vmatpush.msra.mxu0 0.0
  %3008 = vmatpush.msra.mxu0 0.0
  %3009 = vmatpush.msra.mxu0 0.0
  %v3010 = vand.u32 %v43, 4294901760
  %v3011 = vsub.f32 %v43, %v3010
  %3012 = vmatpush.msra.mxu0 %v3011
  %v3013 = vand.u32 %v2657, 4294901760
  %v3014 = vsub.f32 %v2657, %v3013
  %3015 = vmatmul.f32.gmra.mxu0 %v3014
  %v3016 = vpop.f32.mrf.mxu0
  %v3017 = vadd.f32 %v2981, %v3016
  %v3018 = vand.u32 %v2660, 4294901760
  %v3019 = vsub.f32 %v2660, %v3018
  %3020 = vmatmul.f32.gmra.mxu0 %v3019
  %v3021 = vpop.f32.mrf.mxu0
  %v3022 = vadd.f32 %v2985, %v3021
  %v3023 = vand.u32 %v2663, 4294901760
  %v3024 = vsub.f32 %v2663, %v3023
  %3025 = vmatmul.f32.gmra.mxu0 %v3024
  %v3026 = vpop.f32.mrf.mxu0
  %v3027 = vadd.f32 %v2989, %v3026
  %v3028 = vand.u32 %v2666, 4294901760
  %v3029 = vsub.f32 %v2666, %v3028
  %3030 = vmatmul.f32.gmra.mxu0 %v3029
  %v3031 = vpop.f32.mrf.mxu0
  %v3032 = vadd.f32 %v2993, %v3031
  %3033 = vdwg.mxu0
  %3034 = vmatpush.msra.mxu0 0.0
  %3035 = vmatpush.msra.mxu0 0.0
  %3036 = vmatpush.msra.mxu0 0.0
  %3037 = vmatpush.msra.mxu0 0.0
  %3038 = vmatpush.msra.mxu0 0.0
  %3039 = vmatpush.msra.mxu0 0.0
  %3040 = vmatpush.msra.mxu0 0.0
  %3041 = vmatpush.msra.mxu0 0.0
  %3042 = vmatpush.msra.mxu0 0.0
  %3043 = vmatpush.msra.mxu0 0.0
  %3044 = vmatpush.msra.mxu0 0.0
  %3045 = vmatpush.msra.mxu0 0.0
  %3046 = vmatpush.msra.mxu0 0.0
  %3047 = vmatpush.msra.mxu0 0.0
  %3048 = vmatpush.msra.mxu0 0.0
  %v3049 = vand.u32 %v43, 4294901760
  %3050 = vmatpush.msra.mxu0 %v3049
  %v3051 = vand.u32 %v2657, 4294901760
  %v3052 = vsub.f32 %v2657, %v3051
  %v3053 = vand.u32 %v3052, 4294901760
  %3054 = vmatmul.f32.gmra.mxu0 %v3053
  %v3055 = vpop.f32.mrf.mxu0
  %v3056 = vadd.f32 %v3017, %v3055
  %v3057 = vand.u32 %v2660, 4294901760
  %v3058 = vsub.f32 %v2660, %v3057
  %v3059 = vand.u32 %v3058, 4294901760
  %3060 = vmatmul.f32.gmra.mxu0 %v3059
  %v3061 = vpop.f32.mrf.mxu0
  %v3062 = vadd.f32 %v3022, %v3061
  %v3063 = vand.u32 %v2663, 4294901760
  %v3064 = vsub.f32 %v2663, %v3063
  %v3065 = vand.u32 %v3064, 4294901760
  %3066 = vmatmul.f32.gmra.mxu0 %v3065
  %v3067 = vpop.f32.mrf.mxu0
  %v3068 = vadd.f32 %v3027, %v3067
  %v3069 = vand.u32 %v2666, 4294901760
  %v3070 = vsub.f32 %v2666, %v3069
  %v3071 = vand.u32 %v3070, 4294901760
  %3072 = vmatmul.f32.gmra.mxu0 %v3071
  %v3073 = vpop.f32.mrf.mxu0
  %v3074 = vadd.f32 %v3032, %v3073
  %3075 = vdwg.mxu0
  %3076 = vmatpush.msra.mxu0 0.0
  %3077 = vmatpush.msra.mxu0 0.0
  %3078 = vmatpush.msra.mxu0 0.0
  %3079 = vmatpush.msra.mxu0 0.0
  %3080 = vmatpush.msra.mxu0 0.0
  %3081 = vmatpush.msra.mxu0 0.0
  %3082 = vmatpush.msra.mxu0 0.0
  %3083 = vmatpush.msra.mxu0 0.0
  %3084 = vmatpush.msra.mxu0 0.0
  %3085 = vmatpush.msra.mxu0 0.0
  %3086 = vmatpush.msra.mxu0 0.0
  %3087 = vmatpush.msra.mxu0 0.0
  %3088 = vmatpush.msra.mxu0 0.0
  %3089 = vmatpush.msra.mxu0 0.0
  %3090 = vmatpush.msra.mxu0 0.0
  %v3091 = vand.u32 %v43, 4294901760
  %v3092 = vsub.f32 %v43, %v3091
  %v3093 = vand.u32 %v3092, 4294901760
  %3094 = vmatpush.msra.mxu0 %v3093
  %v3095 = vand.u32 %v2657, 4294901760
  %3096 = vmatmul.f32.gmra.mxu0 %v3095
  %v3097 = vpop.f32.mrf.mxu0
  %v3098 = vadd.f32 %v3056, %v3097
  %v3099 = vand.u32 %v2660, 4294901760
  %3100 = vmatmul.f32.gmra.mxu0 %v3099
  %v3101 = vpop.f32.mrf.mxu0
  %v3102 = vadd.f32 %v3062, %v3101
  %v3103 = vand.u32 %v2663, 4294901760
  %3104 = vmatmul.f32.gmra.mxu0 %v3103
  %v3105 = vpop.f32.mrf.mxu0
  %v3106 = vadd.f32 %v3068, %v3105
  %v3107 = vand.u32 %v2666, 4294901760
  %3108 = vmatmul.f32.gmra.mxu0 %v3107
  %v3109 = vpop.f32.mrf.mxu0
  %v3110 = vadd.f32 %v3074, %v3109
  %3111 = vdwg.mxu0
  %3112 = vmatpush.msra.mxu0 0.0
  %3113 = vmatpush.msra.mxu0 0.0
  %3114 = vmatpush.msra.mxu0 0.0
  %3115 = vmatpush.msra.mxu0 0.0
  %3116 = vmatpush.msra.mxu0 0.0
  %3117 = vmatpush.msra.mxu0 0.0
  %3118 = vmatpush.msra.mxu0 0.0
  %3119 = vmatpush.msra.mxu0 0.0
  %3120 = vmatpush.msra.mxu0 0.0
  %3121 = vmatpush.msra.mxu0 0.0
  %3122 = vmatpush.msra.mxu0 0.0
  %3123 = vmatpush.msra.mxu0 0.0
  %3124 = vmatpush.msra.mxu0 0.0
  %3125 = vmatpush.msra.mxu0 0.0
  %3126 = vmatpush.msra.mxu0 0.0
  %v3127 = vand.u32 %v43, 4294901760
  %3128 = vmatpush.msra.mxu0 %v3127
  %v3129 = vand.u32 %v2657, 4294901760
  %3130 = vmatmul.f32.gmra.mxu0 %v3129
  %v3131 = vpop.f32.mrf.mxu0
  %v3132 = vadd.f32 %v3098, %v3131
  %v3133 = vand.u32 %v2660, 4294901760
  %3134 = vmatmul.f32.gmra.mxu0 %v3133
  %v3135 = vpop.f32.mrf.mxu0
  %v3136 = vadd.f32 %v3102, %v3135
  %v3137 = vand.u32 %v2663, 4294901760
  %3138 = vmatmul.f32.gmra.mxu0 %v3137
  %v3139 = vpop.f32.mrf.mxu0
  %v3140 = vadd.f32 %v3106, %v3139
  %v3141 = vand.u32 %v2666, 4294901760
  %3142 = vmatmul.f32.gmra.mxu0 %v3141
  %v3143 = vpop.f32.mrf.mxu0
  %v3144 = vadd.f32 %v3110, %v3143
  %3145 = vdwg.mxu0
  %v3146 = vmul.f32 %v2893, 0.5
  %v3147 = vmul.f32 %v3132, 0.5
  %v3148 = vmul.f32 %v2897, 0.5
  %v3149 = vmul.f32 %v3136, 0.5
  %v3150 = vmul.f32 %v2901, 0.5
  %v3151 = vmul.f32 %v3140, 0.5
  %v3152 = vmul.f32 %v2905, 0.5
  %v3153 = vmul.f32 %v3144, 0.5
  %v3154 = vadd.f32 %v2399, %v3146
  %v3155 = vadd.f32 %v2638, %v3147
  %v3156 = vadd.f32 %v2403, %v3148
  %v3157 = vadd.f32 %v2642, %v3149
  %v3158 = vadd.f32 %v2407, %v3150
  %v3159 = vadd.f32 %v2646, %v3151
  %v3160 = vadd.f32 %v2411, %v3152
  %v3161 = vadd.f32 %v2650, %v3153
  %v3162 = vsub.f32 %v2399, %v3146
  %v3163 = vsub.f32 %v2638, %v3147
  %v3164 = vsub.f32 %v2403, %v3148
  %v3165 = vsub.f32 %v2642, %v3149
  %v3166 = vsub.f32 %v2407, %v3150
  %v3167 = vsub.f32 %v2646, %v3151
  %v3168 = vsub.f32 %v2411, %v3152
  %v3169 = vsub.f32 %v2650, %v3153
  %v3170 = vmin.f32 %v3162, %v3154
  %v3171 = vmin.f32 %v3163, %v3155
  %v3172 = vmin.f32 %v3164, %v3156
  %v3173 = vmin.f32 %v3165, %v3157
  %v3174 = vmin.f32 %v3166, %v3158
  %v3175 = vmin.f32 %v3167, %v3159
  %v3176 = vmin.f32 %v3168, %v3160
  %v3177 = vmin.f32 %v3169, %v3161
  %v3178 = vmax.f32 %v3162, %v3154
  %v3179 = vmax.f32 %v3163, %v3155
  %v3180 = vmax.f32 %v3164, %v3156
  %v3181 = vmax.f32 %v3165, %v3157
  %v3182 = vmax.f32 %v3166, %v3158
  %v3183 = vmax.f32 %v3167, %v3159
  %v3184 = vmax.f32 %v3168, %v3160
  %v3185 = vmax.f32 %v3169, %v3161
  %v3186 = vsub.f32 %v3178, %v3170
  %v3187 = vsub.f32 %v3179, %v3171
  %v3188 = vsub.f32 %v3180, %v3172
  %v3189 = vsub.f32 %v3181, %v3173
  %v3190 = vsub.f32 %v3182, %v3174
  %v3191 = vsub.f32 %v3183, %v3175
  %v3192 = vsub.f32 %v3184, %v3176
  %v3193 = vsub.f32 %v3185, %v3177
  %v3194 = vadd.f32 %v3186, 1.0
  %v3195 = vadd.f32 %v3187, 1.0
  %v3196 = vadd.f32 %v3188, 1.0
  %v3197 = vadd.f32 %v3189, 1.0
  %v3198 = vadd.f32 %v3190, 1.0
  %v3199 = vadd.f32 %v3191, 1.0
  %v3200 = vadd.f32 %v3192, 1.0
  %v3201 = vadd.f32 %v3193, 1.0
  %v3202 = vrcp.pop %v3194
  %v3203 = vmul.f32 %v3194, %v3202
  %v3204 = vsub.f32 1.0, %v3203
  %v3205 = vmul.f32 %v3202, %v3204
  %v3206 = vadd.f32 %v3202, %v3205
  %vm3207 = vweird.f32 %v3194
  %vm3208 = vweird.f32 %v3202
  %vm3209 = vmor %vm3207, %vm3208
  %v3210 = vsel %vm3209, %v3202, %v3206
  %v3211 = vand.u32 2147483647, %v3194
  %vm3212 = vcmp.eq.f32.partialorder %v3211, 8.507059e+37
  %v3213 = vand.u32 %v3194, 2147483648
  %v3214 = vor.u32 1.1754944e-38, %v3213
  %v3215 = vsel %vm3212, %v3214, %v3210
  %v3216 = vmul.f32 1.0, %v3215
  %v3217 = vrcp.pop %v3195
  %v3218 = vmul.f32 %v3195, %v3217
  %v3219 = vsub.f32 1.0, %v3218
  %v3220 = vmul.f32 %v3217, %v3219
  %v3221 = vadd.f32 %v3217, %v3220
  %vm3222 = vweird.f32 %v3195
  %vm3223 = vweird.f32 %v3217
  %vm3224 = vmor %vm3222, %vm3223
  %v3225 = vsel %vm3224, %v3217, %v3221
  %v3226 = vand.u32 2147483647, %v3195
  %vm3227 = vcmp.eq.f32.partialorder %v3226, 8.507059e+37
  %v3228 = vand.u32 %v3195, 2147483648
  %v3229 = vor.u32 1.1754944e-38, %v3228
  %v3230 = vsel %vm3227, %v3229, %v3225
  %v3231 = vmul.f32 1.0, %v3230
  %v3232 = vrcp.pop %v3196
  %v3233 = vmul.f32 %v3196, %v3232
  %v3234 = vsub.f32 1.0, %v3233
  %v3235 = vmul.f32 %v3232, %v3234
  %v3236 = vadd.f32 %v3232, %v3235
  %vm3237 = vweird.f32 %v3196
  %vm3238 = vweird.f32 %v3232
  %vm3239 = vmor %vm3237, %vm3238
  %v3240 = vsel %vm3239, %v3232, %v3236
  %v3241 = vand.u32 2147483647, %v3196
  %vm3242 = vcmp.eq.f32.partialorder %v3241, 8.507059e+37
  %v3243 = vand.u32 %v3196, 2147483648
  %v3244 = vor.u32 1.1754944e-38, %v3243
  %v3245 = vsel %vm3242, %v3244, %v3240
  %v3246 = vmul.f32 1.0, %v3245
  %v3247 = vrcp.pop %v3197
  %v3248 = vmul.f32 %v3197, %v3247
  %v3249 = vsub.f32 1.0, %v3248
  %v3250 = vmul.f32 %v3247, %v3249
  %v3251 = vadd.f32 %v3247, %v3250
  %vm3252 = vweird.f32 %v3197
  %vm3253 = vweird.f32 %v3247
  %vm3254 = vmor %vm3252, %vm3253
  %v3255 = vsel %vm3254, %v3247, %v3251
  %v3256 = vand.u32 2147483647, %v3197
  %vm3257 = vcmp.eq.f32.partialorder %v3256, 8.507059e+37
  %v3258 = vand.u32 %v3197, 2147483648
  %v3259 = vor.u32 1.1754944e-38, %v3258
  %v3260 = vsel %vm3257, %v3259, %v3255
  %v3261 = vmul.f32 1.0, %v3260
  %v3262 = vrcp.pop %v3198
  %v3263 = vmul.f32 %v3198, %v3262
  %v3264 = vsub.f32 1.0, %v3263
  %v3265 = vmul.f32 %v3262, %v3264
  %v3266 = vadd.f32 %v3262, %v3265
  %vm3267 = vweird.f32 %v3198
  %vm3268 = vweird.f32 %v3262
  %vm3269 = vmor %vm3267, %vm3268
  %v3270 = vsel %vm3269, %v3262, %v3266
  %v3271 = vand.u32 2147483647, %v3198
  %vm3272 = vcmp.eq.f32.partialorder %v3271, 8.507059e+37
  %v3273 = vand.u32 %v3198, 2147483648
  %v3274 = vor.u32 1.1754944e-38, %v3273
  %v3275 = vsel %vm3272, %v3274, %v3270
  %v3276 = vmul.f32 1.0, %v3275
  %v3277 = vrcp.pop %v3199
  %v3278 = vmul.f32 %v3199, %v3277
  %v3279 = vsub.f32 1.0, %v3278
  %v3280 = vmul.f32 %v3277, %v3279
  %v3281 = vadd.f32 %v3277, %v3280
  %vm3282 = vweird.f32 %v3199
  %vm3283 = vweird.f32 %v3277
  %vm3284 = vmor %vm3282, %vm3283
  %v3285 = vsel %vm3284, %v3277, %v3281
  %v3286 = vand.u32 2147483647, %v3199
  %vm3287 = vcmp.eq.f32.partialorder %v3286, 8.507059e+37
  %v3288 = vand.u32 %v3199, 2147483648
  %v3289 = vor.u32 1.1754944e-38, %v3288
  %v3290 = vsel %vm3287, %v3289, %v3285
  %v3291 = vmul.f32 1.0, %v3290
  %v3292 = vrcp.pop %v3200
  %v3293 = vmul.f32 %v3200, %v3292
  %v3294 = vsub.f32 1.0, %v3293
  %v3295 = vmul.f32 %v3292, %v3294
  %v3296 = vadd.f32 %v3292, %v3295
  %vm3297 = vweird.f32 %v3200
  %vm3298 = vweird.f32 %v3292
  %vm3299 = vmor %vm3297, %vm3298
  %v3300 = vsel %vm3299, %v3292, %v3296
  %v3301 = vand.u32 2147483647, %v3200
  %vm3302 = vcmp.eq.f32.partialorder %v3301, 8.507059e+37
  %v3303 = vand.u32 %v3200, 2147483648
  %v3304 = vor.u32 1.1754944e-38, %v3303
  %v3305 = vsel %vm3302, %v3304, %v3300
  %v3306 = vmul.f32 1.0, %v3305
  %v3307 = vrcp.pop %v3201
  %v3308 = vmul.f32 %v3201, %v3307
  %v3309 = vsub.f32 1.0, %v3308
  %v3310 = vmul.f32 %v3307, %v3309
  %v3311 = vadd.f32 %v3307, %v3310
  %vm3312 = vweird.f32 %v3201
  %vm3313 = vweird.f32 %v3307
  %vm3314 = vmor %vm3312, %vm3313
  %v3315 = vsel %vm3314, %v3307, %v3311
  %v3316 = vand.u32 2147483647, %v3201
  %vm3317 = vcmp.eq.f32.partialorder %v3316, 8.507059e+37
  %v3318 = vand.u32 %v3201, 2147483648
  %v3319 = vor.u32 1.1754944e-38, %v3318
  %v3320 = vsel %vm3317, %v3319, %v3315
  %v3321 = vmul.f32 1.0, %v3320
  %v3322 = vadd.f32 %v3170, %v3178
  %v3323 = vadd.f32 %v3171, %v3179
  %v3324 = vadd.f32 %v3172, %v3180
  %v3325 = vadd.f32 %v3173, %v3181
  %v3326 = vadd.f32 %v3174, %v3182
  %v3327 = vadd.f32 %v3175, %v3183
  %v3328 = vadd.f32 %v3176, %v3184
  %v3329 = vadd.f32 %v3177, %v3185
  %v3330 = vmul.f32 %v3322, 0.5
  %v3331 = vmul.f32 %v3323, 0.5
  %v3332 = vmul.f32 %v3324, 0.5
  %v3333 = vmul.f32 %v3325, 0.5
  %v3334 = vmul.f32 %v3326, 0.5
  %v3335 = vmul.f32 %v3327, 0.5
  %v3336 = vmul.f32 %v3328, 0.5
  %v3337 = vmul.f32 %v3329, 0.5
  %v3338 = vsub.f32 %v2149, %v3330
  %v3339 = vsub.f32 %v2150, %v3331
  %v3340 = vsub.f32 %v2151, %v3332
  %v3341 = vsub.f32 %v2152, %v3333
  %v3342 = vsub.f32 %v2153, %v3334
  %v3343 = vsub.f32 %v2154, %v3335
  %v3344 = vsub.f32 %v2155, %v3336
  %v3345 = vsub.f32 %v2156, %v3337
  %v3346 = vand.u32 2147483647, %v3338
  %v3347 = vand.u32 2147483647, %v3339
  %v3348 = vand.u32 2147483647, %v3340
  %v3349 = vand.u32 2147483647, %v3341
  %v3350 = vand.u32 2147483647, %v3342
  %v3351 = vand.u32 2147483647, %v3343
  %v3352 = vand.u32 2147483647, %v3344
  %v3353 = vand.u32 2147483647, %v3345
  %vm3354 = vcmp.le.f32.partialorder %v3170, %v2149
  %vm3355 = vcmp.le.f32.partialorder %v3171, %v2150
  %vm3356 = vcmp.le.f32.partialorder %v3172, %v2151
  %vm3357 = vcmp.le.f32.partialorder %v3173, %v2152
  %vm3358 = vcmp.le.f32.partialorder %v3174, %v2153
  %vm3359 = vcmp.le.f32.partialorder %v3175, %v2154
  %vm3360 = vcmp.le.f32.partialorder %v3176, %v2155
  %vm3361 = vcmp.le.f32.partialorder %v3177, %v2156
  %vm3362 = vcmp.le.f32.partialorder %v2149, %v3178
  %vm3363 = vcmp.le.f32.partialorder %v2150, %v3179
  %vm3364 = vcmp.le.f32.partialorder %v2151, %v3180
  %vm3365 = vcmp.le.f32.partialorder %v2152, %v3181
  %vm3366 = vcmp.le.f32.partialorder %v2153, %v3182
  %vm3367 = vcmp.le.f32.partialorder %v2154, %v3183
  %vm3368 = vcmp.le.f32.partialorder %v2155, %v3184
  %vm3369 = vcmp.le.f32.partialorder %v2156, %v3185
  %vm3370 = vmand %vm3354, %vm3362
  %vm3371 = vmand %vm3355, %vm3363
  %vm3372 = vmand %vm3356, %vm3364
  %vm3373 = vmand %vm3357, %vm3365
  %vm3374 = vmand %vm3358, %vm3366
  %vm3375 = vmand %vm3359, %vm3367
  %vm3376 = vmand %vm3360, %vm3368
  %vm3377 = vmand %vm3361, %vm3369
  %v3378 = vmul.f32 %v3346, %v3216
  %v3379 = vmul.f32 %v3347, %v3231
  %v3380 = vmul.f32 %v3348, %v3246
  %v3381 = vmul.f32 %v3349, %v3261
  %v3382 = vmul.f32 %v3350, %v3276
  %v3383 = vmul.f32 %v3351, %v3291
  %v3384 = vmul.f32 %v3352, %v3306
  %v3385 = vmul.f32 %v3353, %v3321
  %v3386 = vmul.f32 %v3194, %v3346
  %v3387 = vmul.f32 %v3195, %v3347
  %v3388 = vmul.f32 %v3196, %v3348
  %v3389 = vmul.f32 %v3197, %v3349
  %v3390 = vmul.f32 %v3198, %v3350
  %v3391 = vmul.f32 %v3199, %v3351
  %v3392 = vmul.f32 %v3200, %v3352
  %v3393 = vmul.f32 %v3201, %v3353
  %v3394 = vmul.f32 %v3186, 0.5
  %v3395 = vmul.f32 %v3187, 0.5
  %v3396 = vmul.f32 %v3188, 0.5
  %v3397 = vmul.f32 %v3189, 0.5
  %v3398 = vmul.f32 %v3190, 0.5
  %v3399 = vmul.f32 %v3191, 0.5
  %v3400 = vmul.f32 %v3192, 0.5
  %v3401 = vmul.f32 %v3193, 0.5
  %v3402 = vsub.f32 %v3194, %v3216
  %v3403 = vsub.f32 %v3195, %v3231
  %v3404 = vsub.f32 %v3196, %v3246
  %v3405 = vsub.f32 %v3197, %v3261
  %v3406 = vsub.f32 %v3198, %v3276
  %v3407 = vsub.f32 %v3199, %v3291
  %v3408 = vsub.f32 %v3200, %v3306
  %v3409 = vsub.f32 %v3201, %v3321
  %v3410 = vmul.f32 %v3394, %v3402
  %v3411 = vmul.f32 %v3395, %v3403
  %v3412 = vmul.f32 %v3396, %v3404
  %v3413 = vmul.f32 %v3397, %v3405
  %v3414 = vmul.f32 %v3398, %v3406
  %v3415 = vmul.f32 %v3399, %v3407
  %v3416 = vmul.f32 %v3400, %v3408
  %v3417 = vmul.f32 %v3401, %v3409
  %v3418 = vsub.f32 %v3386, %v3410
  %v3419 = vsub.f32 %v3387, %v3411
  %v3420 = vsub.f32 %v3388, %v3412
  %v3421 = vsub.f32 %v3389, %v3413
  %v3422 = vsub.f32 %v3390, %v3414
  %v3423 = vsub.f32 %v3391, %v3415
  %v3424 = vsub.f32 %v3392, %v3416
  %v3425 = vsub.f32 %v3393, %v3417
  %v3426 = vsel %vm3370, %v3378, %v3418
  %v3427 = vsel %vm3371, %v3379, %v3419
  %v3428 = vsel %vm3372, %v3380, %v3420
  %v3429 = vsel %vm3373, %v3381, %v3421
  %v3430 = vsel %vm3374, %v3382, %v3422
  %v3431 = vsel %vm3375, %v3383, %v3423
  %v3432 = vsel %vm3376, %v3384, %v3424
  %v3433 = vsel %vm3377, %v3385, %v3425
  %v3434 = vand.u32 2147483647, %v3426
  %v3435 = vand.u32 2147483647, %v3427
  %v3436 = vand.u32 2147483647, %v3428
  %v3437 = vand.u32 2147483647, %v3429
  %v3438 = vand.u32 2147483647, %v3430
  %v3439 = vand.u32 2147483647, %v3431
  %v3440 = vand.u32 2147483647, %v3432
  %v3441 = vand.u32 2147483647, %v3433
  %v3442 = vadd.f32 %v3434, %v3436
  %v3443 = vadd.f32 %v3442, %v3438
  %v3444 = vadd.f32 %v3443, %v3440
  %v3445 = vrot.slane %v3444, 4
  %v3446 = vadd.f32 %v3444, %v3445
  %v3447 = vrot.slane %v3446, 2
  %v3448 = vadd.f32 %v3446, %v3447
  %v3449 = vrot.slane %v3448, 1
  %v3450 = vadd.f32 %v3448, %v3449
  %v3451 = vadd.f32 %v3435, %v3437
  %v3452 = vadd.f32 %v3451, %v3439
  %v3453 = vadd.f32 %v3452, %v3441
  %v3454 = vrot.slane %v3453, 4
  %v3455 = vadd.f32 %v3453, %v3454
  %v3456 = vrot.slane %v3455, 2
  %v3457 = vadd.f32 %v3455, %v3456
  %v3458 = vrot.slane %v3457, 1
  %v3459 = vadd.f32 %v3457, %v3458
  %v3460 = vadd.f32 %v3450, 0.0
  %v3461 = vadd.f32 %v3459, 0.0
  %3462 = vmatpush.msra.mxu0 0.0
  %3463 = vmatpush.msra.mxu0 0.0
  %3464 = vmatpush.msra.mxu0 0.0
  %3465 = vmatpush.msra.mxu0 0.0
  %3466 = vmatpush.msra.mxu0 0.0
  %3467 = vmatpush.msra.mxu0 0.0
  %3468 = vmatpush.msra.mxu0 0.0
  %3469 = vmatpush.msra.mxu0 0.0
  %3470 = vmatpush.msra.mxu0 0.0
  %3471 = vmatpush.msra.mxu0 0.0
  %3472 = vmatpush.msra.mxu0 0.0
  %3473 = vmatpush.msra.mxu0 0.0
  %3474 = vmatpush.msra.mxu0 0.0
  %3475 = vmatpush.msra.mxu0 0.0
  %v3476 = vand.u32 %v591, 4294901760
  %3477 = vmatpush.msra.mxu0 %v3476
  %v3478 = vand.u32 %v589, 4294901760
  %3479 = vmatpush.msra.mxu0 %v3478
  %v3480 = vand.u32 %v1634, 4294901760
  %v3481 = vsub.f32 %v1634, %v3480
  %v3482 = vand.u32 %v3481, 4294901760
  %v3483 = vsub.f32 %v3481, %v3482
  %v3484 = vand.u32 %v3483, 4294901760
  %3485 = vmatmul.f32.gmra.mxu0 %v3484
  %v3486 = vpop.f32.mrf.mxu0
  %v3487 = vadd.f32 %v1625, %v3486
  %v3488 = vand.u32 %v1637, 4294901760
  %v3489 = vsub.f32 %v1637, %v3488
  %v3490 = vand.u32 %v3489, 4294901760
  %v3491 = vsub.f32 %v3489, %v3490
  %v3492 = vand.u32 %v3491, 4294901760
  %3493 = vmatmul.f32.gmra.mxu0 %v3492
  %v3494 = vpop.f32.mrf.mxu0
  %v3495 = vadd.f32 %v1627, %v3494
  %v3496 = vand.u32 %v1640, 4294901760
  %v3497 = vsub.f32 %v1640, %v3496
  %v3498 = vand.u32 %v3497, 4294901760
  %v3499 = vsub.f32 %v3497, %v3498
  %v3500 = vand.u32 %v3499, 4294901760
  %3501 = vmatmul.f32.gmra.mxu0 %v3500
  %v3502 = vpop.f32.mrf.mxu0
  %v3503 = vadd.f32 %v1629, %v3502
  %v3504 = vand.u32 %v1643, 4294901760
  %v3505 = vsub.f32 %v1643, %v3504
  %v3506 = vand.u32 %v3505, 4294901760
  %v3507 = vsub.f32 %v3505, %v3506
  %v3508 = vand.u32 %v3507, 4294901760
  %3509 = vmatmul.f32.gmra.mxu0 %v3508
  %v3510 = vpop.f32.mrf.mxu0
  %v3511 = vadd.f32 %v1631, %v3510
  %3512 = vdwg.mxu0
  %3513 = vmatpush.msra.mxu0 0.0
  %3514 = vmatpush.msra.mxu0 0.0
  %3515 = vmatpush.msra.mxu0 0.0
  %3516 = vmatpush.msra.mxu0 0.0
  %3517 = vmatpush.msra.mxu0 0.0
  %3518 = vmatpush.msra.mxu0 0.0
  %3519 = vmatpush.msra.mxu0 0.0
  %3520 = vmatpush.msra.mxu0 0.0
  %3521 = vmatpush.msra.mxu0 0.0
  %3522 = vmatpush.msra.mxu0 0.0
  %3523 = vmatpush.msra.mxu0 0.0
  %3524 = vmatpush.msra.mxu0 0.0
  %3525 = vmatpush.msra.mxu0 0.0
  %3526 = vmatpush.msra.mxu0 0.0
  %v3527 = vand.u32 %v591, 4294901760
  %v3528 = vsub.f32 %v591, %v3527
  %v3529 = vand.u32 %v3528, 4294901760
  %v3530 = vsub.f32 %v3528, %v3529
  %v3531 = vand.u32 %v3530, 4294901760
  %3532 = vmatpush.msra.mxu0 %v3531
  %v3533 = vand.u32 %v589, 4294901760
  %v3534 = vsub.f32 %v589, %v3533
  %v3535 = vand.u32 %v3534, 4294901760
  %v3536 = vsub.f32 %v3534, %v3535
  %v3537 = vand.u32 %v3536, 4294901760
  %3538 = vmatpush.msra.mxu0 %v3537
  %v3539 = vand.u32 %v1634, 4294901760
  %3540 = vmatmul.f32.gmra.mxu0 %v3539
  %v3541 = vpop.f32.mrf.mxu0
  %v3542 = vadd.f32 %v3487, %v3541
  %v3543 = vand.u32 %v1637, 4294901760
  %3544 = vmatmul.f32.gmra.mxu0 %v3543
  %v3545 = vpop.f32.mrf.mxu0
  %v3546 = vadd.f32 %v3495, %v3545
  %v3547 = vand.u32 %v1640, 4294901760
  %3548 = vmatmul.f32.gmra.mxu0 %v3547
  %v3549 = vpop.f32.mrf.mxu0
  %v3550 = vadd.f32 %v3503, %v3549
  %v3551 = vand.u32 %v1643, 4294901760
  %3552 = vmatmul.f32.gmra.mxu0 %v3551
  %v3553 = vpop.f32.mrf.mxu0
  %v3554 = vadd.f32 %v3511, %v3553
  %3555 = vdwg.mxu0
  %3556 = vmatpush.msra.mxu0 0.0
  %3557 = vmatpush.msra.mxu0 0.0
  %3558 = vmatpush.msra.mxu0 0.0
  %3559 = vmatpush.msra.mxu0 0.0
  %3560 = vmatpush.msra.mxu0 0.0
  %3561 = vmatpush.msra.mxu0 0.0
  %3562 = vmatpush.msra.mxu0 0.0
  %3563 = vmatpush.msra.mxu0 0.0
  %3564 = vmatpush.msra.mxu0 0.0
  %3565 = vmatpush.msra.mxu0 0.0
  %3566 = vmatpush.msra.mxu0 0.0
  %3567 = vmatpush.msra.mxu0 0.0
  %3568 = vmatpush.msra.mxu0 0.0
  %3569 = vmatpush.msra.mxu0 0.0
  %v3570 = vand.u32 %v591, 4294901760
  %v3571 = vsub.f32 %v591, %v3570
  %3572 = vmatpush.msra.mxu0 %v3571
  %v3573 = vand.u32 %v589, 4294901760
  %v3574 = vsub.f32 %v589, %v3573
  %3575 = vmatpush.msra.mxu0 %v3574
  %v3576 = vand.u32 %v1634, 4294901760
  %v3577 = vsub.f32 %v1634, %v3576
  %3578 = vmatmul.f32.gmra.mxu0 %v3577
  %v3579 = vpop.f32.mrf.mxu0
  %v3580 = vadd.f32 %v3542, %v3579
  %v3581 = vand.u32 %v1637, 4294901760
  %v3582 = vsub.f32 %v1637, %v3581
  %3583 = vmatmul.f32.gmra.mxu0 %v3582
  %v3584 = vpop.f32.mrf.mxu0
  %v3585 = vadd.f32 %v3546, %v3584
  %v3586 = vand.u32 %v1640, 4294901760
  %v3587 = vsub.f32 %v1640, %v3586
  %3588 = vmatmul.f32.gmra.mxu0 %v3587
  %v3589 = vpop.f32.mrf.mxu0
  %v3590 = vadd.f32 %v3550, %v3589
  %v3591 = vand.u32 %v1643, 4294901760
  %v3592 = vsub.f32 %v1643, %v3591
  %3593 = vmatmul.f32.gmra.mxu0 %v3592
  %v3594 = vpop.f32.mrf.mxu0
  %v3595 = vadd.f32 %v3554, %v3594
  %3596 = vdwg.mxu0
  %3597 = vmatpush.msra.mxu0 0.0
  %3598 = vmatpush.msra.mxu0 0.0
  %3599 = vmatpush.msra.mxu0 0.0
  %3600 = vmatpush.msra.mxu0 0.0
  %3601 = vmatpush.msra.mxu0 0.0
  %3602 = vmatpush.msra.mxu0 0.0
  %3603 = vmatpush.msra.mxu0 0.0
  %3604 = vmatpush.msra.mxu0 0.0
  %3605 = vmatpush.msra.mxu0 0.0
  %3606 = vmatpush.msra.mxu0 0.0
  %3607 = vmatpush.msra.mxu0 0.0
  %3608 = vmatpush.msra.mxu0 0.0
  %3609 = vmatpush.msra.mxu0 0.0
  %3610 = vmatpush.msra.mxu0 0.0
  %v3611 = vand.u32 %v591, 4294901760
  %3612 = vmatpush.msra.mxu0 %v3611
  %v3613 = vand.u32 %v589, 4294901760
  %3614 = vmatpush.msra.mxu0 %v3613
  %v3615 = vand.u32 %v1634, 4294901760
  %v3616 = vsub.f32 %v1634, %v3615
  %v3617 = vand.u32 %v3616, 4294901760
  %3618 = vmatmul.f32.gmra.mxu0 %v3617
  %v3619 = vpop.f32.mrf.mxu0
  %v3620 = vadd.f32 %v3580, %v3619
  %v3621 = vand.u32 %v1637, 4294901760
  %v3622 = vsub.f32 %v1637, %v3621
  %v3623 = vand.u32 %v3622, 4294901760
  %3624 = vmatmul.f32.gmra.mxu0 %v3623
  %v3625 = vpop.f32.mrf.mxu0
  %v3626 = vadd.f32 %v3585, %v3625
  %v3627 = vand.u32 %v1640, 4294901760
  %v3628 = vsub.f32 %v1640, %v3627
  %v3629 = vand.u32 %v3628, 4294901760
  %3630 = vmatmul.f32.gmra.mxu0 %v3629
  %v3631 = vpop.f32.mrf.mxu0
  %v3632 = vadd.f32 %v3590, %v3631
  %v3633 = vand.u32 %v1643, 4294901760
  %v3634 = vsub.f32 %v1643, %v3633
  %v3635 = vand.u32 %v3634, 4294901760
  %3636 = vmatmul.f32.gmra.mxu0 %v3635
  %v3637 = vpop.f32.mrf.mxu0
  %v3638 = vadd.f32 %v3595, %v3637
  %3639 = vdwg.mxu0
  %3640 = vmatpush.msra.mxu0 0.0
  %3641 = vmatpush.msra.mxu0 0.0
  %3642 = vmatpush.msra.mxu0 0.0
  %3643 = vmatpush.msra.mxu0 0.0
  %3644 = vmatpush.msra.mxu0 0.0
  %3645 = vmatpush.msra.mxu0 0.0
  %3646 = vmatpush.msra.mxu0 0.0
  %3647 = vmatpush.msra.mxu0 0.0
  %3648 = vmatpush.msra.mxu0 0.0
  %3649 = vmatpush.msra.mxu0 0.0
  %3650 = vmatpush.msra.mxu0 0.0
  %3651 = vmatpush.msra.mxu0 0.0
  %3652 = vmatpush.msra.mxu0 0.0
  %3653 = vmatpush.msra.mxu0 0.0
  %v3654 = vand.u32 %v591, 4294901760
  %v3655 = vsub.f32 %v591, %v3654
  %v3656 = vand.u32 %v3655, 4294901760
  %3657 = vmatpush.msra.mxu0 %v3656
  %v3658 = vand.u32 %v589, 4294901760
  %v3659 = vsub.f32 %v589, %v3658
  %v3660 = vand.u32 %v3659, 4294901760
  %3661 = vmatpush.msra.mxu0 %v3660
  %v3662 = vand.u32 %v1634, 4294901760
  %3663 = vmatmul.f32.gmra.mxu0 %v3662
  %v3664 = vpop.f32.mrf.mxu0
  %v3665 = vadd.f32 %v3620, %v3664
  %v3666 = vand.u32 %v1637, 4294901760
  %3667 = vmatmul.f32.gmra.mxu0 %v3666
  %v3668 = vpop.f32.mrf.mxu0
  %v3669 = vadd.f32 %v3626, %v3668
  %v3670 = vand.u32 %v1640, 4294901760
  %3671 = vmatmul.f32.gmra.mxu0 %v3670
  %v3672 = vpop.f32.mrf.mxu0
  %v3673 = vadd.f32 %v3632, %v3672
  %v3674 = vand.u32 %v1643, 4294901760
  %3675 = vmatmul.f32.gmra.mxu0 %v3674
  %v3676 = vpop.f32.mrf.mxu0
  %v3677 = vadd.f32 %v3638, %v3676
  %3678 = vdwg.mxu0
  %3679 = vmatpush.msra.mxu0 0.0
  %3680 = vmatpush.msra.mxu0 0.0
  %3681 = vmatpush.msra.mxu0 0.0
  %3682 = vmatpush.msra.mxu0 0.0
  %3683 = vmatpush.msra.mxu0 0.0
  %3684 = vmatpush.msra.mxu0 0.0
  %3685 = vmatpush.msra.mxu0 0.0
  %3686 = vmatpush.msra.mxu0 0.0
  %3687 = vmatpush.msra.mxu0 0.0
  %3688 = vmatpush.msra.mxu0 0.0
  %3689 = vmatpush.msra.mxu0 0.0
  %3690 = vmatpush.msra.mxu0 0.0
  %3691 = vmatpush.msra.mxu0 0.0
  %3692 = vmatpush.msra.mxu0 0.0
  %v3693 = vand.u32 %v591, 4294901760
  %3694 = vmatpush.msra.mxu0 %v3693
  %v3695 = vand.u32 %v589, 4294901760
  %3696 = vmatpush.msra.mxu0 %v3695
  %v3697 = vand.u32 %v1634, 4294901760
  %3698 = vmatmul.f32.gmra.mxu0 %v3697
  %v3699 = vpop.f32.mrf.mxu0
  %v3700 = vadd.f32 %v3665, %v3699
  %v3701 = vand.u32 %v1637, 4294901760
  %3702 = vmatmul.f32.gmra.mxu0 %v3701
  %v3703 = vpop.f32.mrf.mxu0
  %v3704 = vadd.f32 %v3669, %v3703
  %v3705 = vand.u32 %v1640, 4294901760
  %3706 = vmatmul.f32.gmra.mxu0 %v3705
  %v3707 = vpop.f32.mrf.mxu0
  %v3708 = vadd.f32 %v3673, %v3707
  %v3709 = vand.u32 %v1643, 4294901760
  %3710 = vmatmul.f32.gmra.mxu0 %v3709
  %v3711 = vpop.f32.mrf.mxu0
  %v3712 = vadd.f32 %v3677, %v3711
  %3713 = vdwg.mxu0
  %3714 = vmatpush.msra.mxu0 0.0
  %3715 = vmatpush.msra.mxu0 0.0
  %3716 = vmatpush.msra.mxu0 0.0
  %3717 = vmatpush.msra.mxu0 0.0
  %3718 = vmatpush.msra.mxu0 0.0
  %3719 = vmatpush.msra.mxu0 0.0
  %3720 = vmatpush.msra.mxu0 0.0
  %3721 = vmatpush.msra.mxu0 0.0
  %3722 = vmatpush.msra.mxu0 0.0
  %3723 = vmatpush.msra.mxu0 0.0
  %3724 = vmatpush.msra.mxu0 0.0
  %3725 = vmatpush.msra.mxu0 0.0
  %3726 = vmatpush.msra.mxu0 0.0
  %3727 = vmatpush.msra.mxu0 0.0
  %v3728 = vand.u32 %v592, 4294901760
  %3729 = vmatpush.msra.mxu0 %v3728
  %v3730 = vand.u32 %v590, 4294901760
  %3731 = vmatpush.msra.mxu0 %v3730
  %v3732 = vand.u32 %v1634, 4294901760
  %v3733 = vsub.f32 %v1634, %v3732
  %v3734 = vand.u32 %v3733, 4294901760
  %v3735 = vsub.f32 %v3733, %v3734
  %v3736 = vand.u32 %v3735, 4294901760
  %3737 = vmatmul.f32.gmra.mxu0 %v3736
  %v3738 = vpop.f32.mrf.mxu0
  %v3739 = vadd.f32 %v1626, %v3738
  %v3740 = vand.u32 %v1637, 4294901760
  %v3741 = vsub.f32 %v1637, %v3740
  %v3742 = vand.u32 %v3741, 4294901760
  %v3743 = vsub.f32 %v3741, %v3742
  %v3744 = vand.u32 %v3743, 4294901760
  %3745 = vmatmul.f32.gmra.mxu0 %v3744
  %v3746 = vpop.f32.mrf.mxu0
  %v3747 = vadd.f32 %v1628, %v3746
  %v3748 = vand.u32 %v1640, 4294901760
  %v3749 = vsub.f32 %v1640, %v3748
  %v3750 = vand.u32 %v3749, 4294901760
  %v3751 = vsub.f32 %v3749, %v3750
  %v3752 = vand.u32 %v3751, 4294901760
  %3753 = vmatmul.f32.gmra.mxu0 %v3752
  %v3754 = vpop.f32.mrf.mxu0
  %v3755 = vadd.f32 %v1630, %v3754
  %v3756 = vand.u32 %v1643, 4294901760
  %v3757 = vsub.f32 %v1643, %v3756
  %v3758 = vand.u32 %v3757, 4294901760
  %v3759 = vsub.f32 %v3757, %v3758
  %v3760 = vand.u32 %v3759, 4294901760
  %3761 = vmatmul.f32.gmra.mxu0 %v3760
  %v3762 = vpop.f32.mrf.mxu0
  %v3763 = vadd.f32 %v1632, %v3762
  %3764 = vdwg.mxu0
  %3765 = vmatpush.msra.mxu0 0.0
  %3766 = vmatpush.msra.mxu0 0.0
  %3767 = vmatpush.msra.mxu0 0.0
  %3768 = vmatpush.msra.mxu0 0.0
  %3769 = vmatpush.msra.mxu0 0.0
  %3770 = vmatpush.msra.mxu0 0.0
  %3771 = vmatpush.msra.mxu0 0.0
  %3772 = vmatpush.msra.mxu0 0.0
  %3773 = vmatpush.msra.mxu0 0.0
  %3774 = vmatpush.msra.mxu0 0.0
  %3775 = vmatpush.msra.mxu0 0.0
  %3776 = vmatpush.msra.mxu0 0.0
  %3777 = vmatpush.msra.mxu0 0.0
  %3778 = vmatpush.msra.mxu0 0.0
  %v3779 = vand.u32 %v592, 4294901760
  %v3780 = vsub.f32 %v592, %v3779
  %v3781 = vand.u32 %v3780, 4294901760
  %v3782 = vsub.f32 %v3780, %v3781
  %v3783 = vand.u32 %v3782, 4294901760
  %3784 = vmatpush.msra.mxu0 %v3783
  %v3785 = vand.u32 %v590, 4294901760
  %v3786 = vsub.f32 %v590, %v3785
  %v3787 = vand.u32 %v3786, 4294901760
  %v3788 = vsub.f32 %v3786, %v3787
  %v3789 = vand.u32 %v3788, 4294901760
  %3790 = vmatpush.msra.mxu0 %v3789
  %v3791 = vand.u32 %v1634, 4294901760
  %3792 = vmatmul.f32.gmra.mxu0 %v3791
  %v3793 = vpop.f32.mrf.mxu0
  %v3794 = vadd.f32 %v3739, %v3793
  %v3795 = vand.u32 %v1637, 4294901760
  %3796 = vmatmul.f32.gmra.mxu0 %v3795
  %v3797 = vpop.f32.mrf.mxu0
  %v3798 = vadd.f32 %v3747, %v3797
  %v3799 = vand.u32 %v1640, 4294901760
  %3800 = vmatmul.f32.gmra.mxu0 %v3799
  %v3801 = vpop.f32.mrf.mxu0
  %v3802 = vadd.f32 %v3755, %v3801
  %v3803 = vand.u32 %v1643, 4294901760
  %3804 = vmatmul.f32.gmra.mxu0 %v3803
  %v3805 = vpop.f32.mrf.mxu0
  %v3806 = vadd.f32 %v3763, %v3805
  %3807 = vdwg.mxu0
  %3808 = vmatpush.msra.mxu0 0.0
  %3809 = vmatpush.msra.mxu0 0.0
  %3810 = vmatpush.msra.mxu0 0.0
  %3811 = vmatpush.msra.mxu0 0.0
  %3812 = vmatpush.msra.mxu0 0.0
  %3813 = vmatpush.msra.mxu0 0.0
  %3814 = vmatpush.msra.mxu0 0.0
  %3815 = vmatpush.msra.mxu0 0.0
  %3816 = vmatpush.msra.mxu0 0.0
  %3817 = vmatpush.msra.mxu0 0.0
  %3818 = vmatpush.msra.mxu0 0.0
  %3819 = vmatpush.msra.mxu0 0.0
  %3820 = vmatpush.msra.mxu0 0.0
  %3821 = vmatpush.msra.mxu0 0.0
  %v3822 = vand.u32 %v592, 4294901760
  %v3823 = vsub.f32 %v592, %v3822
  %3824 = vmatpush.msra.mxu0 %v3823
  %v3825 = vand.u32 %v590, 4294901760
  %v3826 = vsub.f32 %v590, %v3825
  %3827 = vmatpush.msra.mxu0 %v3826
  %v3828 = vand.u32 %v1634, 4294901760
  %v3829 = vsub.f32 %v1634, %v3828
  %3830 = vmatmul.f32.gmra.mxu0 %v3829
  %v3831 = vpop.f32.mrf.mxu0
  %v3832 = vadd.f32 %v3794, %v3831
  %v3833 = vand.u32 %v1637, 4294901760
  %v3834 = vsub.f32 %v1637, %v3833
  %3835 = vmatmul.f32.gmra.mxu0 %v3834
  %v3836 = vpop.f32.mrf.mxu0
  %v3837 = vadd.f32 %v3798, %v3836
  %v3838 = vand.u32 %v1640, 4294901760
  %v3839 = vsub.f32 %v1640, %v3838
  %3840 = vmatmul.f32.gmra.mxu0 %v3839
  %v3841 = vpop.f32.mrf.mxu0
  %v3842 = vadd.f32 %v3802, %v3841
  %v3843 = vand.u32 %v1643, 4294901760
  %v3844 = vsub.f32 %v1643, %v3843
  %3845 = vmatmul.f32.gmra.mxu0 %v3844
  %v3846 = vpop.f32.mrf.mxu0
  %v3847 = vadd.f32 %v3806, %v3846
  %3848 = vdwg.mxu0
  %3849 = vmatpush.msra.mxu0 0.0
  %3850 = vmatpush.msra.mxu0 0.0
  %3851 = vmatpush.msra.mxu0 0.0
  %3852 = vmatpush.msra.mxu0 0.0
  %3853 = vmatpush.msra.mxu0 0.0
  %3854 = vmatpush.msra.mxu0 0.0
  %3855 = vmatpush.msra.mxu0 0.0
  %3856 = vmatpush.msra.mxu0 0.0
  %3857 = vmatpush.msra.mxu0 0.0
  %3858 = vmatpush.msra.mxu0 0.0
  %3859 = vmatpush.msra.mxu0 0.0
  %3860 = vmatpush.msra.mxu0 0.0
  %3861 = vmatpush.msra.mxu0 0.0
  %3862 = vmatpush.msra.mxu0 0.0
  %v3863 = vand.u32 %v592, 4294901760
  %3864 = vmatpush.msra.mxu0 %v3863
  %v3865 = vand.u32 %v590, 4294901760
  %3866 = vmatpush.msra.mxu0 %v3865
  %v3867 = vand.u32 %v1634, 4294901760
  %v3868 = vsub.f32 %v1634, %v3867
  %v3869 = vand.u32 %v3868, 4294901760
  %3870 = vmatmul.f32.gmra.mxu0 %v3869
  %v3871 = vpop.f32.mrf.mxu0
  %v3872 = vadd.f32 %v3832, %v3871
  %v3873 = vand.u32 %v1637, 4294901760
  %v3874 = vsub.f32 %v1637, %v3873
  %v3875 = vand.u32 %v3874, 4294901760
  %3876 = vmatmul.f32.gmra.mxu0 %v3875
  %v3877 = vpop.f32.mrf.mxu0
  %v3878 = vadd.f32 %v3837, %v3877
  %v3879 = vand.u32 %v1640, 4294901760
  %v3880 = vsub.f32 %v1640, %v3879
  %v3881 = vand.u32 %v3880, 4294901760
  %3882 = vmatmul.f32.gmra.mxu0 %v3881
  %v3883 = vpop.f32.mrf.mxu0
  %v3884 = vadd.f32 %v3842, %v3883
  %v3885 = vand.u32 %v1643, 4294901760
  %v3886 = vsub.f32 %v1643, %v3885
  %v3887 = vand.u32 %v3886, 4294901760
  %3888 = vmatmul.f32.gmra.mxu0 %v3887
  %v3889 = vpop.f32.mrf.mxu0
  %v3890 = vadd.f32 %v3847, %v3889
  %3891 = vdwg.mxu0
  %3892 = vmatpush.msra.mxu0 0.0
  %3893 = vmatpush.msra.mxu0 0.0
  %3894 = vmatpush.msra.mxu0 0.0
  %3895 = vmatpush.msra.mxu0 0.0
  %3896 = vmatpush.msra.mxu0 0.0
  %3897 = vmatpush.msra.mxu0 0.0
  %3898 = vmatpush.msra.mxu0 0.0
  %3899 = vmatpush.msra.mxu0 0.0
  %3900 = vmatpush.msra.mxu0 0.0
  %3901 = vmatpush.msra.mxu0 0.0
  %3902 = vmatpush.msra.mxu0 0.0
  %3903 = vmatpush.msra.mxu0 0.0
  %3904 = vmatpush.msra.mxu0 0.0
  %3905 = vmatpush.msra.mxu0 0.0
  %v3906 = vand.u32 %v592, 4294901760
  %v3907 = vsub.f32 %v592, %v3906
  %v3908 = vand.u32 %v3907, 4294901760
  %3909 = vmatpush.msra.mxu0 %v3908
  %v3910 = vand.u32 %v590, 4294901760
  %v3911 = vsub.f32 %v590, %v3910
  %v3912 = vand.u32 %v3911, 4294901760
  %3913 = vmatpush.msra.mxu0 %v3912
  %v3914 = vand.u32 %v1634, 4294901760
  %3915 = vmatmul.f32.gmra.mxu0 %v3914
  %v3916 = vpop.f32.mrf.mxu0
  %v3917 = vadd.f32 %v3872, %v3916
  %v3918 = vand.u32 %v1637, 4294901760
  %3919 = vmatmul.f32.gmra.mxu0 %v3918
  %v3920 = vpop.f32.mrf.mxu0
  %v3921 = vadd.f32 %v3878, %v3920
  %v3922 = vand.u32 %v1640, 4294901760
  %3923 = vmatmul.f32.gmra.mxu0 %v3922
  %v3924 = vpop.f32.mrf.mxu0
  %v3925 = vadd.f32 %v3884, %v3924
  %v3926 = vand.u32 %v1643, 4294901760
  %3927 = vmatmul.f32.gmra.mxu0 %v3926
  %v3928 = vpop.f32.mrf.mxu0
  %v3929 = vadd.f32 %v3890, %v3928
  %3930 = vdwg.mxu0
  %3931 = vmatpush.msra.mxu0 0.0
  %3932 = vmatpush.msra.mxu0 0.0
  %3933 = vmatpush.msra.mxu0 0.0
  %3934 = vmatpush.msra.mxu0 0.0
  %3935 = vmatpush.msra.mxu0 0.0
  %3936 = vmatpush.msra.mxu0 0.0
  %3937 = vmatpush.msra.mxu0 0.0
  %3938 = vmatpush.msra.mxu0 0.0
  %3939 = vmatpush.msra.mxu0 0.0
  %3940 = vmatpush.msra.mxu0 0.0
  %3941 = vmatpush.msra.mxu0 0.0
  %3942 = vmatpush.msra.mxu0 0.0
  %3943 = vmatpush.msra.mxu0 0.0
  %3944 = vmatpush.msra.mxu0 0.0
  %v3945 = vand.u32 %v592, 4294901760
  %3946 = vmatpush.msra.mxu0 %v3945
  %v3947 = vand.u32 %v590, 4294901760
  %3948 = vmatpush.msra.mxu0 %v3947
  %v3949 = vand.u32 %v1634, 4294901760
  %3950 = vmatmul.f32.gmra.mxu0 %v3949
  %v3951 = vpop.f32.mrf.mxu0
  %v3952 = vadd.f32 %v3917, %v3951
  %v3953 = vand.u32 %v1637, 4294901760
  %3954 = vmatmul.f32.gmra.mxu0 %v3953
  %v3955 = vpop.f32.mrf.mxu0
  %v3956 = vadd.f32 %v3921, %v3955
  %v3957 = vand.u32 %v1640, 4294901760
  %3958 = vmatmul.f32.gmra.mxu0 %v3957
  %v3959 = vpop.f32.mrf.mxu0
  %v3960 = vadd.f32 %v3925, %v3959
  %v3961 = vand.u32 %v1643, 4294901760
  %3962 = vmatmul.f32.gmra.mxu0 %v3961
  %v3963 = vpop.f32.mrf.mxu0
  %v3964 = vadd.f32 %v3929, %v3963
  %3965 = vdwg.mxu0
  %v3966 = vsub.f32 %v3700, %v831
  %v3967 = vsub.f32 %v3952, %v1083
  %v3968 = vsub.f32 %v3704, %v835
  %v3969 = vsub.f32 %v3956, %v1087
  %v3970 = vsub.f32 %v3708, %v839
  %v3971 = vsub.f32 %v3960, %v1091
  %v3972 = vsub.f32 %v3712, %v843
  %v3973 = vsub.f32 %v3964, %v1095
  %s3974 = scalar_lea.vmem %s4, 32
  %v3975 = vld [vmem:[%s3974] sm:$0xff]
  %v3976 = vld [vmem:[%s3974 + $0x8] sm:$0xff]
  %v3977 = vld [vmem:[%s3974 + $0x10] sm:$0xff]
  %v3978 = vld [vmem:[%s3974 + $0x18] sm:$0xff]
  %v3980 = vsel %vm2161, %v3975, 0
  %v3983 = vsel %vm2161, %v3976, 0
  %v3986 = vsel %vm2161, %v3977, 0
  %v3989 = vsel %vm2161, %v3978, 0
  %3991 = vmatpush.msra.mxu0 0.0
  %3992 = vmatpush.msra.mxu0 0.0
  %3993 = vmatpush.msra.mxu0 0.0
  %3994 = vmatpush.msra.mxu0 0.0
  %3995 = vmatpush.msra.mxu0 0.0
  %3996 = vmatpush.msra.mxu0 0.0
  %3997 = vmatpush.msra.mxu0 0.0
  %3998 = vmatpush.msra.mxu0 0.0
  %3999 = vmatpush.msra.mxu0 0.0
  %4000 = vmatpush.msra.mxu0 0.0
  %4001 = vmatpush.msra.mxu0 0.0
  %4002 = vmatpush.msra.mxu0 0.0
  %4003 = vmatpush.msra.mxu0 0.0
  %4004 = vmatpush.msra.mxu0 0.0
  %4005 = vmatpush.msra.mxu0 0.0
  %v4006 = vand.u32 %v42, 4294901760
  %4007 = vmatpush.msra.mxu0 %v4006
  %v4008 = vand.u32 %v3980, 4294901760
  %v4009 = vsub.f32 %v3980, %v4008
  %v4010 = vand.u32 %v4009, 4294901760
  %v4011 = vsub.f32 %v4009, %v4010
  %v4012 = vand.u32 %v4011, 4294901760
  %4013 = vmatmul.f32.gmra.mxu0 %v4012
  %v4014 = vpop.f32.mrf.mxu0
  %v4015 = vadd.f32 0.0, %v4014
  %v4016 = vand.u32 %v3983, 4294901760
  %v4017 = vsub.f32 %v3983, %v4016
  %v4018 = vand.u32 %v4017, 4294901760
  %v4019 = vsub.f32 %v4017, %v4018
  %v4020 = vand.u32 %v4019, 4294901760
  %4021 = vmatmul.f32.gmra.mxu0 %v4020
  %v4022 = vpop.f32.mrf.mxu0
  %v4023 = vadd.f32 0.0, %v4022
  %v4024 = vand.u32 %v3986, 4294901760
  %v4025 = vsub.f32 %v3986, %v4024
  %v4026 = vand.u32 %v4025, 4294901760
  %v4027 = vsub.f32 %v4025, %v4026
  %v4028 = vand.u32 %v4027, 4294901760
  %4029 = vmatmul.f32.gmra.mxu0 %v4028
  %v4030 = vpop.f32.mrf.mxu0
  %v4031 = vadd.f32 0.0, %v4030
  %v4032 = vand.u32 %v3989, 4294901760
  %v4033 = vsub.f32 %v3989, %v4032
  %v4034 = vand.u32 %v4033, 4294901760
  %v4035 = vsub.f32 %v4033, %v4034
  %v4036 = vand.u32 %v4035, 4294901760
  %4037 = vmatmul.f32.gmra.mxu0 %v4036
  %v4038 = vpop.f32.mrf.mxu0
  %v4039 = vadd.f32 0.0, %v4038
  %4040 = vdwg.mxu0
  %4041 = vmatpush.msra.mxu0 0.0
  %4042 = vmatpush.msra.mxu0 0.0
  %4043 = vmatpush.msra.mxu0 0.0
  %4044 = vmatpush.msra.mxu0 0.0
  %4045 = vmatpush.msra.mxu0 0.0
  %4046 = vmatpush.msra.mxu0 0.0
  %4047 = vmatpush.msra.mxu0 0.0
  %4048 = vmatpush.msra.mxu0 0.0
  %4049 = vmatpush.msra.mxu0 0.0
  %4050 = vmatpush.msra.mxu0 0.0
  %4051 = vmatpush.msra.mxu0 0.0
  %4052 = vmatpush.msra.mxu0 0.0
  %4053 = vmatpush.msra.mxu0 0.0
  %4054 = vmatpush.msra.mxu0 0.0
  %4055 = vmatpush.msra.mxu0 0.0
  %v4056 = vand.u32 %v42, 4294901760
  %v4057 = vsub.f32 %v42, %v4056
  %v4058 = vand.u32 %v4057, 4294901760
  %v4059 = vsub.f32 %v4057, %v4058
  %v4060 = vand.u32 %v4059, 4294901760
  %4061 = vmatpush.msra.mxu0 %v4060
  %v4062 = vand.u32 %v3980, 4294901760
  %4063 = vmatmul.f32.gmra.mxu0 %v4062
  %v4064 = vpop.f32.mrf.mxu0
  %v4065 = vadd.f32 %v4015, %v4064
  %v4066 = vand.u32 %v3983, 4294901760
  %4067 = vmatmul.f32.gmra.mxu0 %v4066
  %v4068 = vpop.f32.mrf.mxu0
  %v4069 = vadd.f32 %v4023, %v4068
  %v4070 = vand.u32 %v3986, 4294901760
  %4071 = vmatmul.f32.gmra.mxu0 %v4070
  %v4072 = vpop.f32.mrf.mxu0
  %v4073 = vadd.f32 %v4031, %v4072
  %v4074 = vand.u32 %v3989, 4294901760
  %4075 = vmatmul.f32.gmra.mxu0 %v4074
  %v4076 = vpop.f32.mrf.mxu0
  %v4077 = vadd.f32 %v4039, %v4076
  %4078 = vdwg.mxu0
  %4079 = vmatpush.msra.mxu0 0.0
  %4080 = vmatpush.msra.mxu0 0.0
  %4081 = vmatpush.msra.mxu0 0.0
  %4082 = vmatpush.msra.mxu0 0.0
  %4083 = vmatpush.msra.mxu0 0.0
  %4084 = vmatpush.msra.mxu0 0.0
  %4085 = vmatpush.msra.mxu0 0.0
  %4086 = vmatpush.msra.mxu0 0.0
  %4087 = vmatpush.msra.mxu0 0.0
  %4088 = vmatpush.msra.mxu0 0.0
  %4089 = vmatpush.msra.mxu0 0.0
  %4090 = vmatpush.msra.mxu0 0.0
  %4091 = vmatpush.msra.mxu0 0.0
  %4092 = vmatpush.msra.mxu0 0.0
  %4093 = vmatpush.msra.mxu0 0.0
  %v4094 = vand.u32 %v42, 4294901760
  %v4095 = vsub.f32 %v42, %v4094
  %4096 = vmatpush.msra.mxu0 %v4095
  %v4097 = vand.u32 %v3980, 4294901760
  %v4098 = vsub.f32 %v3980, %v4097
  %4099 = vmatmul.f32.gmra.mxu0 %v4098
  %v4100 = vpop.f32.mrf.mxu0
  %v4101 = vadd.f32 %v4065, %v4100
  %v4102 = vand.u32 %v3983, 4294901760
  %v4103 = vsub.f32 %v3983, %v4102
  %4104 = vmatmul.f32.gmra.mxu0 %v4103
  %v4105 = vpop.f32.mrf.mxu0
  %v4106 = vadd.f32 %v4069, %v4105
  %v4107 = vand.u32 %v3986, 4294901760
  %v4108 = vsub.f32 %v3986, %v4107
  %4109 = vmatmul.f32.gmra.mxu0 %v4108
  %v4110 = vpop.f32.mrf.mxu0
  %v4111 = vadd.f32 %v4073, %v4110
  %v4112 = vand.u32 %v3989, 4294901760
  %v4113 = vsub.f32 %v3989, %v4112
  %4114 = vmatmul.f32.gmra.mxu0 %v4113
  %v4115 = vpop.f32.mrf.mxu0
  %v4116 = vadd.f32 %v4077, %v4115
  %4117 = vdwg.mxu0
  %4118 = vmatpush.msra.mxu0 0.0
  %4119 = vmatpush.msra.mxu0 0.0
  %4120 = vmatpush.msra.mxu0 0.0
  %4121 = vmatpush.msra.mxu0 0.0
  %4122 = vmatpush.msra.mxu0 0.0
  %4123 = vmatpush.msra.mxu0 0.0
  %4124 = vmatpush.msra.mxu0 0.0
  %4125 = vmatpush.msra.mxu0 0.0
  %4126 = vmatpush.msra.mxu0 0.0
  %4127 = vmatpush.msra.mxu0 0.0
  %4128 = vmatpush.msra.mxu0 0.0
  %4129 = vmatpush.msra.mxu0 0.0
  %4130 = vmatpush.msra.mxu0 0.0
  %4131 = vmatpush.msra.mxu0 0.0
  %4132 = vmatpush.msra.mxu0 0.0
  %v4133 = vand.u32 %v42, 4294901760
  %4134 = vmatpush.msra.mxu0 %v4133
  %v4135 = vand.u32 %v3980, 4294901760
  %v4136 = vsub.f32 %v3980, %v4135
  %v4137 = vand.u32 %v4136, 4294901760
  %4138 = vmatmul.f32.gmra.mxu0 %v4137
  %v4139 = vpop.f32.mrf.mxu0
  %v4140 = vadd.f32 %v4101, %v4139
  %v4141 = vand.u32 %v3983, 4294901760
  %v4142 = vsub.f32 %v3983, %v4141
  %v4143 = vand.u32 %v4142, 4294901760
  %4144 = vmatmul.f32.gmra.mxu0 %v4143
  %v4145 = vpop.f32.mrf.mxu0
  %v4146 = vadd.f32 %v4106, %v4145
  %v4147 = vand.u32 %v3986, 4294901760
  %v4148 = vsub.f32 %v3986, %v4147
  %v4149 = vand.u32 %v4148, 4294901760
  %4150 = vmatmul.f32.gmra.mxu0 %v4149
  %v4151 = vpop.f32.mrf.mxu0
  %v4152 = vadd.f32 %v4111, %v4151
  %v4153 = vand.u32 %v3989, 4294901760
  %v4154 = vsub.f32 %v3989, %v4153
  %v4155 = vand.u32 %v4154, 4294901760
  %4156 = vmatmul.f32.gmra.mxu0 %v4155
  %v4157 = vpop.f32.mrf.mxu0
  %v4158 = vadd.f32 %v4116, %v4157
  %4159 = vdwg.mxu0
  %4160 = vmatpush.msra.mxu0 0.0
  %4161 = vmatpush.msra.mxu0 0.0
  %4162 = vmatpush.msra.mxu0 0.0
  %4163 = vmatpush.msra.mxu0 0.0
  %4164 = vmatpush.msra.mxu0 0.0
  %4165 = vmatpush.msra.mxu0 0.0
  %4166 = vmatpush.msra.mxu0 0.0
  %4167 = vmatpush.msra.mxu0 0.0
  %4168 = vmatpush.msra.mxu0 0.0
  %4169 = vmatpush.msra.mxu0 0.0
  %4170 = vmatpush.msra.mxu0 0.0
  %4171 = vmatpush.msra.mxu0 0.0
  %4172 = vmatpush.msra.mxu0 0.0
  %4173 = vmatpush.msra.mxu0 0.0
  %4174 = vmatpush.msra.mxu0 0.0
  %v4175 = vand.u32 %v42, 4294901760
  %v4176 = vsub.f32 %v42, %v4175
  %v4177 = vand.u32 %v4176, 4294901760
  %4178 = vmatpush.msra.mxu0 %v4177
  %v4179 = vand.u32 %v3980, 4294901760
  %4180 = vmatmul.f32.gmra.mxu0 %v4179
  %v4181 = vpop.f32.mrf.mxu0
  %v4182 = vadd.f32 %v4140, %v4181
  %v4183 = vand.u32 %v3983, 4294901760
  %4184 = vmatmul.f32.gmra.mxu0 %v4183
  %v4185 = vpop.f32.mrf.mxu0
  %v4186 = vadd.f32 %v4146, %v4185
  %v4187 = vand.u32 %v3986, 4294901760
  %4188 = vmatmul.f32.gmra.mxu0 %v4187
  %v4189 = vpop.f32.mrf.mxu0
  %v4190 = vadd.f32 %v4152, %v4189
  %v4191 = vand.u32 %v3989, 4294901760
  %4192 = vmatmul.f32.gmra.mxu0 %v4191
  %v4193 = vpop.f32.mrf.mxu0
  %v4194 = vadd.f32 %v4158, %v4193
  %4195 = vdwg.mxu0
  %4196 = vmatpush.msra.mxu0 0.0
  %4197 = vmatpush.msra.mxu0 0.0
  %4198 = vmatpush.msra.mxu0 0.0
  %4199 = vmatpush.msra.mxu0 0.0
  %4200 = vmatpush.msra.mxu0 0.0
  %4201 = vmatpush.msra.mxu0 0.0
  %4202 = vmatpush.msra.mxu0 0.0
  %4203 = vmatpush.msra.mxu0 0.0
  %4204 = vmatpush.msra.mxu0 0.0
  %4205 = vmatpush.msra.mxu0 0.0
  %4206 = vmatpush.msra.mxu0 0.0
  %4207 = vmatpush.msra.mxu0 0.0
  %4208 = vmatpush.msra.mxu0 0.0
  %4209 = vmatpush.msra.mxu0 0.0
  %4210 = vmatpush.msra.mxu0 0.0
  %v4211 = vand.u32 %v42, 4294901760
  %4212 = vmatpush.msra.mxu0 %v4211
  %v4213 = vand.u32 %v3980, 4294901760
  %4214 = vmatmul.f32.gmra.mxu0 %v4213
  %v4215 = vpop.f32.mrf.mxu0
  %v4216 = vadd.f32 %v4182, %v4215
  %v4217 = vand.u32 %v3983, 4294901760
  %4218 = vmatmul.f32.gmra.mxu0 %v4217
  %v4219 = vpop.f32.mrf.mxu0
  %v4220 = vadd.f32 %v4186, %v4219
  %v4221 = vand.u32 %v3986, 4294901760
  %4222 = vmatmul.f32.gmra.mxu0 %v4221
  %v4223 = vpop.f32.mrf.mxu0
  %v4224 = vadd.f32 %v4190, %v4223
  %v4225 = vand.u32 %v3989, 4294901760
  %4226 = vmatmul.f32.gmra.mxu0 %v4225
  %v4227 = vpop.f32.mrf.mxu0
  %v4228 = vadd.f32 %v4194, %v4227
  %4229 = vdwg.mxu0
  %4230 = vmatpush.msra.mxu0 0.0
  %4231 = vmatpush.msra.mxu0 0.0
  %4232 = vmatpush.msra.mxu0 0.0
  %4233 = vmatpush.msra.mxu0 0.0
  %4234 = vmatpush.msra.mxu0 0.0
  %4235 = vmatpush.msra.mxu0 0.0
  %4236 = vmatpush.msra.mxu0 0.0
  %4237 = vmatpush.msra.mxu0 0.0
  %4238 = vmatpush.msra.mxu0 0.0
  %4239 = vmatpush.msra.mxu0 0.0
  %4240 = vmatpush.msra.mxu0 0.0
  %4241 = vmatpush.msra.mxu0 0.0
  %4242 = vmatpush.msra.mxu0 0.0
  %4243 = vmatpush.msra.mxu0 0.0
  %4244 = vmatpush.msra.mxu0 0.0
  %v4245 = vand.u32 %v43, 4294901760
  %4246 = vmatpush.msra.mxu0 %v4245
  %v4247 = vand.u32 %v3980, 4294901760
  %v4248 = vsub.f32 %v3980, %v4247
  %v4249 = vand.u32 %v4248, 4294901760
  %v4250 = vsub.f32 %v4248, %v4249
  %v4251 = vand.u32 %v4250, 4294901760
  %4252 = vmatmul.f32.gmra.mxu0 %v4251
  %v4253 = vpop.f32.mrf.mxu0
  %v4254 = vadd.f32 0.0, %v4253
  %v4255 = vand.u32 %v3983, 4294901760
  %v4256 = vsub.f32 %v3983, %v4255
  %v4257 = vand.u32 %v4256, 4294901760
  %v4258 = vsub.f32 %v4256, %v4257
  %v4259 = vand.u32 %v4258, 4294901760
  %4260 = vmatmul.f32.gmra.mxu0 %v4259
  %v4261 = vpop.f32.mrf.mxu0
  %v4262 = vadd.f32 0.0, %v4261
  %v4263 = vand.u32 %v3986, 4294901760
  %v4264 = vsub.f32 %v3986, %v4263
  %v4265 = vand.u32 %v4264, 4294901760
  %v4266 = vsub.f32 %v4264, %v4265
  %v4267 = vand.u32 %v4266, 4294901760
  %4268 = vmatmul.f32.gmra.mxu0 %v4267
  %v4269 = vpop.f32.mrf.mxu0
  %v4270 = vadd.f32 0.0, %v4269
  %v4271 = vand.u32 %v3989, 4294901760
  %v4272 = vsub.f32 %v3989, %v4271
  %v4273 = vand.u32 %v4272, 4294901760
  %v4274 = vsub.f32 %v4272, %v4273
  %v4275 = vand.u32 %v4274, 4294901760
  %4276 = vmatmul.f32.gmra.mxu0 %v4275
  %v4277 = vpop.f32.mrf.mxu0
  %v4278 = vadd.f32 0.0, %v4277
  %4279 = vdwg.mxu0
  %4280 = vmatpush.msra.mxu0 0.0
  %4281 = vmatpush.msra.mxu0 0.0
  %4282 = vmatpush.msra.mxu0 0.0
  %4283 = vmatpush.msra.mxu0 0.0
  %4284 = vmatpush.msra.mxu0 0.0
  %4285 = vmatpush.msra.mxu0 0.0
  %4286 = vmatpush.msra.mxu0 0.0
  %4287 = vmatpush.msra.mxu0 0.0
  %4288 = vmatpush.msra.mxu0 0.0
  %4289 = vmatpush.msra.mxu0 0.0
  %4290 = vmatpush.msra.mxu0 0.0
  %4291 = vmatpush.msra.mxu0 0.0
  %4292 = vmatpush.msra.mxu0 0.0
  %4293 = vmatpush.msra.mxu0 0.0
  %4294 = vmatpush.msra.mxu0 0.0
  %v4295 = vand.u32 %v43, 4294901760
  %v4296 = vsub.f32 %v43, %v4295
  %v4297 = vand.u32 %v4296, 4294901760
  %v4298 = vsub.f32 %v4296, %v4297
  %v4299 = vand.u32 %v4298, 4294901760
  %4300 = vmatpush.msra.mxu0 %v4299
  %v4301 = vand.u32 %v3980, 4294901760
  %4302 = vmatmul.f32.gmra.mxu0 %v4301
  %v4303 = vpop.f32.mrf.mxu0
  %v4304 = vadd.f32 %v4254, %v4303
  %v4305 = vand.u32 %v3983, 4294901760
  %4306 = vmatmul.f32.gmra.mxu0 %v4305
  %v4307 = vpop.f32.mrf.mxu0
  %v4308 = vadd.f32 %v4262, %v4307
  %v4309 = vand.u32 %v3986, 4294901760
  %4310 = vmatmul.f32.gmra.mxu0 %v4309
  %v4311 = vpop.f32.mrf.mxu0
  %v4312 = vadd.f32 %v4270, %v4311
  %v4313 = vand.u32 %v3989, 4294901760
  %4314 = vmatmul.f32.gmra.mxu0 %v4313
  %v4315 = vpop.f32.mrf.mxu0
  %v4316 = vadd.f32 %v4278, %v4315
  %4317 = vdwg.mxu0
  %4318 = vmatpush.msra.mxu0 0.0
  %4319 = vmatpush.msra.mxu0 0.0
  %4320 = vmatpush.msra.mxu0 0.0
  %4321 = vmatpush.msra.mxu0 0.0
  %4322 = vmatpush.msra.mxu0 0.0
  %4323 = vmatpush.msra.mxu0 0.0
  %4324 = vmatpush.msra.mxu0 0.0
  %4325 = vmatpush.msra.mxu0 0.0
  %4326 = vmatpush.msra.mxu0 0.0
  %4327 = vmatpush.msra.mxu0 0.0
  %4328 = vmatpush.msra.mxu0 0.0
  %4329 = vmatpush.msra.mxu0 0.0
  %4330 = vmatpush.msra.mxu0 0.0
  %4331 = vmatpush.msra.mxu0 0.0
  %4332 = vmatpush.msra.mxu0 0.0
  %v4333 = vand.u32 %v43, 4294901760
  %v4334 = vsub.f32 %v43, %v4333
  %4335 = vmatpush.msra.mxu0 %v4334
  %v4336 = vand.u32 %v3980, 4294901760
  %v4337 = vsub.f32 %v3980, %v4336
  %4338 = vmatmul.f32.gmra.mxu0 %v4337
  %v4339 = vpop.f32.mrf.mxu0
  %v4340 = vadd.f32 %v4304, %v4339
  %v4341 = vand.u32 %v3983, 4294901760
  %v4342 = vsub.f32 %v3983, %v4341
  %4343 = vmatmul.f32.gmra.mxu0 %v4342
  %v4344 = vpop.f32.mrf.mxu0
  %v4345 = vadd.f32 %v4308, %v4344
  %v4346 = vand.u32 %v3986, 4294901760
  %v4347 = vsub.f32 %v3986, %v4346
  %4348 = vmatmul.f32.gmra.mxu0 %v4347
  %v4349 = vpop.f32.mrf.mxu0
  %v4350 = vadd.f32 %v4312, %v4349
  %v4351 = vand.u32 %v3989, 4294901760
  %v4352 = vsub.f32 %v3989, %v4351
  %4353 = vmatmul.f32.gmra.mxu0 %v4352
  %v4354 = vpop.f32.mrf.mxu0
  %v4355 = vadd.f32 %v4316, %v4354
  %4356 = vdwg.mxu0
  %4357 = vmatpush.msra.mxu0 0.0
  %4358 = vmatpush.msra.mxu0 0.0
  %4359 = vmatpush.msra.mxu0 0.0
  %4360 = vmatpush.msra.mxu0 0.0
  %4361 = vmatpush.msra.mxu0 0.0
  %4362 = vmatpush.msra.mxu0 0.0
  %4363 = vmatpush.msra.mxu0 0.0
  %4364 = vmatpush.msra.mxu0 0.0
  %4365 = vmatpush.msra.mxu0 0.0
  %4366 = vmatpush.msra.mxu0 0.0
  %4367 = vmatpush.msra.mxu0 0.0
  %4368 = vmatpush.msra.mxu0 0.0
  %4369 = vmatpush.msra.mxu0 0.0
  %4370 = vmatpush.msra.mxu0 0.0
  %4371 = vmatpush.msra.mxu0 0.0
  %v4372 = vand.u32 %v43, 4294901760
  %4373 = vmatpush.msra.mxu0 %v4372
  %v4374 = vand.u32 %v3980, 4294901760
  %v4375 = vsub.f32 %v3980, %v4374
  %v4376 = vand.u32 %v4375, 4294901760
  %4377 = vmatmul.f32.gmra.mxu0 %v4376
  %v4378 = vpop.f32.mrf.mxu0
  %v4379 = vadd.f32 %v4340, %v4378
  %v4380 = vand.u32 %v3983, 4294901760
  %v4381 = vsub.f32 %v3983, %v4380
  %v4382 = vand.u32 %v4381, 4294901760
  %4383 = vmatmul.f32.gmra.mxu0 %v4382
  %v4384 = vpop.f32.mrf.mxu0
  %v4385 = vadd.f32 %v4345, %v4384
  %v4386 = vand.u32 %v3986, 4294901760
  %v4387 = vsub.f32 %v3986, %v4386
  %v4388 = vand.u32 %v4387, 4294901760
  %4389 = vmatmul.f32.gmra.mxu0 %v4388
  %v4390 = vpop.f32.mrf.mxu0
  %v4391 = vadd.f32 %v4350, %v4390
  %v4392 = vand.u32 %v3989, 4294901760
  %v4393 = vsub.f32 %v3989, %v4392
  %v4394 = vand.u32 %v4393, 4294901760
  %4395 = vmatmul.f32.gmra.mxu0 %v4394
  %v4396 = vpop.f32.mrf.mxu0
  %v4397 = vadd.f32 %v4355, %v4396
  %4398 = vdwg.mxu0
  %4399 = vmatpush.msra.mxu0 0.0
  %4400 = vmatpush.msra.mxu0 0.0
  %4401 = vmatpush.msra.mxu0 0.0
  %4402 = vmatpush.msra.mxu0 0.0
  %4403 = vmatpush.msra.mxu0 0.0
  %4404 = vmatpush.msra.mxu0 0.0
  %4405 = vmatpush.msra.mxu0 0.0
  %4406 = vmatpush.msra.mxu0 0.0
  %4407 = vmatpush.msra.mxu0 0.0
  %4408 = vmatpush.msra.mxu0 0.0
  %4409 = vmatpush.msra.mxu0 0.0
  %4410 = vmatpush.msra.mxu0 0.0
  %4411 = vmatpush.msra.mxu0 0.0
  %4412 = vmatpush.msra.mxu0 0.0
  %4413 = vmatpush.msra.mxu0 0.0
  %v4414 = vand.u32 %v43, 4294901760
  %v4415 = vsub.f32 %v43, %v4414
  %v4416 = vand.u32 %v4415, 4294901760
  %4417 = vmatpush.msra.mxu0 %v4416
  %v4418 = vand.u32 %v3980, 4294901760
  %4419 = vmatmul.f32.gmra.mxu0 %v4418
  %v4420 = vpop.f32.mrf.mxu0
  %v4421 = vadd.f32 %v4379, %v4420
  %v4422 = vand.u32 %v3983, 4294901760
  %4423 = vmatmul.f32.gmra.mxu0 %v4422
  %v4424 = vpop.f32.mrf.mxu0
  %v4425 = vadd.f32 %v4385, %v4424
  %v4426 = vand.u32 %v3986, 4294901760
  %4427 = vmatmul.f32.gmra.mxu0 %v4426
  %v4428 = vpop.f32.mrf.mxu0
  %v4429 = vadd.f32 %v4391, %v4428
  %v4430 = vand.u32 %v3989, 4294901760
  %4431 = vmatmul.f32.gmra.mxu0 %v4430
  %v4432 = vpop.f32.mrf.mxu0
  %v4433 = vadd.f32 %v4397, %v4432
  %4434 = vdwg.mxu0
  %4435 = vmatpush.msra.mxu0 0.0
  %4436 = vmatpush.msra.mxu0 0.0
  %4437 = vmatpush.msra.mxu0 0.0
  %4438 = vmatpush.msra.mxu0 0.0
  %4439 = vmatpush.msra.mxu0 0.0
  %4440 = vmatpush.msra.mxu0 0.0
  %4441 = vmatpush.msra.mxu0 0.0
  %4442 = vmatpush.msra.mxu0 0.0
  %4443 = vmatpush.msra.mxu0 0.0
  %4444 = vmatpush.msra.mxu0 0.0
  %4445 = vmatpush.msra.mxu0 0.0
  %4446 = vmatpush.msra.mxu0 0.0
  %4447 = vmatpush.msra.mxu0 0.0
  %4448 = vmatpush.msra.mxu0 0.0
  %4449 = vmatpush.msra.mxu0 0.0
  %v4450 = vand.u32 %v43, 4294901760
  %4451 = vmatpush.msra.mxu0 %v4450
  %v4452 = vand.u32 %v3980, 4294901760
  %4453 = vmatmul.f32.gmra.mxu0 %v4452
  %v4454 = vpop.f32.mrf.mxu0
  %v4455 = vadd.f32 %v4421, %v4454
  %v4456 = vand.u32 %v3983, 4294901760
  %4457 = vmatmul.f32.gmra.mxu0 %v4456
  %v4458 = vpop.f32.mrf.mxu0
  %v4459 = vadd.f32 %v4425, %v4458
  %v4460 = vand.u32 %v3986, 4294901760
  %4461 = vmatmul.f32.gmra.mxu0 %v4460
  %v4462 = vpop.f32.mrf.mxu0
  %v4463 = vadd.f32 %v4429, %v4462
  %v4464 = vand.u32 %v3989, 4294901760
  %4465 = vmatmul.f32.gmra.mxu0 %v4464
  %v4466 = vpop.f32.mrf.mxu0
  %v4467 = vadd.f32 %v4433, %v4466
  %4468 = vdwg.mxu0
  %s4469 = scalar_lea.vmem %s5, 32
  %v4470 = vld [vmem:[%s4469] sm:$0xff]
  %v4471 = vld [vmem:[%s4469 + $0x8] sm:$0xff]
  %v4472 = vld [vmem:[%s4469 + $0x10] sm:$0xff]
  %v4473 = vld [vmem:[%s4469 + $0x18] sm:$0xff]
  %v4475 = vsel %vm2161, %v4470, 0
  %v4478 = vsel %vm2161, %v4471, 0
  %v4481 = vsel %vm2161, %v4472, 0
  %v4484 = vsel %vm2161, %v4473, 0
  %4486 = vmatpush.msra.mxu0 0.0
  %4487 = vmatpush.msra.mxu0 0.0
  %4488 = vmatpush.msra.mxu0 0.0
  %4489 = vmatpush.msra.mxu0 0.0
  %4490 = vmatpush.msra.mxu0 0.0
  %4491 = vmatpush.msra.mxu0 0.0
  %4492 = vmatpush.msra.mxu0 0.0
  %4493 = vmatpush.msra.mxu0 0.0
  %4494 = vmatpush.msra.mxu0 0.0
  %4495 = vmatpush.msra.mxu0 0.0
  %4496 = vmatpush.msra.mxu0 0.0
  %4497 = vmatpush.msra.mxu0 0.0
  %4498 = vmatpush.msra.mxu0 0.0
  %4499 = vmatpush.msra.mxu0 0.0
  %4500 = vmatpush.msra.mxu0 0.0
  %v4501 = vand.u32 %v42, 4294901760
  %4502 = vmatpush.msra.mxu0 %v4501
  %v4503 = vand.u32 %v4475, 4294901760
  %v4504 = vsub.f32 %v4475, %v4503
  %v4505 = vand.u32 %v4504, 4294901760
  %v4506 = vsub.f32 %v4504, %v4505
  %v4507 = vand.u32 %v4506, 4294901760
  %4508 = vmatmul.f32.gmra.mxu0 %v4507
  %v4509 = vpop.f32.mrf.mxu0
  %v4510 = vadd.f32 0.0, %v4509
  %v4511 = vand.u32 %v4478, 4294901760
  %v4512 = vsub.f32 %v4478, %v4511
  %v4513 = vand.u32 %v4512, 4294901760
  %v4514 = vsub.f32 %v4512, %v4513
  %v4515 = vand.u32 %v4514, 4294901760
  %4516 = vmatmul.f32.gmra.mxu0 %v4515
  %v4517 = vpop.f32.mrf.mxu0
  %v4518 = vadd.f32 0.0, %v4517
  %v4519 = vand.u32 %v4481, 4294901760
  %v4520 = vsub.f32 %v4481, %v4519
  %v4521 = vand.u32 %v4520, 4294901760
  %v4522 = vsub.f32 %v4520, %v4521
  %v4523 = vand.u32 %v4522, 4294901760
  %4524 = vmatmul.f32.gmra.mxu0 %v4523
  %v4525 = vpop.f32.mrf.mxu0
  %v4526 = vadd.f32 0.0, %v4525
  %v4527 = vand.u32 %v4484, 4294901760
  %v4528 = vsub.f32 %v4484, %v4527
  %v4529 = vand.u32 %v4528, 4294901760
  %v4530 = vsub.f32 %v4528, %v4529
  %v4531 = vand.u32 %v4530, 4294901760
  %4532 = vmatmul.f32.gmra.mxu0 %v4531
  %v4533 = vpop.f32.mrf.mxu0
  %v4534 = vadd.f32 0.0, %v4533
  %4535 = vdwg.mxu0
  %4536 = vmatpush.msra.mxu0 0.0
  %4537 = vmatpush.msra.mxu0 0.0
  %4538 = vmatpush.msra.mxu0 0.0
  %4539 = vmatpush.msra.mxu0 0.0
  %4540 = vmatpush.msra.mxu0 0.0
  %4541 = vmatpush.msra.mxu0 0.0
  %4542 = vmatpush.msra.mxu0 0.0
  %4543 = vmatpush.msra.mxu0 0.0
  %4544 = vmatpush.msra.mxu0 0.0
  %4545 = vmatpush.msra.mxu0 0.0
  %4546 = vmatpush.msra.mxu0 0.0
  %4547 = vmatpush.msra.mxu0 0.0
  %4548 = vmatpush.msra.mxu0 0.0
  %4549 = vmatpush.msra.mxu0 0.0
  %4550 = vmatpush.msra.mxu0 0.0
  %v4551 = vand.u32 %v42, 4294901760
  %v4552 = vsub.f32 %v42, %v4551
  %v4553 = vand.u32 %v4552, 4294901760
  %v4554 = vsub.f32 %v4552, %v4553
  %v4555 = vand.u32 %v4554, 4294901760
  %4556 = vmatpush.msra.mxu0 %v4555
  %v4557 = vand.u32 %v4475, 4294901760
  %4558 = vmatmul.f32.gmra.mxu0 %v4557
  %v4559 = vpop.f32.mrf.mxu0
  %v4560 = vadd.f32 %v4510, %v4559
  %v4561 = vand.u32 %v4478, 4294901760
  %4562 = vmatmul.f32.gmra.mxu0 %v4561
  %v4563 = vpop.f32.mrf.mxu0
  %v4564 = vadd.f32 %v4518, %v4563
  %v4565 = vand.u32 %v4481, 4294901760
  %4566 = vmatmul.f32.gmra.mxu0 %v4565
  %v4567 = vpop.f32.mrf.mxu0
  %v4568 = vadd.f32 %v4526, %v4567
  %v4569 = vand.u32 %v4484, 4294901760
  %4570 = vmatmul.f32.gmra.mxu0 %v4569
  %v4571 = vpop.f32.mrf.mxu0
  %v4572 = vadd.f32 %v4534, %v4571
  %4573 = vdwg.mxu0
  %4574 = vmatpush.msra.mxu0 0.0
  %4575 = vmatpush.msra.mxu0 0.0
  %4576 = vmatpush.msra.mxu0 0.0
  %4577 = vmatpush.msra.mxu0 0.0
  %4578 = vmatpush.msra.mxu0 0.0
  %4579 = vmatpush.msra.mxu0 0.0
  %4580 = vmatpush.msra.mxu0 0.0
  %4581 = vmatpush.msra.mxu0 0.0
  %4582 = vmatpush.msra.mxu0 0.0
  %4583 = vmatpush.msra.mxu0 0.0
  %4584 = vmatpush.msra.mxu0 0.0
  %4585 = vmatpush.msra.mxu0 0.0
  %4586 = vmatpush.msra.mxu0 0.0
  %4587 = vmatpush.msra.mxu0 0.0
  %4588 = vmatpush.msra.mxu0 0.0
  %v4589 = vand.u32 %v42, 4294901760
  %v4590 = vsub.f32 %v42, %v4589
  %4591 = vmatpush.msra.mxu0 %v4590
  %v4592 = vand.u32 %v4475, 4294901760
  %v4593 = vsub.f32 %v4475, %v4592
  %4594 = vmatmul.f32.gmra.mxu0 %v4593
  %v4595 = vpop.f32.mrf.mxu0
  %v4596 = vadd.f32 %v4560, %v4595
  %v4597 = vand.u32 %v4478, 4294901760
  %v4598 = vsub.f32 %v4478, %v4597
  %4599 = vmatmul.f32.gmra.mxu0 %v4598
  %v4600 = vpop.f32.mrf.mxu0
  %v4601 = vadd.f32 %v4564, %v4600
  %v4602 = vand.u32 %v4481, 4294901760
  %v4603 = vsub.f32 %v4481, %v4602
  %4604 = vmatmul.f32.gmra.mxu0 %v4603
  %v4605 = vpop.f32.mrf.mxu0
  %v4606 = vadd.f32 %v4568, %v4605
  %v4607 = vand.u32 %v4484, 4294901760
  %v4608 = vsub.f32 %v4484, %v4607
  %4609 = vmatmul.f32.gmra.mxu0 %v4608
  %v4610 = vpop.f32.mrf.mxu0
  %v4611 = vadd.f32 %v4572, %v4610
  %4612 = vdwg.mxu0
  %4613 = vmatpush.msra.mxu0 0.0
  %4614 = vmatpush.msra.mxu0 0.0
  %4615 = vmatpush.msra.mxu0 0.0
  %4616 = vmatpush.msra.mxu0 0.0
  %4617 = vmatpush.msra.mxu0 0.0
  %4618 = vmatpush.msra.mxu0 0.0
  %4619 = vmatpush.msra.mxu0 0.0
  %4620 = vmatpush.msra.mxu0 0.0
  %4621 = vmatpush.msra.mxu0 0.0
  %4622 = vmatpush.msra.mxu0 0.0
  %4623 = vmatpush.msra.mxu0 0.0
  %4624 = vmatpush.msra.mxu0 0.0
  %4625 = vmatpush.msra.mxu0 0.0
  %4626 = vmatpush.msra.mxu0 0.0
  %4627 = vmatpush.msra.mxu0 0.0
  %v4628 = vand.u32 %v42, 4294901760
  %4629 = vmatpush.msra.mxu0 %v4628
  %v4630 = vand.u32 %v4475, 4294901760
  %v4631 = vsub.f32 %v4475, %v4630
  %v4632 = vand.u32 %v4631, 4294901760
  %4633 = vmatmul.f32.gmra.mxu0 %v4632
  %v4634 = vpop.f32.mrf.mxu0
  %v4635 = vadd.f32 %v4596, %v4634
  %v4636 = vand.u32 %v4478, 4294901760
  %v4637 = vsub.f32 %v4478, %v4636
  %v4638 = vand.u32 %v4637, 4294901760
  %4639 = vmatmul.f32.gmra.mxu0 %v4638
  %v4640 = vpop.f32.mrf.mxu0
  %v4641 = vadd.f32 %v4601, %v4640
  %v4642 = vand.u32 %v4481, 4294901760
  %v4643 = vsub.f32 %v4481, %v4642
  %v4644 = vand.u32 %v4643, 4294901760
  %4645 = vmatmul.f32.gmra.mxu0 %v4644
  %v4646 = vpop.f32.mrf.mxu0
  %v4647 = vadd.f32 %v4606, %v4646
  %v4648 = vand.u32 %v4484, 4294901760
  %v4649 = vsub.f32 %v4484, %v4648
  %v4650 = vand.u32 %v4649, 4294901760
  %4651 = vmatmul.f32.gmra.mxu0 %v4650
  %v4652 = vpop.f32.mrf.mxu0
  %v4653 = vadd.f32 %v4611, %v4652
  %4654 = vdwg.mxu0
  %4655 = vmatpush.msra.mxu0 0.0
  %4656 = vmatpush.msra.mxu0 0.0
  %4657 = vmatpush.msra.mxu0 0.0
  %4658 = vmatpush.msra.mxu0 0.0
  %4659 = vmatpush.msra.mxu0 0.0
  %4660 = vmatpush.msra.mxu0 0.0
  %4661 = vmatpush.msra.mxu0 0.0
  %4662 = vmatpush.msra.mxu0 0.0
  %4663 = vmatpush.msra.mxu0 0.0
  %4664 = vmatpush.msra.mxu0 0.0
  %4665 = vmatpush.msra.mxu0 0.0
  %4666 = vmatpush.msra.mxu0 0.0
  %4667 = vmatpush.msra.mxu0 0.0
  %4668 = vmatpush.msra.mxu0 0.0
  %4669 = vmatpush.msra.mxu0 0.0
  %v4670 = vand.u32 %v42, 4294901760
  %v4671 = vsub.f32 %v42, %v4670
  %v4672 = vand.u32 %v4671, 4294901760
  %4673 = vmatpush.msra.mxu0 %v4672
  %v4674 = vand.u32 %v4475, 4294901760
  %4675 = vmatmul.f32.gmra.mxu0 %v4674
  %v4676 = vpop.f32.mrf.mxu0
  %v4677 = vadd.f32 %v4635, %v4676
  %v4678 = vand.u32 %v4478, 4294901760
  %4679 = vmatmul.f32.gmra.mxu0 %v4678
  %v4680 = vpop.f32.mrf.mxu0
  %v4681 = vadd.f32 %v4641, %v4680
  %v4682 = vand.u32 %v4481, 4294901760
  %4683 = vmatmul.f32.gmra.mxu0 %v4682
  %v4684 = vpop.f32.mrf.mxu0
  %v4685 = vadd.f32 %v4647, %v4684
  %v4686 = vand.u32 %v4484, 4294901760
  %4687 = vmatmul.f32.gmra.mxu0 %v4686
  %v4688 = vpop.f32.mrf.mxu0
  %v4689 = vadd.f32 %v4653, %v4688
  %4690 = vdwg.mxu0
  %4691 = vmatpush.msra.mxu0 0.0
  %4692 = vmatpush.msra.mxu0 0.0
  %4693 = vmatpush.msra.mxu0 0.0
  %4694 = vmatpush.msra.mxu0 0.0
  %4695 = vmatpush.msra.mxu0 0.0
  %4696 = vmatpush.msra.mxu0 0.0
  %4697 = vmatpush.msra.mxu0 0.0
  %4698 = vmatpush.msra.mxu0 0.0
  %4699 = vmatpush.msra.mxu0 0.0
  %4700 = vmatpush.msra.mxu0 0.0
  %4701 = vmatpush.msra.mxu0 0.0
  %4702 = vmatpush.msra.mxu0 0.0
  %4703 = vmatpush.msra.mxu0 0.0
  %4704 = vmatpush.msra.mxu0 0.0
  %4705 = vmatpush.msra.mxu0 0.0
  %v4706 = vand.u32 %v42, 4294901760
  %4707 = vmatpush.msra.mxu0 %v4706
  %v4708 = vand.u32 %v4475, 4294901760
  %4709 = vmatmul.f32.gmra.mxu0 %v4708
  %v4710 = vpop.f32.mrf.mxu0
  %v4711 = vadd.f32 %v4677, %v4710
  %v4712 = vand.u32 %v4478, 4294901760
  %4713 = vmatmul.f32.gmra.mxu0 %v4712
  %v4714 = vpop.f32.mrf.mxu0
  %v4715 = vadd.f32 %v4681, %v4714
  %v4716 = vand.u32 %v4481, 4294901760
  %4717 = vmatmul.f32.gmra.mxu0 %v4716
  %v4718 = vpop.f32.mrf.mxu0
  %v4719 = vadd.f32 %v4685, %v4718
  %v4720 = vand.u32 %v4484, 4294901760
  %4721 = vmatmul.f32.gmra.mxu0 %v4720
  %v4722 = vpop.f32.mrf.mxu0
  %v4723 = vadd.f32 %v4689, %v4722
  %4724 = vdwg.mxu0
  %4725 = vmatpush.msra.mxu0 0.0
  %4726 = vmatpush.msra.mxu0 0.0
  %4727 = vmatpush.msra.mxu0 0.0
  %4728 = vmatpush.msra.mxu0 0.0
  %4729 = vmatpush.msra.mxu0 0.0
  %4730 = vmatpush.msra.mxu0 0.0
  %4731 = vmatpush.msra.mxu0 0.0
  %4732 = vmatpush.msra.mxu0 0.0
  %4733 = vmatpush.msra.mxu0 0.0
  %4734 = vmatpush.msra.mxu0 0.0
  %4735 = vmatpush.msra.mxu0 0.0
  %4736 = vmatpush.msra.mxu0 0.0
  %4737 = vmatpush.msra.mxu0 0.0
  %4738 = vmatpush.msra.mxu0 0.0
  %4739 = vmatpush.msra.mxu0 0.0
  %v4740 = vand.u32 %v43, 4294901760
  %4741 = vmatpush.msra.mxu0 %v4740
  %v4742 = vand.u32 %v4475, 4294901760
  %v4743 = vsub.f32 %v4475, %v4742
  %v4744 = vand.u32 %v4743, 4294901760
  %v4745 = vsub.f32 %v4743, %v4744
  %v4746 = vand.u32 %v4745, 4294901760
  %4747 = vmatmul.f32.gmra.mxu0 %v4746
  %v4748 = vpop.f32.mrf.mxu0
  %v4749 = vadd.f32 0.0, %v4748
  %v4750 = vand.u32 %v4478, 4294901760
  %v4751 = vsub.f32 %v4478, %v4750
  %v4752 = vand.u32 %v4751, 4294901760
  %v4753 = vsub.f32 %v4751, %v4752
  %v4754 = vand.u32 %v4753, 4294901760
  %4755 = vmatmul.f32.gmra.mxu0 %v4754
  %v4756 = vpop.f32.mrf.mxu0
  %v4757 = vadd.f32 0.0, %v4756
  %v4758 = vand.u32 %v4481, 4294901760
  %v4759 = vsub.f32 %v4481, %v4758
  %v4760 = vand.u32 %v4759, 4294901760
  %v4761 = vsub.f32 %v4759, %v4760
  %v4762 = vand.u32 %v4761, 4294901760
  %4763 = vmatmul.f32.gmra.mxu0 %v4762
  %v4764 = vpop.f32.mrf.mxu0
  %v4765 = vadd.f32 0.0, %v4764
  %v4766 = vand.u32 %v4484, 4294901760
  %v4767 = vsub.f32 %v4484, %v4766
  %v4768 = vand.u32 %v4767, 4294901760
  %v4769 = vsub.f32 %v4767, %v4768
  %v4770 = vand.u32 %v4769, 4294901760
  %4771 = vmatmul.f32.gmra.mxu0 %v4770
  %v4772 = vpop.f32.mrf.mxu0
  %v4773 = vadd.f32 0.0, %v4772
  %4774 = vdwg.mxu0
  %4775 = vmatpush.msra.mxu0 0.0
  %4776 = vmatpush.msra.mxu0 0.0
  %4777 = vmatpush.msra.mxu0 0.0
  %4778 = vmatpush.msra.mxu0 0.0
  %4779 = vmatpush.msra.mxu0 0.0
  %4780 = vmatpush.msra.mxu0 0.0
  %4781 = vmatpush.msra.mxu0 0.0
  %4782 = vmatpush.msra.mxu0 0.0
  %4783 = vmatpush.msra.mxu0 0.0
  %4784 = vmatpush.msra.mxu0 0.0
  %4785 = vmatpush.msra.mxu0 0.0
  %4786 = vmatpush.msra.mxu0 0.0
  %4787 = vmatpush.msra.mxu0 0.0
  %4788 = vmatpush.msra.mxu0 0.0
  %4789 = vmatpush.msra.mxu0 0.0
  %v4790 = vand.u32 %v43, 4294901760
  %v4791 = vsub.f32 %v43, %v4790
  %v4792 = vand.u32 %v4791, 4294901760
  %v4793 = vsub.f32 %v4791, %v4792
  %v4794 = vand.u32 %v4793, 4294901760
  %4795 = vmatpush.msra.mxu0 %v4794
  %v4796 = vand.u32 %v4475, 4294901760
  %4797 = vmatmul.f32.gmra.mxu0 %v4796
  %v4798 = vpop.f32.mrf.mxu0
  %v4799 = vadd.f32 %v4749, %v4798
  %v4800 = vand.u32 %v4478, 4294901760
  %4801 = vmatmul.f32.gmra.mxu0 %v4800
  %v4802 = vpop.f32.mrf.mxu0
  %v4803 = vadd.f32 %v4757, %v4802
  %v4804 = vand.u32 %v4481, 4294901760
  %4805 = vmatmul.f32.gmra.mxu0 %v4804
  %v4806 = vpop.f32.mrf.mxu0
  %v4807 = vadd.f32 %v4765, %v4806
  %v4808 = vand.u32 %v4484, 4294901760
  %4809 = vmatmul.f32.gmra.mxu0 %v4808
  %v4810 = vpop.f32.mrf.mxu0
  %v4811 = vadd.f32 %v4773, %v4810
  %4812 = vdwg.mxu0
  %4813 = vmatpush.msra.mxu0 0.0
  %4814 = vmatpush.msra.mxu0 0.0
  %4815 = vmatpush.msra.mxu0 0.0
  %4816 = vmatpush.msra.mxu0 0.0
  %4817 = vmatpush.msra.mxu0 0.0
  %4818 = vmatpush.msra.mxu0 0.0
  %4819 = vmatpush.msra.mxu0 0.0
  %4820 = vmatpush.msra.mxu0 0.0
  %4821 = vmatpush.msra.mxu0 0.0
  %4822 = vmatpush.msra.mxu0 0.0
  %4823 = vmatpush.msra.mxu0 0.0
  %4824 = vmatpush.msra.mxu0 0.0
  %4825 = vmatpush.msra.mxu0 0.0
  %4826 = vmatpush.msra.mxu0 0.0
  %4827 = vmatpush.msra.mxu0 0.0
  %v4828 = vand.u32 %v43, 4294901760
  %v4829 = vsub.f32 %v43, %v4828
  %4830 = vmatpush.msra.mxu0 %v4829
  %v4831 = vand.u32 %v4475, 4294901760
  %v4832 = vsub.f32 %v4475, %v4831
  %4833 = vmatmul.f32.gmra.mxu0 %v4832
  %v4834 = vpop.f32.mrf.mxu0
  %v4835 = vadd.f32 %v4799, %v4834
  %v4836 = vand.u32 %v4478, 4294901760
  %v4837 = vsub.f32 %v4478, %v4836
  %4838 = vmatmul.f32.gmra.mxu0 %v4837
  %v4839 = vpop.f32.mrf.mxu0
  %v4840 = vadd.f32 %v4803, %v4839
  %v4841 = vand.u32 %v4481, 4294901760
  %v4842 = vsub.f32 %v4481, %v4841
  %4843 = vmatmul.f32.gmra.mxu0 %v4842
  %v4844 = vpop.f32.mrf.mxu0
  %v4845 = vadd.f32 %v4807, %v4844
  %v4846 = vand.u32 %v4484, 4294901760
  %v4847 = vsub.f32 %v4484, %v4846
  %4848 = vmatmul.f32.gmra.mxu0 %v4847
  %v4849 = vpop.f32.mrf.mxu0
  %v4850 = vadd.f32 %v4811, %v4849
  %4851 = vdwg.mxu0
  %4852 = vmatpush.msra.mxu0 0.0
  %4853 = vmatpush.msra.mxu0 0.0
  %4854 = vmatpush.msra.mxu0 0.0
  %4855 = vmatpush.msra.mxu0 0.0
  %4856 = vmatpush.msra.mxu0 0.0
  %4857 = vmatpush.msra.mxu0 0.0
  %4858 = vmatpush.msra.mxu0 0.0
  %4859 = vmatpush.msra.mxu0 0.0
  %4860 = vmatpush.msra.mxu0 0.0
  %4861 = vmatpush.msra.mxu0 0.0
  %4862 = vmatpush.msra.mxu0 0.0
  %4863 = vmatpush.msra.mxu0 0.0
  %4864 = vmatpush.msra.mxu0 0.0
  %4865 = vmatpush.msra.mxu0 0.0
  %4866 = vmatpush.msra.mxu0 0.0
  %v4867 = vand.u32 %v43, 4294901760
  %4868 = vmatpush.msra.mxu0 %v4867
  %v4869 = vand.u32 %v4475, 4294901760
  %v4870 = vsub.f32 %v4475, %v4869
  %v4871 = vand.u32 %v4870, 4294901760
  %4872 = vmatmul.f32.gmra.mxu0 %v4871
  %v4873 = vpop.f32.mrf.mxu0
  %v4874 = vadd.f32 %v4835, %v4873
  %v4875 = vand.u32 %v4478, 4294901760
  %v4876 = vsub.f32 %v4478, %v4875
  %v4877 = vand.u32 %v4876, 4294901760
  %4878 = vmatmul.f32.gmra.mxu0 %v4877
  %v4879 = vpop.f32.mrf.mxu0
  %v4880 = vadd.f32 %v4840, %v4879
  %v4881 = vand.u32 %v4481, 4294901760
  %v4882 = vsub.f32 %v4481, %v4881
  %v4883 = vand.u32 %v4882, 4294901760
  %4884 = vmatmul.f32.gmra.mxu0 %v4883
  %v4885 = vpop.f32.mrf.mxu0
  %v4886 = vadd.f32 %v4845, %v4885
  %v4887 = vand.u32 %v4484, 4294901760
  %v4888 = vsub.f32 %v4484, %v4887
  %v4889 = vand.u32 %v4888, 4294901760
  %4890 = vmatmul.f32.gmra.mxu0 %v4889
  %v4891 = vpop.f32.mrf.mxu0
  %v4892 = vadd.f32 %v4850, %v4891
  %4893 = vdwg.mxu0
  %4894 = vmatpush.msra.mxu0 0.0
  %4895 = vmatpush.msra.mxu0 0.0
  %4896 = vmatpush.msra.mxu0 0.0
  %4897 = vmatpush.msra.mxu0 0.0
  %4898 = vmatpush.msra.mxu0 0.0
  %4899 = vmatpush.msra.mxu0 0.0
  %4900 = vmatpush.msra.mxu0 0.0
  %4901 = vmatpush.msra.mxu0 0.0
  %4902 = vmatpush.msra.mxu0 0.0
  %4903 = vmatpush.msra.mxu0 0.0
  %4904 = vmatpush.msra.mxu0 0.0
  %4905 = vmatpush.msra.mxu0 0.0
  %4906 = vmatpush.msra.mxu0 0.0
  %4907 = vmatpush.msra.mxu0 0.0
  %4908 = vmatpush.msra.mxu0 0.0
  %v4909 = vand.u32 %v43, 4294901760
  %v4910 = vsub.f32 %v43, %v4909
  %v4911 = vand.u32 %v4910, 4294901760
  %4912 = vmatpush.msra.mxu0 %v4911
  %v4913 = vand.u32 %v4475, 4294901760
  %4914 = vmatmul.f32.gmra.mxu0 %v4913
  %v4915 = vpop.f32.mrf.mxu0
  %v4916 = vadd.f32 %v4874, %v4915
  %v4917 = vand.u32 %v4478, 4294901760
  %4918 = vmatmul.f32.gmra.mxu0 %v4917
  %v4919 = vpop.f32.mrf.mxu0
  %v4920 = vadd.f32 %v4880, %v4919
  %v4921 = vand.u32 %v4481, 4294901760
  %4922 = vmatmul.f32.gmra.mxu0 %v4921
  %v4923 = vpop.f32.mrf.mxu0
  %v4924 = vadd.f32 %v4886, %v4923
  %v4925 = vand.u32 %v4484, 4294901760
  %4926 = vmatmul.f32.gmra.mxu0 %v4925
  %v4927 = vpop.f32.mrf.mxu0
  %v4928 = vadd.f32 %v4892, %v4927
  %4929 = vdwg.mxu0
  %4930 = vmatpush.msra.mxu0 0.0
  %4931 = vmatpush.msra.mxu0 0.0
  %4932 = vmatpush.msra.mxu0 0.0
  %4933 = vmatpush.msra.mxu0 0.0
  %4934 = vmatpush.msra.mxu0 0.0
  %4935 = vmatpush.msra.mxu0 0.0
  %4936 = vmatpush.msra.mxu0 0.0
  %4937 = vmatpush.msra.mxu0 0.0
  %4938 = vmatpush.msra.mxu0 0.0
  %4939 = vmatpush.msra.mxu0 0.0
  %4940 = vmatpush.msra.mxu0 0.0
  %4941 = vmatpush.msra.mxu0 0.0
  %4942 = vmatpush.msra.mxu0 0.0
  %4943 = vmatpush.msra.mxu0 0.0
  %4944 = vmatpush.msra.mxu0 0.0
  %v4945 = vand.u32 %v43, 4294901760
  %4946 = vmatpush.msra.mxu0 %v4945
  %v4947 = vand.u32 %v4475, 4294901760
  %4948 = vmatmul.f32.gmra.mxu0 %v4947
  %v4949 = vpop.f32.mrf.mxu0
  %v4950 = vadd.f32 %v4916, %v4949
  %v4951 = vand.u32 %v4478, 4294901760
  %4952 = vmatmul.f32.gmra.mxu0 %v4951
  %v4953 = vpop.f32.mrf.mxu0
  %v4954 = vadd.f32 %v4920, %v4953
  %v4955 = vand.u32 %v4481, 4294901760
  %4956 = vmatmul.f32.gmra.mxu0 %v4955
  %v4957 = vpop.f32.mrf.mxu0
  %v4958 = vadd.f32 %v4924, %v4957
  %v4959 = vand.u32 %v4484, 4294901760
  %4960 = vmatmul.f32.gmra.mxu0 %v4959
  %v4961 = vpop.f32.mrf.mxu0
  %v4962 = vadd.f32 %v4928, %v4961
  %4963 = vdwg.mxu0
  %v4964 = vmul.f32 %v4711, 0.5
  %v4965 = vmul.f32 %v4950, 0.5
  %v4966 = vmul.f32 %v4715, 0.5
  %v4967 = vmul.f32 %v4954, 0.5
  %v4968 = vmul.f32 %v4719, 0.5
  %v4969 = vmul.f32 %v4958, 0.5
  %v4970 = vmul.f32 %v4723, 0.5
  %v4971 = vmul.f32 %v4962, 0.5
  %v4972 = vadd.f32 %v4216, %v4964
  %v4973 = vadd.f32 %v4455, %v4965
  %v4974 = vadd.f32 %v4220, %v4966
  %v4975 = vadd.f32 %v4459, %v4967
  %v4976 = vadd.f32 %v4224, %v4968
  %v4977 = vadd.f32 %v4463, %v4969
  %v4978 = vadd.f32 %v4228, %v4970
  %v4979 = vadd.f32 %v4467, %v4971
  %v4980 = vsub.f32 %v4216, %v4964
  %v4981 = vsub.f32 %v4455, %v4965
  %v4982 = vsub.f32 %v4220, %v4966
  %v4983 = vsub.f32 %v4459, %v4967
  %v4984 = vsub.f32 %v4224, %v4968
  %v4985 = vsub.f32 %v4463, %v4969
  %v4986 = vsub.f32 %v4228, %v4970
  %v4987 = vsub.f32 %v4467, %v4971
  %v4988 = vmin.f32 %v4980, %v4972
  %v4989 = vmin.f32 %v4981, %v4973
  %v4990 = vmin.f32 %v4982, %v4974
  %v4991 = vmin.f32 %v4983, %v4975
  %v4992 = vmin.f32 %v4984, %v4976
  %v4993 = vmin.f32 %v4985, %v4977
  %v4994 = vmin.f32 %v4986, %v4978
  %v4995 = vmin.f32 %v4987, %v4979
  %v4996 = vmax.f32 %v4980, %v4972
  %v4997 = vmax.f32 %v4981, %v4973
  %v4998 = vmax.f32 %v4982, %v4974
  %v4999 = vmax.f32 %v4983, %v4975
  %v5000 = vmax.f32 %v4984, %v4976
  %v5001 = vmax.f32 %v4985, %v4977
  %v5002 = vmax.f32 %v4986, %v4978
  %v5003 = vmax.f32 %v4987, %v4979
  %v5004 = vsub.f32 %v4996, %v4988
  %v5005 = vsub.f32 %v4997, %v4989
  %v5006 = vsub.f32 %v4998, %v4990
  %v5007 = vsub.f32 %v4999, %v4991
  %v5008 = vsub.f32 %v5000, %v4992
  %v5009 = vsub.f32 %v5001, %v4993
  %v5010 = vsub.f32 %v5002, %v4994
  %v5011 = vsub.f32 %v5003, %v4995
  %v5012 = vadd.f32 %v5004, 1.0
  %v5013 = vadd.f32 %v5005, 1.0
  %v5014 = vadd.f32 %v5006, 1.0
  %v5015 = vadd.f32 %v5007, 1.0
  %v5016 = vadd.f32 %v5008, 1.0
  %v5017 = vadd.f32 %v5009, 1.0
  %v5018 = vadd.f32 %v5010, 1.0
  %v5019 = vadd.f32 %v5011, 1.0
  %v5020 = vrcp.pop %v5012
  %v5021 = vmul.f32 %v5012, %v5020
  %v5022 = vsub.f32 1.0, %v5021
  %v5023 = vmul.f32 %v5020, %v5022
  %v5024 = vadd.f32 %v5020, %v5023
  %vm5025 = vweird.f32 %v5012
  %vm5026 = vweird.f32 %v5020
  %vm5027 = vmor %vm5025, %vm5026
  %v5028 = vsel %vm5027, %v5020, %v5024
  %v5029 = vand.u32 2147483647, %v5012
  %vm5030 = vcmp.eq.f32.partialorder %v5029, 8.507059e+37
  %v5031 = vand.u32 %v5012, 2147483648
  %v5032 = vor.u32 1.1754944e-38, %v5031
  %v5033 = vsel %vm5030, %v5032, %v5028
  %v5034 = vmul.f32 1.0, %v5033
  %v5035 = vrcp.pop %v5013
  %v5036 = vmul.f32 %v5013, %v5035
  %v5037 = vsub.f32 1.0, %v5036
  %v5038 = vmul.f32 %v5035, %v5037
  %v5039 = vadd.f32 %v5035, %v5038
  %vm5040 = vweird.f32 %v5013
  %vm5041 = vweird.f32 %v5035
  %vm5042 = vmor %vm5040, %vm5041
  %v5043 = vsel %vm5042, %v5035, %v5039
  %v5044 = vand.u32 2147483647, %v5013
  %vm5045 = vcmp.eq.f32.partialorder %v5044, 8.507059e+37
  %v5046 = vand.u32 %v5013, 2147483648
  %v5047 = vor.u32 1.1754944e-38, %v5046
  %v5048 = vsel %vm5045, %v5047, %v5043
  %v5049 = vmul.f32 1.0, %v5048
  %v5050 = vrcp.pop %v5014
  %v5051 = vmul.f32 %v5014, %v5050
  %v5052 = vsub.f32 1.0, %v5051
  %v5053 = vmul.f32 %v5050, %v5052
  %v5054 = vadd.f32 %v5050, %v5053
  %vm5055 = vweird.f32 %v5014
  %vm5056 = vweird.f32 %v5050
  %vm5057 = vmor %vm5055, %vm5056
  %v5058 = vsel %vm5057, %v5050, %v5054
  %v5059 = vand.u32 2147483647, %v5014
  %vm5060 = vcmp.eq.f32.partialorder %v5059, 8.507059e+37
  %v5061 = vand.u32 %v5014, 2147483648
  %v5062 = vor.u32 1.1754944e-38, %v5061
  %v5063 = vsel %vm5060, %v5062, %v5058
  %v5064 = vmul.f32 1.0, %v5063
  %v5065 = vrcp.pop %v5015
  %v5066 = vmul.f32 %v5015, %v5065
  %v5067 = vsub.f32 1.0, %v5066
  %v5068 = vmul.f32 %v5065, %v5067
  %v5069 = vadd.f32 %v5065, %v5068
  %vm5070 = vweird.f32 %v5015
  %vm5071 = vweird.f32 %v5065
  %vm5072 = vmor %vm5070, %vm5071
  %v5073 = vsel %vm5072, %v5065, %v5069
  %v5074 = vand.u32 2147483647, %v5015
  %vm5075 = vcmp.eq.f32.partialorder %v5074, 8.507059e+37
  %v5076 = vand.u32 %v5015, 2147483648
  %v5077 = vor.u32 1.1754944e-38, %v5076
  %v5078 = vsel %vm5075, %v5077, %v5073
  %v5079 = vmul.f32 1.0, %v5078
  %v5080 = vrcp.pop %v5016
  %v5081 = vmul.f32 %v5016, %v5080
  %v5082 = vsub.f32 1.0, %v5081
  %v5083 = vmul.f32 %v5080, %v5082
  %v5084 = vadd.f32 %v5080, %v5083
  %vm5085 = vweird.f32 %v5016
  %vm5086 = vweird.f32 %v5080
  %vm5087 = vmor %vm5085, %vm5086
  %v5088 = vsel %vm5087, %v5080, %v5084
  %v5089 = vand.u32 2147483647, %v5016
  %vm5090 = vcmp.eq.f32.partialorder %v5089, 8.507059e+37
  %v5091 = vand.u32 %v5016, 2147483648
  %v5092 = vor.u32 1.1754944e-38, %v5091
  %v5093 = vsel %vm5090, %v5092, %v5088
  %v5094 = vmul.f32 1.0, %v5093
  %v5095 = vrcp.pop %v5017
  %v5096 = vmul.f32 %v5017, %v5095
  %v5097 = vsub.f32 1.0, %v5096
  %v5098 = vmul.f32 %v5095, %v5097
  %v5099 = vadd.f32 %v5095, %v5098
  %vm5100 = vweird.f32 %v5017
  %vm5101 = vweird.f32 %v5095
  %vm5102 = vmor %vm5100, %vm5101
  %v5103 = vsel %vm5102, %v5095, %v5099
  %v5104 = vand.u32 2147483647, %v5017
  %vm5105 = vcmp.eq.f32.partialorder %v5104, 8.507059e+37
  %v5106 = vand.u32 %v5017, 2147483648
  %v5107 = vor.u32 1.1754944e-38, %v5106
  %v5108 = vsel %vm5105, %v5107, %v5103
  %v5109 = vmul.f32 1.0, %v5108
  %v5110 = vrcp.pop %v5018
  %v5111 = vmul.f32 %v5018, %v5110
  %v5112 = vsub.f32 1.0, %v5111
  %v5113 = vmul.f32 %v5110, %v5112
  %v5114 = vadd.f32 %v5110, %v5113
  %vm5115 = vweird.f32 %v5018
  %vm5116 = vweird.f32 %v5110
  %vm5117 = vmor %vm5115, %vm5116
  %v5118 = vsel %vm5117, %v5110, %v5114
  %v5119 = vand.u32 2147483647, %v5018
  %vm5120 = vcmp.eq.f32.partialorder %v5119, 8.507059e+37
  %v5121 = vand.u32 %v5018, 2147483648
  %v5122 = vor.u32 1.1754944e-38, %v5121
  %v5123 = vsel %vm5120, %v5122, %v5118
  %v5124 = vmul.f32 1.0, %v5123
  %v5125 = vrcp.pop %v5019
  %v5126 = vmul.f32 %v5019, %v5125
  %v5127 = vsub.f32 1.0, %v5126
  %v5128 = vmul.f32 %v5125, %v5127
  %v5129 = vadd.f32 %v5125, %v5128
  %vm5130 = vweird.f32 %v5019
  %vm5131 = vweird.f32 %v5125
  %vm5132 = vmor %vm5130, %vm5131
  %v5133 = vsel %vm5132, %v5125, %v5129
  %v5134 = vand.u32 2147483647, %v5019
  %vm5135 = vcmp.eq.f32.partialorder %v5134, 8.507059e+37
  %v5136 = vand.u32 %v5019, 2147483648
  %v5137 = vor.u32 1.1754944e-38, %v5136
  %v5138 = vsel %vm5135, %v5137, %v5133
  %v5139 = vmul.f32 1.0, %v5138
  %v5140 = vadd.f32 %v4988, %v4996
  %v5141 = vadd.f32 %v4989, %v4997
  %v5142 = vadd.f32 %v4990, %v4998
  %v5143 = vadd.f32 %v4991, %v4999
  %v5144 = vadd.f32 %v4992, %v5000
  %v5145 = vadd.f32 %v4993, %v5001
  %v5146 = vadd.f32 %v4994, %v5002
  %v5147 = vadd.f32 %v4995, %v5003
  %v5148 = vmul.f32 %v5140, 0.5
  %v5149 = vmul.f32 %v5141, 0.5
  %v5150 = vmul.f32 %v5142, 0.5
  %v5151 = vmul.f32 %v5143, 0.5
  %v5152 = vmul.f32 %v5144, 0.5
  %v5153 = vmul.f32 %v5145, 0.5
  %v5154 = vmul.f32 %v5146, 0.5
  %v5155 = vmul.f32 %v5147, 0.5
  %v5156 = vsub.f32 %v3966, %v5148
  %v5157 = vsub.f32 %v3967, %v5149
  %v5158 = vsub.f32 %v3968, %v5150
  %v5159 = vsub.f32 %v3969, %v5151
  %v5160 = vsub.f32 %v3970, %v5152
  %v5161 = vsub.f32 %v3971, %v5153
  %v5162 = vsub.f32 %v3972, %v5154
  %v5163 = vsub.f32 %v3973, %v5155
  %v5164 = vand.u32 2147483647, %v5156
  %v5165 = vand.u32 2147483647, %v5157
  %v5166 = vand.u32 2147483647, %v5158
  %v5167 = vand.u32 2147483647, %v5159
  %v5168 = vand.u32 2147483647, %v5160
  %v5169 = vand.u32 2147483647, %v5161
  %v5170 = vand.u32 2147483647, %v5162
  %v5171 = vand.u32 2147483647, %v5163
  %vm5172 = vcmp.le.f32.partialorder %v4988, %v3966
  %vm5173 = vcmp.le.f32.partialorder %v4989, %v3967
  %vm5174 = vcmp.le.f32.partialorder %v4990, %v3968
  %vm5175 = vcmp.le.f32.partialorder %v4991, %v3969
  %vm5176 = vcmp.le.f32.partialorder %v4992, %v3970
  %vm5177 = vcmp.le.f32.partialorder %v4993, %v3971
  %vm5178 = vcmp.le.f32.partialorder %v4994, %v3972
  %vm5179 = vcmp.le.f32.partialorder %v4995, %v3973
  %vm5180 = vcmp.le.f32.partialorder %v3966, %v4996
  %vm5181 = vcmp.le.f32.partialorder %v3967, %v4997
  %vm5182 = vcmp.le.f32.partialorder %v3968, %v4998
  %vm5183 = vcmp.le.f32.partialorder %v3969, %v4999
  %vm5184 = vcmp.le.f32.partialorder %v3970, %v5000
  %vm5185 = vcmp.le.f32.partialorder %v3971, %v5001
  %vm5186 = vcmp.le.f32.partialorder %v3972, %v5002
  %vm5187 = vcmp.le.f32.partialorder %v3973, %v5003
  %vm5188 = vmand %vm5172, %vm5180
  %vm5189 = vmand %vm5173, %vm5181
  %vm5190 = vmand %vm5174, %vm5182
  %vm5191 = vmand %vm5175, %vm5183
  %vm5192 = vmand %vm5176, %vm5184
  %vm5193 = vmand %vm5177, %vm5185
  %vm5194 = vmand %vm5178, %vm5186
  %vm5195 = vmand %vm5179, %vm5187
  %v5196 = vmul.f32 %v5164, %v5034
  %v5197 = vmul.f32 %v5165, %v5049
  %v5198 = vmul.f32 %v5166, %v5064
  %v5199 = vmul.f32 %v5167, %v5079
  %v5200 = vmul.f32 %v5168, %v5094
  %v5201 = vmul.f32 %v5169, %v5109
  %v5202 = vmul.f32 %v5170, %v5124
  %v5203 = vmul.f32 %v5171, %v5139
  %v5204 = vmul.f32 %v5012, %v5164
  %v5205 = vmul.f32 %v5013, %v5165
  %v5206 = vmul.f32 %v5014, %v5166
  %v5207 = vmul.f32 %v5015, %v5167
  %v5208 = vmul.f32 %v5016, %v5168
  %v5209 = vmul.f32 %v5017, %v5169
  %v5210 = vmul.f32 %v5018, %v5170
  %v5211 = vmul.f32 %v5019, %v5171
  %v5212 = vmul.f32 %v5004, 0.5
  %v5213 = vmul.f32 %v5005, 0.5
  %v5214 = vmul.f32 %v5006, 0.5
  %v5215 = vmul.f32 %v5007, 0.5
  %v5216 = vmul.f32 %v5008, 0.5
  %v5217 = vmul.f32 %v5009, 0.5
  %v5218 = vmul.f32 %v5010, 0.5
  %v5219 = vmul.f32 %v5011, 0.5
  %v5220 = vsub.f32 %v5012, %v5034
  %v5221 = vsub.f32 %v5013, %v5049
  %v5222 = vsub.f32 %v5014, %v5064
  %v5223 = vsub.f32 %v5015, %v5079
  %v5224 = vsub.f32 %v5016, %v5094
  %v5225 = vsub.f32 %v5017, %v5109
  %v5226 = vsub.f32 %v5018, %v5124
  %v5227 = vsub.f32 %v5019, %v5139
  %v5228 = vmul.f32 %v5212, %v5220
  %v5229 = vmul.f32 %v5213, %v5221
  %v5230 = vmul.f32 %v5214, %v5222
  %v5231 = vmul.f32 %v5215, %v5223
  %v5232 = vmul.f32 %v5216, %v5224
  %v5233 = vmul.f32 %v5217, %v5225
  %v5234 = vmul.f32 %v5218, %v5226
  %v5235 = vmul.f32 %v5219, %v5227
  %v5236 = vsub.f32 %v5204, %v5228
  %v5237 = vsub.f32 %v5205, %v5229
  %v5238 = vsub.f32 %v5206, %v5230
  %v5239 = vsub.f32 %v5207, %v5231
  %v5240 = vsub.f32 %v5208, %v5232
  %v5241 = vsub.f32 %v5209, %v5233
  %v5242 = vsub.f32 %v5210, %v5234
  %v5243 = vsub.f32 %v5211, %v5235
  %v5244 = vsel %vm5188, %v5196, %v5236
  %v5245 = vsel %vm5189, %v5197, %v5237
  %v5246 = vsel %vm5190, %v5198, %v5238
  %v5247 = vsel %vm5191, %v5199, %v5239
  %v5248 = vsel %vm5192, %v5200, %v5240
  %v5249 = vsel %vm5193, %v5201, %v5241
  %v5250 = vsel %vm5194, %v5202, %v5242
  %v5251 = vsel %vm5195, %v5203, %v5243
  %v5252 = vand.u32 2147483647, %v5244
  %v5253 = vand.u32 2147483647, %v5245
  %v5254 = vand.u32 2147483647, %v5246
  %v5255 = vand.u32 2147483647, %v5247
  %v5256 = vand.u32 2147483647, %v5248
  %v5257 = vand.u32 2147483647, %v5249
  %v5258 = vand.u32 2147483647, %v5250
  %v5259 = vand.u32 2147483647, %v5251
  %v5260 = vadd.f32 %v5252, %v5254
  %v5261 = vadd.f32 %v5260, %v5256
  %v5262 = vadd.f32 %v5261, %v5258
  %v5263 = vrot.slane %v5262, 4
  %v5264 = vadd.f32 %v5262, %v5263
  %v5265 = vrot.slane %v5264, 2
  %v5266 = vadd.f32 %v5264, %v5265
  %v5267 = vrot.slane %v5266, 1
  %v5268 = vadd.f32 %v5266, %v5267
  %v5269 = vadd.f32 %v5253, %v5255
  %v5270 = vadd.f32 %v5269, %v5257
  %v5271 = vadd.f32 %v5270, %v5259
  %v5272 = vrot.slane %v5271, 4
  %v5273 = vadd.f32 %v5271, %v5272
  %v5274 = vrot.slane %v5273, 2
  %v5275 = vadd.f32 %v5273, %v5274
  %v5276 = vrot.slane %v5275, 1
  %v5277 = vadd.f32 %v5275, %v5276
  %v5278 = vadd.f32 %v3460, %v5268
  %v5279 = vadd.f32 %v3461, %v5277
  %5280 = vmatpush.msra.mxu0 0.0
  %5281 = vmatpush.msra.mxu0 0.0
  %5282 = vmatpush.msra.mxu0 0.0
  %5283 = vmatpush.msra.mxu0 0.0
  %5284 = vmatpush.msra.mxu0 0.0
  %5285 = vmatpush.msra.mxu0 0.0
  %5286 = vmatpush.msra.mxu0 0.0
  %5287 = vmatpush.msra.mxu0 0.0
  %5288 = vmatpush.msra.mxu0 0.0
  %5289 = vmatpush.msra.mxu0 0.0
  %5290 = vmatpush.msra.mxu0 0.0
  %5291 = vmatpush.msra.mxu0 0.0
  %5292 = vmatpush.msra.mxu0 0.0
  %5293 = vmatpush.msra.mxu0 0.0
  %v5294 = vand.u32 %v1111, 4294901760
  %5295 = vmatpush.msra.mxu0 %v5294
  %v5296 = vand.u32 %v1109, 4294901760
  %5297 = vmatpush.msra.mxu0 %v5296
  %v5298 = vand.u32 %v1634, 4294901760
  %v5299 = vsub.f32 %v1634, %v5298
  %v5300 = vand.u32 %v5299, 4294901760
  %v5301 = vsub.f32 %v5299, %v5300
  %v5302 = vand.u32 %v5301, 4294901760
  %5303 = vmatmul.f32.gmra.mxu0 %v5302
  %v5304 = vpop.f32.mrf.mxu0
  %v5305 = vadd.f32 %v1625, %v5304
  %v5306 = vand.u32 %v1637, 4294901760
  %v5307 = vsub.f32 %v1637, %v5306
  %v5308 = vand.u32 %v5307, 4294901760
  %v5309 = vsub.f32 %v5307, %v5308
  %v5310 = vand.u32 %v5309, 4294901760
  %5311 = vmatmul.f32.gmra.mxu0 %v5310
  %v5312 = vpop.f32.mrf.mxu0
  %v5313 = vadd.f32 %v1627, %v5312
  %v5314 = vand.u32 %v1640, 4294901760
  %v5315 = vsub.f32 %v1640, %v5314
  %v5316 = vand.u32 %v5315, 4294901760
  %v5317 = vsub.f32 %v5315, %v5316
  %v5318 = vand.u32 %v5317, 4294901760
  %5319 = vmatmul.f32.gmra.mxu0 %v5318
  %v5320 = vpop.f32.mrf.mxu0
  %v5321 = vadd.f32 %v1629, %v5320
  %v5322 = vand.u32 %v1643, 4294901760
  %v5323 = vsub.f32 %v1643, %v5322
  %v5324 = vand.u32 %v5323, 4294901760
  %v5325 = vsub.f32 %v5323, %v5324
  %v5326 = vand.u32 %v5325, 4294901760
  %5327 = vmatmul.f32.gmra.mxu0 %v5326
  %v5328 = vpop.f32.mrf.mxu0
  %v5329 = vadd.f32 %v1631, %v5328
  %5330 = vdwg.mxu0
  %5331 = vmatpush.msra.mxu0 0.0
  %5332 = vmatpush.msra.mxu0 0.0
  %5333 = vmatpush.msra.mxu0 0.0
  %5334 = vmatpush.msra.mxu0 0.0
  %5335 = vmatpush.msra.mxu0 0.0
  %5336 = vmatpush.msra.mxu0 0.0
  %5337 = vmatpush.msra.mxu0 0.0
  %5338 = vmatpush.msra.mxu0 0.0
  %5339 = vmatpush.msra.mxu0 0.0
  %5340 = vmatpush.msra.mxu0 0.0
  %5341 = vmatpush.msra.mxu0 0.0
  %5342 = vmatpush.msra.mxu0 0.0
  %5343 = vmatpush.msra.mxu0 0.0
  %5344 = vmatpush.msra.mxu0 0.0
  %v5345 = vand.u32 %v1111, 4294901760
  %v5346 = vsub.f32 %v1111, %v5345
  %v5347 = vand.u32 %v5346, 4294901760
  %v5348 = vsub.f32 %v5346, %v5347
  %v5349 = vand.u32 %v5348, 4294901760
  %5350 = vmatpush.msra.mxu0 %v5349
  %v5351 = vand.u32 %v1109, 4294901760
  %v5352 = vsub.f32 %v1109, %v5351
  %v5353 = vand.u32 %v5352, 4294901760
  %v5354 = vsub.f32 %v5352, %v5353
  %v5355 = vand.u32 %v5354, 4294901760
  %5356 = vmatpush.msra.mxu0 %v5355
  %v5357 = vand.u32 %v1634, 4294901760
  %5358 = vmatmul.f32.gmra.mxu0 %v5357
  %v5359 = vpop.f32.mrf.mxu0
  %v5360 = vadd.f32 %v5305, %v5359
  %v5361 = vand.u32 %v1637, 4294901760
  %5362 = vmatmul.f32.gmra.mxu0 %v5361
  %v5363 = vpop.f32.mrf.mxu0
  %v5364 = vadd.f32 %v5313, %v5363
  %v5365 = vand.u32 %v1640, 4294901760
  %5366 = vmatmul.f32.gmra.mxu0 %v5365
  %v5367 = vpop.f32.mrf.mxu0
  %v5368 = vadd.f32 %v5321, %v5367
  %v5369 = vand.u32 %v1643, 4294901760
  %5370 = vmatmul.f32.gmra.mxu0 %v5369
  %v5371 = vpop.f32.mrf.mxu0
  %v5372 = vadd.f32 %v5329, %v5371
  %5373 = vdwg.mxu0
  %5374 = vmatpush.msra.mxu0 0.0
  %5375 = vmatpush.msra.mxu0 0.0
  %5376 = vmatpush.msra.mxu0 0.0
  %5377 = vmatpush.msra.mxu0 0.0
  %5378 = vmatpush.msra.mxu0 0.0
  %5379 = vmatpush.msra.mxu0 0.0
  %5380 = vmatpush.msra.mxu0 0.0
  %5381 = vmatpush.msra.mxu0 0.0
  %5382 = vmatpush.msra.mxu0 0.0
  %5383 = vmatpush.msra.mxu0 0.0
  %5384 = vmatpush.msra.mxu0 0.0
  %5385 = vmatpush.msra.mxu0 0.0
  %5386 = vmatpush.msra.mxu0 0.0
  %5387 = vmatpush.msra.mxu0 0.0
  %v5388 = vand.u32 %v1111, 4294901760
  %v5389 = vsub.f32 %v1111, %v5388
  %5390 = vmatpush.msra.mxu0 %v5389
  %v5391 = vand.u32 %v1109, 4294901760
  %v5392 = vsub.f32 %v1109, %v5391
  %5393 = vmatpush.msra.mxu0 %v5392
  %v5394 = vand.u32 %v1634, 4294901760
  %v5395 = vsub.f32 %v1634, %v5394
  %5396 = vmatmul.f32.gmra.mxu0 %v5395
  %v5397 = vpop.f32.mrf.mxu0
  %v5398 = vadd.f32 %v5360, %v5397
  %v5399 = vand.u32 %v1637, 4294901760
  %v5400 = vsub.f32 %v1637, %v5399
  %5401 = vmatmul.f32.gmra.mxu0 %v5400
  %v5402 = vpop.f32.mrf.mxu0
  %v5403 = vadd.f32 %v5364, %v5402
  %v5404 = vand.u32 %v1640, 4294901760
  %v5405 = vsub.f32 %v1640, %v5404
  %5406 = vmatmul.f32.gmra.mxu0 %v5405
  %v5407 = vpop.f32.mrf.mxu0
  %v5408 = vadd.f32 %v5368, %v5407
  %v5409 = vand.u32 %v1643, 4294901760
  %v5410 = vsub.f32 %v1643, %v5409
  %5411 = vmatmul.f32.gmra.mxu0 %v5410
  %v5412 = vpop.f32.mrf.mxu0
  %v5413 = vadd.f32 %v5372, %v5412
  %5414 = vdwg.mxu0
  %5415 = vmatpush.msra.mxu0 0.0
  %5416 = vmatpush.msra.mxu0 0.0
  %5417 = vmatpush.msra.mxu0 0.0
  %5418 = vmatpush.msra.mxu0 0.0
  %5419 = vmatpush.msra.mxu0 0.0
  %5420 = vmatpush.msra.mxu0 0.0
  %5421 = vmatpush.msra.mxu0 0.0
  %5422 = vmatpush.msra.mxu0 0.0
  %5423 = vmatpush.msra.mxu0 0.0
  %5424 = vmatpush.msra.mxu0 0.0
  %5425 = vmatpush.msra.mxu0 0.0
  %5426 = vmatpush.msra.mxu0 0.0
  %5427 = vmatpush.msra.mxu0 0.0
  %5428 = vmatpush.msra.mxu0 0.0
  %v5429 = vand.u32 %v1111, 4294901760
  %5430 = vmatpush.msra.mxu0 %v5429
  %v5431 = vand.u32 %v1109, 4294901760
  %5432 = vmatpush.msra.mxu0 %v5431
  %v5433 = vand.u32 %v1634, 4294901760
  %v5434 = vsub.f32 %v1634, %v5433
  %v5435 = vand.u32 %v5434, 4294901760
  %5436 = vmatmul.f32.gmra.mxu0 %v5435
  %v5437 = vpop.f32.mrf.mxu0
  %v5438 = vadd.f32 %v5398, %v5437
  %v5439 = vand.u32 %v1637, 4294901760
  %v5440 = vsub.f32 %v1637, %v5439
  %v5441 = vand.u32 %v5440, 4294901760
  %5442 = vmatmul.f32.gmra.mxu0 %v5441
  %v5443 = vpop.f32.mrf.mxu0
  %v5444 = vadd.f32 %v5403, %v5443
  %v5445 = vand.u32 %v1640, 4294901760
  %v5446 = vsub.f32 %v1640, %v5445
  %v5447 = vand.u32 %v5446, 4294901760
  %5448 = vmatmul.f32.gmra.mxu0 %v5447
  %v5449 = vpop.f32.mrf.mxu0
  %v5450 = vadd.f32 %v5408, %v5449
  %v5451 = vand.u32 %v1643, 4294901760
  %v5452 = vsub.f32 %v1643, %v5451
  %v5453 = vand.u32 %v5452, 4294901760
  %5454 = vmatmul.f32.gmra.mxu0 %v5453
  %v5455 = vpop.f32.mrf.mxu0
  %v5456 = vadd.f32 %v5413, %v5455
  %5457 = vdwg.mxu0
  %5458 = vmatpush.msra.mxu0 0.0
  %5459 = vmatpush.msra.mxu0 0.0
  %5460 = vmatpush.msra.mxu0 0.0
  %5461 = vmatpush.msra.mxu0 0.0
  %5462 = vmatpush.msra.mxu0 0.0
  %5463 = vmatpush.msra.mxu0 0.0
  %5464 = vmatpush.msra.mxu0 0.0
  %5465 = vmatpush.msra.mxu0 0.0
  %5466 = vmatpush.msra.mxu0 0.0
  %5467 = vmatpush.msra.mxu0 0.0
  %5468 = vmatpush.msra.mxu0 0.0
  %5469 = vmatpush.msra.mxu0 0.0
  %5470 = vmatpush.msra.mxu0 0.0
  %5471 = vmatpush.msra.mxu0 0.0
  %v5472 = vand.u32 %v1111, 4294901760
  %v5473 = vsub.f32 %v1111, %v5472
  %v5474 = vand.u32 %v5473, 4294901760
  %5475 = vmatpush.msra.mxu0 %v5474
  %v5476 = vand.u32 %v1109, 4294901760
  %v5477 = vsub.f32 %v1109, %v5476
  %v5478 = vand.u32 %v5477, 4294901760
  %5479 = vmatpush.msra.mxu0 %v5478
  %v5480 = vand.u32 %v1634, 4294901760
  %5481 = vmatmul.f32.gmra.mxu0 %v5480
  %v5482 = vpop.f32.mrf.mxu0
  %v5483 = vadd.f32 %v5438, %v5482
  %v5484 = vand.u32 %v1637, 4294901760
  %5485 = vmatmul.f32.gmra.mxu0 %v5484
  %v5486 = vpop.f32.mrf.mxu0
  %v5487 = vadd.f32 %v5444, %v5486
  %v5488 = vand.u32 %v1640, 4294901760
  %5489 = vmatmul.f32.gmra.mxu0 %v5488
  %v5490 = vpop.f32.mrf.mxu0
  %v5491 = vadd.f32 %v5450, %v5490
  %v5492 = vand.u32 %v1643, 4294901760
  %5493 = vmatmul.f32.gmra.mxu0 %v5492
  %v5494 = vpop.f32.mrf.mxu0
  %v5495 = vadd.f32 %v5456, %v5494
  %5496 = vdwg.mxu0
  %5497 = vmatpush.msra.mxu0 0.0
  %5498 = vmatpush.msra.mxu0 0.0
  %5499 = vmatpush.msra.mxu0 0.0
  %5500 = vmatpush.msra.mxu0 0.0
  %5501 = vmatpush.msra.mxu0 0.0
  %5502 = vmatpush.msra.mxu0 0.0
  %5503 = vmatpush.msra.mxu0 0.0
  %5504 = vmatpush.msra.mxu0 0.0
  %5505 = vmatpush.msra.mxu0 0.0
  %5506 = vmatpush.msra.mxu0 0.0
  %5507 = vmatpush.msra.mxu0 0.0
  %5508 = vmatpush.msra.mxu0 0.0
  %5509 = vmatpush.msra.mxu0 0.0
  %5510 = vmatpush.msra.mxu0 0.0
  %v5511 = vand.u32 %v1111, 4294901760
  %5512 = vmatpush.msra.mxu0 %v5511
  %v5513 = vand.u32 %v1109, 4294901760
  %5514 = vmatpush.msra.mxu0 %v5513
  %v5515 = vand.u32 %v1634, 4294901760
  %5516 = vmatmul.f32.gmra.mxu0 %v5515
  %v5517 = vpop.f32.mrf.mxu0
  %v5518 = vadd.f32 %v5483, %v5517
  %v5519 = vand.u32 %v1637, 4294901760
  %5520 = vmatmul.f32.gmra.mxu0 %v5519
  %v5521 = vpop.f32.mrf.mxu0
  %v5522 = vadd.f32 %v5487, %v5521
  %v5523 = vand.u32 %v1640, 4294901760
  %5524 = vmatmul.f32.gmra.mxu0 %v5523
  %v5525 = vpop.f32.mrf.mxu0
  %v5526 = vadd.f32 %v5491, %v5525
  %v5527 = vand.u32 %v1643, 4294901760
  %5528 = vmatmul.f32.gmra.mxu0 %v5527
  %v5529 = vpop.f32.mrf.mxu0
  %v5530 = vadd.f32 %v5495, %v5529
  %5531 = vdwg.mxu0
  %5532 = vmatpush.msra.mxu0 0.0
  %5533 = vmatpush.msra.mxu0 0.0
  %5534 = vmatpush.msra.mxu0 0.0
  %5535 = vmatpush.msra.mxu0 0.0
  %5536 = vmatpush.msra.mxu0 0.0
  %5537 = vmatpush.msra.mxu0 0.0
  %5538 = vmatpush.msra.mxu0 0.0
  %5539 = vmatpush.msra.mxu0 0.0
  %5540 = vmatpush.msra.mxu0 0.0
  %5541 = vmatpush.msra.mxu0 0.0
  %5542 = vmatpush.msra.mxu0 0.0
  %5543 = vmatpush.msra.mxu0 0.0
  %5544 = vmatpush.msra.mxu0 0.0
  %5545 = vmatpush.msra.mxu0 0.0
  %v5546 = vand.u32 %v1112, 4294901760
  %5547 = vmatpush.msra.mxu0 %v5546
  %v5548 = vand.u32 %v1110, 4294901760
  %5549 = vmatpush.msra.mxu0 %v5548
  %v5550 = vand.u32 %v1634, 4294901760
  %v5551 = vsub.f32 %v1634, %v5550
  %v5552 = vand.u32 %v5551, 4294901760
  %v5553 = vsub.f32 %v5551, %v5552
  %v5554 = vand.u32 %v5553, 4294901760
  %5555 = vmatmul.f32.gmra.mxu0 %v5554
  %v5556 = vpop.f32.mrf.mxu0
  %v5557 = vadd.f32 %v1626, %v5556
  %v5558 = vand.u32 %v1637, 4294901760
  %v5559 = vsub.f32 %v1637, %v5558
  %v5560 = vand.u32 %v5559, 4294901760
  %v5561 = vsub.f32 %v5559, %v5560
  %v5562 = vand.u32 %v5561, 4294901760
  %5563 = vmatmul.f32.gmra.mxu0 %v5562
  %v5564 = vpop.f32.mrf.mxu0
  %v5565 = vadd.f32 %v1628, %v5564
  %v5566 = vand.u32 %v1640, 4294901760
  %v5567 = vsub.f32 %v1640, %v5566
  %v5568 = vand.u32 %v5567, 4294901760
  %v5569 = vsub.f32 %v5567, %v5568
  %v5570 = vand.u32 %v5569, 4294901760
  %5571 = vmatmul.f32.gmra.mxu0 %v5570
  %v5572 = vpop.f32.mrf.mxu0
  %v5573 = vadd.f32 %v1630, %v5572
  %v5574 = vand.u32 %v1643, 4294901760
  %v5575 = vsub.f32 %v1643, %v5574
  %v5576 = vand.u32 %v5575, 4294901760
  %v5577 = vsub.f32 %v5575, %v5576
  %v5578 = vand.u32 %v5577, 4294901760
  %5579 = vmatmul.f32.gmra.mxu0 %v5578
  %v5580 = vpop.f32.mrf.mxu0
  %v5581 = vadd.f32 %v1632, %v5580
  %5582 = vdwg.mxu0
  %5583 = vmatpush.msra.mxu0 0.0
  %5584 = vmatpush.msra.mxu0 0.0
  %5585 = vmatpush.msra.mxu0 0.0
  %5586 = vmatpush.msra.mxu0 0.0
  %5587 = vmatpush.msra.mxu0 0.0
  %5588 = vmatpush.msra.mxu0 0.0
  %5589 = vmatpush.msra.mxu0 0.0
  %5590 = vmatpush.msra.mxu0 0.0
  %5591 = vmatpush.msra.mxu0 0.0
  %5592 = vmatpush.msra.mxu0 0.0
  %5593 = vmatpush.msra.mxu0 0.0
  %5594 = vmatpush.msra.mxu0 0.0
  %5595 = vmatpush.msra.mxu0 0.0
  %5596 = vmatpush.msra.mxu0 0.0
  %v5597 = vand.u32 %v1112, 4294901760
  %v5598 = vsub.f32 %v1112, %v5597
  %v5599 = vand.u32 %v5598, 4294901760
  %v5600 = vsub.f32 %v5598, %v5599
  %v5601 = vand.u32 %v5600, 4294901760
  %5602 = vmatpush.msra.mxu0 %v5601
  %v5603 = vand.u32 %v1110, 4294901760
  %v5604 = vsub.f32 %v1110, %v5603
  %v5605 = vand.u32 %v5604, 4294901760
  %v5606 = vsub.f32 %v5604, %v5605
  %v5607 = vand.u32 %v5606, 4294901760
  %5608 = vmatpush.msra.mxu0 %v5607
  %v5609 = vand.u32 %v1634, 4294901760
  %5610 = vmatmul.f32.gmra.mxu0 %v5609
  %v5611 = vpop.f32.mrf.mxu0
  %v5612 = vadd.f32 %v5557, %v5611
  %v5613 = vand.u32 %v1637, 4294901760
  %5614 = vmatmul.f32.gmra.mxu0 %v5613
  %v5615 = vpop.f32.mrf.mxu0
  %v5616 = vadd.f32 %v5565, %v5615
  %v5617 = vand.u32 %v1640, 4294901760
  %5618 = vmatmul.f32.gmra.mxu0 %v5617
  %v5619 = vpop.f32.mrf.mxu0
  %v5620 = vadd.f32 %v5573, %v5619
  %v5621 = vand.u32 %v1643, 4294901760
  %5622 = vmatmul.f32.gmra.mxu0 %v5621
  %v5623 = vpop.f32.mrf.mxu0
  %v5624 = vadd.f32 %v5581, %v5623
  %5625 = vdwg.mxu0
  %5626 = vmatpush.msra.mxu0 0.0
  %5627 = vmatpush.msra.mxu0 0.0
  %5628 = vmatpush.msra.mxu0 0.0
  %5629 = vmatpush.msra.mxu0 0.0
  %5630 = vmatpush.msra.mxu0 0.0
  %5631 = vmatpush.msra.mxu0 0.0
  %5632 = vmatpush.msra.mxu0 0.0
  %5633 = vmatpush.msra.mxu0 0.0
  %5634 = vmatpush.msra.mxu0 0.0
  %5635 = vmatpush.msra.mxu0 0.0
  %5636 = vmatpush.msra.mxu0 0.0
  %5637 = vmatpush.msra.mxu0 0.0
  %5638 = vmatpush.msra.mxu0 0.0
  %5639 = vmatpush.msra.mxu0 0.0
  %v5640 = vand.u32 %v1112, 4294901760
  %v5641 = vsub.f32 %v1112, %v5640
  %5642 = vmatpush.msra.mxu0 %v5641
  %v5643 = vand.u32 %v1110, 4294901760
  %v5644 = vsub.f32 %v1110, %v5643
  %5645 = vmatpush.msra.mxu0 %v5644
  %v5646 = vand.u32 %v1634, 4294901760
  %v5647 = vsub.f32 %v1634, %v5646
  %5648 = vmatmul.f32.gmra.mxu0 %v5647
  %v5649 = vpop.f32.mrf.mxu0
  %v5650 = vadd.f32 %v5612, %v5649
  %v5651 = vand.u32 %v1637, 4294901760
  %v5652 = vsub.f32 %v1637, %v5651
  %5653 = vmatmul.f32.gmra.mxu0 %v5652
  %v5654 = vpop.f32.mrf.mxu0
  %v5655 = vadd.f32 %v5616, %v5654
  %v5656 = vand.u32 %v1640, 4294901760
  %v5657 = vsub.f32 %v1640, %v5656
  %5658 = vmatmul.f32.gmra.mxu0 %v5657
  %v5659 = vpop.f32.mrf.mxu0
  %v5660 = vadd.f32 %v5620, %v5659
  %v5661 = vand.u32 %v1643, 4294901760
  %v5662 = vsub.f32 %v1643, %v5661
  %5663 = vmatmul.f32.gmra.mxu0 %v5662
  %v5664 = vpop.f32.mrf.mxu0
  %v5665 = vadd.f32 %v5624, %v5664
  %5666 = vdwg.mxu0
  %5667 = vmatpush.msra.mxu0 0.0
  %5668 = vmatpush.msra.mxu0 0.0
  %5669 = vmatpush.msra.mxu0 0.0
  %5670 = vmatpush.msra.mxu0 0.0
  %5671 = vmatpush.msra.mxu0 0.0
  %5672 = vmatpush.msra.mxu0 0.0
  %5673 = vmatpush.msra.mxu0 0.0
  %5674 = vmatpush.msra.mxu0 0.0
  %5675 = vmatpush.msra.mxu0 0.0
  %5676 = vmatpush.msra.mxu0 0.0
  %5677 = vmatpush.msra.mxu0 0.0
  %5678 = vmatpush.msra.mxu0 0.0
  %5679 = vmatpush.msra.mxu0 0.0
  %5680 = vmatpush.msra.mxu0 0.0
  %v5681 = vand.u32 %v1112, 4294901760
  %5682 = vmatpush.msra.mxu0 %v5681
  %v5683 = vand.u32 %v1110, 4294901760
  %5684 = vmatpush.msra.mxu0 %v5683
  %v5685 = vand.u32 %v1634, 4294901760
  %v5686 = vsub.f32 %v1634, %v5685
  %v5687 = vand.u32 %v5686, 4294901760
  %5688 = vmatmul.f32.gmra.mxu0 %v5687
  %v5689 = vpop.f32.mrf.mxu0
  %v5690 = vadd.f32 %v5650, %v5689
  %v5691 = vand.u32 %v1637, 4294901760
  %v5692 = vsub.f32 %v1637, %v5691
  %v5693 = vand.u32 %v5692, 4294901760
  %5694 = vmatmul.f32.gmra.mxu0 %v5693
  %v5695 = vpop.f32.mrf.mxu0
  %v5696 = vadd.f32 %v5655, %v5695
  %v5697 = vand.u32 %v1640, 4294901760
  %v5698 = vsub.f32 %v1640, %v5697
  %v5699 = vand.u32 %v5698, 4294901760
  %5700 = vmatmul.f32.gmra.mxu0 %v5699
  %v5701 = vpop.f32.mrf.mxu0
  %v5702 = vadd.f32 %v5660, %v5701
  %v5703 = vand.u32 %v1643, 4294901760
  %v5704 = vsub.f32 %v1643, %v5703
  %v5705 = vand.u32 %v5704, 4294901760
  %5706 = vmatmul.f32.gmra.mxu0 %v5705
  %v5707 = vpop.f32.mrf.mxu0
  %v5708 = vadd.f32 %v5665, %v5707
  %5709 = vdwg.mxu0
  %5710 = vmatpush.msra.mxu0 0.0
  %5711 = vmatpush.msra.mxu0 0.0
  %5712 = vmatpush.msra.mxu0 0.0
  %5713 = vmatpush.msra.mxu0 0.0
  %5714 = vmatpush.msra.mxu0 0.0
  %5715 = vmatpush.msra.mxu0 0.0
  %5716 = vmatpush.msra.mxu0 0.0
  %5717 = vmatpush.msra.mxu0 0.0
  %5718 = vmatpush.msra.mxu0 0.0
  %5719 = vmatpush.msra.mxu0 0.0
  %5720 = vmatpush.msra.mxu0 0.0
  %5721 = vmatpush.msra.mxu0 0.0
  %5722 = vmatpush.msra.mxu0 0.0
  %5723 = vmatpush.msra.mxu0 0.0
  %v5724 = vand.u32 %v1112, 4294901760
  %v5725 = vsub.f32 %v1112, %v5724
  %v5726 = vand.u32 %v5725, 4294901760
  %5727 = vmatpush.msra.mxu0 %v5726
  %v5728 = vand.u32 %v1110, 4294901760
  %v5729 = vsub.f32 %v1110, %v5728
  %v5730 = vand.u32 %v5729, 4294901760
  %5731 = vmatpush.msra.mxu0 %v5730
  %v5732 = vand.u32 %v1634, 4294901760
  %5733 = vmatmul.f32.gmra.mxu0 %v5732
  %v5734 = vpop.f32.mrf.mxu0
  %v5735 = vadd.f32 %v5690, %v5734
  %v5736 = vand.u32 %v1637, 4294901760
  %5737 = vmatmul.f32.gmra.mxu0 %v5736
  %v5738 = vpop.f32.mrf.mxu0
  %v5739 = vadd.f32 %v5696, %v5738
  %v5740 = vand.u32 %v1640, 4294901760
  %5741 = vmatmul.f32.gmra.mxu0 %v5740
  %v5742 = vpop.f32.mrf.mxu0
  %v5743 = vadd.f32 %v5702, %v5742
  %v5744 = vand.u32 %v1643, 4294901760
  %5745 = vmatmul.f32.gmra.mxu0 %v5744
  %v5746 = vpop.f32.mrf.mxu0
  %v5747 = vadd.f32 %v5708, %v5746
  %5748 = vdwg.mxu0
  %5749 = vmatpush.msra.mxu0 0.0
  %5750 = vmatpush.msra.mxu0 0.0
  %5751 = vmatpush.msra.mxu0 0.0
  %5752 = vmatpush.msra.mxu0 0.0
  %5753 = vmatpush.msra.mxu0 0.0
  %5754 = vmatpush.msra.mxu0 0.0
  %5755 = vmatpush.msra.mxu0 0.0
  %5756 = vmatpush.msra.mxu0 0.0
  %5757 = vmatpush.msra.mxu0 0.0
  %5758 = vmatpush.msra.mxu0 0.0
  %5759 = vmatpush.msra.mxu0 0.0
  %5760 = vmatpush.msra.mxu0 0.0
  %5761 = vmatpush.msra.mxu0 0.0
  %5762 = vmatpush.msra.mxu0 0.0
  %v5763 = vand.u32 %v1112, 4294901760
  %5764 = vmatpush.msra.mxu0 %v5763
  %v5765 = vand.u32 %v1110, 4294901760
  %5766 = vmatpush.msra.mxu0 %v5765
  %v5767 = vand.u32 %v1634, 4294901760
  %5768 = vmatmul.f32.gmra.mxu0 %v5767
  %v5769 = vpop.f32.mrf.mxu0
  %v5770 = vadd.f32 %v5735, %v5769
  %v5771 = vand.u32 %v1637, 4294901760
  %5772 = vmatmul.f32.gmra.mxu0 %v5771
  %v5773 = vpop.f32.mrf.mxu0
  %v5774 = vadd.f32 %v5739, %v5773
  %v5775 = vand.u32 %v1640, 4294901760
  %5776 = vmatmul.f32.gmra.mxu0 %v5775
  %v5777 = vpop.f32.mrf.mxu0
  %v5778 = vadd.f32 %v5743, %v5777
  %v5779 = vand.u32 %v1643, 4294901760
  %5780 = vmatmul.f32.gmra.mxu0 %v5779
  %v5781 = vpop.f32.mrf.mxu0
  %v5782 = vadd.f32 %v5747, %v5781
  %5783 = vdwg.mxu0
  %v5784 = vsub.f32 %v5518, %v1351
  %v5785 = vsub.f32 %v5770, %v1603
  %v5786 = vsub.f32 %v5522, %v1355
  %v5787 = vsub.f32 %v5774, %v1607
  %v5788 = vsub.f32 %v5526, %v1359
  %v5789 = vsub.f32 %v5778, %v1611
  %v5790 = vsub.f32 %v5530, %v1363
  %v5791 = vsub.f32 %v5782, %v1615
  %s5792 = scalar_lea.vmem %s4, 64
  %v5793 = vld [vmem:[%s5792] sm:$0xff]
  %v5794 = vld [vmem:[%s5792 + $0x8] sm:$0xff]
  %v5795 = vld [vmem:[%s5792 + $0x10] sm:$0xff]
  %v5796 = vld [vmem:[%s5792 + $0x18] sm:$0xff]
  %v5798 = vsel %vm2161, %v5793, 0
  %v5801 = vsel %vm2161, %v5794, 0
  %v5804 = vsel %vm2161, %v5795, 0
  %v5807 = vsel %vm2161, %v5796, 0
  %5809 = vmatpush.msra.mxu0 0.0
  %5810 = vmatpush.msra.mxu0 0.0
  %5811 = vmatpush.msra.mxu0 0.0
  %5812 = vmatpush.msra.mxu0 0.0
  %5813 = vmatpush.msra.mxu0 0.0
  %5814 = vmatpush.msra.mxu0 0.0
  %5815 = vmatpush.msra.mxu0 0.0
  %5816 = vmatpush.msra.mxu0 0.0
  %5817 = vmatpush.msra.mxu0 0.0
  %5818 = vmatpush.msra.mxu0 0.0
  %5819 = vmatpush.msra.mxu0 0.0
  %5820 = vmatpush.msra.mxu0 0.0
  %5821 = vmatpush.msra.mxu0 0.0
  %5822 = vmatpush.msra.mxu0 0.0
  %5823 = vmatpush.msra.mxu0 0.0
  %v5824 = vand.u32 %v42, 4294901760
  %5825 = vmatpush.msra.mxu0 %v5824
  %v5826 = vand.u32 %v5798, 4294901760
  %v5827 = vsub.f32 %v5798, %v5826
  %v5828 = vand.u32 %v5827, 4294901760
  %v5829 = vsub.f32 %v5827, %v5828
  %v5830 = vand.u32 %v5829, 4294901760
  %5831 = vmatmul.f32.gmra.mxu0 %v5830
  %v5832 = vpop.f32.mrf.mxu0
  %v5833 = vadd.f32 0.0, %v5832
  %v5834 = vand.u32 %v5801, 4294901760
  %v5835 = vsub.f32 %v5801, %v5834
  %v5836 = vand.u32 %v5835, 4294901760
  %v5837 = vsub.f32 %v5835, %v5836
  %v5838 = vand.u32 %v5837, 4294901760
  %5839 = vmatmul.f32.gmra.mxu0 %v5838
  %v5840 = vpop.f32.mrf.mxu0
  %v5841 = vadd.f32 0.0, %v5840
  %v5842 = vand.u32 %v5804, 4294901760
  %v5843 = vsub.f32 %v5804, %v5842
  %v5844 = vand.u32 %v5843, 4294901760
  %v5845 = vsub.f32 %v5843, %v5844
  %v5846 = vand.u32 %v5845, 4294901760
  %5847 = vmatmul.f32.gmra.mxu0 %v5846
  %v5848 = vpop.f32.mrf.mxu0
  %v5849 = vadd.f32 0.0, %v5848
  %v5850 = vand.u32 %v5807, 4294901760
  %v5851 = vsub.f32 %v5807, %v5850
  %v5852 = vand.u32 %v5851, 4294901760
  %v5853 = vsub.f32 %v5851, %v5852
  %v5854 = vand.u32 %v5853, 4294901760
  %5855 = vmatmul.f32.gmra.mxu0 %v5854
  %v5856 = vpop.f32.mrf.mxu0
  %v5857 = vadd.f32 0.0, %v5856
  %5858 = vdwg.mxu0
  %5859 = vmatpush.msra.mxu0 0.0
  %5860 = vmatpush.msra.mxu0 0.0
  %5861 = vmatpush.msra.mxu0 0.0
  %5862 = vmatpush.msra.mxu0 0.0
  %5863 = vmatpush.msra.mxu0 0.0
  %5864 = vmatpush.msra.mxu0 0.0
  %5865 = vmatpush.msra.mxu0 0.0
  %5866 = vmatpush.msra.mxu0 0.0
  %5867 = vmatpush.msra.mxu0 0.0
  %5868 = vmatpush.msra.mxu0 0.0
  %5869 = vmatpush.msra.mxu0 0.0
  %5870 = vmatpush.msra.mxu0 0.0
  %5871 = vmatpush.msra.mxu0 0.0
  %5872 = vmatpush.msra.mxu0 0.0
  %5873 = vmatpush.msra.mxu0 0.0
  %v5874 = vand.u32 %v42, 4294901760
  %v5875 = vsub.f32 %v42, %v5874
  %v5876 = vand.u32 %v5875, 4294901760
  %v5877 = vsub.f32 %v5875, %v5876
  %v5878 = vand.u32 %v5877, 4294901760
  %5879 = vmatpush.msra.mxu0 %v5878
  %v5880 = vand.u32 %v5798, 4294901760
  %5881 = vmatmul.f32.gmra.mxu0 %v5880
  %v5882 = vpop.f32.mrf.mxu0
  %v5883 = vadd.f32 %v5833, %v5882
  %v5884 = vand.u32 %v5801, 4294901760
  %5885 = vmatmul.f32.gmra.mxu0 %v5884
  %v5886 = vpop.f32.mrf.mxu0
  %v5887 = vadd.f32 %v5841, %v5886
  %v5888 = vand.u32 %v5804, 4294901760
  %5889 = vmatmul.f32.gmra.mxu0 %v5888
  %v5890 = vpop.f32.mrf.mxu0
  %v5891 = vadd.f32 %v5849, %v5890
  %v5892 = vand.u32 %v5807, 4294901760
  %5893 = vmatmul.f32.gmra.mxu0 %v5892
  %v5894 = vpop.f32.mrf.mxu0
  %v5895 = vadd.f32 %v5857, %v5894
  %5896 = vdwg.mxu0
  %5897 = vmatpush.msra.mxu0 0.0
  %5898 = vmatpush.msra.mxu0 0.0
  %5899 = vmatpush.msra.mxu0 0.0
  %5900 = vmatpush.msra.mxu0 0.0
  %5901 = vmatpush.msra.mxu0 0.0
  %5902 = vmatpush.msra.mxu0 0.0
  %5903 = vmatpush.msra.mxu0 0.0
  %5904 = vmatpush.msra.mxu0 0.0
  %5905 = vmatpush.msra.mxu0 0.0
  %5906 = vmatpush.msra.mxu0 0.0
  %5907 = vmatpush.msra.mxu0 0.0
  %5908 = vmatpush.msra.mxu0 0.0
  %5909 = vmatpush.msra.mxu0 0.0
  %5910 = vmatpush.msra.mxu0 0.0
  %5911 = vmatpush.msra.mxu0 0.0
  %v5912 = vand.u32 %v42, 4294901760
  %v5913 = vsub.f32 %v42, %v5912
  %5914 = vmatpush.msra.mxu0 %v5913
  %v5915 = vand.u32 %v5798, 4294901760
  %v5916 = vsub.f32 %v5798, %v5915
  %5917 = vmatmul.f32.gmra.mxu0 %v5916
  %v5918 = vpop.f32.mrf.mxu0
  %v5919 = vadd.f32 %v5883, %v5918
  %v5920 = vand.u32 %v5801, 4294901760
  %v5921 = vsub.f32 %v5801, %v5920
  %5922 = vmatmul.f32.gmra.mxu0 %v5921
  %v5923 = vpop.f32.mrf.mxu0
  %v5924 = vadd.f32 %v5887, %v5923
  %v5925 = vand.u32 %v5804, 4294901760
  %v5926 = vsub.f32 %v5804, %v5925
  %5927 = vmatmul.f32.gmra.mxu0 %v5926
  %v5928 = vpop.f32.mrf.mxu0
  %v5929 = vadd.f32 %v5891, %v5928
  %v5930 = vand.u32 %v5807, 4294901760
  %v5931 = vsub.f32 %v5807, %v5930
  %5932 = vmatmul.f32.gmra.mxu0 %v5931
  %v5933 = vpop.f32.mrf.mxu0
  %v5934 = vadd.f32 %v5895, %v5933
  %5935 = vdwg.mxu0
  %5936 = vmatpush.msra.mxu0 0.0
  %5937 = vmatpush.msra.mxu0 0.0
  %5938 = vmatpush.msra.mxu0 0.0
  %5939 = vmatpush.msra.mxu0 0.0
  %5940 = vmatpush.msra.mxu0 0.0
  %5941 = vmatpush.msra.mxu0 0.0
  %5942 = vmatpush.msra.mxu0 0.0
  %5943 = vmatpush.msra.mxu0 0.0
  %5944 = vmatpush.msra.mxu0 0.0
  %5945 = vmatpush.msra.mxu0 0.0
  %5946 = vmatpush.msra.mxu0 0.0
  %5947 = vmatpush.msra.mxu0 0.0
  %5948 = vmatpush.msra.mxu0 0.0
  %5949 = vmatpush.msra.mxu0 0.0
  %5950 = vmatpush.msra.mxu0 0.0
  %v5951 = vand.u32 %v42, 4294901760
  %5952 = vmatpush.msra.mxu0 %v5951
  %v5953 = vand.u32 %v5798, 4294901760
  %v5954 = vsub.f32 %v5798, %v5953
  %v5955 = vand.u32 %v5954, 4294901760
  %5956 = vmatmul.f32.gmra.mxu0 %v5955
  %v5957 = vpop.f32.mrf.mxu0
  %v5958 = vadd.f32 %v5919, %v5957
  %v5959 = vand.u32 %v5801, 4294901760
  %v5960 = vsub.f32 %v5801, %v5959
  %v5961 = vand.u32 %v5960, 4294901760
  %5962 = vmatmul.f32.gmra.mxu0 %v5961
  %v5963 = vpop.f32.mrf.mxu0
  %v5964 = vadd.f32 %v5924, %v5963
  %v5965 = vand.u32 %v5804, 4294901760
  %v5966 = vsub.f32 %v5804, %v5965
  %v5967 = vand.u32 %v5966, 4294901760
  %5968 = vmatmul.f32.gmra.mxu0 %v5967
  %v5969 = vpop.f32.mrf.mxu0
  %v5970 = vadd.f32 %v5929, %v5969
  %v5971 = vand.u32 %v5807, 4294901760
  %v5972 = vsub.f32 %v5807, %v5971
  %v5973 = vand.u32 %v5972, 4294901760
  %5974 = vmatmul.f32.gmra.mxu0 %v5973
  %v5975 = vpop.f32.mrf.mxu0
  %v5976 = vadd.f32 %v5934, %v5975
  %5977 = vdwg.mxu0
  %5978 = vmatpush.msra.mxu0 0.0
  %5979 = vmatpush.msra.mxu0 0.0
  %5980 = vmatpush.msra.mxu0 0.0
  %5981 = vmatpush.msra.mxu0 0.0
  %5982 = vmatpush.msra.mxu0 0.0
  %5983 = vmatpush.msra.mxu0 0.0
  %5984 = vmatpush.msra.mxu0 0.0
  %5985 = vmatpush.msra.mxu0 0.0
  %5986 = vmatpush.msra.mxu0 0.0
  %5987 = vmatpush.msra.mxu0 0.0
  %5988 = vmatpush.msra.mxu0 0.0
  %5989 = vmatpush.msra.mxu0 0.0
  %5990 = vmatpush.msra.mxu0 0.0
  %5991 = vmatpush.msra.mxu0 0.0
  %5992 = vmatpush.msra.mxu0 0.0
  %v5993 = vand.u32 %v42, 4294901760
  %v5994 = vsub.f32 %v42, %v5993
  %v5995 = vand.u32 %v5994, 4294901760
  %5996 = vmatpush.msra.mxu0 %v5995
  %v5997 = vand.u32 %v5798, 4294901760
  %5998 = vmatmul.f32.gmra.mxu0 %v5997
  %v5999 = vpop.f32.mrf.mxu0
  %v6000 = vadd.f32 %v5958, %v5999
  %v6001 = vand.u32 %v5801, 4294901760
  %6002 = vmatmul.f32.gmra.mxu0 %v6001
  %v6003 = vpop.f32.mrf.mxu0
  %v6004 = vadd.f32 %v5964, %v6003
  %v6005 = vand.u32 %v5804, 4294901760
  %6006 = vmatmul.f32.gmra.mxu0 %v6005
  %v6007 = vpop.f32.mrf.mxu0
  %v6008 = vadd.f32 %v5970, %v6007
  %v6009 = vand.u32 %v5807, 4294901760
  %6010 = vmatmul.f32.gmra.mxu0 %v6009
  %v6011 = vpop.f32.mrf.mxu0
  %v6012 = vadd.f32 %v5976, %v6011
  %6013 = vdwg.mxu0
  %6014 = vmatpush.msra.mxu0 0.0
  %6015 = vmatpush.msra.mxu0 0.0
  %6016 = vmatpush.msra.mxu0 0.0
  %6017 = vmatpush.msra.mxu0 0.0
  %6018 = vmatpush.msra.mxu0 0.0
  %6019 = vmatpush.msra.mxu0 0.0
  %6020 = vmatpush.msra.mxu0 0.0
  %6021 = vmatpush.msra.mxu0 0.0
  %6022 = vmatpush.msra.mxu0 0.0
  %6023 = vmatpush.msra.mxu0 0.0
  %6024 = vmatpush.msra.mxu0 0.0
  %6025 = vmatpush.msra.mxu0 0.0
  %6026 = vmatpush.msra.mxu0 0.0
  %6027 = vmatpush.msra.mxu0 0.0
  %6028 = vmatpush.msra.mxu0 0.0
  %v6029 = vand.u32 %v42, 4294901760
  %6030 = vmatpush.msra.mxu0 %v6029
  %v6031 = vand.u32 %v5798, 4294901760
  %6032 = vmatmul.f32.gmra.mxu0 %v6031
  %v6033 = vpop.f32.mrf.mxu0
  %v6034 = vadd.f32 %v6000, %v6033
  %v6035 = vand.u32 %v5801, 4294901760
  %6036 = vmatmul.f32.gmra.mxu0 %v6035
  %v6037 = vpop.f32.mrf.mxu0
  %v6038 = vadd.f32 %v6004, %v6037
  %v6039 = vand.u32 %v5804, 4294901760
  %6040 = vmatmul.f32.gmra.mxu0 %v6039
  %v6041 = vpop.f32.mrf.mxu0
  %v6042 = vadd.f32 %v6008, %v6041
  %v6043 = vand.u32 %v5807, 4294901760
  %6044 = vmatmul.f32.gmra.mxu0 %v6043
  %v6045 = vpop.f32.mrf.mxu0
  %v6046 = vadd.f32 %v6012, %v6045
  %6047 = vdwg.mxu0
  %6048 = vmatpush.msra.mxu0 0.0
  %6049 = vmatpush.msra.mxu0 0.0
  %6050 = vmatpush.msra.mxu0 0.0
  %6051 = vmatpush.msra.mxu0 0.0
  %6052 = vmatpush.msra.mxu0 0.0
  %6053 = vmatpush.msra.mxu0 0.0
  %6054 = vmatpush.msra.mxu0 0.0
  %6055 = vmatpush.msra.mxu0 0.0
  %6056 = vmatpush.msra.mxu0 0.0
  %6057 = vmatpush.msra.mxu0 0.0
  %6058 = vmatpush.msra.mxu0 0.0
  %6059 = vmatpush.msra.mxu0 0.0
  %6060 = vmatpush.msra.mxu0 0.0
  %6061 = vmatpush.msra.mxu0 0.0
  %6062 = vmatpush.msra.mxu0 0.0
  %v6063 = vand.u32 %v43, 4294901760
  %6064 = vmatpush.msra.mxu0 %v6063
  %v6065 = vand.u32 %v5798, 4294901760
  %v6066 = vsub.f32 %v5798, %v6065
  %v6067 = vand.u32 %v6066, 4294901760
  %v6068 = vsub.f32 %v6066, %v6067
  %v6069 = vand.u32 %v6068, 4294901760
  %6070 = vmatmul.f32.gmra.mxu0 %v6069
  %v6071 = vpop.f32.mrf.mxu0
  %v6072 = vadd.f32 0.0, %v6071
  %v6073 = vand.u32 %v5801, 4294901760
  %v6074 = vsub.f32 %v5801, %v6073
  %v6075 = vand.u32 %v6074, 4294901760
  %v6076 = vsub.f32 %v6074, %v6075
  %v6077 = vand.u32 %v6076, 4294901760
  %6078 = vmatmul.f32.gmra.mxu0 %v6077
  %v6079 = vpop.f32.mrf.mxu0
  %v6080 = vadd.f32 0.0, %v6079
  %v6081 = vand.u32 %v5804, 4294901760
  %v6082 = vsub.f32 %v5804, %v6081
  %v6083 = vand.u32 %v6082, 4294901760
  %v6084 = vsub.f32 %v6082, %v6083
  %v6085 = vand.u32 %v6084, 4294901760
  %6086 = vmatmul.f32.gmra.mxu0 %v6085
  %v6087 = vpop.f32.mrf.mxu0
  %v6088 = vadd.f32 0.0, %v6087
  %v6089 = vand.u32 %v5807, 4294901760
  %v6090 = vsub.f32 %v5807, %v6089
  %v6091 = vand.u32 %v6090, 4294901760
  %v6092 = vsub.f32 %v6090, %v6091
  %v6093 = vand.u32 %v6092, 4294901760
  %6094 = vmatmul.f32.gmra.mxu0 %v6093
  %v6095 = vpop.f32.mrf.mxu0
  %v6096 = vadd.f32 0.0, %v6095
  %6097 = vdwg.mxu0
  %6098 = vmatpush.msra.mxu0 0.0
  %6099 = vmatpush.msra.mxu0 0.0
  %6100 = vmatpush.msra.mxu0 0.0
  %6101 = vmatpush.msra.mxu0 0.0
  %6102 = vmatpush.msra.mxu0 0.0
  %6103 = vmatpush.msra.mxu0 0.0
  %6104 = vmatpush.msra.mxu0 0.0
  %6105 = vmatpush.msra.mxu0 0.0
  %6106 = vmatpush.msra.mxu0 0.0
  %6107 = vmatpush.msra.mxu0 0.0
  %6108 = vmatpush.msra.mxu0 0.0
  %6109 = vmatpush.msra.mxu0 0.0
  %6110 = vmatpush.msra.mxu0 0.0
  %6111 = vmatpush.msra.mxu0 0.0
  %6112 = vmatpush.msra.mxu0 0.0
  %v6113 = vand.u32 %v43, 4294901760
  %v6114 = vsub.f32 %v43, %v6113
  %v6115 = vand.u32 %v6114, 4294901760
  %v6116 = vsub.f32 %v6114, %v6115
  %v6117 = vand.u32 %v6116, 4294901760
  %6118 = vmatpush.msra.mxu0 %v6117
  %v6119 = vand.u32 %v5798, 4294901760
  %6120 = vmatmul.f32.gmra.mxu0 %v6119
  %v6121 = vpop.f32.mrf.mxu0
  %v6122 = vadd.f32 %v6072, %v6121
  %v6123 = vand.u32 %v5801, 4294901760
  %6124 = vmatmul.f32.gmra.mxu0 %v6123
  %v6125 = vpop.f32.mrf.mxu0
  %v6126 = vadd.f32 %v6080, %v6125
  %v6127 = vand.u32 %v5804, 4294901760
  %6128 = vmatmul.f32.gmra.mxu0 %v6127
  %v6129 = vpop.f32.mrf.mxu0
  %v6130 = vadd.f32 %v6088, %v6129
  %v6131 = vand.u32 %v5807, 4294901760
  %6132 = vmatmul.f32.gmra.mxu0 %v6131
  %v6133 = vpop.f32.mrf.mxu0
  %v6134 = vadd.f32 %v6096, %v6133
  %6135 = vdwg.mxu0
  %6136 = vmatpush.msra.mxu0 0.0
  %6137 = vmatpush.msra.mxu0 0.0
  %6138 = vmatpush.msra.mxu0 0.0
  %6139 = vmatpush.msra.mxu0 0.0
  %6140 = vmatpush.msra.mxu0 0.0
  %6141 = vmatpush.msra.mxu0 0.0
  %6142 = vmatpush.msra.mxu0 0.0
  %6143 = vmatpush.msra.mxu0 0.0
  %6144 = vmatpush.msra.mxu0 0.0
  %6145 = vmatpush.msra.mxu0 0.0
  %6146 = vmatpush.msra.mxu0 0.0
  %6147 = vmatpush.msra.mxu0 0.0
  %6148 = vmatpush.msra.mxu0 0.0
  %6149 = vmatpush.msra.mxu0 0.0
  %6150 = vmatpush.msra.mxu0 0.0
  %v6151 = vand.u32 %v43, 4294901760
  %v6152 = vsub.f32 %v43, %v6151
  %6153 = vmatpush.msra.mxu0 %v6152
  %v6154 = vand.u32 %v5798, 4294901760
  %v6155 = vsub.f32 %v5798, %v6154
  %6156 = vmatmul.f32.gmra.mxu0 %v6155
  %v6157 = vpop.f32.mrf.mxu0
  %v6158 = vadd.f32 %v6122, %v6157
  %v6159 = vand.u32 %v5801, 4294901760
  %v6160 = vsub.f32 %v5801, %v6159
  %6161 = vmatmul.f32.gmra.mxu0 %v6160
  %v6162 = vpop.f32.mrf.mxu0
  %v6163 = vadd.f32 %v6126, %v6162
  %v6164 = vand.u32 %v5804, 4294901760
  %v6165 = vsub.f32 %v5804, %v6164
  %6166 = vmatmul.f32.gmra.mxu0 %v6165
  %v6167 = vpop.f32.mrf.mxu0
  %v6168 = vadd.f32 %v6130, %v6167
  %v6169 = vand.u32 %v5807, 4294901760
  %v6170 = vsub.f32 %v5807, %v6169
  %6171 = vmatmul.f32.gmra.mxu0 %v6170
  %v6172 = vpop.f32.mrf.mxu0
  %v6173 = vadd.f32 %v6134, %v6172
  %6174 = vdwg.mxu0
  %6175 = vmatpush.msra.mxu0 0.0
  %6176 = vmatpush.msra.mxu0 0.0
  %6177 = vmatpush.msra.mxu0 0.0
  %6178 = vmatpush.msra.mxu0 0.0
  %6179 = vmatpush.msra.mxu0 0.0
  %6180 = vmatpush.msra.mxu0 0.0
  %6181 = vmatpush.msra.mxu0 0.0
  %6182 = vmatpush.msra.mxu0 0.0
  %6183 = vmatpush.msra.mxu0 0.0
  %6184 = vmatpush.msra.mxu0 0.0
  %6185 = vmatpush.msra.mxu0 0.0
  %6186 = vmatpush.msra.mxu0 0.0
  %6187 = vmatpush.msra.mxu0 0.0
  %6188 = vmatpush.msra.mxu0 0.0
  %6189 = vmatpush.msra.mxu0 0.0
  %v6190 = vand.u32 %v43, 4294901760
  %6191 = vmatpush.msra.mxu0 %v6190
  %v6192 = vand.u32 %v5798, 4294901760
  %v6193 = vsub.f32 %v5798, %v6192
  %v6194 = vand.u32 %v6193, 4294901760
  %6195 = vmatmul.f32.gmra.mxu0 %v6194
  %v6196 = vpop.f32.mrf.mxu0
  %v6197 = vadd.f32 %v6158, %v6196
  %v6198 = vand.u32 %v5801, 4294901760
  %v6199 = vsub.f32 %v5801, %v6198
  %v6200 = vand.u32 %v6199, 4294901760
  %6201 = vmatmul.f32.gmra.mxu0 %v6200
  %v6202 = vpop.f32.mrf.mxu0
  %v6203 = vadd.f32 %v6163, %v6202
  %v6204 = vand.u32 %v5804, 4294901760
  %v6205 = vsub.f32 %v5804, %v6204
  %v6206 = vand.u32 %v6205, 4294901760
  %6207 = vmatmul.f32.gmra.mxu0 %v6206
  %v6208 = vpop.f32.mrf.mxu0
  %v6209 = vadd.f32 %v6168, %v6208
  %v6210 = vand.u32 %v5807, 4294901760
  %v6211 = vsub.f32 %v5807, %v6210
  %v6212 = vand.u32 %v6211, 4294901760
  %6213 = vmatmul.f32.gmra.mxu0 %v6212
  %v6214 = vpop.f32.mrf.mxu0
  %v6215 = vadd.f32 %v6173, %v6214
  %6216 = vdwg.mxu0
  %6217 = vmatpush.msra.mxu0 0.0
  %6218 = vmatpush.msra.mxu0 0.0
  %6219 = vmatpush.msra.mxu0 0.0
  %6220 = vmatpush.msra.mxu0 0.0
  %6221 = vmatpush.msra.mxu0 0.0
  %6222 = vmatpush.msra.mxu0 0.0
  %6223 = vmatpush.msra.mxu0 0.0
  %6224 = vmatpush.msra.mxu0 0.0
  %6225 = vmatpush.msra.mxu0 0.0
  %6226 = vmatpush.msra.mxu0 0.0
  %6227 = vmatpush.msra.mxu0 0.0
  %6228 = vmatpush.msra.mxu0 0.0
  %6229 = vmatpush.msra.mxu0 0.0
  %6230 = vmatpush.msra.mxu0 0.0
  %6231 = vmatpush.msra.mxu0 0.0
  %v6232 = vand.u32 %v43, 4294901760
  %v6233 = vsub.f32 %v43, %v6232
  %v6234 = vand.u32 %v6233, 4294901760
  %6235 = vmatpush.msra.mxu0 %v6234
  %v6236 = vand.u32 %v5798, 4294901760
  %6237 = vmatmul.f32.gmra.mxu0 %v6236
  %v6238 = vpop.f32.mrf.mxu0
  %v6239 = vadd.f32 %v6197, %v6238
  %v6240 = vand.u32 %v5801, 4294901760
  %6241 = vmatmul.f32.gmra.mxu0 %v6240
  %v6242 = vpop.f32.mrf.mxu0
  %v6243 = vadd.f32 %v6203, %v6242
  %v6244 = vand.u32 %v5804, 4294901760
  %6245 = vmatmul.f32.gmra.mxu0 %v6244
  %v6246 = vpop.f32.mrf.mxu0
  %v6247 = vadd.f32 %v6209, %v6246
  %v6248 = vand.u32 %v5807, 4294901760
  %6249 = vmatmul.f32.gmra.mxu0 %v6248
  %v6250 = vpop.f32.mrf.mxu0
  %v6251 = vadd.f32 %v6215, %v6250
  %6252 = vdwg.mxu0
  %6253 = vmatpush.msra.mxu0 0.0
  %6254 = vmatpush.msra.mxu0 0.0
  %6255 = vmatpush.msra.mxu0 0.0
  %6256 = vmatpush.msra.mxu0 0.0
  %6257 = vmatpush.msra.mxu0 0.0
  %6258 = vmatpush.msra.mxu0 0.0
  %6259 = vmatpush.msra.mxu0 0.0
  %6260 = vmatpush.msra.mxu0 0.0
  %6261 = vmatpush.msra.mxu0 0.0
  %6262 = vmatpush.msra.mxu0 0.0
  %6263 = vmatpush.msra.mxu0 0.0
  %6264 = vmatpush.msra.mxu0 0.0
  %6265 = vmatpush.msra.mxu0 0.0
  %6266 = vmatpush.msra.mxu0 0.0
  %6267 = vmatpush.msra.mxu0 0.0
  %v6268 = vand.u32 %v43, 4294901760
  %6269 = vmatpush.msra.mxu0 %v6268
  %v6270 = vand.u32 %v5798, 4294901760
  %6271 = vmatmul.f32.gmra.mxu0 %v6270
  %v6272 = vpop.f32.mrf.mxu0
  %v6273 = vadd.f32 %v6239, %v6272
  %v6274 = vand.u32 %v5801, 4294901760
  %6275 = vmatmul.f32.gmra.mxu0 %v6274
  %v6276 = vpop.f32.mrf.mxu0
  %v6277 = vadd.f32 %v6243, %v6276
  %v6278 = vand.u32 %v5804, 4294901760
  %6279 = vmatmul.f32.gmra.mxu0 %v6278
  %v6280 = vpop.f32.mrf.mxu0
  %v6281 = vadd.f32 %v6247, %v6280
  %v6282 = vand.u32 %v5807, 4294901760
  %6283 = vmatmul.f32.gmra.mxu0 %v6282
  %v6284 = vpop.f32.mrf.mxu0
  %v6285 = vadd.f32 %v6251, %v6284
  %6286 = vdwg.mxu0
  %s6287 = scalar_lea.vmem %s5, 64
  %v6288 = vld [vmem:[%s6287] sm:$0xff]
  %v6289 = vld [vmem:[%s6287 + $0x8] sm:$0xff]
  %v6290 = vld [vmem:[%s6287 + $0x10] sm:$0xff]
  %v6291 = vld [vmem:[%s6287 + $0x18] sm:$0xff]
  %v6293 = vsel %vm2161, %v6288, 0
  %v6296 = vsel %vm2161, %v6289, 0
  %v6299 = vsel %vm2161, %v6290, 0
  %v6302 = vsel %vm2161, %v6291, 0
  %6304 = vmatpush.msra.mxu0 0.0
  %6305 = vmatpush.msra.mxu0 0.0
  %6306 = vmatpush.msra.mxu0 0.0
  %6307 = vmatpush.msra.mxu0 0.0
  %6308 = vmatpush.msra.mxu0 0.0
  %6309 = vmatpush.msra.mxu0 0.0
  %6310 = vmatpush.msra.mxu0 0.0
  %6311 = vmatpush.msra.mxu0 0.0
  %6312 = vmatpush.msra.mxu0 0.0
  %6313 = vmatpush.msra.mxu0 0.0
  %6314 = vmatpush.msra.mxu0 0.0
  %6315 = vmatpush.msra.mxu0 0.0
  %6316 = vmatpush.msra.mxu0 0.0
  %6317 = vmatpush.msra.mxu0 0.0
  %6318 = vmatpush.msra.mxu0 0.0
  %v6319 = vand.u32 %v42, 4294901760
  %6320 = vmatpush.msra.mxu0 %v6319
  %v6321 = vand.u32 %v6293, 4294901760
  %v6322 = vsub.f32 %v6293, %v6321
  %v6323 = vand.u32 %v6322, 4294901760
  %v6324 = vsub.f32 %v6322, %v6323
  %v6325 = vand.u32 %v6324, 4294901760
  %6326 = vmatmul.f32.gmra.mxu0 %v6325
  %v6327 = vpop.f32.mrf.mxu0
  %v6328 = vadd.f32 0.0, %v6327
  %v6329 = vand.u32 %v6296, 4294901760
  %v6330 = vsub.f32 %v6296, %v6329
  %v6331 = vand.u32 %v6330, 4294901760
  %v6332 = vsub.f32 %v6330, %v6331
  %v6333 = vand.u32 %v6332, 4294901760
  %6334 = vmatmul.f32.gmra.mxu0 %v6333
  %v6335 = vpop.f32.mrf.mxu0
  %v6336 = vadd.f32 0.0, %v6335
  %v6337 = vand.u32 %v6299, 4294901760
  %v6338 = vsub.f32 %v6299, %v6337
  %v6339 = vand.u32 %v6338, 4294901760
  %v6340 = vsub.f32 %v6338, %v6339
  %v6341 = vand.u32 %v6340, 4294901760
  %6342 = vmatmul.f32.gmra.mxu0 %v6341
  %v6343 = vpop.f32.mrf.mxu0
  %v6344 = vadd.f32 0.0, %v6343
  %v6345 = vand.u32 %v6302, 4294901760
  %v6346 = vsub.f32 %v6302, %v6345
  %v6347 = vand.u32 %v6346, 4294901760
  %v6348 = vsub.f32 %v6346, %v6347
  %v6349 = vand.u32 %v6348, 4294901760
  %6350 = vmatmul.f32.gmra.mxu0 %v6349
  %v6351 = vpop.f32.mrf.mxu0
  %v6352 = vadd.f32 0.0, %v6351
  %6353 = vdwg.mxu0
  %6354 = vmatpush.msra.mxu0 0.0
  %6355 = vmatpush.msra.mxu0 0.0
  %6356 = vmatpush.msra.mxu0 0.0
  %6357 = vmatpush.msra.mxu0 0.0
  %6358 = vmatpush.msra.mxu0 0.0
  %6359 = vmatpush.msra.mxu0 0.0
  %6360 = vmatpush.msra.mxu0 0.0
  %6361 = vmatpush.msra.mxu0 0.0
  %6362 = vmatpush.msra.mxu0 0.0
  %6363 = vmatpush.msra.mxu0 0.0
  %6364 = vmatpush.msra.mxu0 0.0
  %6365 = vmatpush.msra.mxu0 0.0
  %6366 = vmatpush.msra.mxu0 0.0
  %6367 = vmatpush.msra.mxu0 0.0
  %6368 = vmatpush.msra.mxu0 0.0
  %v6369 = vand.u32 %v42, 4294901760
  %v6370 = vsub.f32 %v42, %v6369
  %v6371 = vand.u32 %v6370, 4294901760
  %v6372 = vsub.f32 %v6370, %v6371
  %v6373 = vand.u32 %v6372, 4294901760
  %6374 = vmatpush.msra.mxu0 %v6373
  %v6375 = vand.u32 %v6293, 4294901760
  %6376 = vmatmul.f32.gmra.mxu0 %v6375
  %v6377 = vpop.f32.mrf.mxu0
  %v6378 = vadd.f32 %v6328, %v6377
  %v6379 = vand.u32 %v6296, 4294901760
  %6380 = vmatmul.f32.gmra.mxu0 %v6379
  %v6381 = vpop.f32.mrf.mxu0
  %v6382 = vadd.f32 %v6336, %v6381
  %v6383 = vand.u32 %v6299, 4294901760
  %6384 = vmatmul.f32.gmra.mxu0 %v6383
  %v6385 = vpop.f32.mrf.mxu0
  %v6386 = vadd.f32 %v6344, %v6385
  %v6387 = vand.u32 %v6302, 4294901760
  %6388 = vmatmul.f32.gmra.mxu0 %v6387
  %v6389 = vpop.f32.mrf.mxu0
  %v6390 = vadd.f32 %v6352, %v6389
  %6391 = vdwg.mxu0
  %6392 = vmatpush.msra.mxu0 0.0
  %6393 = vmatpush.msra.mxu0 0.0
  %6394 = vmatpush.msra.mxu0 0.0
  %6395 = vmatpush.msra.mxu0 0.0
  %6396 = vmatpush.msra.mxu0 0.0
  %6397 = vmatpush.msra.mxu0 0.0
  %6398 = vmatpush.msra.mxu0 0.0
  %6399 = vmatpush.msra.mxu0 0.0
  %6400 = vmatpush.msra.mxu0 0.0
  %6401 = vmatpush.msra.mxu0 0.0
  %6402 = vmatpush.msra.mxu0 0.0
  %6403 = vmatpush.msra.mxu0 0.0
  %6404 = vmatpush.msra.mxu0 0.0
  %6405 = vmatpush.msra.mxu0 0.0
  %6406 = vmatpush.msra.mxu0 0.0
  %v6407 = vand.u32 %v42, 4294901760
  %v6408 = vsub.f32 %v42, %v6407
  %6409 = vmatpush.msra.mxu0 %v6408
  %v6410 = vand.u32 %v6293, 4294901760
  %v6411 = vsub.f32 %v6293, %v6410
  %6412 = vmatmul.f32.gmra.mxu0 %v6411
  %v6413 = vpop.f32.mrf.mxu0
  %v6414 = vadd.f32 %v6378, %v6413
  %v6415 = vand.u32 %v6296, 4294901760
  %v6416 = vsub.f32 %v6296, %v6415
  %6417 = vmatmul.f32.gmra.mxu0 %v6416
  %v6418 = vpop.f32.mrf.mxu0
  %v6419 = vadd.f32 %v6382, %v6418
  %v6420 = vand.u32 %v6299, 4294901760
  %v6421 = vsub.f32 %v6299, %v6420
  %6422 = vmatmul.f32.gmra.mxu0 %v6421
  %v6423 = vpop.f32.mrf.mxu0
  %v6424 = vadd.f32 %v6386, %v6423
  %v6425 = vand.u32 %v6302, 4294901760
  %v6426 = vsub.f32 %v6302, %v6425
  %6427 = vmatmul.f32.gmra.mxu0 %v6426
  %v6428 = vpop.f32.mrf.mxu0
  %v6429 = vadd.f32 %v6390, %v6428
  %6430 = vdwg.mxu0
  %6431 = vmatpush.msra.mxu0 0.0
  %6432 = vmatpush.msra.mxu0 0.0
  %6433 = vmatpush.msra.mxu0 0.0
  %6434 = vmatpush.msra.mxu0 0.0
  %6435 = vmatpush.msra.mxu0 0.0
  %6436 = vmatpush.msra.mxu0 0.0
  %6437 = vmatpush.msra.mxu0 0.0
  %6438 = vmatpush.msra.mxu0 0.0
  %6439 = vmatpush.msra.mxu0 0.0
  %6440 = vmatpush.msra.mxu0 0.0
  %6441 = vmatpush.msra.mxu0 0.0
  %6442 = vmatpush.msra.mxu0 0.0
  %6443 = vmatpush.msra.mxu0 0.0
  %6444 = vmatpush.msra.mxu0 0.0
  %6445 = vmatpush.msra.mxu0 0.0
  %v6446 = vand.u32 %v42, 4294901760
  %6447 = vmatpush.msra.mxu0 %v6446
  %v6448 = vand.u32 %v6293, 4294901760
  %v6449 = vsub.f32 %v6293, %v6448
  %v6450 = vand.u32 %v6449, 4294901760
  %6451 = vmatmul.f32.gmra.mxu0 %v6450
  %v6452 = vpop.f32.mrf.mxu0
  %v6453 = vadd.f32 %v6414, %v6452
  %v6454 = vand.u32 %v6296, 4294901760
  %v6455 = vsub.f32 %v6296, %v6454
  %v6456 = vand.u32 %v6455, 4294901760
  %6457 = vmatmul.f32.gmra.mxu0 %v6456
  %v6458 = vpop.f32.mrf.mxu0
  %v6459 = vadd.f32 %v6419, %v6458
  %v6460 = vand.u32 %v6299, 4294901760
  %v6461 = vsub.f32 %v6299, %v6460
  %v6462 = vand.u32 %v6461, 4294901760
  %6463 = vmatmul.f32.gmra.mxu0 %v6462
  %v6464 = vpop.f32.mrf.mxu0
  %v6465 = vadd.f32 %v6424, %v6464
  %v6466 = vand.u32 %v6302, 4294901760
  %v6467 = vsub.f32 %v6302, %v6466
  %v6468 = vand.u32 %v6467, 4294901760
  %6469 = vmatmul.f32.gmra.mxu0 %v6468
  %v6470 = vpop.f32.mrf.mxu0
  %v6471 = vadd.f32 %v6429, %v6470
  %6472 = vdwg.mxu0
  %6473 = vmatpush.msra.mxu0 0.0
  %6474 = vmatpush.msra.mxu0 0.0
  %6475 = vmatpush.msra.mxu0 0.0
  %6476 = vmatpush.msra.mxu0 0.0
  %6477 = vmatpush.msra.mxu0 0.0
  %6478 = vmatpush.msra.mxu0 0.0
  %6479 = vmatpush.msra.mxu0 0.0
  %6480 = vmatpush.msra.mxu0 0.0
  %6481 = vmatpush.msra.mxu0 0.0
  %6482 = vmatpush.msra.mxu0 0.0
  %6483 = vmatpush.msra.mxu0 0.0
  %6484 = vmatpush.msra.mxu0 0.0
  %6485 = vmatpush.msra.mxu0 0.0
  %6486 = vmatpush.msra.mxu0 0.0
  %6487 = vmatpush.msra.mxu0 0.0
  %v6488 = vand.u32 %v42, 4294901760
  %v6489 = vsub.f32 %v42, %v6488
  %v6490 = vand.u32 %v6489, 4294901760
  %6491 = vmatpush.msra.mxu0 %v6490
  %v6492 = vand.u32 %v6293, 4294901760
  %6493 = vmatmul.f32.gmra.mxu0 %v6492
  %v6494 = vpop.f32.mrf.mxu0
  %v6495 = vadd.f32 %v6453, %v6494
  %v6496 = vand.u32 %v6296, 4294901760
  %6497 = vmatmul.f32.gmra.mxu0 %v6496
  %v6498 = vpop.f32.mrf.mxu0
  %v6499 = vadd.f32 %v6459, %v6498
  %v6500 = vand.u32 %v6299, 4294901760
  %6501 = vmatmul.f32.gmra.mxu0 %v6500
  %v6502 = vpop.f32.mrf.mxu0
  %v6503 = vadd.f32 %v6465, %v6502
  %v6504 = vand.u32 %v6302, 4294901760
  %6505 = vmatmul.f32.gmra.mxu0 %v6504
  %v6506 = vpop.f32.mrf.mxu0
  %v6507 = vadd.f32 %v6471, %v6506
  %6508 = vdwg.mxu0
  %6509 = vmatpush.msra.mxu0 0.0
  %6510 = vmatpush.msra.mxu0 0.0
  %6511 = vmatpush.msra.mxu0 0.0
  %6512 = vmatpush.msra.mxu0 0.0
  %6513 = vmatpush.msra.mxu0 0.0
  %6514 = vmatpush.msra.mxu0 0.0
  %6515 = vmatpush.msra.mxu0 0.0
  %6516 = vmatpush.msra.mxu0 0.0
  %6517 = vmatpush.msra.mxu0 0.0
  %6518 = vmatpush.msra.mxu0 0.0
  %6519 = vmatpush.msra.mxu0 0.0
  %6520 = vmatpush.msra.mxu0 0.0
  %6521 = vmatpush.msra.mxu0 0.0
  %6522 = vmatpush.msra.mxu0 0.0
  %6523 = vmatpush.msra.mxu0 0.0
  %v6524 = vand.u32 %v42, 4294901760
  %6525 = vmatpush.msra.mxu0 %v6524
  %v6526 = vand.u32 %v6293, 4294901760
  %6527 = vmatmul.f32.gmra.mxu0 %v6526
  %v6528 = vpop.f32.mrf.mxu0
  %v6529 = vadd.f32 %v6495, %v6528
  %v6530 = vand.u32 %v6296, 4294901760
  %6531 = vmatmul.f32.gmra.mxu0 %v6530
  %v6532 = vpop.f32.mrf.mxu0
  %v6533 = vadd.f32 %v6499, %v6532
  %v6534 = vand.u32 %v6299, 4294901760
  %6535 = vmatmul.f32.gmra.mxu0 %v6534
  %v6536 = vpop.f32.mrf.mxu0
  %v6537 = vadd.f32 %v6503, %v6536
  %v6538 = vand.u32 %v6302, 4294901760
  %6539 = vmatmul.f32.gmra.mxu0 %v6538
  %v6540 = vpop.f32.mrf.mxu0
  %v6541 = vadd.f32 %v6507, %v6540
  %6542 = vdwg.mxu0
  %6543 = vmatpush.msra.mxu0 0.0
  %6544 = vmatpush.msra.mxu0 0.0
  %6545 = vmatpush.msra.mxu0 0.0
  %6546 = vmatpush.msra.mxu0 0.0
  %6547 = vmatpush.msra.mxu0 0.0
  %6548 = vmatpush.msra.mxu0 0.0
  %6549 = vmatpush.msra.mxu0 0.0
  %6550 = vmatpush.msra.mxu0 0.0
  %6551 = vmatpush.msra.mxu0 0.0
  %6552 = vmatpush.msra.mxu0 0.0
  %6553 = vmatpush.msra.mxu0 0.0
  %6554 = vmatpush.msra.mxu0 0.0
  %6555 = vmatpush.msra.mxu0 0.0
  %6556 = vmatpush.msra.mxu0 0.0
  %6557 = vmatpush.msra.mxu0 0.0
  %v6558 = vand.u32 %v43, 4294901760
  %6559 = vmatpush.msra.mxu0 %v6558
  %v6560 = vand.u32 %v6293, 4294901760
  %v6561 = vsub.f32 %v6293, %v6560
  %v6562 = vand.u32 %v6561, 4294901760
  %v6563 = vsub.f32 %v6561, %v6562
  %v6564 = vand.u32 %v6563, 4294901760
  %6565 = vmatmul.f32.gmra.mxu0 %v6564
  %v6566 = vpop.f32.mrf.mxu0
  %v6567 = vadd.f32 0.0, %v6566
  %v6568 = vand.u32 %v6296, 4294901760
  %v6569 = vsub.f32 %v6296, %v6568
  %v6570 = vand.u32 %v6569, 4294901760
  %v6571 = vsub.f32 %v6569, %v6570
  %v6572 = vand.u32 %v6571, 4294901760
  %6573 = vmatmul.f32.gmra.mxu0 %v6572
  %v6574 = vpop.f32.mrf.mxu0
  %v6575 = vadd.f32 0.0, %v6574
  %v6576 = vand.u32 %v6299, 4294901760
  %v6577 = vsub.f32 %v6299, %v6576
  %v6578 = vand.u32 %v6577, 4294901760
  %v6579 = vsub.f32 %v6577, %v6578
  %v6580 = vand.u32 %v6579, 4294901760
  %6581 = vmatmul.f32.gmra.mxu0 %v6580
  %v6582 = vpop.f32.mrf.mxu0
  %v6583 = vadd.f32 0.0, %v6582
  %v6584 = vand.u32 %v6302, 4294901760
  %v6585 = vsub.f32 %v6302, %v6584
  %v6586 = vand.u32 %v6585, 4294901760
  %v6587 = vsub.f32 %v6585, %v6586
  %v6588 = vand.u32 %v6587, 4294901760
  %6589 = vmatmul.f32.gmra.mxu0 %v6588
  %v6590 = vpop.f32.mrf.mxu0
  %v6591 = vadd.f32 0.0, %v6590
  %6592 = vdwg.mxu0
  %6593 = vmatpush.msra.mxu0 0.0
  %6594 = vmatpush.msra.mxu0 0.0
  %6595 = vmatpush.msra.mxu0 0.0
  %6596 = vmatpush.msra.mxu0 0.0
  %6597 = vmatpush.msra.mxu0 0.0
  %6598 = vmatpush.msra.mxu0 0.0
  %6599 = vmatpush.msra.mxu0 0.0
  %6600 = vmatpush.msra.mxu0 0.0
  %6601 = vmatpush.msra.mxu0 0.0
  %6602 = vmatpush.msra.mxu0 0.0
  %6603 = vmatpush.msra.mxu0 0.0
  %6604 = vmatpush.msra.mxu0 0.0
  %6605 = vmatpush.msra.mxu0 0.0
  %6606 = vmatpush.msra.mxu0 0.0
  %6607 = vmatpush.msra.mxu0 0.0
  %v6608 = vand.u32 %v43, 4294901760
  %v6609 = vsub.f32 %v43, %v6608
  %v6610 = vand.u32 %v6609, 4294901760
  %v6611 = vsub.f32 %v6609, %v6610
  %v6612 = vand.u32 %v6611, 4294901760
  %6613 = vmatpush.msra.mxu0 %v6612
  %v6614 = vand.u32 %v6293, 4294901760
  %6615 = vmatmul.f32.gmra.mxu0 %v6614
  %v6616 = vpop.f32.mrf.mxu0
  %v6617 = vadd.f32 %v6567, %v6616
  %v6618 = vand.u32 %v6296, 4294901760
  %6619 = vmatmul.f32.gmra.mxu0 %v6618
  %v6620 = vpop.f32.mrf.mxu0
  %v6621 = vadd.f32 %v6575, %v6620
  %v6622 = vand.u32 %v6299, 4294901760
  %6623 = vmatmul.f32.gmra.mxu0 %v6622
  %v6624 = vpop.f32.mrf.mxu0
  %v6625 = vadd.f32 %v6583, %v6624
  %v6626 = vand.u32 %v6302, 4294901760
  %6627 = vmatmul.f32.gmra.mxu0 %v6626
  %v6628 = vpop.f32.mrf.mxu0
  %v6629 = vadd.f32 %v6591, %v6628
  %6630 = vdwg.mxu0
  %6631 = vmatpush.msra.mxu0 0.0
  %6632 = vmatpush.msra.mxu0 0.0
  %6633 = vmatpush.msra.mxu0 0.0
  %6634 = vmatpush.msra.mxu0 0.0
  %6635 = vmatpush.msra.mxu0 0.0
  %6636 = vmatpush.msra.mxu0 0.0
  %6637 = vmatpush.msra.mxu0 0.0
  %6638 = vmatpush.msra.mxu0 0.0
  %6639 = vmatpush.msra.mxu0 0.0
  %6640 = vmatpush.msra.mxu0 0.0
  %6641 = vmatpush.msra.mxu0 0.0
  %6642 = vmatpush.msra.mxu0 0.0
  %6643 = vmatpush.msra.mxu0 0.0
  %6644 = vmatpush.msra.mxu0 0.0
  %6645 = vmatpush.msra.mxu0 0.0
  %v6646 = vand.u32 %v43, 4294901760
  %v6647 = vsub.f32 %v43, %v6646
  %6648 = vmatpush.msra.mxu0 %v6647
  %v6649 = vand.u32 %v6293, 4294901760
  %v6650 = vsub.f32 %v6293, %v6649
  %6651 = vmatmul.f32.gmra.mxu0 %v6650
  %v6652 = vpop.f32.mrf.mxu0
  %v6653 = vadd.f32 %v6617, %v6652
  %v6654 = vand.u32 %v6296, 4294901760
  %v6655 = vsub.f32 %v6296, %v6654
  %6656 = vmatmul.f32.gmra.mxu0 %v6655
  %v6657 = vpop.f32.mrf.mxu0
  %v6658 = vadd.f32 %v6621, %v6657
  %v6659 = vand.u32 %v6299, 4294901760
  %v6660 = vsub.f32 %v6299, %v6659
  %6661 = vmatmul.f32.gmra.mxu0 %v6660
  %v6662 = vpop.f32.mrf.mxu0
  %v6663 = vadd.f32 %v6625, %v6662
  %v6664 = vand.u32 %v6302, 4294901760
  %v6665 = vsub.f32 %v6302, %v6664
  %6666 = vmatmul.f32.gmra.mxu0 %v6665
  %v6667 = vpop.f32.mrf.mxu0
  %v6668 = vadd.f32 %v6629, %v6667
  %6669 = vdwg.mxu0
  %6670 = vmatpush.msra.mxu0 0.0
  %6671 = vmatpush.msra.mxu0 0.0
  %6672 = vmatpush.msra.mxu0 0.0
  %6673 = vmatpush.msra.mxu0 0.0
  %6674 = vmatpush.msra.mxu0 0.0
  %6675 = vmatpush.msra.mxu0 0.0
  %6676 = vmatpush.msra.mxu0 0.0
  %6677 = vmatpush.msra.mxu0 0.0
  %6678 = vmatpush.msra.mxu0 0.0
  %6679 = vmatpush.msra.mxu0 0.0
  %6680 = vmatpush.msra.mxu0 0.0
  %6681 = vmatpush.msra.mxu0 0.0
  %6682 = vmatpush.msra.mxu0 0.0
  %6683 = vmatpush.msra.mxu0 0.0
  %6684 = vmatpush.msra.mxu0 0.0
  %v6685 = vand.u32 %v43, 4294901760
  %6686 = vmatpush.msra.mxu0 %v6685
  %v6687 = vand.u32 %v6293, 4294901760
  %v6688 = vsub.f32 %v6293, %v6687
  %v6689 = vand.u32 %v6688, 4294901760
  %6690 = vmatmul.f32.gmra.mxu0 %v6689
  %v6691 = vpop.f32.mrf.mxu0
  %v6692 = vadd.f32 %v6653, %v6691
  %v6693 = vand.u32 %v6296, 4294901760
  %v6694 = vsub.f32 %v6296, %v6693
  %v6695 = vand.u32 %v6694, 4294901760
  %6696 = vmatmul.f32.gmra.mxu0 %v6695
  %v6697 = vpop.f32.mrf.mxu0
  %v6698 = vadd.f32 %v6658, %v6697
  %v6699 = vand.u32 %v6299, 4294901760
  %v6700 = vsub.f32 %v6299, %v6699
  %v6701 = vand.u32 %v6700, 4294901760
  %6702 = vmatmul.f32.gmra.mxu0 %v6701
  %v6703 = vpop.f32.mrf.mxu0
  %v6704 = vadd.f32 %v6663, %v6703
  %v6705 = vand.u32 %v6302, 4294901760
  %v6706 = vsub.f32 %v6302, %v6705
  %v6707 = vand.u32 %v6706, 4294901760
  %6708 = vmatmul.f32.gmra.mxu0 %v6707
  %v6709 = vpop.f32.mrf.mxu0
  %v6710 = vadd.f32 %v6668, %v6709
  %6711 = vdwg.mxu0
  %6712 = vmatpush.msra.mxu0 0.0
  %6713 = vmatpush.msra.mxu0 0.0
  %6714 = vmatpush.msra.mxu0 0.0
  %6715 = vmatpush.msra.mxu0 0.0
  %6716 = vmatpush.msra.mxu0 0.0
  %6717 = vmatpush.msra.mxu0 0.0
  %6718 = vmatpush.msra.mxu0 0.0
  %6719 = vmatpush.msra.mxu0 0.0
  %6720 = vmatpush.msra.mxu0 0.0
  %6721 = vmatpush.msra.mxu0 0.0
  %6722 = vmatpush.msra.mxu0 0.0
  %6723 = vmatpush.msra.mxu0 0.0
  %6724 = vmatpush.msra.mxu0 0.0
  %6725 = vmatpush.msra.mxu0 0.0
  %6726 = vmatpush.msra.mxu0 0.0
  %v6727 = vand.u32 %v43, 4294901760
  %v6728 = vsub.f32 %v43, %v6727
  %v6729 = vand.u32 %v6728, 4294901760
  %6730 = vmatpush.msra.mxu0 %v6729
  %v6731 = vand.u32 %v6293, 4294901760
  %6732 = vmatmul.f32.gmra.mxu0 %v6731
  %v6733 = vpop.f32.mrf.mxu0
  %v6734 = vadd.f32 %v6692, %v6733
  %v6735 = vand.u32 %v6296, 4294901760
  %6736 = vmatmul.f32.gmra.mxu0 %v6735
  %v6737 = vpop.f32.mrf.mxu0
  %v6738 = vadd.f32 %v6698, %v6737
  %v6739 = vand.u32 %v6299, 4294901760
  %6740 = vmatmul.f32.gmra.mxu0 %v6739
  %v6741 = vpop.f32.mrf.mxu0
  %v6742 = vadd.f32 %v6704, %v6741
  %v6743 = vand.u32 %v6302, 4294901760
  %6744 = vmatmul.f32.gmra.mxu0 %v6743
  %v6745 = vpop.f32.mrf.mxu0
  %v6746 = vadd.f32 %v6710, %v6745
  %6747 = vdwg.mxu0
  %6748 = vmatpush.msra.mxu0 0.0
  %6749 = vmatpush.msra.mxu0 0.0
  %6750 = vmatpush.msra.mxu0 0.0
  %6751 = vmatpush.msra.mxu0 0.0
  %6752 = vmatpush.msra.mxu0 0.0
  %6753 = vmatpush.msra.mxu0 0.0
  %6754 = vmatpush.msra.mxu0 0.0
  %6755 = vmatpush.msra.mxu0 0.0
  %6756 = vmatpush.msra.mxu0 0.0
  %6757 = vmatpush.msra.mxu0 0.0
  %6758 = vmatpush.msra.mxu0 0.0
  %6759 = vmatpush.msra.mxu0 0.0
  %6760 = vmatpush.msra.mxu0 0.0
  %6761 = vmatpush.msra.mxu0 0.0
  %6762 = vmatpush.msra.mxu0 0.0
  %v6763 = vand.u32 %v43, 4294901760
  %6764 = vmatpush.msra.mxu0 %v6763
  %v6765 = vand.u32 %v6293, 4294901760
  %6766 = vmatmul.f32.gmra.mxu0 %v6765
  %v6767 = vpop.f32.mrf.mxu0
  %v6768 = vadd.f32 %v6734, %v6767
  %v6769 = vand.u32 %v6296, 4294901760
  %6770 = vmatmul.f32.gmra.mxu0 %v6769
  %v6771 = vpop.f32.mrf.mxu0
  %v6772 = vadd.f32 %v6738, %v6771
  %v6773 = vand.u32 %v6299, 4294901760
  %6774 = vmatmul.f32.gmra.mxu0 %v6773
  %v6775 = vpop.f32.mrf.mxu0
  %v6776 = vadd.f32 %v6742, %v6775
  %v6777 = vand.u32 %v6302, 4294901760
  %6778 = vmatmul.f32.gmra.mxu0 %v6777
  %v6779 = vpop.f32.mrf.mxu0
  %v6780 = vadd.f32 %v6746, %v6779
  %6781 = vdwg.mxu0
  %v6782 = vmul.f32 %v6529, 0.5
  %v6783 = vmul.f32 %v6768, 0.5
  %v6784 = vmul.f32 %v6533, 0.5
  %v6785 = vmul.f32 %v6772, 0.5
  %v6786 = vmul.f32 %v6537, 0.5
  %v6787 = vmul.f32 %v6776, 0.5
  %v6788 = vmul.f32 %v6541, 0.5
  %v6789 = vmul.f32 %v6780, 0.5
  %v6790 = vadd.f32 %v6034, %v6782
  %v6791 = vadd.f32 %v6273, %v6783
  %v6792 = vadd.f32 %v6038, %v6784
  %v6793 = vadd.f32 %v6277, %v6785
  %v6794 = vadd.f32 %v6042, %v6786
  %v6795 = vadd.f32 %v6281, %v6787
  %v6796 = vadd.f32 %v6046, %v6788
  %v6797 = vadd.f32 %v6285, %v6789
  %v6798 = vsub.f32 %v6034, %v6782
  %v6799 = vsub.f32 %v6273, %v6783
  %v6800 = vsub.f32 %v6038, %v6784
  %v6801 = vsub.f32 %v6277, %v6785
  %v6802 = vsub.f32 %v6042, %v6786
  %v6803 = vsub.f32 %v6281, %v6787
  %v6804 = vsub.f32 %v6046, %v6788
  %v6805 = vsub.f32 %v6285, %v6789
  %v6806 = vmin.f32 %v6798, %v6790
  %v6807 = vmin.f32 %v6799, %v6791
  %v6808 = vmin.f32 %v6800, %v6792
  %v6809 = vmin.f32 %v6801, %v6793
  %v6810 = vmin.f32 %v6802, %v6794
  %v6811 = vmin.f32 %v6803, %v6795
  %v6812 = vmin.f32 %v6804, %v6796
  %v6813 = vmin.f32 %v6805, %v6797
  %v6814 = vmax.f32 %v6798, %v6790
  %v6815 = vmax.f32 %v6799, %v6791
  %v6816 = vmax.f32 %v6800, %v6792
  %v6817 = vmax.f32 %v6801, %v6793
  %v6818 = vmax.f32 %v6802, %v6794
  %v6819 = vmax.f32 %v6803, %v6795
  %v6820 = vmax.f32 %v6804, %v6796
  %v6821 = vmax.f32 %v6805, %v6797
  %v6822 = vsub.f32 %v6814, %v6806
  %v6823 = vsub.f32 %v6815, %v6807
  %v6824 = vsub.f32 %v6816, %v6808
  %v6825 = vsub.f32 %v6817, %v6809
  %v6826 = vsub.f32 %v6818, %v6810
  %v6827 = vsub.f32 %v6819, %v6811
  %v6828 = vsub.f32 %v6820, %v6812
  %v6829 = vsub.f32 %v6821, %v6813
  %v6830 = vadd.f32 %v6822, 1.0
  %v6831 = vadd.f32 %v6823, 1.0
  %v6832 = vadd.f32 %v6824, 1.0
  %v6833 = vadd.f32 %v6825, 1.0
  %v6834 = vadd.f32 %v6826, 1.0
  %v6835 = vadd.f32 %v6827, 1.0
  %v6836 = vadd.f32 %v6828, 1.0
  %v6837 = vadd.f32 %v6829, 1.0
  %v6838 = vrcp.pop %v6830
  %v6839 = vmul.f32 %v6830, %v6838
  %v6840 = vsub.f32 1.0, %v6839
  %v6841 = vmul.f32 %v6838, %v6840
  %v6842 = vadd.f32 %v6838, %v6841
  %vm6843 = vweird.f32 %v6830
  %vm6844 = vweird.f32 %v6838
  %vm6845 = vmor %vm6843, %vm6844
  %v6846 = vsel %vm6845, %v6838, %v6842
  %v6847 = vand.u32 2147483647, %v6830
  %vm6848 = vcmp.eq.f32.partialorder %v6847, 8.507059e+37
  %v6849 = vand.u32 %v6830, 2147483648
  %v6850 = vor.u32 1.1754944e-38, %v6849
  %v6851 = vsel %vm6848, %v6850, %v6846
  %v6852 = vmul.f32 1.0, %v6851
  %v6853 = vrcp.pop %v6831
  %v6854 = vmul.f32 %v6831, %v6853
  %v6855 = vsub.f32 1.0, %v6854
  %v6856 = vmul.f32 %v6853, %v6855
  %v6857 = vadd.f32 %v6853, %v6856
  %vm6858 = vweird.f32 %v6831
  %vm6859 = vweird.f32 %v6853
  %vm6860 = vmor %vm6858, %vm6859
  %v6861 = vsel %vm6860, %v6853, %v6857
  %v6862 = vand.u32 2147483647, %v6831
  %vm6863 = vcmp.eq.f32.partialorder %v6862, 8.507059e+37
  %v6864 = vand.u32 %v6831, 2147483648
  %v6865 = vor.u32 1.1754944e-38, %v6864
  %v6866 = vsel %vm6863, %v6865, %v6861
  %v6867 = vmul.f32 1.0, %v6866
  %v6868 = vrcp.pop %v6832
  %v6869 = vmul.f32 %v6832, %v6868
  %v6870 = vsub.f32 1.0, %v6869
  %v6871 = vmul.f32 %v6868, %v6870
  %v6872 = vadd.f32 %v6868, %v6871
  %vm6873 = vweird.f32 %v6832
  %vm6874 = vweird.f32 %v6868
  %vm6875 = vmor %vm6873, %vm6874
  %v6876 = vsel %vm6875, %v6868, %v6872
  %v6877 = vand.u32 2147483647, %v6832
  %vm6878 = vcmp.eq.f32.partialorder %v6877, 8.507059e+37
  %v6879 = vand.u32 %v6832, 2147483648
  %v6880 = vor.u32 1.1754944e-38, %v6879
  %v6881 = vsel %vm6878, %v6880, %v6876
  %v6882 = vmul.f32 1.0, %v6881
  %v6883 = vrcp.pop %v6833
  %v6884 = vmul.f32 %v6833, %v6883
  %v6885 = vsub.f32 1.0, %v6884
  %v6886 = vmul.f32 %v6883, %v6885
  %v6887 = vadd.f32 %v6883, %v6886
  %vm6888 = vweird.f32 %v6833
  %vm6889 = vweird.f32 %v6883
  %vm6890 = vmor %vm6888, %vm6889
  %v6891 = vsel %vm6890, %v6883, %v6887
  %v6892 = vand.u32 2147483647, %v6833
  %vm6893 = vcmp.eq.f32.partialorder %v6892, 8.507059e+37
  %v6894 = vand.u32 %v6833, 2147483648
  %v6895 = vor.u32 1.1754944e-38, %v6894
  %v6896 = vsel %vm6893, %v6895, %v6891
  %v6897 = vmul.f32 1.0, %v6896
  %v6898 = vrcp.pop %v6834
  %v6899 = vmul.f32 %v6834, %v6898
  %v6900 = vsub.f32 1.0, %v6899
  %v6901 = vmul.f32 %v6898, %v6900
  %v6902 = vadd.f32 %v6898, %v6901
  %vm6903 = vweird.f32 %v6834
  %vm6904 = vweird.f32 %v6898
  %vm6905 = vmor %vm6903, %vm6904
  %v6906 = vsel %vm6905, %v6898, %v6902
  %v6907 = vand.u32 2147483647, %v6834
  %vm6908 = vcmp.eq.f32.partialorder %v6907, 8.507059e+37
  %v6909 = vand.u32 %v6834, 2147483648
  %v6910 = vor.u32 1.1754944e-38, %v6909
  %v6911 = vsel %vm6908, %v6910, %v6906
  %v6912 = vmul.f32 1.0, %v6911
  %v6913 = vrcp.pop %v6835
  %v6914 = vmul.f32 %v6835, %v6913
  %v6915 = vsub.f32 1.0, %v6914
  %v6916 = vmul.f32 %v6913, %v6915
  %v6917 = vadd.f32 %v6913, %v6916
  %vm6918 = vweird.f32 %v6835
  %vm6919 = vweird.f32 %v6913
  %vm6920 = vmor %vm6918, %vm6919
  %v6921 = vsel %vm6920, %v6913, %v6917
  %v6922 = vand.u32 2147483647, %v6835
  %vm6923 = vcmp.eq.f32.partialorder %v6922, 8.507059e+37
  %v6924 = vand.u32 %v6835, 2147483648
  %v6925 = vor.u32 1.1754944e-38, %v6924
  %v6926 = vsel %vm6923, %v6925, %v6921
  %v6927 = vmul.f32 1.0, %v6926
  %v6928 = vrcp.pop %v6836
  %v6929 = vmul.f32 %v6836, %v6928
  %v6930 = vsub.f32 1.0, %v6929
  %v6931 = vmul.f32 %v6928, %v6930
  %v6932 = vadd.f32 %v6928, %v6931
  %vm6933 = vweird.f32 %v6836
  %vm6934 = vweird.f32 %v6928
  %vm6935 = vmor %vm6933, %vm6934
  %v6936 = vsel %vm6935, %v6928, %v6932
  %v6937 = vand.u32 2147483647, %v6836
  %vm6938 = vcmp.eq.f32.partialorder %v6937, 8.507059e+37
  %v6939 = vand.u32 %v6836, 2147483648
  %v6940 = vor.u32 1.1754944e-38, %v6939
  %v6941 = vsel %vm6938, %v6940, %v6936
  %v6942 = vmul.f32 1.0, %v6941
  %v6943 = vrcp.pop %v6837
  %v6944 = vmul.f32 %v6837, %v6943
  %v6945 = vsub.f32 1.0, %v6944
  %v6946 = vmul.f32 %v6943, %v6945
  %v6947 = vadd.f32 %v6943, %v6946
  %vm6948 = vweird.f32 %v6837
  %vm6949 = vweird.f32 %v6943
  %vm6950 = vmor %vm6948, %vm6949
  %v6951 = vsel %vm6950, %v6943, %v6947
  %v6952 = vand.u32 2147483647, %v6837
  %vm6953 = vcmp.eq.f32.partialorder %v6952, 8.507059e+37
  %v6954 = vand.u32 %v6837, 2147483648
  %v6955 = vor.u32 1.1754944e-38, %v6954
  %v6956 = vsel %vm6953, %v6955, %v6951
  %v6957 = vmul.f32 1.0, %v6956
  %v6958 = vadd.f32 %v6806, %v6814
  %v6959 = vadd.f32 %v6807, %v6815
  %v6960 = vadd.f32 %v6808, %v6816
  %v6961 = vadd.f32 %v6809, %v6817
  %v6962 = vadd.f32 %v6810, %v6818
  %v6963 = vadd.f32 %v6811, %v6819
  %v6964 = vadd.f32 %v6812, %v6820
  %v6965 = vadd.f32 %v6813, %v6821
  %v6966 = vmul.f32 %v6958, 0.5
  %v6967 = vmul.f32 %v6959, 0.5
  %v6968 = vmul.f32 %v6960, 0.5
  %v6969 = vmul.f32 %v6961, 0.5
  %v6970 = vmul.f32 %v6962, 0.5
  %v6971 = vmul.f32 %v6963, 0.5
  %v6972 = vmul.f32 %v6964, 0.5
  %v6973 = vmul.f32 %v6965, 0.5
  %v6974 = vsub.f32 %v5784, %v6966
  %v6975 = vsub.f32 %v5785, %v6967
  %v6976 = vsub.f32 %v5786, %v6968
  %v6977 = vsub.f32 %v5787, %v6969
  %v6978 = vsub.f32 %v5788, %v6970
  %v6979 = vsub.f32 %v5789, %v6971
  %v6980 = vsub.f32 %v5790, %v6972
  %v6981 = vsub.f32 %v5791, %v6973
  %v6982 = vand.u32 2147483647, %v6974
  %v6983 = vand.u32 2147483647, %v6975
  %v6984 = vand.u32 2147483647, %v6976
  %v6985 = vand.u32 2147483647, %v6977
  %v6986 = vand.u32 2147483647, %v6978
  %v6987 = vand.u32 2147483647, %v6979
  %v6988 = vand.u32 2147483647, %v6980
  %v6989 = vand.u32 2147483647, %v6981
  %vm6990 = vcmp.le.f32.partialorder %v6806, %v5784
  %vm6991 = vcmp.le.f32.partialorder %v6807, %v5785
  %vm6992 = vcmp.le.f32.partialorder %v6808, %v5786
  %vm6993 = vcmp.le.f32.partialorder %v6809, %v5787
  %vm6994 = vcmp.le.f32.partialorder %v6810, %v5788
  %vm6995 = vcmp.le.f32.partialorder %v6811, %v5789
  %vm6996 = vcmp.le.f32.partialorder %v6812, %v5790
  %vm6997 = vcmp.le.f32.partialorder %v6813, %v5791
  %vm6998 = vcmp.le.f32.partialorder %v5784, %v6814
  %vm6999 = vcmp.le.f32.partialorder %v5785, %v6815
  %vm7000 = vcmp.le.f32.partialorder %v5786, %v6816
  %vm7001 = vcmp.le.f32.partialorder %v5787, %v6817
  %vm7002 = vcmp.le.f32.partialorder %v5788, %v6818
  %vm7003 = vcmp.le.f32.partialorder %v5789, %v6819
  %vm7004 = vcmp.le.f32.partialorder %v5790, %v6820
  %vm7005 = vcmp.le.f32.partialorder %v5791, %v6821
  %vm7006 = vmand %vm6990, %vm6998
  %vm7007 = vmand %vm6991, %vm6999
  %vm7008 = vmand %vm6992, %vm7000
  %vm7009 = vmand %vm6993, %vm7001
  %vm7010 = vmand %vm6994, %vm7002
  %vm7011 = vmand %vm6995, %vm7003
  %vm7012 = vmand %vm6996, %vm7004
  %vm7013 = vmand %vm6997, %vm7005
  %v7014 = vmul.f32 %v6982, %v6852
  %v7015 = vmul.f32 %v6983, %v6867
  %v7016 = vmul.f32 %v6984, %v6882
  %v7017 = vmul.f32 %v6985, %v6897
  %v7018 = vmul.f32 %v6986, %v6912
  %v7019 = vmul.f32 %v6987, %v6927
  %v7020 = vmul.f32 %v6988, %v6942
  %v7021 = vmul.f32 %v6989, %v6957
  %v7022 = vmul.f32 %v6830, %v6982
  %v7023 = vmul.f32 %v6831, %v6983
  %v7024 = vmul.f32 %v6832, %v6984
  %v7025 = vmul.f32 %v6833, %v6985
  %v7026 = vmul.f32 %v6834, %v6986
  %v7027 = vmul.f32 %v6835, %v6987
  %v7028 = vmul.f32 %v6836, %v6988
  %v7029 = vmul.f32 %v6837, %v6989
  %v7030 = vmul.f32 %v6822, 0.5
  %v7031 = vmul.f32 %v6823, 0.5
  %v7032 = vmul.f32 %v6824, 0.5
  %v7033 = vmul.f32 %v6825, 0.5
  %v7034 = vmul.f32 %v6826, 0.5
  %v7035 = vmul.f32 %v6827, 0.5
  %v7036 = vmul.f32 %v6828, 0.5
  %v7037 = vmul.f32 %v6829, 0.5
  %v7038 = vsub.f32 %v6830, %v6852
  %v7039 = vsub.f32 %v6831, %v6867
  %v7040 = vsub.f32 %v6832, %v6882
  %v7041 = vsub.f32 %v6833, %v6897
  %v7042 = vsub.f32 %v6834, %v6912
  %v7043 = vsub.f32 %v6835, %v6927
  %v7044 = vsub.f32 %v6836, %v6942
  %v7045 = vsub.f32 %v6837, %v6957
  %v7046 = vmul.f32 %v7030, %v7038
  %v7047 = vmul.f32 %v7031, %v7039
  %v7048 = vmul.f32 %v7032, %v7040
  %v7049 = vmul.f32 %v7033, %v7041
  %v7050 = vmul.f32 %v7034, %v7042
  %v7051 = vmul.f32 %v7035, %v7043
  %v7052 = vmul.f32 %v7036, %v7044
  %v7053 = vmul.f32 %v7037, %v7045
  %v7054 = vsub.f32 %v7022, %v7046
  %v7055 = vsub.f32 %v7023, %v7047
  %v7056 = vsub.f32 %v7024, %v7048
  %v7057 = vsub.f32 %v7025, %v7049
  %v7058 = vsub.f32 %v7026, %v7050
  %v7059 = vsub.f32 %v7027, %v7051
  %v7060 = vsub.f32 %v7028, %v7052
  %v7061 = vsub.f32 %v7029, %v7053
  %v7062 = vsel %vm7006, %v7014, %v7054
  %v7063 = vsel %vm7007, %v7015, %v7055
  %v7064 = vsel %vm7008, %v7016, %v7056
  %v7065 = vsel %vm7009, %v7017, %v7057
  %v7066 = vsel %vm7010, %v7018, %v7058
  %v7067 = vsel %vm7011, %v7019, %v7059
  %v7068 = vsel %vm7012, %v7020, %v7060
  %v7069 = vsel %vm7013, %v7021, %v7061
  %v7070 = vand.u32 2147483647, %v7062
  %v7071 = vand.u32 2147483647, %v7063
  %v7072 = vand.u32 2147483647, %v7064
  %v7073 = vand.u32 2147483647, %v7065
  %v7074 = vand.u32 2147483647, %v7066
  %v7075 = vand.u32 2147483647, %v7067
  %v7076 = vand.u32 2147483647, %v7068
  %v7077 = vand.u32 2147483647, %v7069
  %v7078 = vadd.f32 %v7070, %v7072
  %v7079 = vadd.f32 %v7078, %v7074
  %v7080 = vadd.f32 %v7079, %v7076
  %v7081 = vrot.slane %v7080, 4
  %v7082 = vadd.f32 %v7080, %v7081
  %v7083 = vrot.slane %v7082, 2
  %v7084 = vadd.f32 %v7082, %v7083
  %v7085 = vrot.slane %v7084, 1
  %v7086 = vadd.f32 %v7084, %v7085
  %v7087 = vadd.f32 %v7071, %v7073
  %v7088 = vadd.f32 %v7087, %v7075
  %v7089 = vadd.f32 %v7088, %v7077
  %v7090 = vrot.slane %v7089, 4
  %v7091 = vadd.f32 %v7089, %v7090
  %v7092 = vrot.slane %v7091, 2
  %v7093 = vadd.f32 %v7091, %v7092
  %v7094 = vrot.slane %v7093, 1
  %v7095 = vadd.f32 %v7093, %v7094
  %v7096 = vadd.f32 %v5278, %v7086
  %v7097 = vadd.f32 %v5279, %v7095
  %v7100 = vrot.slane %v7097, 7
  %vm7101 = vcmask 1040384
  %v7102 = vsel %vm7101, %v7096, %v7100
  %v7104 = vlaneseq
  %vm7105 = vcmp.ge.s32.totalorder %v7104, 0
  %vm7106 = vcmp.lt.s32.totalorder %v7104, 256
  %vm7107 = vmand %vm7105, %vm7106
  %7108 = vst.msk [vmem:[%s6] sm:$0x3] %vm7107, %v7102
  // Predicated region
  $region26: #{my_boxe_forward.1} parent=0 // pred_check
    _
  $region27: #{my_boxe_forward.1} parent=0 // pred_check_branch
    %7110 = sbr.rel (0) target = $region29
  $region28: #{my_boxe_forward.1} parent=0 // pred_region
    _
  $region29: #{my_boxe_forward.1} parent=0 // pred_fallthru
    _
  // Predicated region
  $region30: #{my_boxe_forward.1} parent=0 // pred_check
    _
  $region31: #{my_boxe_forward.1} parent=0 // pred_check_branch
    %7112 = sbr.rel (0) target = $region33
  $region32: #{my_boxe_forward.1} parent=0 // pred_region
    _
  $region33: #{my_boxe_forward.1} parent=0 // pred_fallthru
    _

</llo_original>
